<compile_context>
chip_gen: v7x
topology: tpu7x:2x2x1
jax: 0.10.0
libtpu: 0.0.40
codegen_flags: <defaults>
</compile_context>

<pallas_src>
import functools

import jax
import jax.numpy as jnp
from jax.experimental import pallas as pl
from jax.experimental.pallas import tpu as pltpu


# ----------------------------------------------------------------------------
# Helpers
# ----------------------------------------------------------------------------
_VMEM_BUDGET = 24 * 1024 * 1024          # leave headroom under the 32 MiB scoped default
_SPLIT_FLOPS_THRESHOLD = 1e8             # only shard M across TCs if work clearly > overhead


def _round_up(x, m):
    return ((x + m - 1) // m) * m


def _pick_tile_m(M, K, Np):
    """Single full-extent M block unless the GEMM is big enough that a 2-way
    'parallel' split (v7x two-TensorCore sharding) pays for its extra grid step."""
    if M >= 256 and M % 16 == 0 and 2.0 * M * K * Np >= _SPLIT_FLOPS_THRESHOLD:
        return M // 2
    return M


def _largest_fitting_tk(tm, K, Np, out_bytes, budget):
    """Largest multiple-of-128 divisor of K whose double-buffered working set fits."""
    best = None
    for ntk in range(1, K // 128 + 1):
        tk = 128 * ntk
        if K % tk:
            continue
        need = (2 * (tm * tk + tk * Np) * 2          # bf16 inputs, double-buffered
                + 2 * tm * Np * out_bytes            # output, double-buffered
                + tm * Np * 4                        # f32 accumulator scratch
                + 2 * 4 * Np)                        # bias
        if need <= budget:
            best = tk
    assert best is not None, "even tk=128 does not fit VMEM budget"
    return best


# ----------------------------------------------------------------------------
# Shared f32 epilogue: bias already added; ReLU / clip / top-T
# ----------------------------------------------------------------------------
def _epilogue(acc, relu, clamp01, top_t):
    if clamp01:
        acc = jnp.clip(acc, 0.0, 1.0)                # lower bound subsumes the ReLU
    elif relu:
        acc = jnp.maximum(acc, 0.0)
    if top_t is not None:
        # Keep top-T per row across the lane (dict-atom) dim; inputs are >= 0
        # post-ReLU so tie/padding handling at zero is benign.
        cur = acc
        thresh = jnp.max(cur, axis=-1, keepdims=True)
        for _ in range(top_t - 1):
            cur = jnp.where(cur >= thresh, -1.0, cur)
            thresh = jnp.max(cur, axis=-1, keepdims=True)
        acc = jnp.where(acc >= thresh, acc, 0.0)
    return acc


# ----------------------------------------------------------------------------
# Pallas kernels
# ----------------------------------------------------------------------------
def _gemm_kernel_fused(x_ref, w_ref, b_ref, o_ref, *, relu, clamp01, top_t):
    """Single K step: dot + bias + epilogue straight to the output block."""
    acc = jnp.dot(x_ref[...], w_ref[...], preferred_element_type=jnp.float32)
    acc = acc + b_ref[...]
    o_ref[...] = _epilogue(acc, relu, clamp01, top_t).astype(o_ref.dtype)


def _gemm_kernel_ksplit(x_ref, w_ref, b_ref, o_ref, acc_ref, *, relu, clamp01, top_t):
    """Fallback for working sets too big for a single K step (large dictionaries)."""
    k = pl.program_id(1)

    @pl.when(k == 0)
    def _():
        acc_ref[...] = jnp.zeros_like(acc_ref)

    acc_ref[...] += jnp.dot(x_ref[...], w_ref[...],
                            preferred_element_type=jnp.float32)

    @pl.when(k == pl.num_programs(1) - 1)
    def _():
        acc = acc_ref[...] + b_ref[...]
        o_ref[...] = _epilogue(acc, relu, clamp01, top_t).astype(o_ref.dtype)


# ----------------------------------------------------------------------------
# GEMM wrapper: x (M,K) bf16, w (K,Np) bf16, b (1,Np) f32 -- all pre-aligned.
# ----------------------------------------------------------------------------
def gemm_bias_act(x, w, b, *, relu, clamp01=False, top_t=None,
                  out_dtype=jnp.bfloat16):
    M, K = x.shape
    Kw, Np = w.shape
    assert K == Kw and b.shape == (1, Np)
    out_bytes = jnp.dtype(out_dtype).itemsize

    tm = _pick_tile_m(M, K, Np)
    assert M % tm == 0

    cost = pl.CostEstimate(
        flops=2 * M * K * Np,
        transcendentals=0,
        bytes_accessed=2 * (M * K + K * Np) + 4 * Np + out_bytes * M * Np,
    )

    # Single K-step working set: double-buffered bf16 inputs + output + bias.
    need_single = 2 * (tm * K + K * Np) * 2 + 2 * tm * Np * out_bytes + 2 * 4 * Np

    if need_single <= _VMEM_BUDGET:
        return pl.pallas_call(
            functools.partial(_gemm_kernel_fused,
                              relu=relu, clamp01=clamp01, top_t=top_t),
            out_shape=jax.ShapeDtypeStruct((M, Np), out_dtype),
            grid_spec=pltpu.PrefetchScalarGridSpec(
                num_scalar_prefetch=0,
                grid=(M // tm,),
                in_specs=[
                    pl.BlockSpec((tm, K), lambda i: (i, 0)),
                    pl.BlockSpec((K, Np), lambda i: (0, 0)),
                    pl.BlockSpec((1, Np), lambda i: (0, 0)),
                ],
                out_specs=pl.BlockSpec((tm, Np), lambda i: (i, 0)),
            ),
            compiler_params=pltpu.CompilerParams(
                dimension_semantics=("parallel",),
                vmem_limit_bytes=32 * 1024 * 1024,
            ),
            cost_estimate=cost,
        )(x, w, b)

    # Fallback: split K (keep full-N blocks so top-T stays correct), f32 accumulator.
    tk = _largest_fitting_tk(tm, K, Np, out_bytes, _VMEM_BUDGET)
    return pl.pallas_call(
        functools.partial(_gemm_kernel_ksplit,
                          relu=relu, clamp01=clamp01, top_t=top_t),
        out_shape=jax.ShapeDtypeStruct((M, Np), out_dtype),
        grid_spec=pltpu.PrefetchScalarGridSpec(
            num_scalar_prefetch=0,
            grid=(M // tm, K // tk),
            in_specs=[
                pl.BlockSpec((tm, tk), lambda i, k: (i, k)),
                pl.BlockSpec((tk, Np), lambda i, k: (k, 0)),
                pl.BlockSpec((1, Np), lambda i, k: (0, 0)),
            ],
            out_specs=pl.BlockSpec((tm, Np), lambda i, k: (i, 0)),
            scratch_shapes=[pltpu.VMEM((tm, Np), jnp.float32)],
        ),
        compiler_params=pltpu.CompilerParams(
            dimension_semantics=("parallel", "arbitrary"),
            vmem_limit_bytes=32 * 1024 * 1024,
        ),
        cost_estimate=cost,
    )(x, w, b)


# ----------------------------------------------------------------------------
# Glue: im2col conv / conv-transpose built on the Pallas GEMM
# ----------------------------------------------------------------------------
def _im2col(x, kh, kw, stride):
    """x: (N, H, W, C) -> patches (N*OH*OW, kh*kw*C) in (kh, kw, cin) order."""
    N, H, W, C = x.shape
    OH = (H - kh) // stride + 1
    OW = (W - kw) // stride + 1
    cols = []
    for i in range(kh):
        for j in range(kw):
            cols.append(
                jax.lax.slice(
                    x,
                    (0, i, j, 0),
                    (N, i + stride * (OH - 1) + 1, j + stride * (OW - 1) + 1, C),
                    (1, stride, stride, 1),
                )
            )
    patches = jnp.stack(cols, axis=3)                  # (N, OH, OW, kh*kw, C)
    return patches.reshape(N * OH * OW, kh * kw * C), OH, OW


def conv2d(x, w_mat, b, *, k, stride, pad, relu, clamp01=False, top_t=None,
           out_dtype=jnp.bfloat16):
    """x: (N,H,W,Cin_padded) bf16; w_mat: (k*k*Cin_padded, Cout_padded) bf16."""
    if pad > 0:
        x = jnp.pad(x, ((0, 0), (pad, pad), (pad, pad), (0, 0)))
    N = x.shape[0]
    patches, OH, OW = _im2col(x, k, k, stride)
    out = gemm_bias_act(patches, w_mat, b, relu=relu, clamp01=clamp01,
                        top_t=top_t, out_dtype=out_dtype)
    return out.reshape(N, OH, OW, -1)


def _dilate(x, s):
    """Stride-s zero interleave via pad/reshape (no scatter materialization)."""
    if s == 1:
        return x
    N, H, W, C = x.shape
    y = x.reshape(N, H, 1, W, 1, C)
    y = jnp.pad(y, ((0, 0), (0, 0), (0, s - 1), (0, 0), (0, s - 1), (0, 0)))
    y = y.reshape(N, H * s, W * s, C)
    return y[:, : H * s - (s - 1), : W * s - (s - 1), :]


def conv_transpose2d(x, w_mat, b, *, k, stride, pad, relu, clamp01=False,
                     out_dtype=jnp.bfloat16):
    """ConvTranspose2d = dilation + padding + stride-1 conv with flipped kernel.
    w_mat must already be the conv-equivalent matrix (k*k*Cin_padded, Cout_padded)."""
    xd = _dilate(x, stride)
    p = k - 1 - pad
    return conv2d(xd, w_mat, b, k=k, stride=1, pad=p, relu=relu, clamp01=clamp01,
                  out_dtype=out_dtype)


def take_middle_of_img(x_nhwc, size):
    N, H, W, C = x_nhwc.shape
    sh = (H - size) // 2
    sw = (W - size) // 2
    return x_nhwc[:, sh: sh + size, sw: sw + size, :]


# ----------------------------------------------------------------------------
# Parameter setup (deterministic, synthetic) -- padded + bf16-cast ONCE here.
# ----------------------------------------------------------------------------
IN_CH_PAD = 8   # network input channels (3) padded to 8 so conv1's K = 4*4*8 = 128


def init_params(key, dict_nbatoms):
    dpad = _round_up(dict_nbatoms, 128)
    specs = [
        # name,     kind,     torch weight shape,          cin_pad, cout_pad
        ("conv1",   "conv",   (100, 3, 4, 4),              IN_CH_PAD, 128),
        ("conv2",   "conv",   (300, 100, 3, 3),            128,       384),
        ("conv3",   "conv",   (dict_nbatoms, 300, 3, 3),   384,       dpad),
        ("deconv1", "deconv", (dict_nbatoms, 300, 3, 3),   dpad,      384),
        ("deconv2", "deconv", (300, 100, 3, 3),            384,       128),
        ("deconv3", "deconv", (100, 3, 4, 4),              128,       128),
    ]
    params = {}
    keys = jax.random.split(key, 2 * len(specs))
    for idx, (name, kind, wshape, cin_pad, cout_pad) in enumerate(specs):
        w = 0.05 * jax.random.normal(keys[2 * idx], wshape, dtype=jnp.float32)
        if kind == "conv":
            co, ci, kh, kw = wshape
            wm = jnp.transpose(w, (2, 3, 1, 0))                       # (kh,kw,ci,co)
        else:  # ConvTranspose2d weight (Cin, Cout, KH, KW): flip + swap channels
            ci, co, kh, kw = wshape
            wm = jnp.transpose(jnp.flip(w, axis=(2, 3)), (2, 3, 0, 1))  # (kh,kw,ci,co)
        wm = jnp.pad(wm, ((0, 0), (0, 0), (0, cin_pad - ci), (0, cout_pad - co)))
        params[name + "_w"] = wm.reshape(kh * kw * cin_pad, cout_pad).astype(jnp.bfloat16)
        b = 0.01 * jax.random.normal(keys[2 * idx + 1], (co,), dtype=jnp.float32)
        params[name + "_b"] = jnp.pad(b, (0, cout_pad - co)).reshape(1, cout_pad)
    return params


# ----------------------------------------------------------------------------
# Forward pass (matches sparse_autoencoder.forward)
# ----------------------------------------------------------------------------
def sparse_autoencoder_forward(x_nchw, params, *, top_T, image_size):
    x = jnp.transpose(x_nchw, (0, 2, 3, 1)).astype(jnp.bfloat16)      # NCHW -> NHWC
    x = jnp.pad(x, ((0, 0), (0, 0), (0, 0), (0, IN_CH_PAD - x.shape[-1])))

    out = conv2d(x, params["conv1_w"], params["conv1_b"],
                 k=4, stride=2, pad=1, relu=True)
    out = conv2d(out, params["conv2_w"], params["conv2_b"],
                 k=3, stride=1, pad=0, relu=True)
    # conv3: ReLU + top-T sparsification fused into the GEMM epilogue.
    out = conv2d(out, params["conv3_w"], params["conv3_b"],
                 k=3, stride=1, pad=0, relu=True, top_t=top_T)

    out = conv_transpose2d(out, params["deconv1_w"], params["deconv1_b"],
                           k=3, stride=1, pad=0, relu=True)
    out = conv_transpose2d(out, params["deconv2_w"], params["deconv2_b"],
                           k=3, stride=1, pad=0, relu=True)
    # final ReLU + clamp(0,1) fused (clip subsumes the ReLU; commutes with crop)
    out = conv_transpose2d(out, params["deconv3_w"], params["deconv3_b"],
                           k=4, stride=2, pad=1, relu=True, clamp01=True,
                           out_dtype=jnp.float32)

    out = out[..., :3]                                 # drop padded output channels
    out = take_middle_of_img(out, image_size)
    return jnp.transpose(out, (0, 3, 1, 2))            # back to NCHW


# ----------------------------------------------------------------------------
if __name__ == "__main__":
    # args: image_shape=(16,16,3), top_T=5, dict_nbatoms=128
    image_size = 16
    top_T = 5
    dict_nbatoms = 128
    batch = 2

    key = jax.random.PRNGKey(0)
    k_params, k_x = jax.random.split(key)
    params = init_params(k_params, dict_nbatoms)
    x = jax.random.uniform(k_x, (batch, 3, image_size, image_size),
                           dtype=jnp.float32)

    fwd = jax.jit(functools.partial(sparse_autoencoder_forward,
                                    top_T=top_T, image_size=image_size))
    y = fwd(x, params)
    jax.block_until_ready(y)

    assert y.shape == (batch, 3, image_size, image_size), y.shape
    assert bool(jnp.all(y >= 0.0)) and bool(jnp.all(y <= 1.0))
    print("KERNEL_OK")
</pallas_src>

<mosaic_0001>
module attributes {stable_mosaic.version = 11 : i64} {
  func.func @_gemm_kernel_fused(%arg0: i32, %arg1: memref<128x128xbf16, #tpu.memory_space<vmem>>, %arg2: memref<128x128xbf16, #tpu.memory_space<vmem>>, %arg3: memref<1x128xf32, #tpu.memory_space<vmem>>, %arg4: memref<128x128xbf16, #tpu.memory_space<vmem>>) attributes {dimension_semantics = [#tpu.dimension_semantics<parallel>], iteration_bounds = array<i64: 1>, scalar_prefetch = 0 : i64, scratch_operands = 0 : i64, tpu.core_type = #tpu.core_type<tc>, window_params = [{transform_indices = @transform_0, window_bounds = array<i64: 128, 128>}, {pipeline_mode = #tpu.pipeline_mode<synchronous>, transform_indices = @transform_1, window_bounds = array<i64: 128, 128>}, {pipeline_mode = #tpu.pipeline_mode<synchronous>, transform_indices = @transform_2, window_bounds = array<i64: 1, 128>}, {transform_indices = @transform_3, window_bounds = array<i64: 128, 128>}]} {
    %c0 = arith.constant 0 : index
    %c0_0 = arith.constant 0 : index
    %0 = vector.load %arg1[%c0, %c0_0] : memref<128x128xbf16, #tpu.memory_space<vmem>>, vector<128x128xbf16>
    %c0_1 = arith.constant 0 : index
    %c0_2 = arith.constant 0 : index
    %1 = vector.load %arg2[%c0_1, %c0_2] : memref<128x128xbf16, #tpu.memory_space<vmem>>, vector<128x128xbf16>
    %cst = arith.constant dense<0.000000e+00> : vector<128x128xf32>
    %2 = tpu.matmul %0, %1, %cst {dimension_numbers = #tpu.dot_dimension_numbers<[1], [0], [0], [1], [0, 0, 1, 1], [], []>} : vector<128x128xbf16>, vector<128x128xbf16>, vector<128x128xf32> -> vector<128x128xf32>
    %c0_3 = arith.constant 0 : index
    %c0_4 = arith.constant 0 : index
    %3 = vector.load %arg3[%c0_3, %c0_4] : memref<1x128xf32, #tpu.memory_space<vmem>>, vector<1x128xf32>
    %4 = vector.broadcast %3 : vector<1x128xf32> to vector<128x128xf32>
    %5 = arith.addf %2, %4 : vector<128x128xf32>
    %cst_5 = arith.constant 0.000000e+00 : f32
    %6 = vector.broadcast %cst_5 : f32 to vector<128x128xf32>
    %7 = arith.maximumf %5, %6 : vector<128x128xf32>
    %8 = arith.truncf %7 : vector<128x128xf32> to vector<128x128xbf16>
    %c0_6 = arith.constant 0 : index
    %c0_7 = arith.constant 0 : index
    %9 = vector.load %arg4[%c0_6, %c0_7] : memref<128x128xbf16, #tpu.memory_space<vmem>>, vector<128x128xbf16>
    tpu.vector_store %arg4[%c0_6, %c0_7], %8 {strides = array<i32>} : memref<128x128xbf16, #tpu.memory_space<vmem>>, vector<128x128xbf16>,
    return
  }
  func.func @transform_0(%arg0: i32) -> (i32, i32) {
    %c0_i32 = arith.constant 0 : i32
    %c0_i32_0 = arith.constant 0 : i32
    return %arg0, %c0_i32 : i32, i32
  }
  func.func @transform_1(%arg0: i32) -> (i32, i32) {
    %c0_i32 = arith.constant 0 : i32
    %c0_i32_0 = arith.constant 0 : i32
    %c0_i32_1 = arith.constant 0 : i32
    return %c0_i32, %c0_i32_0 : i32, i32
  }
  func.func @transform_2(%arg0: i32) -> (i32, i32) {
    %c0_i32 = arith.constant 0 : i32
    %c0_i32_0 = arith.constant 0 : i32
    %c0_i32_1 = arith.constant 0 : i32
    return %c0_i32, %c0_i32_0 : i32, i32
  }
  func.func @transform_3(%arg0: i32) -> (i32, i32) {
    %c0_i32 = arith.constant 0 : i32
    %c0_i32_0 = arith.constant 0 : i32
    return %arg0, %c0_i32 : i32, i32
  }
}

module attributes {stable_mosaic.version = 11 : i64} {
  func.func @_gemm_kernel_fused(%arg0: i32, %arg1: memref<72x1152xbf16, #tpu.memory_space<vmem>>, %arg2: memref<1152x384xbf16, #tpu.memory_space<vmem>>, %arg3: memref<1x384xf32, #tpu.memory_space<vmem>>, %arg4: memref<72x384xbf16, #tpu.memory_space<vmem>>) attributes {dimension_semantics = [#tpu.dimension_semantics<parallel>], iteration_bounds = array<i64: 1>, scalar_prefetch = 0 : i64, scratch_operands = 0 : i64, tpu.core_type = #tpu.core_type<tc>, window_params = [{transform_indices = @transform_0, window_bounds = array<i64: 72, 1152>}, {pipeline_mode = #tpu.pipeline_mode<synchronous>, transform_indices = @transform_1, window_bounds = array<i64: 1152, 384>}, {pipeline_mode = #tpu.pipeline_mode<synchronous>, transform_indices = @transform_2, window_bounds = array<i64: 1, 384>}, {transform_indices = @transform_3, window_bounds = array<i64: 72, 384>}]} {
    %c0 = arith.constant 0 : index
    %c0_0 = arith.constant 0 : index
    %0 = vector.load %arg1[%c0, %c0_0] : memref<72x1152xbf16, #tpu.memory_space<vmem>>, vector<72x1152xbf16>
    %c0_1 = arith.constant 0 : index
    %c0_2 = arith.constant 0 : index
    %1 = vector.load %arg2[%c0_1, %c0_2] : memref<1152x384xbf16, #tpu.memory_space<vmem>>, vector<1152x384xbf16>
    %cst = arith.constant dense<0.000000e+00> : vector<72x384xf32>
    %2 = tpu.matmul %0, %1, %cst {dimension_numbers = #tpu.dot_dimension_numbers<[1], [0], [0], [1], [0, 0, 1, 1], [], []>} : vector<72x1152xbf16>, vector<1152x384xbf16>, vector<72x384xf32> -> vector<72x384xf32>
    %c0_3 = arith.constant 0 : index
    %c0_4 = arith.constant 0 : index
    %3 = vector.load %arg3[%c0_3, %c0_4] : memref<1x384xf32, #tpu.memory_space<vmem>>, vector<1x384xf32>
    %4 = vector.broadcast %3 : vector<1x384xf32> to vector<72x384xf32>
    %5 = arith.addf %2, %4 : vector<72x384xf32>
    %cst_5 = arith.constant 0.000000e+00 : f32
    %6 = vector.broadcast %cst_5 : f32 to vector<72x384xf32>
    %7 = arith.maximumf %5, %6 : vector<72x384xf32>
    %8 = arith.truncf %7 : vector<72x384xf32> to vector<72x384xbf16>
    %c0_6 = arith.constant 0 : index
    %c0_7 = arith.constant 0 : index
    %9 = vector.load %arg4[%c0_6, %c0_7] : memref<72x384xbf16, #tpu.memory_space<vmem>>, vector<72x384xbf16>
    tpu.vector_store %arg4[%c0_6, %c0_7], %8 {strides = array<i32>} : memref<72x384xbf16, #tpu.memory_space<vmem>>, vector<72x384xbf16>,
    return
  }
  func.func @transform_0(%arg0: i32) -> (i32, i32) {
    %c0_i32 = arith.constant 0 : i32
    %c0_i32_0 = arith.constant 0 : i32
    return %arg0, %c0_i32 : i32, i32
  }
  func.func @transform_1(%arg0: i32) -> (i32, i32) {
    %c0_i32 = arith.constant 0 : i32
    %c0_i32_0 = arith.constant 0 : i32
    %c0_i32_1 = arith.constant 0 : i32
    return %c0_i32, %c0_i32_0 : i32, i32
  }
  func.func @transform_2(%arg0: i32) -> (i32, i32) {
    %c0_i32 = arith.constant 0 : i32
    %c0_i32_0 = arith.constant 0 : i32
    %c0_i32_1 = arith.constant 0 : i32
    return %c0_i32, %c0_i32_0 : i32, i32
  }
  func.func @transform_3(%arg0: i32) -> (i32, i32) {
    %c0_i32 = arith.constant 0 : i32
    %c0_i32_0 = arith.constant 0 : i32
    return %arg0, %c0_i32 : i32, i32
  }
}

module attributes {stable_mosaic.version = 11 : i64} {
  func.func @_gemm_kernel_fused(%arg0: i32, %arg1: memref<32x3456xbf16, #tpu.memory_space<vmem>>, %arg2: memref<3456x128xbf16, #tpu.memory_space<vmem>>, %arg3: memref<1x128xf32, #tpu.memory_space<vmem>>, %arg4: memref<32x128xbf16, #tpu.memory_space<vmem>>) attributes {dimension_semantics = [#tpu.dimension_semantics<parallel>], iteration_bounds = array<i64: 1>, scalar_prefetch = 0 : i64, scratch_operands = 0 : i64, tpu.core_type = #tpu.core_type<tc>, window_params = [{transform_indices = @transform_0, window_bounds = array<i64: 32, 3456>}, {pipeline_mode = #tpu.pipeline_mode<synchronous>, transform_indices = @transform_1, window_bounds = array<i64: 3456, 128>}, {pipeline_mode = #tpu.pipeline_mode<synchronous>, transform_indices = @transform_2, window_bounds = array<i64: 1, 128>}, {transform_indices = @transform_3, window_bounds = array<i64: 32, 128>}]} {
    %c0 = arith.constant 0 : index
    %c0_0 = arith.constant 0 : index
    %0 = vector.load %arg1[%c0, %c0_0] : memref<32x3456xbf16, #tpu.memory_space<vmem>>, vector<32x3456xbf16>
    %c0_1 = arith.constant 0 : index
    %c0_2 = arith.constant 0 : index
    %1 = vector.load %arg2[%c0_1, %c0_2] : memref<3456x128xbf16, #tpu.memory_space<vmem>>, vector<3456x128xbf16>
    %cst = arith.constant dense<0.000000e+00> : vector<32x128xf32>
    %2 = tpu.matmul %0, %1, %cst {dimension_numbers = #tpu.dot_dimension_numbers<[1], [0], [0], [1], [0, 0, 1, 1], [], []>} : vector<32x3456xbf16>, vector<3456x128xbf16>, vector<32x128xf32> -> vector<32x128xf32>
    %c0_3 = arith.constant 0 : index
    %c0_4 = arith.constant 0 : index
    %3 = vector.load %arg3[%c0_3, %c0_4] : memref<1x128xf32, #tpu.memory_space<vmem>>, vector<1x128xf32>
    %4 = vector.broadcast %3 : vector<1x128xf32> to vector<32x128xf32>
    %5 = arith.addf %2, %4 : vector<32x128xf32>
    %cst_5 = arith.constant 0.000000e+00 : f32
    %6 = vector.broadcast %cst_5 : f32 to vector<32x128xf32>
    %7 = arith.maximumf %5, %6 : vector<32x128xf32>
    %cst_6 = arith.constant dense<0xFF800000> : vector<32xf32>
    %8 = vector.multi_reduction <maximumf>, %7, %cst_6 [1] : vector<32x128xf32> to vector<32xf32>
    %9 = vector.shape_cast %8 : vector<32xf32> to vector<32x1xf32>
    %10 = vector.broadcast %9 : vector<32x1xf32> to vector<32x128xf32>
    %11 = arith.cmpf oge, %7, %10 : vector<32x128xf32>
    %cst_7 = arith.constant -1.000000e+00 : f32
    %12 = vector.broadcast %cst_7 : f32 to vector<32x128xf32>
    %13 = arith.select %11, %12, %7 : vector<32x128xi1>, vector<32x128xf32>
    %cst_8 = arith.constant dense<0xFF800000> : vector<32xf32>
    %14 = vector.multi_reduction <maximumf>, %13, %cst_8 [1] : vector<32x128xf32> to vector<32xf32>
    %15 = vector.shape_cast %14 : vector<32xf32> to vector<32x1xf32>
    %16 = vector.broadcast %15 : vector<32x1xf32> to vector<32x128xf32>
    %17 = arith.cmpf oge, %13, %16 : vector<32x128xf32>
    %cst_9 = arith.constant -1.000000e+00 : f32
    %18 = vector.broadcast %cst_9 : f32 to vector<32x128xf32>
    %19 = arith.select %17, %18, %13 : vector<32x128xi1>, vector<32x128xf32>
    %cst_10 = arith.constant dense<0xFF800000> : vector<32xf32>
    %20 = vector.multi_reduction <maximumf>, %19, %cst_10 [1] : vector<32x128xf32> to vector<32xf32>
    %21 = vector.shape_cast %20 : vector<32xf32> to vector<32x1xf32>
    %22 = vector.broadcast %21 : vector<32x1xf32> to vector<32x128xf32>
    %23 = arith.cmpf oge, %19, %22 : vector<32x128xf32>
    %cst_11 = arith.constant -1.000000e+00 : f32
    %24 = vector.broadcast %cst_11 : f32 to vector<32x128xf32>
    %25 = arith.select %23, %24, %19 : vector<32x128xi1>, vector<32x128xf32>
    %cst_12 = arith.constant dense<0xFF800000> : vector<32xf32>
    %26 = vector.multi_reduction <maximumf>, %25, %cst_12 [1] : vector<32x128xf32> to vector<32xf32>
    %27 = vector.shape_cast %26 : vector<32xf32> to vector<32x1xf32>
    %28 = vector.broadcast %27 : vector<32x1xf32> to vector<32x128xf32>
    %29 = arith.cmpf oge, %25, %28 : vector<32x128xf32>
    %cst_13 = arith.constant -1.000000e+00 : f32
    %30 = vector.broadcast %cst_13 : f32 to vector<32x128xf32>
    %31 = arith.select %29, %30, %25 : vector<32x128xi1>, vector<32x128xf32>
    %cst_14 = arith.constant dense<0xFF800000> : vector<32xf32>
    %32 = vector.multi_reduction <maximumf>, %31, %cst_14 [1] : vector<32x128xf32> to vector<32xf32>
    %33 = vector.shape_cast %32 : vector<32xf32> to vector<32x1xf32>
    %34 = vector.broadcast %33 : vector<32x1xf32> to vector<32x128xf32>
    %35 = arith.cmpf oge, %7, %34 : vector<32x128xf32>
    %cst_15 = arith.constant 0.000000e+00 : f32
    %36 = vector.broadcast %cst_15 : f32 to vector<32x128xf32>
    %37 = arith.select %35, %7, %36 : vector<32x128xi1>, vector<32x128xf32>
    %38 = arith.truncf %37 : vector<32x128xf32> to vector<32x128xbf16>
    %c0_16 = arith.constant 0 : index
    %c0_17 = arith.constant 0 : index
    %39 = vector.load %arg4[%c0_16, %c0_17] : memref<32x128xbf16, #tpu.memory_space<vmem>>, vector<32x128xbf16>
    tpu.vector_store %arg4[%c0_16, %c0_17], %38 {strides = array<i32>} : memref<32x128xbf16, #tpu.memory_space<vmem>>, vector<32x128xbf16>,
    return
  }
  func.func @transform_0(%arg0: i32) -> (i32, i32) {
    %c0_i32 = arith.constant 0 : i32
    %c0_i32_0 = arith.constant 0 : i32
    return %arg0, %c0_i32 : i32, i32
  }
  func.func @transform_1(%arg0: i32) -> (i32, i32) {
    %c0_i32 = arith.constant 0 : i32
    %c0_i32_0 = arith.constant 0 : i32
    %c0_i32_1 = arith.constant 0 : i32
    return %c0_i32, %c0_i32_0 : i32, i32
  }
  func.func @transform_2(%arg0: i32) -> (i32, i32) {
    %c0_i32 = arith.constant 0 : i32
    %c0_i32_0 = arith.constant 0 : i32
    %c0_i32_1 = arith.constant 0 : i32
    return %c0_i32, %c0_i32_0 : i32, i32
  }
  func.func @transform_3(%arg0: i32) -> (i32, i32) {
    %c0_i32 = arith.constant 0 : i32
    %c0_i32_0 = arith.constant 0 : i32
    return %arg0, %c0_i32 : i32, i32
  }
}

module attributes {stable_mosaic.version = 11 : i64} {
  func.func @_gemm_kernel_fused(%arg0: i32, %arg1: memref<128x3456xbf16, #tpu.memory_space<vmem>>, %arg2: memref<3456x128xbf16, #tpu.memory_space<vmem>>, %arg3: memref<1x128xf32, #tpu.memory_space<vmem>>, %arg4: memref<128x128xbf16, #tpu.memory_space<vmem>>) attributes {dimension_semantics = [#tpu.dimension_semantics<parallel>], iteration_bounds = array<i64: 1>, scalar_prefetch = 0 : i64, scratch_operands = 0 : i64, tpu.core_type = #tpu.core_type<tc>, window_params = [{transform_indices = @transform_0, window_bounds = array<i64: 128, 3456>}, {pipeline_mode = #tpu.pipeline_mode<synchronous>, transform_indices = @transform_1, window_bounds = array<i64: 3456, 128>}, {pipeline_mode = #tpu.pipeline_mode<synchronous>, transform_indices = @transform_2, window_bounds = array<i64: 1, 128>}, {transform_indices = @transform_3, window_bounds = array<i64: 128, 128>}]} {
    %c0 = arith.constant 0 : index
    %c0_0 = arith.constant 0 : index
    %0 = vector.load %arg1[%c0, %c0_0] : memref<128x3456xbf16, #tpu.memory_space<vmem>>, vector<128x3456xbf16>
    %c0_1 = arith.constant 0 : index
    %c0_2 = arith.constant 0 : index
    %1 = vector.load %arg2[%c0_1, %c0_2] : memref<3456x128xbf16, #tpu.memory_space<vmem>>, vector<3456x128xbf16>
    %cst = arith.constant dense<0.000000e+00> : vector<128x128xf32>
    %2 = tpu.matmul %0, %1, %cst {dimension_numbers = #tpu.dot_dimension_numbers<[1], [0], [0], [1], [0, 0, 1, 1], [], []>} : vector<128x3456xbf16>, vector<3456x128xbf16>, vector<128x128xf32> -> vector<128x128xf32>
    %c0_3 = arith.constant 0 : index
    %c0_4 = arith.constant 0 : index
    %3 = vector.load %arg3[%c0_3, %c0_4] : memref<1x128xf32, #tpu.memory_space<vmem>>, vector<1x128xf32>
    %4 = vector.broadcast %3 : vector<1x128xf32> to vector<128x128xf32>
    %5 = arith.addf %2, %4 : vector<128x128xf32>
    %cst_5 = arith.constant 0.000000e+00 : f32
    %6 = vector.broadcast %cst_5 : f32 to vector<128x128xf32>
    %7 = arith.maximumf %5, %6 : vector<128x128xf32>
    %8 = arith.truncf %7 : vector<128x128xf32> to vector<128x128xbf16>
    %c0_6 = arith.constant 0 : index
    %c0_7 = arith.constant 0 : index
    %9 = vector.load %arg4[%c0_6, %c0_7] : memref<128x128xbf16, #tpu.memory_space<vmem>>, vector<128x128xbf16>
    tpu.vector_store %arg4[%c0_6, %c0_7], %8 {strides = array<i32>} : memref<128x128xbf16, #tpu.memory_space<vmem>>, vector<128x128xbf16>,
    return
  }
  func.func @transform_0(%arg0: i32) -> (i32, i32) {
    %c0_i32 = arith.constant 0 : i32
    %c0_i32_0 = arith.constant 0 : i32
    return %arg0, %c0_i32 : i32, i32
  }
  func.func @transform_1(%arg0: i32) -> (i32, i32) {
    %c0_i32 = arith.constant 0 : i32
    %c0_i32_0 = arith.constant 0 : i32
    %c0_i32_1 = arith.constant 0 : i32
    return %c0_i32, %c0_i32_0 : i32, i32
  }
  func.func @transform_2(%arg0: i32) -> (i32, i32) {
    %c0_i32 = arith.constant 0 : i32
    %c0_i32_0 = arith.constant 0 : i32
    %c0_i32_1 = arith.constant 0 : i32
    return %c0_i32, %c0_i32_0 : i32, i32
  }
  func.func @transform_3(%arg0: i32) -> (i32, i32) {
    %c0_i32 = arith.constant 0 : i32
    %c0_i32_0 = arith.constant 0 : i32
    return %arg0, %c0_i32 : i32, i32
  }
}

module attributes {stable_mosaic.version = 11 : i64} {
  func.func @_gemm_kernel_fused(%arg0: i32, %arg1: memref<256x2048xbf16, #tpu.memory_space<vmem>>, %arg2: memref<2048x128xbf16, #tpu.memory_space<vmem>>, %arg3: memref<1x128xf32, #tpu.memory_space<vmem>>, %arg4: memref<256x128xf32, #tpu.memory_space<vmem>>) attributes {dimension_semantics = [#tpu.dimension_semantics<parallel>], iteration_bounds = array<i64: 2>, scalar_prefetch = 0 : i64, scratch_operands = 0 : i64, tpu.core_type = #tpu.core_type<tc>, window_params = [{transform_indices = @transform_0, window_bounds = array<i64: 256, 2048>}, {pipeline_mode = #tpu.pipeline_mode<synchronous>, transform_indices = @transform_1, window_bounds = array<i64: 2048, 128>}, {pipeline_mode = #tpu.pipeline_mode<synchronous>, transform_indices = @transform_2, window_bounds = array<i64: 1, 128>}, {transform_indices = @transform_3, window_bounds = array<i64: 256, 128>}]} {
    %c0 = arith.constant 0 : index
    %c0_0 = arith.constant 0 : index
    %0 = vector.load %arg1[%c0, %c0_0] : memref<256x2048xbf16, #tpu.memory_space<vmem>>, vector<256x2048xbf16>
    %c0_1 = arith.constant 0 : index
    %c0_2 = arith.constant 0 : index
    %1 = vector.load %arg2[%c0_1, %c0_2] : memref<2048x128xbf16, #tpu.memory_space<vmem>>, vector<2048x128xbf16>
    %cst = arith.constant dense<0.000000e+00> : vector<256x128xf32>
    %2 = tpu.matmul %0, %1, %cst {dimension_numbers = #tpu.dot_dimension_numbers<[1], [0], [0], [1], [0, 0, 1, 1], [], []>} : vector<256x2048xbf16>, vector<2048x128xbf16>, vector<256x128xf32> -> vector<256x128xf32>
    %c0_3 = arith.constant 0 : index
    %c0_4 = arith.constant 0 : index
    %3 = vector.load %arg3[%c0_3, %c0_4] : memref<1x128xf32, #tpu.memory_space<vmem>>, vector<1x128xf32>
    %4 = vector.broadcast %3 : vector<1x128xf32> to vector<256x128xf32>
    %5 = arith.addf %2, %4 : vector<256x128xf32>
    %cst_5 = arith.constant 0.000000e+00 : f32
    %cst_6 = arith.constant 1.000000e+00 : f32
    %6 = vector.broadcast %cst_5 : f32 to vector<256x128xf32>
    %7 = arith.maximumf %6, %5 : vector<256x128xf32>
    %8 = vector.broadcast %cst_6 : f32 to vector<256x128xf32>
    %9 = arith.minimumf %8, %7 : vector<256x128xf32>
    %c0_7 = arith.constant 0 : index
    %c0_8 = arith.constant 0 : index
    %10 = vector.load %arg4[%c0_7, %c0_8] : memref<256x128xf32, #tpu.memory_space<vmem>>, vector<256x128xf32>
    tpu.vector_store %arg4[%c0_7, %c0_8], %9 {strides = array<i32>} : memref<256x128xf32, #tpu.memory_space<vmem>>, vector<256x128xf32>,
    return
  }
  func.func @transform_0(%arg0: i32) -> (i32, i32) {
    %c0_i32 = arith.constant 0 : i32
    %c0_i32_0 = arith.constant 0 : i32
    return %arg0, %c0_i32 : i32, i32
  }
  func.func @transform_1(%arg0: i32) -> (i32, i32) {
    %c0_i32 = arith.constant 0 : i32
    %c0_i32_0 = arith.constant 0 : i32
    %c0_i32_1 = arith.constant 0 : i32
    return %c0_i32, %c0_i32_0 : i32, i32
  }
  func.func @transform_2(%arg0: i32) -> (i32, i32) {
    %c0_i32 = arith.constant 0 : i32
    %c0_i32_0 = arith.constant 0 : i32
    %c0_i32_1 = arith.constant 0 : i32
    return %c0_i32, %c0_i32_0 : i32, i32
  }
  func.func @transform_3(%arg0: i32) -> (i32, i32) {
    %c0_i32 = arith.constant 0 : i32
    %c0_i32_0 = arith.constant 0 : i32
    return %arg0, %c0_i32 : i32, i32
  }
}

</mosaic_0001>

<llo_original>
// kernel: sparse_autoencoder_forward.6
$region0: #{sparse_autoencoder_forward.6}
  #allocation0 [shape = 'u32[]', space=smem, size = 0x4, offset = 0x4, fixed_abs, tag = 'smem constant byte address 0x4 - core index']
  #allocation1 [shape = 'u32[144,128]{1,0:T(1,128)}', space=vmem, size = 0x12000, scoped, tag = 'internal scratch']
  %s0 = inlined_call_operand.vmem [shape: bf16[128,128], index: 0, kind: input, shape index: {}]
  %s1 = inlined_call_operand.vmem [shape: bf16[128,128], index: 1, kind: input, shape index: {}]
  %s2 = inlined_call_operand.vmem [shape: f32[1,128], index: 2, kind: input, shape index: {}]
  %s3 = inlined_call_operand.vmem [shape: bf16[128,128], index: 3, kind: output, shape index: {}]
  %s4 = sld [smem:[#allocation0]]
  $region22: #{sparse_autoencoder_forward.6} parent=0
    _
  %s6 = ssub.s32 1, %s4
  %s7 = scalar_select 0, %s6, %s4
  // Predicated region
  $region2: #{sparse_autoencoder_forward.6} parent=0 // pred_check
    _
  $region3: #{sparse_autoencoder_forward.6} parent=0 // pred_check_branch
    %9 = sbr.rel (0) target = $region5
  $region4: #{sparse_autoencoder_forward.6} parent=0 // pred_region
    _
  $region5: #{sparse_autoencoder_forward.6} parent=0 // pred_fallthru
    _
  // Predicated region
  $region6: #{sparse_autoencoder_forward.6} parent=0 // pred_check
    _
  $region7: #{sparse_autoencoder_forward.6} parent=0 // pred_check_branch
    %11 = sbr.rel (0) target = $region9
  $region8: #{sparse_autoencoder_forward.6} parent=0 // pred_region
    _
  $region9: #{sparse_autoencoder_forward.6} parent=0 // pred_fallthru
    _
  // Predicated region
  $region10: #{sparse_autoencoder_forward.6} parent=0 // pred_check
    _
  $region11: #{sparse_autoencoder_forward.6} parent=0 // pred_check_branch
    %13 = sbr.rel (0) target = $region13
  $region12: #{sparse_autoencoder_forward.6} parent=0 // pred_region
    _
  $region13: #{sparse_autoencoder_forward.6} parent=0 // pred_fallthru
    _
  %v15 = vld [vmem:[%s0] sm:$0xf]
  %v16 = vld [vmem:[%s0 + $0x4] sm:$0xf]
  %v17 = vld [vmem:[%s0 + $0x8] sm:$0xf]
  %v18 = vld [vmem:[%s0 + $0xc] sm:$0xf]
  %v19 = vld [vmem:[%s0 + $0x10] sm:$0xf]
  %v20 = vld [vmem:[%s0 + $0x14] sm:$0xf]
  %v21 = vld [vmem:[%s0 + $0x18] sm:$0xf]
  %v22 = vld [vmem:[%s0 + $0x1c] sm:$0xf]
  %v23 = vld [vmem:[%s0 + $0x20] sm:$0xf]
  %v24 = vld [vmem:[%s0 + $0x24] sm:$0xf]
  %v25 = vld [vmem:[%s0 + $0x28] sm:$0xf]
  %v26 = vld [vmem:[%s0 + $0x2c] sm:$0xf]
  %v27 = vld [vmem:[%s0 + $0x30] sm:$0xf]
  %v28 = vld [vmem:[%s0 + $0x34] sm:$0xf]
  %v29 = vld [vmem:[%s0 + $0x38] sm:$0xf]
  %v30 = vld [vmem:[%s0 + $0x3c] sm:$0xf]
  %v31 = vld [vmem:[%s1] sm:$0xf]
  %v32 = vld [vmem:[%s1 + $0x4] sm:$0xf]
  %v33 = vld [vmem:[%s1 + $0x8] sm:$0xf]
  %v34 = vld [vmem:[%s1 + $0xc] sm:$0xf]
  %v35 = vld [vmem:[%s1 + $0x10] sm:$0xf]
  %v36 = vld [vmem:[%s1 + $0x14] sm:$0xf]
  %v37 = vld [vmem:[%s1 + $0x18] sm:$0xf]
  %v38 = vld [vmem:[%s1 + $0x1c] sm:$0xf]
  %v39 = vld [vmem:[%s1 + $0x20] sm:$0xf]
  %v40 = vld [vmem:[%s1 + $0x24] sm:$0xf]
  %v41 = vld [vmem:[%s1 + $0x28] sm:$0xf]
  %v42 = vld [vmem:[%s1 + $0x2c] sm:$0xf]
  %v43 = vld [vmem:[%s1 + $0x30] sm:$0xf]
  %v44 = vld [vmem:[%s1 + $0x34] sm:$0xf]
  %v45 = vld [vmem:[%s1 + $0x38] sm:$0xf]
  %v46 = vld [vmem:[%s1 + $0x3c] sm:$0xf]
  %v47 = vld [vmem:[%s2] sm:$0x1]
  %v49 = vlaneseq
  %v50 = vshrl.u32 %v49, 7
  %v51 = vsub.s32 0, %v50
  %v52 = vrot.slane %v47, %v51
  %v70 = vunpack.c.l.b16 %v15
  %v71 = vunpack.c.l.b16 %v16
  %v72 = vunpack.c.l.b16 %v17
  %v73 = vunpack.c.l.b16 %v18
  %v74 = vunpack.c.l.b16 %v19
  %v75 = vunpack.c.l.b16 %v20
  %v76 = vunpack.c.l.b16 %v21
  %v77 = vunpack.c.l.b16 %v22
  %v78 = vunpack.c.l.b16 %v23
  %v79 = vunpack.c.l.b16 %v24
  %v80 = vunpack.c.l.b16 %v25
  %v81 = vunpack.c.l.b16 %v26
  %v82 = vunpack.c.l.b16 %v27
  %v83 = vunpack.c.l.b16 %v28
  %v84 = vunpack.c.l.b16 %v29
  %v85 = vunpack.c.l.b16 %v30
  %v86 = vpack.c.b16 %v71, %v70
  %v87 = vpack.c.b16 %v73, %v72
  %v88 = vpack.c.b16 %v75, %v74
  %v89 = vpack.c.b16 %v77, %v76
  %v90 = vpack.c.b16 %v79, %v78
  %v91 = vpack.c.b16 %v81, %v80
  %v92 = vpack.c.b16 %v83, %v82
  %v93 = vpack.c.b16 %v85, %v84
  %v118 = vunpack.c.l.b16 %v31
  %v119 = vunpack.c.l.b16 %v32
  %v120 = vunpack.c.l.b16 %v33
  %v121 = vunpack.c.l.b16 %v34
  %v122 = vunpack.c.l.b16 %v35
  %v123 = vunpack.c.l.b16 %v36
  %v124 = vunpack.c.l.b16 %v37
  %v125 = vunpack.c.l.b16 %v38
  %v126 = vunpack.c.l.b16 %v39
  %v127 = vunpack.c.l.b16 %v40
  %v128 = vunpack.c.l.b16 %v41
  %v129 = vunpack.c.l.b16 %v42
  %v130 = vunpack.c.l.b16 %v43
  %v131 = vunpack.c.l.b16 %v44
  %v132 = vunpack.c.l.b16 %v45
  %v133 = vunpack.c.l.b16 %v46
  %v134 = vpack.c.b16 %v119, %v118
  %v135 = vpack.c.b16 %v121, %v120
  %v136 = vpack.c.b16 %v123, %v122
  %v137 = vpack.c.b16 %v125, %v124
  %v138 = vpack.c.b16 %v127, %v126
  %v139 = vpack.c.b16 %v129, %v128
  %v140 = vpack.c.b16 %v131, %v130
  %v141 = vpack.c.b16 %v133, %v132
  %150 = vmatprep.subr.bf16.mxu0 0
  %151 = vmatpush1.bf16.msra.mxu0 %v134
  %152 = vmatprep.subr.bf16.mxu0 0
  %153 = vmatpush1.bf16.msra.mxu0 %v135
  %154 = vmatprep.subr.bf16.mxu0 0
  %155 = vmatpush1.bf16.msra.mxu0 %v136
  %156 = vmatprep.subr.bf16.mxu0 0
  %157 = vmatpush1.bf16.msra.mxu0 %v137
  %158 = vmatprep.subr.bf16.mxu0 0
  %159 = vmatpush1.bf16.msra.mxu0 %v138
  %160 = vmatprep.subr.bf16.mxu0 0
  %161 = vmatpush1.bf16.msra.mxu0 %v139
  %162 = vmatprep.subr.bf16.mxu0 0
  %163 = vmatpush1.bf16.msra.mxu0 %v140
  %164 = vmatprep.subr.bf16.mxu0 0
  %165 = vmatpush1.bf16.msra.mxu0 %v141
  %166 = vmatprep.subr.bf16.mxu0 0
  %167 = vmatpush1.bf16.msra.mxu0 0
  %168 = vmatprep.subr.bf16.mxu0 0
  %169 = vmatpush1.bf16.msra.mxu0 0
  %170 = vmatprep.subr.bf16.mxu0 0
  %171 = vmatpush1.bf16.msra.mxu0 0
  %172 = vmatprep.subr.bf16.mxu0 0
  %173 = vmatpush1.bf16.msra.mxu0 0
  %174 = vmatprep.subr.bf16.mxu0 0
  %175 = vmatpush1.bf16.msra.mxu0 0
  %176 = vmatprep.subr.bf16.mxu0 0
  %177 = vmatpush1.bf16.msra.mxu0 0
  %178 = vmatprep.subr.bf16.mxu0 0
  %179 = vmatpush1.bf16.msra.mxu0 0
  %180 = vmatprep.subr.bf16.mxu0 0
  %181 = vmatpush1.bf16.msra.mxu0 0
  %182 = vmatprep.mubr.bf16.mxu0 0
  %183 = vmatmul.mubr.bf16.gmra.mrb[0].mxu0 %v86
  %v184 = vpop.f32.mrb[0].mxu0
  %v185 = vadd.f32 %v52, %v184
  %v186 = vpop.f32.mrb[0].mxu0
  %v187 = vpop.f32.mrb[0].mxu0
  %v188 = vadd.f32 %v52, %v187
  %v189 = vpop.f32.mrb[0].mxu0
  %190 = vmatprep.mubr.bf16.mxu0 0
  %191 = vmatmul.mubr.bf16.gmra.mrb[0].mxu0 %v87
  %v192 = vpop.f32.mrb[0].mxu0
  %v193 = vadd.f32 %v52, %v192
  %v194 = vpop.f32.mrb[0].mxu0
  %v195 = vpop.f32.mrb[0].mxu0
  %v196 = vadd.f32 %v52, %v195
  %v197 = vpop.f32.mrb[0].mxu0
  %198 = vmatprep.mubr.bf16.mxu0 0
  %199 = vmatmul.mubr.bf16.gmra.mrb[0].mxu0 %v88
  %v200 = vpop.f32.mrb[0].mxu0
  %v201 = vadd.f32 %v52, %v200
  %v202 = vpop.f32.mrb[0].mxu0
  %v203 = vpop.f32.mrb[0].mxu0
  %v204 = vadd.f32 %v52, %v203
  %v205 = vpop.f32.mrb[0].mxu0
  %206 = vmatprep.mubr.bf16.mxu0 0
  %207 = vmatmul.mubr.bf16.gmra.mrb[0].mxu0 %v89
  %v208 = vpop.f32.mrb[0].mxu0
  %v209 = vadd.f32 %v52, %v208
  %v210 = vpop.f32.mrb[0].mxu0
  %v211 = vpop.f32.mrb[0].mxu0
  %v212 = vadd.f32 %v52, %v211
  %v213 = vpop.f32.mrb[0].mxu0
  %214 = vmatprep.mubr.bf16.mxu0 0
  %215 = vmatmul.mubr.bf16.gmra.mrb[0].mxu0 %v90
  %v216 = vpop.f32.mrb[0].mxu0
  %v217 = vadd.f32 %v52, %v216
  %v218 = vpop.f32.mrb[0].mxu0
  %v219 = vpop.f32.mrb[0].mxu0
  %v220 = vadd.f32 %v52, %v219
  %v221 = vpop.f32.mrb[0].mxu0
  %222 = vmatprep.mubr.bf16.mxu0 0
  %223 = vmatmul.mubr.bf16.gmra.mrb[0].mxu0 %v91
  %v224 = vpop.f32.mrb[0].mxu0
  %v225 = vadd.f32 %v52, %v224
  %v226 = vpop.f32.mrb[0].mxu0
  %v227 = vpop.f32.mrb[0].mxu0
  %v228 = vadd.f32 %v52, %v227
  %v229 = vpop.f32.mrb[0].mxu0
  %230 = vmatprep.mubr.bf16.mxu0 0
  %231 = vmatmul.mubr.bf16.gmra.mrb[0].mxu0 %v92
  %v232 = vpop.f32.mrb[0].mxu0
  %v233 = vadd.f32 %v52, %v232
  %v234 = vpop.f32.mrb[0].mxu0
  %v235 = vpop.f32.mrb[0].mxu0
  %v236 = vadd.f32 %v52, %v235
  %v237 = vpop.f32.mrb[0].mxu0
  %238 = vmatprep.mubr.bf16.mxu0 0
  %239 = vmatmul.mubr.bf16.gmra.mrb[0].mxu0 %v93
  %v240 = vpop.f32.mrb[0].mxu0
  %v241 = vadd.f32 %v52, %v240
  %v242 = vpop.f32.mrb[0].mxu0
  %v243 = vpop.f32.mrb[0].mxu0
  %v244 = vadd.f32 %v52, %v243
  %v245 = vpop.f32.mrb[0].mxu0
  %246 = vdwg.mxu0
  %v247 = vmax.f32 %v185, 0.0
  %v248 = vmax.f32 %v188, 0.0
  %v249 = vmax.f32 %v193, 0.0
  %v250 = vmax.f32 %v196, 0.0
  %v251 = vmax.f32 %v201, 0.0
  %v252 = vmax.f32 %v204, 0.0
  %v253 = vmax.f32 %v209, 0.0
  %v254 = vmax.f32 %v212, 0.0
  %v255 = vmax.f32 %v217, 0.0
  %v256 = vmax.f32 %v220, 0.0
  %v257 = vmax.f32 %v225, 0.0
  %v258 = vmax.f32 %v228, 0.0
  %v259 = vmax.f32 %v233, 0.0
  %v260 = vmax.f32 %v236, 0.0
  %v261 = vmax.f32 %v241, 0.0
  %v262 = vmax.f32 %v244, 0.0
  %v263 = vpack.c.bf16 %v248, %v247
  %v264 = vpack.c.bf16 %v250, %v249
  %v265 = vpack.c.bf16 %v252, %v251
  %v266 = vpack.c.bf16 %v254, %v253
  %v267 = vpack.c.bf16 %v256, %v255
  %v268 = vpack.c.bf16 %v258, %v257
  %v269 = vpack.c.bf16 %v260, %v259
  %v270 = vpack.c.bf16 %v262, %v261
  %v279 = vunpack.c.l.b16 %v263
  %v280 = vunpack.c.h.b16 %v263
  %v281 = vunpack.c.l.b16 %v264
  %v282 = vunpack.c.h.b16 %v264
  %v283 = vunpack.c.l.b16 %v265
  %v284 = vunpack.c.h.b16 %v265
  %v285 = vunpack.c.l.b16 %v266
  %v286 = vunpack.c.h.b16 %v266
  %v287 = vunpack.c.l.b16 %v267
  %v288 = vunpack.c.h.b16 %v267
  %v289 = vunpack.c.l.b16 %v268
  %v290 = vunpack.c.h.b16 %v268
  %v291 = vunpack.c.l.b16 %v269
  %v292 = vunpack.c.h.b16 %v269
  %v293 = vunpack.c.l.b16 %v270
  %v294 = vunpack.c.h.b16 %v270
  %v295 = vpack.c.b16 %v279, %v279
  %v296 = vpack.c.b16 %v280, %v280
  %v297 = vpack.c.b16 %v281, %v281
  %v298 = vpack.c.b16 %v282, %v282
  %v299 = vpack.c.b16 %v283, %v283
  %v300 = vpack.c.b16 %v284, %v284
  %v301 = vpack.c.b16 %v285, %v285
  %v302 = vpack.c.b16 %v286, %v286
  %v303 = vpack.c.b16 %v287, %v287
  %v304 = vpack.c.b16 %v288, %v288
  %v305 = vpack.c.b16 %v289, %v289
  %v306 = vpack.c.b16 %v290, %v290
  %v307 = vpack.c.b16 %v291, %v291
  %v308 = vpack.c.b16 %v292, %v292
  %v309 = vpack.c.b16 %v293, %v293
  %v310 = vpack.c.b16 %v294, %v294
  %327 = vst [vmem:[%s3] sm:$0xf] %v295
  %328 = vst [vmem:[%s3 + $0x4] sm:$0xf] %v296
  %329 = vst [vmem:[%s3 + $0x8] sm:$0xf] %v297
  %330 = vst [vmem:[%s3 + $0xc] sm:$0xf] %v298
  %331 = vst [vmem:[%s3 + $0x10] sm:$0xf] %v299
  %332 = vst [vmem:[%s3 + $0x14] sm:$0xf] %v300
  %333 = vst [vmem:[%s3 + $0x18] sm:$0xf] %v301
  %334 = vst [vmem:[%s3 + $0x1c] sm:$0xf] %v302
  %335 = vst [vmem:[%s3 + $0x20] sm:$0xf] %v303
  %336 = vst [vmem:[%s3 + $0x24] sm:$0xf] %v304
  %337 = vst [vmem:[%s3 + $0x28] sm:$0xf] %v305
  %338 = vst [vmem:[%s3 + $0x2c] sm:$0xf] %v306
  %339 = vst [vmem:[%s3 + $0x30] sm:$0xf] %v307
  %340 = vst [vmem:[%s3 + $0x34] sm:$0xf] %v308
  %341 = vst [vmem:[%s3 + $0x38] sm:$0xf] %v309
  %342 = vst [vmem:[%s3 + $0x3c] sm:$0xf] %v310
  // Predicated region
  $region14: #{sparse_autoencoder_forward.6} parent=0 // pred_check
    _
  $region15: #{sparse_autoencoder_forward.6} parent=0 // pred_check_branch
    %344 = sbr.rel (0) target = $region17
  $region16: #{sparse_autoencoder_forward.6} parent=0 // pred_region
    _
  $region17: #{sparse_autoencoder_forward.6} parent=0 // pred_fallthru
    _
  // Predicated region
  $region18: #{sparse_autoencoder_forward.6} parent=0 // pred_check
    _
  $region19: #{sparse_autoencoder_forward.6} parent=0 // pred_check_branch
    %346 = sbr.rel (0) target = $region21
  $region20: #{sparse_autoencoder_forward.6} parent=0 // pred_region
    _
  $region21: #{sparse_autoencoder_forward.6} parent=0 // pred_fallthru
    _

// kernel: sparse_autoencoder_forward.7
$region0: #{sparse_autoencoder_forward.7}
  #allocation0 [shape = 'u32[]', space=smem, size = 0x4, offset = 0x4, fixed_abs, tag = 'smem constant byte address 0x4 - core index']
  #allocation1 [shape = 'u32[144,128]{1,0:T(1,128)}', space=vmem, size = 0x12000, scoped, tag = 'internal scratch']
  %s0 = inlined_call_operand.vmem [shape: bf16[72,1152], index: 0, kind: input, shape index: {}]
  %s1 = inlined_call_operand.vmem [shape: bf16[1152,384], index: 1, kind: input, shape index: {}]
  %s2 = inlined_call_operand.vmem [shape: f32[1,384], index: 2, kind: input, shape index: {}]
  %s3 = inlined_call_operand.vmem [shape: bf16[72,384], index: 3, kind: output, shape index: {}]
  %s4 = sld [smem:[#allocation0]]
  $region22: #{sparse_autoencoder_forward.7} parent=0
    _
  %s6 = ssub.s32 1, %s4
  %s7 = scalar_select 0, %s6, %s4
  // Predicated region
  $region2: #{sparse_autoencoder_forward.7} parent=0 // pred_check
    _
  $region3: #{sparse_autoencoder_forward.7} parent=0 // pred_check_branch
    %9 = sbr.rel (0) target = $region5
  $region4: #{sparse_autoencoder_forward.7} parent=0 // pred_region
    _
  $region5: #{sparse_autoencoder_forward.7} parent=0 // pred_fallthru
    _
  // Predicated region
  $region6: #{sparse_autoencoder_forward.7} parent=0 // pred_check
    _
  $region7: #{sparse_autoencoder_forward.7} parent=0 // pred_check_branch
    %11 = sbr.rel (0) target = $region9
  $region8: #{sparse_autoencoder_forward.7} parent=0 // pred_region
    _
  $region9: #{sparse_autoencoder_forward.7} parent=0 // pred_fallthru
    _
  // Predicated region
  $region10: #{sparse_autoencoder_forward.7} parent=0 // pred_check
    _
  $region11: #{sparse_autoencoder_forward.7} parent=0 // pred_check_branch
    %13 = sbr.rel (0) target = $region13
  $region12: #{sparse_autoencoder_forward.7} parent=0 // pred_region
    _
  $region13: #{sparse_autoencoder_forward.7} parent=0 // pred_fallthru
    _
  %v15 = vld [vmem:[%s0] sm:$0xff]
  %v16 = vld [vmem:[%s0 + $0x8] sm:$0xff]
  %v17 = vld [vmem:[%s0 + $0x10] sm:$0xff]
  %v18 = vld [vmem:[%s0 + $0x18] sm:$0xff]
  %v19 = vld [vmem:[%s0 + $0x20] sm:$0xf]
  %v20 = vld [vmem:[%s0 + $0x24] sm:$0xff]
  %v21 = vld [vmem:[%s0 + $0x2c] sm:$0xff]
  %v22 = vld [vmem:[%s0 + $0x34] sm:$0xff]
  %v23 = vld [vmem:[%s0 + $0x3c] sm:$0xff]
  %v24 = vld [vmem:[%s0 + $0x44] sm:$0xf]
  %v25 = vld [vmem:[%s0 + $0x48] sm:$0xff]
  %v26 = vld [vmem:[%s0 + $0x50] sm:$0xff]
  %v27 = vld [vmem:[%s0 + $0x58] sm:$0xff]
  %v28 = vld [vmem:[%s0 + $0x60] sm:$0xff]
  %v29 = vld [vmem:[%s0 + $0x68] sm:$0xf]
  %v30 = vld [vmem:[%s0 + $0x6c] sm:$0xff]
  %v31 = vld [vmem:[%s0 + $0x74] sm:$0xff]
  %v32 = vld [vmem:[%s0 + $0x7c] sm:$0xff]
  %v33 = vld [vmem:[%s0 + $0x84] sm:$0xff]
  %v34 = vld [vmem:[%s0 + $0x8c] sm:$0xf]
  %v35 = vld [vmem:[%s0 + $0x90] sm:$0xff]
  %v36 = vld [vmem:[%s0 + $0x98] sm:$0xff]
  %v37 = vld [vmem:[%s0 + $0xa0] sm:$0xff]
  %v38 = vld [vmem:[%s0 + $0xa8] sm:$0xff]
  %v39 = vld [vmem:[%s0 + $0xb0] sm:$0xf]
  %v40 = vld [vmem:[%s0 + $0xb4] sm:$0xff]
  %v41 = vld [vmem:[%s0 + $0xbc] sm:$0xff]
  %v42 = vld [vmem:[%s0 + $0xc4] sm:$0xff]
  %v43 = vld [vmem:[%s0 + $0xcc] sm:$0xff]
  %v44 = vld [vmem:[%s0 + $0xd4] sm:$0xf]
  %v45 = vld [vmem:[%s0 + $0xd8] sm:$0xff]
  %v46 = vld [vmem:[%s0 + $0xe0] sm:$0xff]
  %v47 = vld [vmem:[%s0 + $0xe8] sm:$0xff]
  %v48 = vld [vmem:[%s0 + $0xf0] sm:$0xff]
  %v49 = vld [vmem:[%s0 + $0xf8] sm:$0xf]
  %v50 = vld [vmem:[%s0 + $0xfc] sm:$0xff]
  %v51 = vld [vmem:[%s0 + $0x104] sm:$0xff]
  %v52 = vld [vmem:[%s0 + $0x10c] sm:$0xff]
  %v53 = vld [vmem:[%s0 + $0x114] sm:$0xff]
  %v54 = vld [vmem:[%s0 + $0x11c] sm:$0xf]
  %v55 = vld [vmem:[%s0 + $0x120] sm:$0xff]
  %v56 = vld [vmem:[%s0 + $0x128] sm:$0xff]
  %v57 = vld [vmem:[%s0 + $0x130] sm:$0xff]
  %v58 = vld [vmem:[%s0 + $0x138] sm:$0xff]
  %v59 = vld [vmem:[%s0 + $0x140] sm:$0xf]
  %v60 = vld [vmem:[%s1] sm:$0xff]
  %v61 = vld [vmem:[%s1 + $0x8] sm:$0xf]
  %v62 = vld [vmem:[%s1 + $0xc] sm:$0xff]
  %v63 = vld [vmem:[%s1 + $0x14] sm:$0xf]
  %v64 = vld [vmem:[%s1 + $0x18] sm:$0xff]
  %v65 = vld [vmem:[%s1 + $0x20] sm:$0xf]
  %v66 = vld [vmem:[%s1 + $0x24] sm:$0xff]
  %v67 = vld [vmem:[%s1 + $0x2c] sm:$0xf]
  %v68 = vld [vmem:[%s1 + $0x30] sm:$0xff]
  %v69 = vld [vmem:[%s1 + $0x38] sm:$0xf]
  %v70 = vld [vmem:[%s1 + $0x3c] sm:$0xff]
  %v71 = vld [vmem:[%s1 + $0x44] sm:$0xf]
  %v72 = vld [vmem:[%s1 + $0x48] sm:$0xff]
  %v73 = vld [vmem:[%s1 + $0x50] sm:$0xf]
  %v74 = vld [vmem:[%s1 + $0x54] sm:$0xff]
  %v75 = vld [vmem:[%s1 + $0x5c] sm:$0xf]
  %v76 = vld [vmem:[%s1 + $0x60] sm:$0xff]
  %v77 = vld [vmem:[%s1 + $0x68] sm:$0xf]
  %v78 = vld [vmem:[%s1 + $0x6c] sm:$0xff]
  %v79 = vld [vmem:[%s1 + $0x74] sm:$0xf]
  %v80 = vld [vmem:[%s1 + $0x78] sm:$0xff]
  %v81 = vld [vmem:[%s1 + $0x80] sm:$0xf]
  %v82 = vld [vmem:[%s1 + $0x84] sm:$0xff]
  %v83 = vld [vmem:[%s1 + $0x8c] sm:$0xf]
  %v84 = vld [vmem:[%s1 + $0x90] sm:$0xff]
  %v85 = vld [vmem:[%s1 + $0x98] sm:$0xf]
  %v86 = vld [vmem:[%s1 + $0x9c] sm:$0xff]
  %v87 = vld [vmem:[%s1 + $0xa4] sm:$0xf]
  %v88 = vld [vmem:[%s1 + $0xa8] sm:$0xff]
  %v89 = vld [vmem:[%s1 + $0xb0] sm:$0xf]
  %v90 = vld [vmem:[%s1 + $0xb4] sm:$0xff]
  %v91 = vld [vmem:[%s1 + $0xbc] sm:$0xf]
  %v92 = vld [vmem:[%s1 + $0xc0] sm:$0xff]
  %v93 = vld [vmem:[%s1 + $0xc8] sm:$0xf]
  %v94 = vld [vmem:[%s1 + $0xcc] sm:$0xff]
  %v95 = vld [vmem:[%s1 + $0xd4] sm:$0xf]
  %v96 = vld [vmem:[%s1 + $0xd8] sm:$0xff]
  %v97 = vld [vmem:[%s1 + $0xe0] sm:$0xf]
  %v98 = vld [vmem:[%s1 + $0xe4] sm:$0xff]
  %v99 = vld [vmem:[%s1 + $0xec] sm:$0xf]
  %v100 = vld [vmem:[%s1 + $0xf0] sm:$0xff]
  %v101 = vld [vmem:[%s1 + $0xf8] sm:$0xf]
  %v102 = vld [vmem:[%s1 + $0xfc] sm:$0xff]
  %v103 = vld [vmem:[%s1 + $0x104] sm:$0xf]
  %v104 = vld [vmem:[%s1 + $0x108] sm:$0xff]
  %v105 = vld [vmem:[%s1 + $0x110] sm:$0xf]
  %v106 = vld [vmem:[%s1 + $0x114] sm:$0xff]
  %v107 = vld [vmem:[%s1 + $0x11c] sm:$0xf]
  %v108 = vld [vmem:[%s1 + $0x120] sm:$0xff]
  %v109 = vld [vmem:[%s1 + $0x128] sm:$0xf]
  %v110 = vld [vmem:[%s1 + $0x12c] sm:$0xff]
  %v111 = vld [vmem:[%s1 + $0x134] sm:$0xf]
  %v112 = vld [vmem:[%s1 + $0x138] sm:$0xff]
  %v113 = vld [vmem:[%s1 + $0x140] sm:$0xf]
  %v114 = vld [vmem:[%s1 + $0x144] sm:$0xff]
  %v115 = vld [vmem:[%s1 + $0x14c] sm:$0xf]
  %v116 = vld [vmem:[%s1 + $0x150] sm:$0xff]
  %v117 = vld [vmem:[%s1 + $0x158] sm:$0xf]
  %v118 = vld [vmem:[%s1 + $0x15c] sm:$0xff]
  %v119 = vld [vmem:[%s1 + $0x164] sm:$0xf]
  %v120 = vld [vmem:[%s1 + $0x168] sm:$0xff]
  %v121 = vld [vmem:[%s1 + $0x170] sm:$0xf]
  %v122 = vld [vmem:[%s1 + $0x174] sm:$0xff]
  %v123 = vld [vmem:[%s1 + $0x17c] sm:$0xf]
  %v124 = vld [vmem:[%s1 + $0x180] sm:$0xff]
  %v125 = vld [vmem:[%s1 + $0x188] sm:$0xf]
  %v126 = vld [vmem:[%s1 + $0x18c] sm:$0xff]
  %v127 = vld [vmem:[%s1 + $0x194] sm:$0xf]
  %v128 = vld [vmem:[%s1 + $0x198] sm:$0xff]
  %v129 = vld [vmem:[%s1 + $0x1a0] sm:$0xf]
  %v130 = vld [vmem:[%s1 + $0x1a4] sm:$0xff]
  %v131 = vld [vmem:[%s1 + $0x1ac] sm:$0xf]
  %v132 = vld [vmem:[%s1 + $0x1b0] sm:$0xff]
  %v133 = vld [vmem:[%s1 + $0x1b8] sm:$0xf]
  %v134 = vld [vmem:[%s1 + $0x1bc] sm:$0xff]
  %v135 = vld [vmem:[%s1 + $0x1c4] sm:$0xf]
  %v136 = vld [vmem:[%s1 + $0x1c8] sm:$0xff]
  %v137 = vld [vmem:[%s1 + $0x1d0] sm:$0xf]
  %v138 = vld [vmem:[%s1 + $0x1d4] sm:$0xff]
  %v139 = vld [vmem:[%s1 + $0x1dc] sm:$0xf]
  %v140 = vld [vmem:[%s1 + $0x1e0] sm:$0xff]
  %v141 = vld [vmem:[%s1 + $0x1e8] sm:$0xf]
  %v142 = vld [vmem:[%s1 + $0x1ec] sm:$0xff]
  %v143 = vld [vmem:[%s1 + $0x1f4] sm:$0xf]
  %v144 = vld [vmem:[%s1 + $0x1f8] sm:$0xff]
  %v145 = vld [vmem:[%s1 + $0x200] sm:$0xf]
  %v146 = vld [vmem:[%s1 + $0x204] sm:$0xff]
  %v147 = vld [vmem:[%s1 + $0x20c] sm:$0xf]
  %v148 = vld [vmem:[%s1 + $0x210] sm:$0xff]
  %v149 = vld [vmem:[%s1 + $0x218] sm:$0xf]
  %v150 = vld [vmem:[%s1 + $0x21c] sm:$0xff]
  %v151 = vld [vmem:[%s1 + $0x224] sm:$0xf]
  %v152 = vld [vmem:[%s1 + $0x228] sm:$0xff]
  %v153 = vld [vmem:[%s1 + $0x230] sm:$0xf]
  %v154 = vld [vmem:[%s1 + $0x234] sm:$0xff]
  %v155 = vld [vmem:[%s1 + $0x23c] sm:$0xf]
  %v156 = vld [vmem:[%s1 + $0x240] sm:$0xff]
  %v157 = vld [vmem:[%s1 + $0x248] sm:$0xf]
  %v158 = vld [vmem:[%s1 + $0x24c] sm:$0xff]
  %v159 = vld [vmem:[%s1 + $0x254] sm:$0xf]
  %v160 = vld [vmem:[%s1 + $0x258] sm:$0xff]
  %v161 = vld [vmem:[%s1 + $0x260] sm:$0xf]
  %v162 = vld [vmem:[%s1 + $0x264] sm:$0xff]
  %v163 = vld [vmem:[%s1 + $0x26c] sm:$0xf]
  %v164 = vld [vmem:[%s1 + $0x270] sm:$0xff]
  %v165 = vld [vmem:[%s1 + $0x278] sm:$0xf]
  %v166 = vld [vmem:[%s1 + $0x27c] sm:$0xff]
  %v167 = vld [vmem:[%s1 + $0x284] sm:$0xf]
  %v168 = vld [vmem:[%s1 + $0x288] sm:$0xff]
  %v169 = vld [vmem:[%s1 + $0x290] sm:$0xf]
  %v170 = vld [vmem:[%s1 + $0x294] sm:$0xff]
  %v171 = vld [vmem:[%s1 + $0x29c] sm:$0xf]
  %v172 = vld [vmem:[%s1 + $0x2a0] sm:$0xff]
  %v173 = vld [vmem:[%s1 + $0x2a8] sm:$0xf]
  %v174 = vld [vmem:[%s1 + $0x2ac] sm:$0xff]
  %v175 = vld [vmem:[%s1 + $0x2b4] sm:$0xf]
  %v176 = vld [vmem:[%s1 + $0x2b8] sm:$0xff]
  %v177 = vld [vmem:[%s1 + $0x2c0] sm:$0xf]
  %v178 = vld [vmem:[%s1 + $0x2c4] sm:$0xff]
  %v179 = vld [vmem:[%s1 + $0x2cc] sm:$0xf]
  %v180 = vld [vmem:[%s1 + $0x2d0] sm:$0xff]
  %v181 = vld [vmem:[%s1 + $0x2d8] sm:$0xf]
  %v182 = vld [vmem:[%s1 + $0x2dc] sm:$0xff]
  %v183 = vld [vmem:[%s1 + $0x2e4] sm:$0xf]
  %v184 = vld [vmem:[%s1 + $0x2e8] sm:$0xff]
  %v185 = vld [vmem:[%s1 + $0x2f0] sm:$0xf]
  %v186 = vld [vmem:[%s1 + $0x2f4] sm:$0xff]
  %v187 = vld [vmem:[%s1 + $0x2fc] sm:$0xf]
  %v188 = vld [vmem:[%s1 + $0x300] sm:$0xff]
  %v189 = vld [vmem:[%s1 + $0x308] sm:$0xf]
  %v190 = vld [vmem:[%s1 + $0x30c] sm:$0xff]
  %v191 = vld [vmem:[%s1 + $0x314] sm:$0xf]
  %v192 = vld [vmem:[%s1 + $0x318] sm:$0xff]
  %v193 = vld [vmem:[%s1 + $0x320] sm:$0xf]
  %v194 = vld [vmem:[%s1 + $0x324] sm:$0xff]
  %v195 = vld [vmem:[%s1 + $0x32c] sm:$0xf]
  %v196 = vld [vmem:[%s1 + $0x330] sm:$0xff]
  %v197 = vld [vmem:[%s1 + $0x338] sm:$0xf]
  %v198 = vld [vmem:[%s1 + $0x33c] sm:$0xff]
  %v199 = vld [vmem:[%s1 + $0x344] sm:$0xf]
  %v200 = vld [vmem:[%s1 + $0x348] sm:$0xff]
  %v201 = vld [vmem:[%s1 + $0x350] sm:$0xf]
  %v202 = vld [vmem:[%s1 + $0x354] sm:$0xff]
  %v203 = vld [vmem:[%s1 + $0x35c] sm:$0xf]
  %v204 = vld [vmem:[%s1 + $0x360] sm:$0xff]
  %v205 = vld [vmem:[%s1 + $0x368] sm:$0xf]
  %v206 = vld [vmem:[%s1 + $0x36c] sm:$0xff]
  %v207 = vld [vmem:[%s1 + $0x374] sm:$0xf]
  %v208 = vld [vmem:[%s1 + $0x378] sm:$0xff]
  %v209 = vld [vmem:[%s1 + $0x380] sm:$0xf]
  %v210 = vld [vmem:[%s1 + $0x384] sm:$0xff]
  %v211 = vld [vmem:[%s1 + $0x38c] sm:$0xf]
  %v212 = vld [vmem:[%s1 + $0x390] sm:$0xff]
  %v213 = vld [vmem:[%s1 + $0x398] sm:$0xf]
  %v214 = vld [vmem:[%s1 + $0x39c] sm:$0xff]
  %v215 = vld [vmem:[%s1 + $0x3a4] sm:$0xf]
  %v216 = vld [vmem:[%s1 + $0x3a8] sm:$0xff]
  %v217 = vld [vmem:[%s1 + $0x3b0] sm:$0xf]
  %v218 = vld [vmem:[%s1 + $0x3b4] sm:$0xff]
  %v219 = vld [vmem:[%s1 + $0x3bc] sm:$0xf]
  %v220 = vld [vmem:[%s1 + $0x3c0] sm:$0xff]
  %v221 = vld [vmem:[%s1 + $0x3c8] sm:$0xf]
  %v222 = vld [vmem:[%s1 + $0x3cc] sm:$0xff]
  %v223 = vld [vmem:[%s1 + $0x3d4] sm:$0xf]
  %v224 = vld [vmem:[%s1 + $0x3d8] sm:$0xff]
  %v225 = vld [vmem:[%s1 + $0x3e0] sm:$0xf]
  %v226 = vld [vmem:[%s1 + $0x3e4] sm:$0xff]
  %v227 = vld [vmem:[%s1 + $0x3ec] sm:$0xf]
  %v228 = vld [vmem:[%s1 + $0x3f0] sm:$0xff]
  %v229 = vld [vmem:[%s1 + $0x3f8] sm:$0xf]
  %v230 = vld [vmem:[%s1 + $0x3fc] sm:$0xff]
  %v231 = vld [vmem:[%s1 + $0x404] sm:$0xf]
  %v232 = vld [vmem:[%s1 + $0x408] sm:$0xff]
  %v233 = vld [vmem:[%s1 + $0x410] sm:$0xf]
  %v234 = vld [vmem:[%s1 + $0x414] sm:$0xff]
  %v235 = vld [vmem:[%s1 + $0x41c] sm:$0xf]
  %v236 = vld [vmem:[%s1 + $0x420] sm:$0xff]
  %v237 = vld [vmem:[%s1 + $0x428] sm:$0xf]
  %v238 = vld [vmem:[%s1 + $0x42c] sm:$0xff]
  %v239 = vld [vmem:[%s1 + $0x434] sm:$0xf]
  %v240 = vld [vmem:[%s1 + $0x438] sm:$0xff]
  %v241 = vld [vmem:[%s1 + $0x440] sm:$0xf]
  %v242 = vld [vmem:[%s1 + $0x444] sm:$0xff]
  %v243 = vld [vmem:[%s1 + $0x44c] sm:$0xf]
  %v244 = vld [vmem:[%s1 + $0x450] sm:$0xff]
  %v245 = vld [vmem:[%s1 + $0x458] sm:$0xf]
  %v246 = vld [vmem:[%s1 + $0x45c] sm:$0xff]
  %v247 = vld [vmem:[%s1 + $0x464] sm:$0xf]
  %v248 = vld [vmem:[%s1 + $0x468] sm:$0xff]
  %v249 = vld [vmem:[%s1 + $0x470] sm:$0xf]
  %v250 = vld [vmem:[%s1 + $0x474] sm:$0xff]
  %v251 = vld [vmem:[%s1 + $0x47c] sm:$0xf]
  %v252 = vld [vmem:[%s1 + $0x480] sm:$0xff]
  %v253 = vld [vmem:[%s1 + $0x488] sm:$0xf]
  %v254 = vld [vmem:[%s1 + $0x48c] sm:$0xff]
  %v255 = vld [vmem:[%s1 + $0x494] sm:$0xf]
  %v256 = vld [vmem:[%s1 + $0x498] sm:$0xff]
  %v257 = vld [vmem:[%s1 + $0x4a0] sm:$0xf]
  %v258 = vld [vmem:[%s1 + $0x4a4] sm:$0xff]
  %v259 = vld [vmem:[%s1 + $0x4ac] sm:$0xf]
  %v260 = vld [vmem:[%s1 + $0x4b0] sm:$0xff]
  %v261 = vld [vmem:[%s1 + $0x4b8] sm:$0xf]
  %v262 = vld [vmem:[%s1 + $0x4bc] sm:$0xff]
  %v263 = vld [vmem:[%s1 + $0x4c4] sm:$0xf]
  %v264 = vld [vmem:[%s1 + $0x4c8] sm:$0xff]
  %v265 = vld [vmem:[%s1 + $0x4d0] sm:$0xf]
  %v266 = vld [vmem:[%s1 + $0x4d4] sm:$0xff]
  %v267 = vld [vmem:[%s1 + $0x4dc] sm:$0xf]
  %v268 = vld [vmem:[%s1 + $0x4e0] sm:$0xff]
  %v269 = vld [vmem:[%s1 + $0x4e8] sm:$0xf]
  %v270 = vld [vmem:[%s1 + $0x4ec] sm:$0xff]
  %v271 = vld [vmem:[%s1 + $0x4f4] sm:$0xf]
  %v272 = vld [vmem:[%s1 + $0x4f8] sm:$0xff]
  %v273 = vld [vmem:[%s1 + $0x500] sm:$0xf]
  %v274 = vld [vmem:[%s1 + $0x504] sm:$0xff]
  %v275 = vld [vmem:[%s1 + $0x50c] sm:$0xf]
  %v276 = vld [vmem:[%s1 + $0x510] sm:$0xff]
  %v277 = vld [vmem:[%s1 + $0x518] sm:$0xf]
  %v278 = vld [vmem:[%s1 + $0x51c] sm:$0xff]
  %v279 = vld [vmem:[%s1 + $0x524] sm:$0xf]
  %v280 = vld [vmem:[%s1 + $0x528] sm:$0xff]
  %v281 = vld [vmem:[%s1 + $0x530] sm:$0xf]
  %v282 = vld [vmem:[%s1 + $0x534] sm:$0xff]
  %v283 = vld [vmem:[%s1 + $0x53c] sm:$0xf]
  %v284 = vld [vmem:[%s1 + $0x540] sm:$0xff]
  %v285 = vld [vmem:[%s1 + $0x548] sm:$0xf]
  %v286 = vld [vmem:[%s1 + $0x54c] sm:$0xff]
  %v287 = vld [vmem:[%s1 + $0x554] sm:$0xf]
  %v288 = vld [vmem:[%s1 + $0x558] sm:$0xff]
  %v289 = vld [vmem:[%s1 + $0x560] sm:$0xf]
  %v290 = vld [vmem:[%s1 + $0x564] sm:$0xff]
  %v291 = vld [vmem:[%s1 + $0x56c] sm:$0xf]
  %v292 = vld [vmem:[%s1 + $0x570] sm:$0xff]
  %v293 = vld [vmem:[%s1 + $0x578] sm:$0xf]
  %v294 = vld [vmem:[%s1 + $0x57c] sm:$0xff]
  %v295 = vld [vmem:[%s1 + $0x584] sm:$0xf]
  %v296 = vld [vmem:[%s1 + $0x588] sm:$0xff]
  %v297 = vld [vmem:[%s1 + $0x590] sm:$0xf]
  %v298 = vld [vmem:[%s1 + $0x594] sm:$0xff]
  %v299 = vld [vmem:[%s1 + $0x59c] sm:$0xf]
  %v300 = vld [vmem:[%s1 + $0x5a0] sm:$0xff]
  %v301 = vld [vmem:[%s1 + $0x5a8] sm:$0xf]
  %v302 = vld [vmem:[%s1 + $0x5ac] sm:$0xff]
  %v303 = vld [vmem:[%s1 + $0x5b4] sm:$0xf]
  %v304 = vld [vmem:[%s1 + $0x5b8] sm:$0xff]
  %v305 = vld [vmem:[%s1 + $0x5c0] sm:$0xf]
  %v306 = vld [vmem:[%s1 + $0x5c4] sm:$0xff]
  %v307 = vld [vmem:[%s1 + $0x5cc] sm:$0xf]
  %v308 = vld [vmem:[%s1 + $0x5d0] sm:$0xff]
  %v309 = vld [vmem:[%s1 + $0x5d8] sm:$0xf]
  %v310 = vld [vmem:[%s1 + $0x5dc] sm:$0xff]
  %v311 = vld [vmem:[%s1 + $0x5e4] sm:$0xf]
  %v312 = vld [vmem:[%s1 + $0x5e8] sm:$0xff]
  %v313 = vld [vmem:[%s1 + $0x5f0] sm:$0xf]
  %v314 = vld [vmem:[%s1 + $0x5f4] sm:$0xff]
  %v315 = vld [vmem:[%s1 + $0x5fc] sm:$0xf]
  %v316 = vld [vmem:[%s1 + $0x600] sm:$0xff]
  %v317 = vld [vmem:[%s1 + $0x608] sm:$0xf]
  %v318 = vld [vmem:[%s1 + $0x60c] sm:$0xff]
  %v319 = vld [vmem:[%s1 + $0x614] sm:$0xf]
  %v320 = vld [vmem:[%s1 + $0x618] sm:$0xff]
  %v321 = vld [vmem:[%s1 + $0x620] sm:$0xf]
  %v322 = vld [vmem:[%s1 + $0x624] sm:$0xff]
  %v323 = vld [vmem:[%s1 + $0x62c] sm:$0xf]
  %v324 = vld [vmem:[%s1 + $0x630] sm:$0xff]
  %v325 = vld [vmem:[%s1 + $0x638] sm:$0xf]
  %v326 = vld [vmem:[%s1 + $0x63c] sm:$0xff]
  %v327 = vld [vmem:[%s1 + $0x644] sm:$0xf]
  %v328 = vld [vmem:[%s1 + $0x648] sm:$0xff]
  %v329 = vld [vmem:[%s1 + $0x650] sm:$0xf]
  %v330 = vld [vmem:[%s1 + $0x654] sm:$0xff]
  %v331 = vld [vmem:[%s1 + $0x65c] sm:$0xf]
  %v332 = vld [vmem:[%s1 + $0x660] sm:$0xff]
  %v333 = vld [vmem:[%s1 + $0x668] sm:$0xf]
  %v334 = vld [vmem:[%s1 + $0x66c] sm:$0xff]
  %v335 = vld [vmem:[%s1 + $0x674] sm:$0xf]
  %v336 = vld [vmem:[%s1 + $0x678] sm:$0xff]
  %v337 = vld [vmem:[%s1 + $0x680] sm:$0xf]
  %v338 = vld [vmem:[%s1 + $0x684] sm:$0xff]
  %v339 = vld [vmem:[%s1 + $0x68c] sm:$0xf]
  %v340 = vld [vmem:[%s1 + $0x690] sm:$0xff]
  %v341 = vld [vmem:[%s1 + $0x698] sm:$0xf]
  %v342 = vld [vmem:[%s1 + $0x69c] sm:$0xff]
  %v343 = vld [vmem:[%s1 + $0x6a4] sm:$0xf]
  %v344 = vld [vmem:[%s1 + $0x6a8] sm:$0xff]
  %v345 = vld [vmem:[%s1 + $0x6b0] sm:$0xf]
  %v346 = vld [vmem:[%s1 + $0x6b4] sm:$0xff]
  %v347 = vld [vmem:[%s1 + $0x6bc] sm:$0xf]
  %v348 = vld [vmem:[%s2] sm:$0x7]
  %v350 = vlaneseq
  %v351 = vshrl.u32 %v350, 7
  %v352 = vsub.s32 0, %v351
  %v353 = vrot.slane %v348, %v352
  %v354 = vlaneseq
  %v355 = vshrl.u32 %v354, 7
  %v356 = vsub.s32 1, %v355
  %v357 = vrot.slane %v348, %v356
  %v358 = vlaneseq
  %v359 = vshrl.u32 %v358, 7
  %v360 = vsub.s32 2, %v359
  %v361 = vrot.slane %v348, %v360
  %v410 = vunpack.c.l.b16 %v15
  %v411 = vunpack.c.h.b16 %v15
  %v412 = vunpack.c.l.b16 %v16
  %v413 = vunpack.c.h.b16 %v16
  %v414 = vunpack.c.l.b16 %v17
  %v415 = vunpack.c.h.b16 %v17
  %v416 = vunpack.c.l.b16 %v18
  %v417 = vunpack.c.h.b16 %v18
  %v418 = vunpack.c.l.b16 %v19
  %v419 = vunpack.c.l.b16 %v20
  %v420 = vunpack.c.h.b16 %v20
  %v421 = vunpack.c.l.b16 %v21
  %v422 = vunpack.c.h.b16 %v21
  %v423 = vunpack.c.l.b16 %v22
  %v424 = vunpack.c.h.b16 %v22
  %v425 = vunpack.c.l.b16 %v23
  %v426 = vunpack.c.h.b16 %v23
  %v427 = vunpack.c.l.b16 %v24
  %v428 = vunpack.c.l.b16 %v25
  %v429 = vunpack.c.h.b16 %v25
  %v430 = vunpack.c.l.b16 %v26
  %v431 = vunpack.c.h.b16 %v26
  %v432 = vunpack.c.l.b16 %v27
  %v433 = vunpack.c.h.b16 %v27
  %v434 = vunpack.c.l.b16 %v28
  %v435 = vunpack.c.h.b16 %v28
  %v436 = vunpack.c.l.b16 %v29
  %v437 = vunpack.c.l.b16 %v30
  %v438 = vunpack.c.h.b16 %v30
  %v439 = vunpack.c.l.b16 %v31
  %v440 = vunpack.c.h.b16 %v31
  %v441 = vunpack.c.l.b16 %v32
  %v442 = vunpack.c.h.b16 %v32
  %v443 = vunpack.c.l.b16 %v33
  %v444 = vunpack.c.h.b16 %v33
  %v445 = vunpack.c.l.b16 %v34
  %v446 = vunpack.c.l.b16 %v35
  %v447 = vunpack.c.h.b16 %v35
  %v448 = vunpack.c.l.b16 %v36
  %v449 = vunpack.c.h.b16 %v36
  %v450 = vunpack.c.l.b16 %v37
  %v451 = vunpack.c.h.b16 %v37
  %v452 = vunpack.c.l.b16 %v38
  %v453 = vunpack.c.h.b16 %v38
  %v454 = vunpack.c.l.b16 %v39
  %v455 = vunpack.c.l.b16 %v40
  %v456 = vunpack.c.h.b16 %v40
  %v457 = vunpack.c.l.b16 %v41
  %v458 = vunpack.c.h.b16 %v41
  %v459 = vunpack.c.l.b16 %v42
  %v460 = vunpack.c.h.b16 %v42
  %v461 = vunpack.c.l.b16 %v43
  %v462 = vunpack.c.h.b16 %v43
  %v463 = vunpack.c.l.b16 %v44
  %v464 = vunpack.c.l.b16 %v45
  %v465 = vunpack.c.h.b16 %v45
  %v466 = vunpack.c.l.b16 %v46
  %v467 = vunpack.c.h.b16 %v46
  %v468 = vunpack.c.l.b16 %v47
  %v469 = vunpack.c.h.b16 %v47
  %v470 = vunpack.c.l.b16 %v48
  %v471 = vunpack.c.h.b16 %v48
  %v472 = vunpack.c.l.b16 %v49
  %v473 = vunpack.c.l.b16 %v50
  %v474 = vunpack.c.h.b16 %v50
  %v475 = vunpack.c.l.b16 %v51
  %v476 = vunpack.c.h.b16 %v51
  %v477 = vunpack.c.l.b16 %v52
  %v478 = vunpack.c.h.b16 %v52
  %v479 = vunpack.c.l.b16 %v53
  %v480 = vunpack.c.h.b16 %v53
  %v481 = vunpack.c.l.b16 %v54
  %v482 = vunpack.c.l.b16 %v55
  %v483 = vunpack.c.h.b16 %v55
  %v484 = vunpack.c.l.b16 %v56
  %v485 = vunpack.c.h.b16 %v56
  %v486 = vunpack.c.l.b16 %v57
  %v487 = vunpack.c.h.b16 %v57
  %v488 = vunpack.c.l.b16 %v58
  %v489 = vunpack.c.h.b16 %v58
  %v490 = vunpack.c.l.b16 %v59
  %v491 = vpack.c.b16 %v419, %v410
  %v492 = vpack.c.b16 %v420, %v411
  %v493 = vpack.c.b16 %v421, %v412
  %v494 = vpack.c.b16 %v422, %v413
  %v495 = vpack.c.b16 %v423, %v414
  %v496 = vpack.c.b16 %v424, %v415
  %v497 = vpack.c.b16 %v425, %v416
  %v498 = vpack.c.b16 %v426, %v417
  %v499 = vpack.c.b16 %v427, %v418
  %v500 = vpack.c.b16 %v437, %v428
  %v501 = vpack.c.b16 %v438, %v429
  %v502 = vpack.c.b16 %v439, %v430
  %v503 = vpack.c.b16 %v440, %v431
  %v504 = vpack.c.b16 %v441, %v432
  %v505 = vpack.c.b16 %v442, %v433
  %v506 = vpack.c.b16 %v443, %v434
  %v507 = vpack.c.b16 %v444, %v435
  %v508 = vpack.c.b16 %v445, %v436
  %v509 = vpack.c.b16 %v455, %v446
  %v510 = vpack.c.b16 %v456, %v447
  %v511 = vpack.c.b16 %v457, %v448
  %v512 = vpack.c.b16 %v458, %v449
  %v513 = vpack.c.b16 %v459, %v450
  %v514 = vpack.c.b16 %v460, %v451
  %v515 = vpack.c.b16 %v461, %v452
  %v516 = vpack.c.b16 %v462, %v453
  %v517 = vpack.c.b16 %v463, %v454
  %v518 = vpack.c.b16 %v473, %v464
  %v519 = vpack.c.b16 %v474, %v465
  %v520 = vpack.c.b16 %v475, %v466
  %v521 = vpack.c.b16 %v476, %v467
  %v522 = vpack.c.b16 %v477, %v468
  %v523 = vpack.c.b16 %v478, %v469
  %v524 = vpack.c.b16 %v479, %v470
  %v525 = vpack.c.b16 %v480, %v471
  %v526 = vpack.c.b16 %v481, %v472
  %v527 = vpack.c.b16 %v482, %v482
  %v528 = vpack.c.b16 %v483, %v483
  %v529 = vpack.c.b16 %v484, %v484
  %v530 = vpack.c.b16 %v485, %v485
  %v531 = vpack.c.b16 %v486, %v486
  %v532 = vpack.c.b16 %v487, %v487
  %v533 = vpack.c.b16 %v488, %v488
  %v534 = vpack.c.b16 %v489, %v489
  %v535 = vpack.c.b16 %v490, %v490
  %v869 = vunpack.c.l.b16 %v60
  %v870 = vunpack.c.h.b16 %v60
  %v871 = vunpack.c.l.b16 %v61
  %v872 = vunpack.c.l.b16 %v62
  %v873 = vunpack.c.h.b16 %v62
  %v874 = vunpack.c.l.b16 %v63
  %v875 = vunpack.c.l.b16 %v64
  %v876 = vunpack.c.h.b16 %v64
  %v877 = vunpack.c.l.b16 %v65
  %v878 = vunpack.c.l.b16 %v66
  %v879 = vunpack.c.h.b16 %v66
  %v880 = vunpack.c.l.b16 %v67
  %v881 = vunpack.c.l.b16 %v68
  %v882 = vunpack.c.h.b16 %v68
  %v883 = vunpack.c.l.b16 %v69
  %v884 = vunpack.c.l.b16 %v70
  %v885 = vunpack.c.h.b16 %v70
  %v886 = vunpack.c.l.b16 %v71
  %v887 = vunpack.c.l.b16 %v72
  %v888 = vunpack.c.h.b16 %v72
  %v889 = vunpack.c.l.b16 %v73
  %v890 = vunpack.c.l.b16 %v74
  %v891 = vunpack.c.h.b16 %v74
  %v892 = vunpack.c.l.b16 %v75
  %v893 = vunpack.c.l.b16 %v76
  %v894 = vunpack.c.h.b16 %v76
  %v895 = vunpack.c.l.b16 %v77
  %v896 = vunpack.c.l.b16 %v78
  %v897 = vunpack.c.h.b16 %v78
  %v898 = vunpack.c.l.b16 %v79
  %v899 = vunpack.c.l.b16 %v80
  %v900 = vunpack.c.h.b16 %v80
  %v901 = vunpack.c.l.b16 %v81
  %v902 = vunpack.c.l.b16 %v82
  %v903 = vunpack.c.h.b16 %v82
  %v904 = vunpack.c.l.b16 %v83
  %v905 = vunpack.c.l.b16 %v84
  %v906 = vunpack.c.h.b16 %v84
  %v907 = vunpack.c.l.b16 %v85
  %v908 = vunpack.c.l.b16 %v86
  %v909 = vunpack.c.h.b16 %v86
  %v910 = vunpack.c.l.b16 %v87
  %v911 = vunpack.c.l.b16 %v88
  %v912 = vunpack.c.h.b16 %v88
  %v913 = vunpack.c.l.b16 %v89
  %v914 = vunpack.c.l.b16 %v90
  %v915 = vunpack.c.h.b16 %v90
  %v916 = vunpack.c.l.b16 %v91
  %v917 = vunpack.c.l.b16 %v92
  %v918 = vunpack.c.h.b16 %v92
  %v919 = vunpack.c.l.b16 %v93
  %v920 = vunpack.c.l.b16 %v94
  %v921 = vunpack.c.h.b16 %v94
  %v922 = vunpack.c.l.b16 %v95
  %v923 = vunpack.c.l.b16 %v96
  %v924 = vunpack.c.h.b16 %v96
  %v925 = vunpack.c.l.b16 %v97
  %v926 = vunpack.c.l.b16 %v98
  %v927 = vunpack.c.h.b16 %v98
  %v928 = vunpack.c.l.b16 %v99
  %v929 = vunpack.c.l.b16 %v100
  %v930 = vunpack.c.h.b16 %v100
  %v931 = vunpack.c.l.b16 %v101
  %v932 = vunpack.c.l.b16 %v102
  %v933 = vunpack.c.h.b16 %v102
  %v934 = vunpack.c.l.b16 %v103
  %v935 = vunpack.c.l.b16 %v104
  %v936 = vunpack.c.h.b16 %v104
  %v937 = vunpack.c.l.b16 %v105
  %v938 = vunpack.c.l.b16 %v106
  %v939 = vunpack.c.h.b16 %v106
  %v940 = vunpack.c.l.b16 %v107
  %v941 = vunpack.c.l.b16 %v108
  %v942 = vunpack.c.h.b16 %v108
  %v943 = vunpack.c.l.b16 %v109
  %v944 = vunpack.c.l.b16 %v110
  %v945 = vunpack.c.h.b16 %v110
  %v946 = vunpack.c.l.b16 %v111
  %v947 = vunpack.c.l.b16 %v112
  %v948 = vunpack.c.h.b16 %v112
  %v949 = vunpack.c.l.b16 %v113
  %v950 = vunpack.c.l.b16 %v114
  %v951 = vunpack.c.h.b16 %v114
  %v952 = vunpack.c.l.b16 %v115
  %v953 = vunpack.c.l.b16 %v116
  %v954 = vunpack.c.h.b16 %v116
  %v955 = vunpack.c.l.b16 %v117
  %v956 = vunpack.c.l.b16 %v118
  %v957 = vunpack.c.h.b16 %v118
  %v958 = vunpack.c.l.b16 %v119
  %v959 = vunpack.c.l.b16 %v120
  %v960 = vunpack.c.h.b16 %v120
  %v961 = vunpack.c.l.b16 %v121
  %v962 = vunpack.c.l.b16 %v122
  %v963 = vunpack.c.h.b16 %v122
  %v964 = vunpack.c.l.b16 %v123
  %v965 = vunpack.c.l.b16 %v124
  %v966 = vunpack.c.h.b16 %v124
  %v967 = vunpack.c.l.b16 %v125
  %v968 = vunpack.c.l.b16 %v126
  %v969 = vunpack.c.h.b16 %v126
  %v970 = vunpack.c.l.b16 %v127
  %v971 = vunpack.c.l.b16 %v128
  %v972 = vunpack.c.h.b16 %v128
  %v973 = vunpack.c.l.b16 %v129
  %v974 = vunpack.c.l.b16 %v130
  %v975 = vunpack.c.h.b16 %v130
  %v976 = vunpack.c.l.b16 %v131
  %v977 = vunpack.c.l.b16 %v132
  %v978 = vunpack.c.h.b16 %v132
  %v979 = vunpack.c.l.b16 %v133
  %v980 = vunpack.c.l.b16 %v134
  %v981 = vunpack.c.h.b16 %v134
  %v982 = vunpack.c.l.b16 %v135
  %v983 = vunpack.c.l.b16 %v136
  %v984 = vunpack.c.h.b16 %v136
  %v985 = vunpack.c.l.b16 %v137
  %v986 = vunpack.c.l.b16 %v138
  %v987 = vunpack.c.h.b16 %v138
  %v988 = vunpack.c.l.b16 %v139
  %v989 = vunpack.c.l.b16 %v140
  %v990 = vunpack.c.h.b16 %v140
  %v991 = vunpack.c.l.b16 %v141
  %v992 = vunpack.c.l.b16 %v142
  %v993 = vunpack.c.h.b16 %v142
  %v994 = vunpack.c.l.b16 %v143
  %v995 = vunpack.c.l.b16 %v144
  %v996 = vunpack.c.h.b16 %v144
  %v997 = vunpack.c.l.b16 %v145
  %v998 = vunpack.c.l.b16 %v146
  %v999 = vunpack.c.h.b16 %v146
  %v1000 = vunpack.c.l.b16 %v147
  %v1001 = vunpack.c.l.b16 %v148
  %v1002 = vunpack.c.h.b16 %v148
  %v1003 = vunpack.c.l.b16 %v149
  %v1004 = vunpack.c.l.b16 %v150
  %v1005 = vunpack.c.h.b16 %v150
  %v1006 = vunpack.c.l.b16 %v151
  %v1007 = vunpack.c.l.b16 %v152
  %v1008 = vunpack.c.h.b16 %v152
  %v1009 = vunpack.c.l.b16 %v153
  %v1010 = vunpack.c.l.b16 %v154
  %v1011 = vunpack.c.h.b16 %v154
  %v1012 = vunpack.c.l.b16 %v155
  %v1013 = vunpack.c.l.b16 %v156
  %v1014 = vunpack.c.h.b16 %v156
  %v1015 = vunpack.c.l.b16 %v157
  %v1016 = vunpack.c.l.b16 %v158
  %v1017 = vunpack.c.h.b16 %v158
  %v1018 = vunpack.c.l.b16 %v159
  %v1019 = vunpack.c.l.b16 %v160
  %v1020 = vunpack.c.h.b16 %v160
  %v1021 = vunpack.c.l.b16 %v161
  %v1022 = vunpack.c.l.b16 %v162
  %v1023 = vunpack.c.h.b16 %v162
  %v1024 = vunpack.c.l.b16 %v163
  %v1025 = vunpack.c.l.b16 %v164
  %v1026 = vunpack.c.h.b16 %v164
  %v1027 = vunpack.c.l.b16 %v165
  %v1028 = vunpack.c.l.b16 %v166
  %v1029 = vunpack.c.h.b16 %v166
  %v1030 = vunpack.c.l.b16 %v167
  %v1031 = vunpack.c.l.b16 %v168
  %v1032 = vunpack.c.h.b16 %v168
  %v1033 = vunpack.c.l.b16 %v169
  %v1034 = vunpack.c.l.b16 %v170
  %v1035 = vunpack.c.h.b16 %v170
  %v1036 = vunpack.c.l.b16 %v171
  %v1037 = vunpack.c.l.b16 %v172
  %v1038 = vunpack.c.h.b16 %v172
  %v1039 = vunpack.c.l.b16 %v173
  %v1040 = vunpack.c.l.b16 %v174
  %v1041 = vunpack.c.h.b16 %v174
  %v1042 = vunpack.c.l.b16 %v175
  %v1043 = vunpack.c.l.b16 %v176
  %v1044 = vunpack.c.h.b16 %v176
  %v1045 = vunpack.c.l.b16 %v177
  %v1046 = vunpack.c.l.b16 %v178
  %v1047 = vunpack.c.h.b16 %v178
  %v1048 = vunpack.c.l.b16 %v179
  %v1049 = vunpack.c.l.b16 %v180
  %v1050 = vunpack.c.h.b16 %v180
  %v1051 = vunpack.c.l.b16 %v181
  %v1052 = vunpack.c.l.b16 %v182
  %v1053 = vunpack.c.h.b16 %v182
  %v1054 = vunpack.c.l.b16 %v183
  %v1055 = vunpack.c.l.b16 %v184
  %v1056 = vunpack.c.h.b16 %v184
  %v1057 = vunpack.c.l.b16 %v185
  %v1058 = vunpack.c.l.b16 %v186
  %v1059 = vunpack.c.h.b16 %v186
  %v1060 = vunpack.c.l.b16 %v187
  %v1061 = vunpack.c.l.b16 %v188
  %v1062 = vunpack.c.h.b16 %v188
  %v1063 = vunpack.c.l.b16 %v189
  %v1064 = vunpack.c.l.b16 %v190
  %v1065 = vunpack.c.h.b16 %v190
  %v1066 = vunpack.c.l.b16 %v191
  %v1067 = vunpack.c.l.b16 %v192
  %v1068 = vunpack.c.h.b16 %v192
  %v1069 = vunpack.c.l.b16 %v193
  %v1070 = vunpack.c.l.b16 %v194
  %v1071 = vunpack.c.h.b16 %v194
  %v1072 = vunpack.c.l.b16 %v195
  %v1073 = vunpack.c.l.b16 %v196
  %v1074 = vunpack.c.h.b16 %v196
  %v1075 = vunpack.c.l.b16 %v197
  %v1076 = vunpack.c.l.b16 %v198
  %v1077 = vunpack.c.h.b16 %v198
  %v1078 = vunpack.c.l.b16 %v199
  %v1079 = vunpack.c.l.b16 %v200
  %v1080 = vunpack.c.h.b16 %v200
  %v1081 = vunpack.c.l.b16 %v201
  %v1082 = vunpack.c.l.b16 %v202
  %v1083 = vunpack.c.h.b16 %v202
  %v1084 = vunpack.c.l.b16 %v203
  %v1085 = vunpack.c.l.b16 %v204
  %v1086 = vunpack.c.h.b16 %v204
  %v1087 = vunpack.c.l.b16 %v205
  %v1088 = vunpack.c.l.b16 %v206
  %v1089 = vunpack.c.h.b16 %v206
  %v1090 = vunpack.c.l.b16 %v207
  %v1091 = vunpack.c.l.b16 %v208
  %v1092 = vunpack.c.h.b16 %v208
  %v1093 = vunpack.c.l.b16 %v209
  %v1094 = vunpack.c.l.b16 %v210
  %v1095 = vunpack.c.h.b16 %v210
  %v1096 = vunpack.c.l.b16 %v211
  %v1097 = vunpack.c.l.b16 %v212
  %v1098 = vunpack.c.h.b16 %v212
  %v1099 = vunpack.c.l.b16 %v213
  %v1100 = vunpack.c.l.b16 %v214
  %v1101 = vunpack.c.h.b16 %v214
  %v1102 = vunpack.c.l.b16 %v215
  %v1103 = vunpack.c.l.b16 %v216
  %v1104 = vunpack.c.h.b16 %v216
  %v1105 = vunpack.c.l.b16 %v217
  %v1106 = vunpack.c.l.b16 %v218
  %v1107 = vunpack.c.h.b16 %v218
  %v1108 = vunpack.c.l.b16 %v219
  %v1109 = vunpack.c.l.b16 %v220
  %v1110 = vunpack.c.h.b16 %v220
  %v1111 = vunpack.c.l.b16 %v221
  %v1112 = vunpack.c.l.b16 %v222
  %v1113 = vunpack.c.h.b16 %v222
  %v1114 = vunpack.c.l.b16 %v223
  %v1115 = vunpack.c.l.b16 %v224
  %v1116 = vunpack.c.h.b16 %v224
  %v1117 = vunpack.c.l.b16 %v225
  %v1118 = vunpack.c.l.b16 %v226
  %v1119 = vunpack.c.h.b16 %v226
  %v1120 = vunpack.c.l.b16 %v227
  %v1121 = vunpack.c.l.b16 %v228
  %v1122 = vunpack.c.h.b16 %v228
  %v1123 = vunpack.c.l.b16 %v229
  %v1124 = vunpack.c.l.b16 %v230
  %v1125 = vunpack.c.h.b16 %v230
  %v1126 = vunpack.c.l.b16 %v231
  %v1127 = vunpack.c.l.b16 %v232
  %v1128 = vunpack.c.h.b16 %v232
  %v1129 = vunpack.c.l.b16 %v233
  %v1130 = vunpack.c.l.b16 %v234
  %v1131 = vunpack.c.h.b16 %v234
  %v1132 = vunpack.c.l.b16 %v235
  %v1133 = vunpack.c.l.b16 %v236
  %v1134 = vunpack.c.h.b16 %v236
  %v1135 = vunpack.c.l.b16 %v237
  %v1136 = vunpack.c.l.b16 %v238
  %v1137 = vunpack.c.h.b16 %v238
  %v1138 = vunpack.c.l.b16 %v239
  %v1139 = vunpack.c.l.b16 %v240
  %v1140 = vunpack.c.h.b16 %v240
  %v1141 = vunpack.c.l.b16 %v241
  %v1142 = vunpack.c.l.b16 %v242
  %v1143 = vunpack.c.h.b16 %v242
  %v1144 = vunpack.c.l.b16 %v243
  %v1145 = vunpack.c.l.b16 %v244
  %v1146 = vunpack.c.h.b16 %v244
  %v1147 = vunpack.c.l.b16 %v245
  %v1148 = vunpack.c.l.b16 %v246
  %v1149 = vunpack.c.h.b16 %v246
  %v1150 = vunpack.c.l.b16 %v247
  %v1151 = vunpack.c.l.b16 %v248
  %v1152 = vunpack.c.h.b16 %v248
  %v1153 = vunpack.c.l.b16 %v249
  %v1154 = vunpack.c.l.b16 %v250
  %v1155 = vunpack.c.h.b16 %v250
  %v1156 = vunpack.c.l.b16 %v251
  %v1157 = vunpack.c.l.b16 %v252
  %v1158 = vunpack.c.h.b16 %v252
  %v1159 = vunpack.c.l.b16 %v253
  %v1160 = vunpack.c.l.b16 %v254
  %v1161 = vunpack.c.h.b16 %v254
  %v1162 = vunpack.c.l.b16 %v255
  %v1163 = vunpack.c.l.b16 %v256
  %v1164 = vunpack.c.h.b16 %v256
  %v1165 = vunpack.c.l.b16 %v257
  %v1166 = vunpack.c.l.b16 %v258
  %v1167 = vunpack.c.h.b16 %v258
  %v1168 = vunpack.c.l.b16 %v259
  %v1169 = vunpack.c.l.b16 %v260
  %v1170 = vunpack.c.h.b16 %v260
  %v1171 = vunpack.c.l.b16 %v261
  %v1172 = vunpack.c.l.b16 %v262
  %v1173 = vunpack.c.h.b16 %v262
  %v1174 = vunpack.c.l.b16 %v263
  %v1175 = vunpack.c.l.b16 %v264
  %v1176 = vunpack.c.h.b16 %v264
  %v1177 = vunpack.c.l.b16 %v265
  %v1178 = vunpack.c.l.b16 %v266
  %v1179 = vunpack.c.h.b16 %v266
  %v1180 = vunpack.c.l.b16 %v267
  %v1181 = vunpack.c.l.b16 %v268
  %v1182 = vunpack.c.h.b16 %v268
  %v1183 = vunpack.c.l.b16 %v269
  %v1184 = vunpack.c.l.b16 %v270
  %v1185 = vunpack.c.h.b16 %v270
  %v1186 = vunpack.c.l.b16 %v271
  %v1187 = vunpack.c.l.b16 %v272
  %v1188 = vunpack.c.h.b16 %v272
  %v1189 = vunpack.c.l.b16 %v273
  %v1190 = vunpack.c.l.b16 %v274
  %v1191 = vunpack.c.h.b16 %v274
  %v1192 = vunpack.c.l.b16 %v275
  %v1193 = vunpack.c.l.b16 %v276
  %v1194 = vunpack.c.h.b16 %v276
  %v1195 = vunpack.c.l.b16 %v277
  %v1196 = vunpack.c.l.b16 %v278
  %v1197 = vunpack.c.h.b16 %v278
  %v1198 = vunpack.c.l.b16 %v279
  %v1199 = vunpack.c.l.b16 %v280
  %v1200 = vunpack.c.h.b16 %v280
  %v1201 = vunpack.c.l.b16 %v281
  %v1202 = vunpack.c.l.b16 %v282
  %v1203 = vunpack.c.h.b16 %v282
  %v1204 = vunpack.c.l.b16 %v283
  %v1205 = vunpack.c.l.b16 %v284
  %v1206 = vunpack.c.h.b16 %v284
  %v1207 = vunpack.c.l.b16 %v285
  %v1208 = vunpack.c.l.b16 %v286
  %v1209 = vunpack.c.h.b16 %v286
  %v1210 = vunpack.c.l.b16 %v287
  %v1211 = vunpack.c.l.b16 %v288
  %v1212 = vunpack.c.h.b16 %v288
  %v1213 = vunpack.c.l.b16 %v289
  %v1214 = vunpack.c.l.b16 %v290
  %v1215 = vunpack.c.h.b16 %v290
  %v1216 = vunpack.c.l.b16 %v291
  %v1217 = vunpack.c.l.b16 %v292
  %v1218 = vunpack.c.h.b16 %v292
  %v1219 = vunpack.c.l.b16 %v293
  %v1220 = vunpack.c.l.b16 %v294
  %v1221 = vunpack.c.h.b16 %v294
  %v1222 = vunpack.c.l.b16 %v295
  %v1223 = vunpack.c.l.b16 %v296
  %v1224 = vunpack.c.h.b16 %v296
  %v1225 = vunpack.c.l.b16 %v297
  %v1226 = vunpack.c.l.b16 %v298
  %v1227 = vunpack.c.h.b16 %v298
  %v1228 = vunpack.c.l.b16 %v299
  %v1229 = vunpack.c.l.b16 %v300
  %v1230 = vunpack.c.h.b16 %v300
  %v1231 = vunpack.c.l.b16 %v301
  %v1232 = vunpack.c.l.b16 %v302
  %v1233 = vunpack.c.h.b16 %v302
  %v1234 = vunpack.c.l.b16 %v303
  %v1235 = vunpack.c.l.b16 %v304
  %v1236 = vunpack.c.h.b16 %v304
  %v1237 = vunpack.c.l.b16 %v305
  %v1238 = vunpack.c.l.b16 %v306
  %v1239 = vunpack.c.h.b16 %v306
  %v1240 = vunpack.c.l.b16 %v307
  %v1241 = vunpack.c.l.b16 %v308
  %v1242 = vunpack.c.h.b16 %v308
  %v1243 = vunpack.c.l.b16 %v309
  %v1244 = vunpack.c.l.b16 %v310
  %v1245 = vunpack.c.h.b16 %v310
  %v1246 = vunpack.c.l.b16 %v311
  %v1247 = vunpack.c.l.b16 %v312
  %v1248 = vunpack.c.h.b16 %v312
  %v1249 = vunpack.c.l.b16 %v313
  %v1250 = vunpack.c.l.b16 %v314
  %v1251 = vunpack.c.h.b16 %v314
  %v1252 = vunpack.c.l.b16 %v315
  %v1253 = vunpack.c.l.b16 %v316
  %v1254 = vunpack.c.h.b16 %v316
  %v1255 = vunpack.c.l.b16 %v317
  %v1256 = vunpack.c.l.b16 %v318
  %v1257 = vunpack.c.h.b16 %v318
  %v1258 = vunpack.c.l.b16 %v319
  %v1259 = vunpack.c.l.b16 %v320
  %v1260 = vunpack.c.h.b16 %v320
  %v1261 = vunpack.c.l.b16 %v321
  %v1262 = vunpack.c.l.b16 %v322
  %v1263 = vunpack.c.h.b16 %v322
  %v1264 = vunpack.c.l.b16 %v323
  %v1265 = vunpack.c.l.b16 %v324
  %v1266 = vunpack.c.h.b16 %v324
  %v1267 = vunpack.c.l.b16 %v325
  %v1268 = vunpack.c.l.b16 %v326
  %v1269 = vunpack.c.h.b16 %v326
  %v1270 = vunpack.c.l.b16 %v327
  %v1271 = vunpack.c.l.b16 %v328
  %v1272 = vunpack.c.h.b16 %v328
  %v1273 = vunpack.c.l.b16 %v329
  %v1274 = vunpack.c.l.b16 %v330
  %v1275 = vunpack.c.h.b16 %v330
  %v1276 = vunpack.c.l.b16 %v331
  %v1277 = vunpack.c.l.b16 %v332
  %v1278 = vunpack.c.h.b16 %v332
  %v1279 = vunpack.c.l.b16 %v333
  %v1280 = vunpack.c.l.b16 %v334
  %v1281 = vunpack.c.h.b16 %v334
  %v1282 = vunpack.c.l.b16 %v335
  %v1283 = vunpack.c.l.b16 %v336
  %v1284 = vunpack.c.h.b16 %v336
  %v1285 = vunpack.c.l.b16 %v337
  %v1286 = vunpack.c.l.b16 %v338
  %v1287 = vunpack.c.h.b16 %v338
  %v1288 = vunpack.c.l.b16 %v339
  %v1289 = vunpack.c.l.b16 %v340
  %v1290 = vunpack.c.h.b16 %v340
  %v1291 = vunpack.c.l.b16 %v341
  %v1292 = vunpack.c.l.b16 %v342
  %v1293 = vunpack.c.h.b16 %v342
  %v1294 = vunpack.c.l.b16 %v343
  %v1295 = vunpack.c.l.b16 %v344
  %v1296 = vunpack.c.h.b16 %v344
  %v1297 = vunpack.c.l.b16 %v345
  %v1298 = vunpack.c.l.b16 %v346
  %v1299 = vunpack.c.h.b16 %v346
  %v1300 = vunpack.c.l.b16 %v347
  %v1301 = vpack.c.b16 %v872, %v869
  %v1302 = vpack.c.b16 %v873, %v870
  %v1303 = vpack.c.b16 %v874, %v871
  %v1304 = vpack.c.b16 %v878, %v875
  %v1305 = vpack.c.b16 %v879, %v876
  %v1306 = vpack.c.b16 %v880, %v877
  %v1307 = vpack.c.b16 %v884, %v881
  %v1308 = vpack.c.b16 %v885, %v882
  %v1309 = vpack.c.b16 %v886, %v883
  %v1310 = vpack.c.b16 %v890, %v887
  %v1311 = vpack.c.b16 %v891, %v888
  %v1312 = vpack.c.b16 %v892, %v889
  %v1313 = vpack.c.b16 %v896, %v893
  %v1314 = vpack.c.b16 %v897, %v894
  %v1315 = vpack.c.b16 %v898, %v895
  %v1316 = vpack.c.b16 %v902, %v899
  %v1317 = vpack.c.b16 %v903, %v900
  %v1318 = vpack.c.b16 %v904, %v901
  %v1319 = vpack.c.b16 %v908, %v905
  %v1320 = vpack.c.b16 %v909, %v906
  %v1321 = vpack.c.b16 %v910, %v907
  %v1322 = vpack.c.b16 %v914, %v911
  %v1323 = vpack.c.b16 %v915, %v912
  %v1324 = vpack.c.b16 %v916, %v913
  %v1325 = vpack.c.b16 %v920, %v917
  %v1326 = vpack.c.b16 %v921, %v918
  %v1327 = vpack.c.b16 %v922, %v919
  %v1328 = vpack.c.b16 %v926, %v923
  %v1329 = vpack.c.b16 %v927, %v924
  %v1330 = vpack.c.b16 %v928, %v925
  %v1331 = vpack.c.b16 %v932, %v929
  %v1332 = vpack.c.b16 %v933, %v930
  %v1333 = vpack.c.b16 %v934, %v931
  %v1334 = vpack.c.b16 %v938, %v935
  %v1335 = vpack.c.b16 %v939, %v936
  %v1336 = vpack.c.b16 %v940, %v937
  %v1337 = vpack.c.b16 %v944, %v941
  %v1338 = vpack.c.b16 %v945, %v942
  %v1339 = vpack.c.b16 %v946, %v943
  %v1340 = vpack.c.b16 %v950, %v947
  %v1341 = vpack.c.b16 %v951, %v948
  %v1342 = vpack.c.b16 %v952, %v949
  %v1343 = vpack.c.b16 %v956, %v953
  %v1344 = vpack.c.b16 %v957, %v954
  %v1345 = vpack.c.b16 %v958, %v955
  %v1346 = vpack.c.b16 %v962, %v959
  %v1347 = vpack.c.b16 %v963, %v960
  %v1348 = vpack.c.b16 %v964, %v961
  %v1349 = vpack.c.b16 %v968, %v965
  %v1350 = vpack.c.b16 %v969, %v966
  %v1351 = vpack.c.b16 %v970, %v967
  %v1352 = vpack.c.b16 %v974, %v971
  %v1353 = vpack.c.b16 %v975, %v972
  %v1354 = vpack.c.b16 %v976, %v973
  %v1355 = vpack.c.b16 %v980, %v977
  %v1356 = vpack.c.b16 %v981, %v978
  %v1357 = vpack.c.b16 %v982, %v979
  %v1358 = vpack.c.b16 %v986, %v983
  %v1359 = vpack.c.b16 %v987, %v984
  %v1360 = vpack.c.b16 %v988, %v985
  %v1361 = vpack.c.b16 %v992, %v989
  %v1362 = vpack.c.b16 %v993, %v990
  %v1363 = vpack.c.b16 %v994, %v991
  %v1364 = vpack.c.b16 %v998, %v995
  %v1365 = vpack.c.b16 %v999, %v996
  %v1366 = vpack.c.b16 %v1000, %v997
  %v1367 = vpack.c.b16 %v1004, %v1001
  %v1368 = vpack.c.b16 %v1005, %v1002
  %v1369 = vpack.c.b16 %v1006, %v1003
  %v1370 = vpack.c.b16 %v1010, %v1007
  %v1371 = vpack.c.b16 %v1011, %v1008
  %v1372 = vpack.c.b16 %v1012, %v1009
  %v1373 = vpack.c.b16 %v1016, %v1013
  %v1374 = vpack.c.b16 %v1017, %v1014
  %v1375 = vpack.c.b16 %v1018, %v1015
  %v1376 = vpack.c.b16 %v1022, %v1019
  %v1377 = vpack.c.b16 %v1023, %v1020
  %v1378 = vpack.c.b16 %v1024, %v1021
  %v1379 = vpack.c.b16 %v1028, %v1025
  %v1380 = vpack.c.b16 %v1029, %v1026
  %v1381 = vpack.c.b16 %v1030, %v1027
  %v1382 = vpack.c.b16 %v1034, %v1031
  %v1383 = vpack.c.b16 %v1035, %v1032
  %v1384 = vpack.c.b16 %v1036, %v1033
  %v1385 = vpack.c.b16 %v1040, %v1037
  %v1386 = vpack.c.b16 %v1041, %v1038
  %v1387 = vpack.c.b16 %v1042, %v1039
  %v1388 = vpack.c.b16 %v1046, %v1043
  %v1389 = vpack.c.b16 %v1047, %v1044
  %v1390 = vpack.c.b16 %v1048, %v1045
  %v1391 = vpack.c.b16 %v1052, %v1049
  %v1392 = vpack.c.b16 %v1053, %v1050
  %v1393 = vpack.c.b16 %v1054, %v1051
  %v1394 = vpack.c.b16 %v1058, %v1055
  %v1395 = vpack.c.b16 %v1059, %v1056
  %v1396 = vpack.c.b16 %v1060, %v1057
  %v1397 = vpack.c.b16 %v1064, %v1061
  %v1398 = vpack.c.b16 %v1065, %v1062
  %v1399 = vpack.c.b16 %v1066, %v1063
  %v1400 = vpack.c.b16 %v1070, %v1067
  %v1401 = vpack.c.b16 %v1071, %v1068
  %v1402 = vpack.c.b16 %v1072, %v1069
  %v1403 = vpack.c.b16 %v1076, %v1073
  %v1404 = vpack.c.b16 %v1077, %v1074
  %v1405 = vpack.c.b16 %v1078, %v1075
  %v1406 = vpack.c.b16 %v1082, %v1079
  %v1407 = vpack.c.b16 %v1083, %v1080
  %v1408 = vpack.c.b16 %v1084, %v1081
  %v1409 = vpack.c.b16 %v1088, %v1085
  %v1410 = vpack.c.b16 %v1089, %v1086
  %v1411 = vpack.c.b16 %v1090, %v1087
  %v1412 = vpack.c.b16 %v1094, %v1091
  %v1413 = vpack.c.b16 %v1095, %v1092
  %v1414 = vpack.c.b16 %v1096, %v1093
  %v1415 = vpack.c.b16 %v1100, %v1097
  %v1416 = vpack.c.b16 %v1101, %v1098
  %v1417 = vpack.c.b16 %v1102, %v1099
  %v1418 = vpack.c.b16 %v1106, %v1103
  %v1419 = vpack.c.b16 %v1107, %v1104
  %v1420 = vpack.c.b16 %v1108, %v1105
  %v1421 = vpack.c.b16 %v1112, %v1109
  %v1422 = vpack.c.b16 %v1113, %v1110
  %v1423 = vpack.c.b16 %v1114, %v1111
  %v1424 = vpack.c.b16 %v1118, %v1115
  %v1425 = vpack.c.b16 %v1119, %v1116
  %v1426 = vpack.c.b16 %v1120, %v1117
  %v1427 = vpack.c.b16 %v1124, %v1121
  %v1428 = vpack.c.b16 %v1125, %v1122
  %v1429 = vpack.c.b16 %v1126, %v1123
  %v1430 = vpack.c.b16 %v1130, %v1127
  %v1431 = vpack.c.b16 %v1131, %v1128
  %v1432 = vpack.c.b16 %v1132, %v1129
  %v1433 = vpack.c.b16 %v1136, %v1133
  %v1434 = vpack.c.b16 %v1137, %v1134
  %v1435 = vpack.c.b16 %v1138, %v1135
  %v1436 = vpack.c.b16 %v1142, %v1139
  %v1437 = vpack.c.b16 %v1143, %v1140
  %v1438 = vpack.c.b16 %v1144, %v1141
  %v1439 = vpack.c.b16 %v1148, %v1145
  %v1440 = vpack.c.b16 %v1149, %v1146
  %v1441 = vpack.c.b16 %v1150, %v1147
  %v1442 = vpack.c.b16 %v1154, %v1151
  %v1443 = vpack.c.b16 %v1155, %v1152
  %v1444 = vpack.c.b16 %v1156, %v1153
  %v1445 = vpack.c.b16 %v1160, %v1157
  %v1446 = vpack.c.b16 %v1161, %v1158
  %v1447 = vpack.c.b16 %v1162, %v1159
  %v1448 = vpack.c.b16 %v1166, %v1163
  %v1449 = vpack.c.b16 %v1167, %v1164
  %v1450 = vpack.c.b16 %v1168, %v1165
  %v1451 = vpack.c.b16 %v1172, %v1169
  %v1452 = vpack.c.b16 %v1173, %v1170
  %v1453 = vpack.c.b16 %v1174, %v1171
  %v1454 = vpack.c.b16 %v1178, %v1175
  %v1455 = vpack.c.b16 %v1179, %v1176
  %v1456 = vpack.c.b16 %v1180, %v1177
  %v1457 = vpack.c.b16 %v1184, %v1181
  %v1458 = vpack.c.b16 %v1185, %v1182
  %v1459 = vpack.c.b16 %v1186, %v1183
  %v1460 = vpack.c.b16 %v1190, %v1187
  %v1461 = vpack.c.b16 %v1191, %v1188
  %v1462 = vpack.c.b16 %v1192, %v1189
  %v1463 = vpack.c.b16 %v1196, %v1193
  %v1464 = vpack.c.b16 %v1197, %v1194
  %v1465 = vpack.c.b16 %v1198, %v1195
  %v1466 = vpack.c.b16 %v1202, %v1199
  %v1467 = vpack.c.b16 %v1203, %v1200
  %v1468 = vpack.c.b16 %v1204, %v1201
  %v1469 = vpack.c.b16 %v1208, %v1205
  %v1470 = vpack.c.b16 %v1209, %v1206
  %v1471 = vpack.c.b16 %v1210, %v1207
  %v1472 = vpack.c.b16 %v1214, %v1211
  %v1473 = vpack.c.b16 %v1215, %v1212
  %v1474 = vpack.c.b16 %v1216, %v1213
  %v1475 = vpack.c.b16 %v1220, %v1217
  %v1476 = vpack.c.b16 %v1221, %v1218
  %v1477 = vpack.c.b16 %v1222, %v1219
  %v1478 = vpack.c.b16 %v1226, %v1223
  %v1479 = vpack.c.b16 %v1227, %v1224
  %v1480 = vpack.c.b16 %v1228, %v1225
  %v1481 = vpack.c.b16 %v1232, %v1229
  %v1482 = vpack.c.b16 %v1233, %v1230
  %v1483 = vpack.c.b16 %v1234, %v1231
  %v1484 = vpack.c.b16 %v1238, %v1235
  %v1485 = vpack.c.b16 %v1239, %v1236
  %v1486 = vpack.c.b16 %v1240, %v1237
  %v1487 = vpack.c.b16 %v1244, %v1241
  %v1488 = vpack.c.b16 %v1245, %v1242
  %v1489 = vpack.c.b16 %v1246, %v1243
  %v1490 = vpack.c.b16 %v1250, %v1247
  %v1491 = vpack.c.b16 %v1251, %v1248
  %v1492 = vpack.c.b16 %v1252, %v1249
  %v1493 = vpack.c.b16 %v1256, %v1253
  %v1494 = vpack.c.b16 %v1257, %v1254
  %v1495 = vpack.c.b16 %v1258, %v1255
  %v1496 = vpack.c.b16 %v1262, %v1259
  %v1497 = vpack.c.b16 %v1263, %v1260
  %v1498 = vpack.c.b16 %v1264, %v1261
  %v1499 = vpack.c.b16 %v1268, %v1265
  %v1500 = vpack.c.b16 %v1269, %v1266
  %v1501 = vpack.c.b16 %v1270, %v1267
  %v1502 = vpack.c.b16 %v1274, %v1271
  %v1503 = vpack.c.b16 %v1275, %v1272
  %v1504 = vpack.c.b16 %v1276, %v1273
  %v1505 = vpack.c.b16 %v1280, %v1277
  %v1506 = vpack.c.b16 %v1281, %v1278
  %v1507 = vpack.c.b16 %v1282, %v1279
  %v1508 = vpack.c.b16 %v1286, %v1283
  %v1509 = vpack.c.b16 %v1287, %v1284
  %v1510 = vpack.c.b16 %v1288, %v1285
  %v1511 = vpack.c.b16 %v1292, %v1289
  %v1512 = vpack.c.b16 %v1293, %v1290
  %v1513 = vpack.c.b16 %v1294, %v1291
  %v1514 = vpack.c.b16 %v1298, %v1295
  %v1515 = vpack.c.b16 %v1299, %v1296
  %v1516 = vpack.c.b16 %v1300, %v1297
  %1733 = vmatprep.subr.bf16.mxu0 %v1302
  %1734 = vmatpush1.bf16.msra.mxu0 %v1301
  %1735 = vmatprep.subr.bf16.mxu0 %v1305
  %1736 = vmatpush1.bf16.msra.mxu0 %v1304
  %1737 = vmatprep.subr.bf16.mxu0 %v1308
  %1738 = vmatpush1.bf16.msra.mxu0 %v1307
  %1739 = vmatprep.subr.bf16.mxu0 %v1311
  %1740 = vmatpush1.bf16.msra.mxu0 %v1310
  %1741 = vmatprep.subr.bf16.mxu0 %v1314
  %1742 = vmatpush1.bf16.msra.mxu0 %v1313
  %1743 = vmatprep.subr.bf16.mxu0 %v1317
  %1744 = vmatpush1.bf16.msra.mxu0 %v1316
  %1745 = vmatprep.subr.bf16.mxu0 %v1320
  %1746 = vmatpush1.bf16.msra.mxu0 %v1319
  %1747 = vmatprep.subr.bf16.mxu0 %v1323
  %1748 = vmatpush1.bf16.msra.mxu0 %v1322
  %1749 = vmatprep.subr.bf16.mxu0 %v1326
  %1750 = vmatpush1.bf16.msra.mxu0 %v1325
  %1751 = vmatprep.subr.bf16.mxu0 %v1329
  %1752 = vmatpush1.bf16.msra.mxu0 %v1328
  %1753 = vmatprep.subr.bf16.mxu0 %v1332
  %1754 = vmatpush1.bf16.msra.mxu0 %v1331
  %1755 = vmatprep.subr.bf16.mxu0 %v1335
  %1756 = vmatpush1.bf16.msra.mxu0 %v1334
  %1757 = vmatprep.subr.bf16.mxu0 %v1338
  %1758 = vmatpush1.bf16.msra.mxu0 %v1337
  %1759 = vmatprep.subr.bf16.mxu0 %v1341
  %1760 = vmatpush1.bf16.msra.mxu0 %v1340
  %1761 = vmatprep.subr.bf16.mxu0 %v1344
  %1762 = vmatpush1.bf16.msra.mxu0 %v1343
  %1763 = vmatprep.subr.bf16.mxu0 %v1347
  %1764 = vmatpush1.bf16.msra.mxu0 %v1346
  %1765 = vmatprep.mubr.bf16.mxu0 %v492
  %1766 = vmatmul.mubr.bf16.gmra.mrb[0].mxu0 %v491
  %v1767 = vpop.f32.mrb[0].mxu0
  %v1768 = vadd.f32 %v353, %v1767
  %v1769 = vpop.f32.mrb[0].mxu0
  %v1770 = vadd.f32 %v357, %v1769
  %v1771 = vpop.f32.mrb[0].mxu0
  %v1772 = vadd.f32 %v353, %v1771
  %v1773 = vpop.f32.mrb[0].mxu0
  %v1774 = vadd.f32 %v357, %v1773
  %1775 = vmatprep.mubr.bf16.mxu0 %v501
  %1776 = vmatmul.mubr.bf16.gmra.mrb[0].mxu0 %v500
  %v1777 = vpop.f32.mrb[0].mxu0
  %v1778 = vadd.f32 %v353, %v1777
  %v1779 = vpop.f32.mrb[0].mxu0
  %v1780 = vadd.f32 %v357, %v1779
  %v1781 = vpop.f32.mrb[0].mxu0
  %v1782 = vadd.f32 %v353, %v1781
  %v1783 = vpop.f32.mrb[0].mxu0
  %v1784 = vadd.f32 %v357, %v1783
  %1785 = vmatprep.mubr.bf16.mxu0 %v510
  %1786 = vmatmul.mubr.bf16.gmra.mrb[0].mxu0 %v509
  %v1787 = vpop.f32.mrb[0].mxu0
  %v1788 = vadd.f32 %v353, %v1787
  %v1789 = vpop.f32.mrb[0].mxu0
  %v1790 = vadd.f32 %v357, %v1789
  %v1791 = vpop.f32.mrb[0].mxu0
  %v1792 = vadd.f32 %v353, %v1791
  %v1793 = vpop.f32.mrb[0].mxu0
  %v1794 = vadd.f32 %v357, %v1793
  %1795 = vmatprep.mubr.bf16.mxu0 %v519
  %1796 = vmatmul.mubr.bf16.gmra.mrb[0].mxu0 %v518
  %v1797 = vpop.f32.mrb[0].mxu0
  %v1798 = vadd.f32 %v353, %v1797
  %v1799 = vpop.f32.mrb[0].mxu0
  %v1800 = vadd.f32 %v357, %v1799
  %v1801 = vpop.f32.mrb[0].mxu0
  %v1802 = vadd.f32 %v353, %v1801
  %v1803 = vpop.f32.mrb[0].mxu0
  %v1804 = vadd.f32 %v357, %v1803
  %1805 = vmatprep.mubr.bf16.mxu0 %v528
  %1806 = vmatmul.mubr.bf16.gmra.mrb[0].mxu0 %v527
  %v1807 = vpop.f32.mrb[0].mxu0
  %v1808 = vadd.f32 %v353, %v1807
  %v1809 = vpop.f32.mrb[0].mxu0
  %v1810 = vadd.f32 %v357, %v1809
  %v1811 = vpop.f32.mrb[0].mxu0
  %v1812 = vpop.f32.mrb[0].mxu0
  %1813 = vdwg.mxu0
  %1814 = vmatprep.subr.bf16.mxu0 %v1350
  %1815 = vmatpush1.bf16.msra.mxu0 %v1349
  %1816 = vmatprep.subr.bf16.mxu0 %v1353
  %1817 = vmatpush1.bf16.msra.mxu0 %v1352
  %1818 = vmatprep.subr.bf16.mxu0 %v1356
  %1819 = vmatpush1.bf16.msra.mxu0 %v1355
  %1820 = vmatprep.subr.bf16.mxu0 %v1359
  %1821 = vmatpush1.bf16.msra.mxu0 %v1358
  %1822 = vmatprep.subr.bf16.mxu0 %v1362
  %1823 = vmatpush1.bf16.msra.mxu0 %v1361
  %1824 = vmatprep.subr.bf16.mxu0 %v1365
  %1825 = vmatpush1.bf16.msra.mxu0 %v1364
  %1826 = vmatprep.subr.bf16.mxu0 %v1368
  %1827 = vmatpush1.bf16.msra.mxu0 %v1367
  %1828 = vmatprep.subr.bf16.mxu0 %v1371
  %1829 = vmatpush1.bf16.msra.mxu0 %v1370
  %1830 = vmatprep.subr.bf16.mxu0 %v1374
  %1831 = vmatpush1.bf16.msra.mxu0 %v1373
  %1832 = vmatprep.subr.bf16.mxu0 %v1377
  %1833 = vmatpush1.bf16.msra.mxu0 %v1376
  %1834 = vmatprep.subr.bf16.mxu0 %v1380
  %1835 = vmatpush1.bf16.msra.mxu0 %v1379
  %1836 = vmatprep.subr.bf16.mxu0 %v1383
  %1837 = vmatpush1.bf16.msra.mxu0 %v1382
  %1838 = vmatprep.subr.bf16.mxu0 %v1386
  %1839 = vmatpush1.bf16.msra.mxu0 %v1385
  %1840 = vmatprep.subr.bf16.mxu0 %v1389
  %1841 = vmatpush1.bf16.msra.mxu0 %v1388
  %1842 = vmatprep.subr.bf16.mxu0 %v1392
  %1843 = vmatpush1.bf16.msra.mxu0 %v1391
  %1844 = vmatprep.subr.bf16.mxu0 %v1395
  %1845 = vmatpush1.bf16.msra.mxu0 %v1394
  %1846 = vmatprep.mubr.bf16.mxu0 %v494
  %1847 = vmatmul.mubr.bf16.gmra.mrb[0].mxu0 %v493
  %v1848 = vpop.f32.mrb[0].mxu0
  %v1849 = vadd.f32 %v1768, %v1848
  %v1850 = vpop.f32.mrb[0].mxu0
  %v1851 = vadd.f32 %v1770, %v1850
  %v1852 = vpop.f32.mrb[0].mxu0
  %v1853 = vadd.f32 %v1772, %v1852
  %v1854 = vpop.f32.mrb[0].mxu0
  %v1855 = vadd.f32 %v1774, %v1854
  %1856 = vmatprep.mubr.bf16.mxu0 %v503
  %1857 = vmatmul.mubr.bf16.gmra.mrb[0].mxu0 %v502
  %v1858 = vpop.f32.mrb[0].mxu0
  %v1859 = vadd.f32 %v1778, %v1858
  %v1860 = vpop.f32.mrb[0].mxu0
  %v1861 = vadd.f32 %v1780, %v1860
  %v1862 = vpop.f32.mrb[0].mxu0
  %v1863 = vadd.f32 %v1782, %v1862
  %v1864 = vpop.f32.mrb[0].mxu0
  %v1865 = vadd.f32 %v1784, %v1864
  %1866 = vmatprep.mubr.bf16.mxu0 %v512
  %1867 = vmatmul.mubr.bf16.gmra.mrb[0].mxu0 %v511
  %v1868 = vpop.f32.mrb[0].mxu0
  %v1869 = vadd.f32 %v1788, %v1868
  %v1870 = vpop.f32.mrb[0].mxu0
  %v1871 = vadd.f32 %v1790, %v1870
  %v1872 = vpop.f32.mrb[0].mxu0
  %v1873 = vadd.f32 %v1792, %v1872
  %v1874 = vpop.f32.mrb[0].mxu0
  %v1875 = vadd.f32 %v1794, %v1874
  %1876 = vmatprep.mubr.bf16.mxu0 %v521
  %1877 = vmatmul.mubr.bf16.gmra.mrb[0].mxu0 %v520
  %v1878 = vpop.f32.mrb[0].mxu0
  %v1879 = vadd.f32 %v1798, %v1878
  %v1880 = vpop.f32.mrb[0].mxu0
  %v1881 = vadd.f32 %v1800, %v1880
  %v1882 = vpop.f32.mrb[0].mxu0
  %v1883 = vadd.f32 %v1802, %v1882
  %v1884 = vpop.f32.mrb[0].mxu0
  %v1885 = vadd.f32 %v1804, %v1884
  %1886 = vmatprep.mubr.bf16.mxu0 %v530
  %1887 = vmatmul.mubr.bf16.gmra.mrb[0].mxu0 %v529
  %v1888 = vpop.f32.mrb[0].mxu0
  %v1889 = vadd.f32 %v1808, %v1888
  %v1890 = vpop.f32.mrb[0].mxu0
  %v1891 = vadd.f32 %v1810, %v1890
  %v1892 = vpop.f32.mrb[0].mxu0
  %v1893 = vpop.f32.mrb[0].mxu0
  %1894 = vdwg.mxu0
  %1895 = vmatprep.subr.bf16.mxu0 %v1398
  %1896 = vmatpush1.bf16.msra.mxu0 %v1397
  %1897 = vmatprep.subr.bf16.mxu0 %v1401
  %1898 = vmatpush1.bf16.msra.mxu0 %v1400
  %1899 = vmatprep.subr.bf16.mxu0 %v1404
  %1900 = vmatpush1.bf16.msra.mxu0 %v1403
  %1901 = vmatprep.subr.bf16.mxu0 %v1407
  %1902 = vmatpush1.bf16.msra.mxu0 %v1406
  %1903 = vmatprep.subr.bf16.mxu0 %v1410
  %1904 = vmatpush1.bf16.msra.mxu0 %v1409
  %1905 = vmatprep.subr.bf16.mxu0 %v1413
  %1906 = vmatpush1.bf16.msra.mxu0 %v1412
  %1907 = vmatprep.subr.bf16.mxu0 %v1416
  %1908 = vmatpush1.bf16.msra.mxu0 %v1415
  %1909 = vmatprep.subr.bf16.mxu0 %v1419
  %1910 = vmatpush1.bf16.msra.mxu0 %v1418
  %1911 = vmatprep.subr.bf16.mxu0 %v1422
  %1912 = vmatpush1.bf16.msra.mxu0 %v1421
  %1913 = vmatprep.subr.bf16.mxu0 %v1425
  %1914 = vmatpush1.bf16.msra.mxu0 %v1424
  %1915 = vmatprep.subr.bf16.mxu0 %v1428
  %1916 = vmatpush1.bf16.msra.mxu0 %v1427
  %1917 = vmatprep.subr.bf16.mxu0 %v1431
  %1918 = vmatpush1.bf16.msra.mxu0 %v1430
  %1919 = vmatprep.subr.bf16.mxu0 %v1434
  %1920 = vmatpush1.bf16.msra.mxu0 %v1433
  %1921 = vmatprep.subr.bf16.mxu0 %v1437
  %1922 = vmatpush1.bf16.msra.mxu0 %v1436
  %1923 = vmatprep.subr.bf16.mxu0 %v1440
  %1924 = vmatpush1.bf16.msra.mxu0 %v1439
  %1925 = vmatprep.subr.bf16.mxu0 %v1443
  %1926 = vmatpush1.bf16.msra.mxu0 %v1442
  %1927 = vmatprep.mubr.bf16.mxu0 %v496
  %1928 = vmatmul.mubr.bf16.gmra.mrb[0].mxu0 %v495
  %v1929 = vpop.f32.mrb[0].mxu0
  %v1930 = vadd.f32 %v1849, %v1929
  %v1931 = vpop.f32.mrb[0].mxu0
  %v1932 = vadd.f32 %v1851, %v1931
  %v1933 = vpop.f32.mrb[0].mxu0
  %v1934 = vadd.f32 %v1853, %v1933
  %v1935 = vpop.f32.mrb[0].mxu0
  %v1936 = vadd.f32 %v1855, %v1935
  %1937 = vmatprep.mubr.bf16.mxu0 %v505
  %1938 = vmatmul.mubr.bf16.gmra.mrb[0].mxu0 %v504
  %v1939 = vpop.f32.mrb[0].mxu0
  %v1940 = vadd.f32 %v1859, %v1939
  %v1941 = vpop.f32.mrb[0].mxu0
  %v1942 = vadd.f32 %v1861, %v1941
  %v1943 = vpop.f32.mrb[0].mxu0
  %v1944 = vadd.f32 %v1863, %v1943
  %v1945 = vpop.f32.mrb[0].mxu0
  %v1946 = vadd.f32 %v1865, %v1945
  %1947 = vmatprep.mubr.bf16.mxu0 %v514
  %1948 = vmatmul.mubr.bf16.gmra.mrb[0].mxu0 %v513
  %v1949 = vpop.f32.mrb[0].mxu0
  %v1950 = vadd.f32 %v1869, %v1949
  %v1951 = vpop.f32.mrb[0].mxu0
  %v1952 = vadd.f32 %v1871, %v1951
  %v1953 = vpop.f32.mrb[0].mxu0
  %v1954 = vadd.f32 %v1873, %v1953
  %v1955 = vpop.f32.mrb[0].mxu0
  %v1956 = vadd.f32 %v1875, %v1955
  %1957 = vmatprep.mubr.bf16.mxu0 %v523
  %1958 = vmatmul.mubr.bf16.gmra.mrb[0].mxu0 %v522
  %v1959 = vpop.f32.mrb[0].mxu0
  %v1960 = vadd.f32 %v1879, %v1959
  %v1961 = vpop.f32.mrb[0].mxu0
  %v1962 = vadd.f32 %v1881, %v1961
  %v1963 = vpop.f32.mrb[0].mxu0
  %v1964 = vadd.f32 %v1883, %v1963
  %v1965 = vpop.f32.mrb[0].mxu0
  %v1966 = vadd.f32 %v1885, %v1965
  %1967 = vmatprep.mubr.bf16.mxu0 %v532
  %1968 = vmatmul.mubr.bf16.gmra.mrb[0].mxu0 %v531
  %v1969 = vpop.f32.mrb[0].mxu0
  %v1970 = vadd.f32 %v1889, %v1969
  %v1971 = vpop.f32.mrb[0].mxu0
  %v1972 = vadd.f32 %v1891, %v1971
  %v1973 = vpop.f32.mrb[0].mxu0
  %v1974 = vpop.f32.mrb[0].mxu0
  %1975 = vdwg.mxu0
  %1976 = vmatprep.subr.bf16.mxu0 %v1446
  %1977 = vmatpush1.bf16.msra.mxu0 %v1445
  %1978 = vmatprep.subr.bf16.mxu0 %v1449
  %1979 = vmatpush1.bf16.msra.mxu0 %v1448
  %1980 = vmatprep.subr.bf16.mxu0 %v1452
  %1981 = vmatpush1.bf16.msra.mxu0 %v1451
  %1982 = vmatprep.subr.bf16.mxu0 %v1455
  %1983 = vmatpush1.bf16.msra.mxu0 %v1454
  %1984 = vmatprep.subr.bf16.mxu0 %v1458
  %1985 = vmatpush1.bf16.msra.mxu0 %v1457
  %1986 = vmatprep.subr.bf16.mxu0 %v1461
  %1987 = vmatpush1.bf16.msra.mxu0 %v1460
  %1988 = vmatprep.subr.bf16.mxu0 %v1464
  %1989 = vmatpush1.bf16.msra.mxu0 %v1463
  %1990 = vmatprep.subr.bf16.mxu0 %v1467
  %1991 = vmatpush1.bf16.msra.mxu0 %v1466
  %1992 = vmatprep.subr.bf16.mxu0 %v1470
  %1993 = vmatpush1.bf16.msra.mxu0 %v1469
  %1994 = vmatprep.subr.bf16.mxu0 %v1473
  %1995 = vmatpush1.bf16.msra.mxu0 %v1472
  %1996 = vmatprep.subr.bf16.mxu0 %v1476
  %1997 = vmatpush1.bf16.msra.mxu0 %v1475
  %1998 = vmatprep.subr.bf16.mxu0 %v1479
  %1999 = vmatpush1.bf16.msra.mxu0 %v1478
  %2000 = vmatprep.subr.bf16.mxu0 %v1482
  %2001 = vmatpush1.bf16.msra.mxu0 %v1481
  %2002 = vmatprep.subr.bf16.mxu0 %v1485
  %2003 = vmatpush1.bf16.msra.mxu0 %v1484
  %2004 = vmatprep.subr.bf16.mxu0 %v1488
  %2005 = vmatpush1.bf16.msra.mxu0 %v1487
  %2006 = vmatprep.subr.bf16.mxu0 %v1491
  %2007 = vmatpush1.bf16.msra.mxu0 %v1490
  %2008 = vmatprep.mubr.bf16.mxu0 %v498
  %2009 = vmatmul.mubr.bf16.gmra.mrb[0].mxu0 %v497
  %v2010 = vpop.f32.mrb[0].mxu0
  %v2011 = vadd.f32 %v1930, %v2010
  %v2012 = vpop.f32.mrb[0].mxu0
  %v2013 = vadd.f32 %v1932, %v2012
  %v2014 = vpop.f32.mrb[0].mxu0
  %v2015 = vadd.f32 %v1934, %v2014
  %v2016 = vpop.f32.mrb[0].mxu0
  %v2017 = vadd.f32 %v1936, %v2016
  %2018 = vmatprep.mubr.bf16.mxu0 %v507
  %2019 = vmatmul.mubr.bf16.gmra.mrb[0].mxu0 %v506
  %v2020 = vpop.f32.mrb[0].mxu0
  %v2021 = vadd.f32 %v1940, %v2020
  %v2022 = vpop.f32.mrb[0].mxu0
  %v2023 = vadd.f32 %v1942, %v2022
  %v2024 = vpop.f32.mrb[0].mxu0
  %v2025 = vadd.f32 %v1944, %v2024
  %v2026 = vpop.f32.mrb[0].mxu0
  %v2027 = vadd.f32 %v1946, %v2026
  %2028 = vmatprep.mubr.bf16.mxu0 %v516
  %2029 = vmatmul.mubr.bf16.gmra.mrb[0].mxu0 %v515
  %v2030 = vpop.f32.mrb[0].mxu0
  %v2031 = vadd.f32 %v1950, %v2030
  %v2032 = vpop.f32.mrb[0].mxu0
  %v2033 = vadd.f32 %v1952, %v2032
  %v2034 = vpop.f32.mrb[0].mxu0
  %v2035 = vadd.f32 %v1954, %v2034
  %v2036 = vpop.f32.mrb[0].mxu0
  %v2037 = vadd.f32 %v1956, %v2036
  %2038 = vmatprep.mubr.bf16.mxu0 %v525
  %2039 = vmatmul.mubr.bf16.gmra.mrb[0].mxu0 %v524
  %v2040 = vpop.f32.mrb[0].mxu0
  %v2041 = vadd.f32 %v1960, %v2040
  %v2042 = vpop.f32.mrb[0].mxu0
  %v2043 = vadd.f32 %v1962, %v2042
  %v2044 = vpop.f32.mrb[0].mxu0
  %v2045 = vadd.f32 %v1964, %v2044
  %v2046 = vpop.f32.mrb[0].mxu0
  %v2047 = vadd.f32 %v1966, %v2046
  %2048 = vmatprep.mubr.bf16.mxu0 %v534
  %2049 = vmatmul.mubr.bf16.gmra.mrb[0].mxu0 %v533
  %v2050 = vpop.f32.mrb[0].mxu0
  %v2051 = vadd.f32 %v1970, %v2050
  %v2052 = vpop.f32.mrb[0].mxu0
  %v2053 = vadd.f32 %v1972, %v2052
  %v2054 = vpop.f32.mrb[0].mxu0
  %v2055 = vpop.f32.mrb[0].mxu0
  %2056 = vdwg.mxu0
  %2057 = vmatprep.subr.bf16.mxu0 %v1494
  %2058 = vmatpush1.bf16.msra.mxu0 %v1493
  %2059 = vmatprep.subr.bf16.mxu0 %v1497
  %2060 = vmatpush1.bf16.msra.mxu0 %v1496
  %2061 = vmatprep.subr.bf16.mxu0 %v1500
  %2062 = vmatpush1.bf16.msra.mxu0 %v1499
  %2063 = vmatprep.subr.bf16.mxu0 %v1503
  %2064 = vmatpush1.bf16.msra.mxu0 %v1502
  %2065 = vmatprep.subr.bf16.mxu0 %v1506
  %2066 = vmatpush1.bf16.msra.mxu0 %v1505
  %2067 = vmatprep.subr.bf16.mxu0 %v1509
  %2068 = vmatpush1.bf16.msra.mxu0 %v1508
  %2069 = vmatprep.subr.bf16.mxu0 %v1512
  %2070 = vmatpush1.bf16.msra.mxu0 %v1511
  %2071 = vmatprep.subr.bf16.mxu0 %v1515
  %2072 = vmatpush1.bf16.msra.mxu0 %v1514
  %2073 = vmatprep.subr.bf16.mxu0 0
  %2074 = vmatpush1.bf16.msra.mxu0 0
  %2075 = vmatprep.subr.bf16.mxu0 0
  %2076 = vmatpush1.bf16.msra.mxu0 0
  %2077 = vmatprep.subr.bf16.mxu0 0
  %2078 = vmatpush1.bf16.msra.mxu0 0
  %2079 = vmatprep.subr.bf16.mxu0 0
  %2080 = vmatpush1.bf16.msra.mxu0 0
  %2081 = vmatprep.subr.bf16.mxu0 0
  %2082 = vmatpush1.bf16.msra.mxu0 0
  %2083 = vmatprep.subr.bf16.mxu0 0
  %2084 = vmatpush1.bf16.msra.mxu0 0
  %2085 = vmatprep.subr.bf16.mxu0 0
  %2086 = vmatpush1.bf16.msra.mxu0 0
  %2087 = vmatprep.subr.bf16.mxu0 0
  %2088 = vmatpush1.bf16.msra.mxu0 0
  %2089 = vmatprep.mubr.bf16.mxu0 0
  %2090 = vmatmul.mubr.bf16.gmra.mrb[0].mxu0 %v499
  %v2091 = vpop.f32.mrb[0].mxu0
  %v2092 = vadd.f32 %v2011, %v2091
  %v2093 = vpop.f32.mrb[0].mxu0
  %v2094 = vadd.f32 %v2013, %v2093
  %v2095 = vpop.f32.mrb[0].mxu0
  %v2096 = vadd.f32 %v2015, %v2095
  %v2097 = vpop.f32.mrb[0].mxu0
  %v2098 = vadd.f32 %v2017, %v2097
  %2099 = vmatprep.mubr.bf16.mxu0 0
  %2100 = vmatmul.mubr.bf16.gmra.mrb[0].mxu0 %v508
  %v2101 = vpop.f32.mrb[0].mxu0
  %v2102 = vadd.f32 %v2021, %v2101
  %v2103 = vpop.f32.mrb[0].mxu0
  %v2104 = vadd.f32 %v2023, %v2103
  %v2105 = vpop.f32.mrb[0].mxu0
  %v2106 = vadd.f32 %v2025, %v2105
  %v2107 = vpop.f32.mrb[0].mxu0
  %v2108 = vadd.f32 %v2027, %v2107
  %2109 = vmatprep.mubr.bf16.mxu0 0
  %2110 = vmatmul.mubr.bf16.gmra.mrb[0].mxu0 %v517
  %v2111 = vpop.f32.mrb[0].mxu0
  %v2112 = vadd.f32 %v2031, %v2111
  %v2113 = vpop.f32.mrb[0].mxu0
  %v2114 = vadd.f32 %v2033, %v2113
  %v2115 = vpop.f32.mrb[0].mxu0
  %v2116 = vadd.f32 %v2035, %v2115
  %v2117 = vpop.f32.mrb[0].mxu0
  %v2118 = vadd.f32 %v2037, %v2117
  %2119 = vmatprep.mubr.bf16.mxu0 0
  %2120 = vmatmul.mubr.bf16.gmra.mrb[0].mxu0 %v526
  %v2121 = vpop.f32.mrb[0].mxu0
  %v2122 = vadd.f32 %v2041, %v2121
  %v2123 = vpop.f32.mrb[0].mxu0
  %v2124 = vadd.f32 %v2043, %v2123
  %v2125 = vpop.f32.mrb[0].mxu0
  %v2126 = vadd.f32 %v2045, %v2125
  %v2127 = vpop.f32.mrb[0].mxu0
  %v2128 = vadd.f32 %v2047, %v2127
  %2129 = vmatprep.mubr.bf16.mxu0 0
  %2130 = vmatmul.mubr.bf16.gmra.mrb[0].mxu0 %v535
  %v2131 = vpop.f32.mrb[0].mxu0
  %v2132 = vadd.f32 %v2051, %v2131
  %v2133 = vpop.f32.mrb[0].mxu0
  %v2134 = vadd.f32 %v2053, %v2133
  %v2135 = vpop.f32.mrb[0].mxu0
  %v2136 = vpop.f32.mrb[0].mxu0
  %2137 = vdwg.mxu0
  %2138 = vmatprep.subr.bf16.mxu0 0
  %2139 = vmatpush1.bf16.msra.mxu0 %v1303
  %2140 = vmatprep.subr.bf16.mxu0 0
  %2141 = vmatpush1.bf16.msra.mxu0 %v1306
  %2142 = vmatprep.subr.bf16.mxu0 0
  %2143 = vmatpush1.bf16.msra.mxu0 %v1309
  %2144 = vmatprep.subr.bf16.mxu0 0
  %2145 = vmatpush1.bf16.msra.mxu0 %v1312
  %2146 = vmatprep.subr.bf16.mxu0 0
  %2147 = vmatpush1.bf16.msra.mxu0 %v1315
  %2148 = vmatprep.subr.bf16.mxu0 0
  %2149 = vmatpush1.bf16.msra.mxu0 %v1318
  %2150 = vmatprep.subr.bf16.mxu0 0
  %2151 = vmatpush1.bf16.msra.mxu0 %v1321
  %2152 = vmatprep.subr.bf16.mxu0 0
  %2153 = vmatpush1.bf16.msra.mxu0 %v1324
  %2154 = vmatprep.subr.bf16.mxu0 0
  %2155 = vmatpush1.bf16.msra.mxu0 %v1327
  %2156 = vmatprep.subr.bf16.mxu0 0
  %2157 = vmatpush1.bf16.msra.mxu0 %v1330
  %2158 = vmatprep.subr.bf16.mxu0 0
  %2159 = vmatpush1.bf16.msra.mxu0 %v1333
  %2160 = vmatprep.subr.bf16.mxu0 0
  %2161 = vmatpush1.bf16.msra.mxu0 %v1336
  %2162 = vmatprep.subr.bf16.mxu0 0
  %2163 = vmatpush1.bf16.msra.mxu0 %v1339
  %2164 = vmatprep.subr.bf16.mxu0 0
  %2165 = vmatpush1.bf16.msra.mxu0 %v1342
  %2166 = vmatprep.subr.bf16.mxu0 0
  %2167 = vmatpush1.bf16.msra.mxu0 %v1345
  %2168 = vmatprep.subr.bf16.mxu0 0
  %2169 = vmatpush1.bf16.msra.mxu0 %v1348
  %2170 = vmatprep.mubr.bf16.mxu0 %v492
  %2171 = vmatmul.mubr.bf16.gmra.mrb[0].mxu0 %v491
  %v2172 = vpop.f32.mrb[0].mxu0
  %v2173 = vadd.f32 %v361, %v2172
  %v2174 = vpop.f32.mrb[0].mxu0
  %v2175 = vpop.f32.mrb[0].mxu0
  %v2176 = vadd.f32 %v361, %v2175
  %v2177 = vpop.f32.mrb[0].mxu0
  %2178 = vmatprep.mubr.bf16.mxu0 %v501
  %2179 = vmatmul.mubr.bf16.gmra.mrb[0].mxu0 %v500
  %v2180 = vpop.f32.mrb[0].mxu0
  %v2181 = vadd.f32 %v361, %v2180
  %v2182 = vpop.f32.mrb[0].mxu0
  %v2183 = vpop.f32.mrb[0].mxu0
  %v2184 = vadd.f32 %v361, %v2183
  %v2185 = vpop.f32.mrb[0].mxu0
  %2186 = vmatprep.mubr.bf16.mxu0 %v510
  %2187 = vmatmul.mubr.bf16.gmra.mrb[0].mxu0 %v509
  %v2188 = vpop.f32.mrb[0].mxu0
  %v2189 = vadd.f32 %v361, %v2188
  %v2190 = vpop.f32.mrb[0].mxu0
  %v2191 = vpop.f32.mrb[0].mxu0
  %v2192 = vadd.f32 %v361, %v2191
  %v2193 = vpop.f32.mrb[0].mxu0
  %2194 = vmatprep.mubr.bf16.mxu0 %v519
  %2195 = vmatmul.mubr.bf16.gmra.mrb[0].mxu0 %v518
  %v2196 = vpop.f32.mrb[0].mxu0
  %v2197 = vadd.f32 %v361, %v2196
  %v2198 = vpop.f32.mrb[0].mxu0
  %v2199 = vpop.f32.mrb[0].mxu0
  %v2200 = vadd.f32 %v361, %v2199
  %v2201 = vpop.f32.mrb[0].mxu0
  %2202 = vmatprep.mubr.bf16.mxu0 %v528
  %2203 = vmatmul.mubr.bf16.gmra.mrb[0].mxu0 %v527
  %v2204 = vpop.f32.mrb[0].mxu0
  %v2205 = vadd.f32 %v361, %v2204
  %v2206 = vpop.f32.mrb[0].mxu0
  %v2207 = vpop.f32.mrb[0].mxu0
  %v2208 = vpop.f32.mrb[0].mxu0
  %2209 = vdwg.mxu0
  %2210 = vmatprep.subr.bf16.mxu0 0
  %2211 = vmatpush1.bf16.msra.mxu0 %v1351
  %2212 = vmatprep.subr.bf16.mxu0 0
  %2213 = vmatpush1.bf16.msra.mxu0 %v1354
  %2214 = vmatprep.subr.bf16.mxu0 0
  %2215 = vmatpush1.bf16.msra.mxu0 %v1357
  %2216 = vmatprep.subr.bf16.mxu0 0
  %2217 = vmatpush1.bf16.msra.mxu0 %v1360
  %2218 = vmatprep.subr.bf16.mxu0 0
  %2219 = vmatpush1.bf16.msra.mxu0 %v1363
  %2220 = vmatprep.subr.bf16.mxu0 0
  %2221 = vmatpush1.bf16.msra.mxu0 %v1366
  %2222 = vmatprep.subr.bf16.mxu0 0
  %2223 = vmatpush1.bf16.msra.mxu0 %v1369
  %2224 = vmatprep.subr.bf16.mxu0 0
  %2225 = vmatpush1.bf16.msra.mxu0 %v1372
  %2226 = vmatprep.subr.bf16.mxu0 0
  %2227 = vmatpush1.bf16.msra.mxu0 %v1375
  %2228 = vmatprep.subr.bf16.mxu0 0
  %2229 = vmatpush1.bf16.msra.mxu0 %v1378
  %2230 = vmatprep.subr.bf16.mxu0 0
  %2231 = vmatpush1.bf16.msra.mxu0 %v1381
  %2232 = vmatprep.subr.bf16.mxu0 0
  %2233 = vmatpush1.bf16.msra.mxu0 %v1384
  %2234 = vmatprep.subr.bf16.mxu0 0
  %2235 = vmatpush1.bf16.msra.mxu0 %v1387
  %2236 = vmatprep.subr.bf16.mxu0 0
  %2237 = vmatpush1.bf16.msra.mxu0 %v1390
  %2238 = vmatprep.subr.bf16.mxu0 0
  %2239 = vmatpush1.bf16.msra.mxu0 %v1393
  %2240 = vmatprep.subr.bf16.mxu0 0
  %2241 = vmatpush1.bf16.msra.mxu0 %v1396
  %2242 = vmatprep.mubr.bf16.mxu0 %v494
  %2243 = vmatmul.mubr.bf16.gmra.mrb[0].mxu0 %v493
  %v2244 = vpop.f32.mrb[0].mxu0
  %v2245 = vadd.f32 %v2173, %v2244
  %v2246 = vpop.f32.mrb[0].mxu0
  %v2247 = vpop.f32.mrb[0].mxu0
  %v2248 = vadd.f32 %v2176, %v2247
  %v2249 = vpop.f32.mrb[0].mxu0
  %2250 = vmatprep.mubr.bf16.mxu0 %v503
  %2251 = vmatmul.mubr.bf16.gmra.mrb[0].mxu0 %v502
  %v2252 = vpop.f32.mrb[0].mxu0
  %v2253 = vadd.f32 %v2181, %v2252
  %v2254 = vpop.f32.mrb[0].mxu0
  %v2255 = vpop.f32.mrb[0].mxu0
  %v2256 = vadd.f32 %v2184, %v2255
  %v2257 = vpop.f32.mrb[0].mxu0
  %2258 = vmatprep.mubr.bf16.mxu0 %v512
  %2259 = vmatmul.mubr.bf16.gmra.mrb[0].mxu0 %v511
  %v2260 = vpop.f32.mrb[0].mxu0
  %v2261 = vadd.f32 %v2189, %v2260
  %v2262 = vpop.f32.mrb[0].mxu0
  %v2263 = vpop.f32.mrb[0].mxu0
  %v2264 = vadd.f32 %v2192, %v2263
  %v2265 = vpop.f32.mrb[0].mxu0
  %2266 = vmatprep.mubr.bf16.mxu0 %v521
  %2267 = vmatmul.mubr.bf16.gmra.mrb[0].mxu0 %v520
  %v2268 = vpop.f32.mrb[0].mxu0
  %v2269 = vadd.f32 %v2197, %v2268
  %v2270 = vpop.f32.mrb[0].mxu0
  %v2271 = vpop.f32.mrb[0].mxu0
  %v2272 = vadd.f32 %v2200, %v2271
  %v2273 = vpop.f32.mrb[0].mxu0
  %2274 = vmatprep.mubr.bf16.mxu0 %v530
  %2275 = vmatmul.mubr.bf16.gmra.mrb[0].mxu0 %v529
  %v2276 = vpop.f32.mrb[0].mxu0
  %v2277 = vadd.f32 %v2205, %v2276
  %v2278 = vpop.f32.mrb[0].mxu0
  %v2279 = vpop.f32.mrb[0].mxu0
  %v2280 = vpop.f32.mrb[0].mxu0
  %2281 = vdwg.mxu0
  %2282 = vmatprep.subr.bf16.mxu0 0
  %2283 = vmatpush1.bf16.msra.mxu0 %v1399
  %2284 = vmatprep.subr.bf16.mxu0 0
  %2285 = vmatpush1.bf16.msra.mxu0 %v1402
  %2286 = vmatprep.subr.bf16.mxu0 0
  %2287 = vmatpush1.bf16.msra.mxu0 %v1405
  %2288 = vmatprep.subr.bf16.mxu0 0
  %2289 = vmatpush1.bf16.msra.mxu0 %v1408
  %2290 = vmatprep.subr.bf16.mxu0 0
  %2291 = vmatpush1.bf16.msra.mxu0 %v1411
  %2292 = vmatprep.subr.bf16.mxu0 0
  %2293 = vmatpush1.bf16.msra.mxu0 %v1414
  %2294 = vmatprep.subr.bf16.mxu0 0
  %2295 = vmatpush1.bf16.msra.mxu0 %v1417
  %2296 = vmatprep.subr.bf16.mxu0 0
  %2297 = vmatpush1.bf16.msra.mxu0 %v1420
  %2298 = vmatprep.subr.bf16.mxu0 0
  %2299 = vmatpush1.bf16.msra.mxu0 %v1423
  %2300 = vmatprep.subr.bf16.mxu0 0
  %2301 = vmatpush1.bf16.msra.mxu0 %v1426
  %2302 = vmatprep.subr.bf16.mxu0 0
  %2303 = vmatpush1.bf16.msra.mxu0 %v1429
  %2304 = vmatprep.subr.bf16.mxu0 0
  %2305 = vmatpush1.bf16.msra.mxu0 %v1432
  %2306 = vmatprep.subr.bf16.mxu0 0
  %2307 = vmatpush1.bf16.msra.mxu0 %v1435
  %2308 = vmatprep.subr.bf16.mxu0 0
  %2309 = vmatpush1.bf16.msra.mxu0 %v1438
  %2310 = vmatprep.subr.bf16.mxu0 0
  %2311 = vmatpush1.bf16.msra.mxu0 %v1441
  %2312 = vmatprep.subr.bf16.mxu0 0
  %2313 = vmatpush1.bf16.msra.mxu0 %v1444
  %2314 = vmatprep.mubr.bf16.mxu0 %v496
  %2315 = vmatmul.mubr.bf16.gmra.mrb[0].mxu0 %v495
  %v2316 = vpop.f32.mrb[0].mxu0
  %v2317 = vadd.f32 %v2245, %v2316
  %v2318 = vpop.f32.mrb[0].mxu0
  %v2319 = vpop.f32.mrb[0].mxu0
  %v2320 = vadd.f32 %v2248, %v2319
  %v2321 = vpop.f32.mrb[0].mxu0
  %2322 = vmatprep.mubr.bf16.mxu0 %v505
  %2323 = vmatmul.mubr.bf16.gmra.mrb[0].mxu0 %v504
  %v2324 = vpop.f32.mrb[0].mxu0
  %v2325 = vadd.f32 %v2253, %v2324
  %v2326 = vpop.f32.mrb[0].mxu0
  %v2327 = vpop.f32.mrb[0].mxu0
  %v2328 = vadd.f32 %v2256, %v2327
  %v2329 = vpop.f32.mrb[0].mxu0
  %2330 = vmatprep.mubr.bf16.mxu0 %v514
  %2331 = vmatmul.mubr.bf16.gmra.mrb[0].mxu0 %v513
  %v2332 = vpop.f32.mrb[0].mxu0
  %v2333 = vadd.f32 %v2261, %v2332
  %v2334 = vpop.f32.mrb[0].mxu0
  %v2335 = vpop.f32.mrb[0].mxu0
  %v2336 = vadd.f32 %v2264, %v2335
  %v2337 = vpop.f32.mrb[0].mxu0
  %2338 = vmatprep.mubr.bf16.mxu0 %v523
  %2339 = vmatmul.mubr.bf16.gmra.mrb[0].mxu0 %v522
  %v2340 = vpop.f32.mrb[0].mxu0
  %v2341 = vadd.f32 %v2269, %v2340
  %v2342 = vpop.f32.mrb[0].mxu0
  %v2343 = vpop.f32.mrb[0].mxu0
  %v2344 = vadd.f32 %v2272, %v2343
  %v2345 = vpop.f32.mrb[0].mxu0
  %2346 = vmatprep.mubr.bf16.mxu0 %v532
  %2347 = vmatmul.mubr.bf16.gmra.mrb[0].mxu0 %v531
  %v2348 = vpop.f32.mrb[0].mxu0
  %v2349 = vadd.f32 %v2277, %v2348
  %v2350 = vpop.f32.mrb[0].mxu0
  %v2351 = vpop.f32.mrb[0].mxu0
  %v2352 = vpop.f32.mrb[0].mxu0
  %2353 = vdwg.mxu0
  %2354 = vmatprep.subr.bf16.mxu0 0
  %2355 = vmatpush1.bf16.msra.mxu0 %v1447
  %2356 = vmatprep.subr.bf16.mxu0 0
  %2357 = vmatpush1.bf16.msra.mxu0 %v1450
  %2358 = vmatprep.subr.bf16.mxu0 0
  %2359 = vmatpush1.bf16.msra.mxu0 %v1453
  %2360 = vmatprep.subr.bf16.mxu0 0
  %2361 = vmatpush1.bf16.msra.mxu0 %v1456
  %2362 = vmatprep.subr.bf16.mxu0 0
  %2363 = vmatpush1.bf16.msra.mxu0 %v1459
  %2364 = vmatprep.subr.bf16.mxu0 0
  %2365 = vmatpush1.bf16.msra.mxu0 %v1462
  %2366 = vmatprep.subr.bf16.mxu0 0
  %2367 = vmatpush1.bf16.msra.mxu0 %v1465
  %2368 = vmatprep.subr.bf16.mxu0 0
  %2369 = vmatpush1.bf16.msra.mxu0 %v1468
  %2370 = vmatprep.subr.bf16.mxu0 0
  %2371 = vmatpush1.bf16.msra.mxu0 %v1471
  %2372 = vmatprep.subr.bf16.mxu0 0
  %2373 = vmatpush1.bf16.msra.mxu0 %v1474
  %2374 = vmatprep.subr.bf16.mxu0 0
  %2375 = vmatpush1.bf16.msra.mxu0 %v1477
  %2376 = vmatprep.subr.bf16.mxu0 0
  %2377 = vmatpush1.bf16.msra.mxu0 %v1480
  %2378 = vmatprep.subr.bf16.mxu0 0
  %2379 = vmatpush1.bf16.msra.mxu0 %v1483
  %2380 = vmatprep.subr.bf16.mxu0 0
  %2381 = vmatpush1.bf16.msra.mxu0 %v1486
  %2382 = vmatprep.subr.bf16.mxu0 0
  %2383 = vmatpush1.bf16.msra.mxu0 %v1489
  %2384 = vmatprep.subr.bf16.mxu0 0
  %2385 = vmatpush1.bf16.msra.mxu0 %v1492
  %2386 = vmatprep.mubr.bf16.mxu0 %v498
  %2387 = vmatmul.mubr.bf16.gmra.mrb[0].mxu0 %v497
  %v2388 = vpop.f32.mrb[0].mxu0
  %v2389 = vadd.f32 %v2317, %v2388
  %v2390 = vpop.f32.mrb[0].mxu0
  %v2391 = vpop.f32.mrb[0].mxu0
  %v2392 = vadd.f32 %v2320, %v2391
  %v2393 = vpop.f32.mrb[0].mxu0
  %2394 = vmatprep.mubr.bf16.mxu0 %v507
  %2395 = vmatmul.mubr.bf16.gmra.mrb[0].mxu0 %v506
  %v2396 = vpop.f32.mrb[0].mxu0
  %v2397 = vadd.f32 %v2325, %v2396
  %v2398 = vpop.f32.mrb[0].mxu0
  %v2399 = vpop.f32.mrb[0].mxu0
  %v2400 = vadd.f32 %v2328, %v2399
  %v2401 = vpop.f32.mrb[0].mxu0
  %2402 = vmatprep.mubr.bf16.mxu0 %v516
  %2403 = vmatmul.mubr.bf16.gmra.mrb[0].mxu0 %v515
  %v2404 = vpop.f32.mrb[0].mxu0
  %v2405 = vadd.f32 %v2333, %v2404
  %v2406 = vpop.f32.mrb[0].mxu0
  %v2407 = vpop.f32.mrb[0].mxu0
  %v2408 = vadd.f32 %v2336, %v2407
  %v2409 = vpop.f32.mrb[0].mxu0
  %2410 = vmatprep.mubr.bf16.mxu0 %v525
  %2411 = vmatmul.mubr.bf16.gmra.mrb[0].mxu0 %v524
  %v2412 = vpop.f32.mrb[0].mxu0
  %v2413 = vadd.f32 %v2341, %v2412
  %v2414 = vpop.f32.mrb[0].mxu0
  %v2415 = vpop.f32.mrb[0].mxu0
  %v2416 = vadd.f32 %v2344, %v2415
  %v2417 = vpop.f32.mrb[0].mxu0
  %2418 = vmatprep.mubr.bf16.mxu0 %v534
  %2419 = vmatmul.mubr.bf16.gmra.mrb[0].mxu0 %v533
  %v2420 = vpop.f32.mrb[0].mxu0
  %v2421 = vadd.f32 %v2349, %v2420
  %v2422 = vpop.f32.mrb[0].mxu0
  %v2423 = vpop.f32.mrb[0].mxu0
  %v2424 = vpop.f32.mrb[0].mxu0
  %2425 = vdwg.mxu0
  %2426 = vmatprep.subr.bf16.mxu0 0
  %2427 = vmatpush1.bf16.msra.mxu0 %v1495
  %2428 = vmatprep.subr.bf16.mxu0 0
  %2429 = vmatpush1.bf16.msra.mxu0 %v1498
  %2430 = vmatprep.subr.bf16.mxu0 0
  %2431 = vmatpush1.bf16.msra.mxu0 %v1501
  %2432 = vmatprep.subr.bf16.mxu0 0
  %2433 = vmatpush1.bf16.msra.mxu0 %v1504
  %2434 = vmatprep.subr.bf16.mxu0 0
  %2435 = vmatpush1.bf16.msra.mxu0 %v1507
  %2436 = vmatprep.subr.bf16.mxu0 0
  %2437 = vmatpush1.bf16.msra.mxu0 %v1510
  %2438 = vmatprep.subr.bf16.mxu0 0
  %2439 = vmatpush1.bf16.msra.mxu0 %v1513
  %2440 = vmatprep.subr.bf16.mxu0 0
  %2441 = vmatpush1.bf16.msra.mxu0 %v1516
  %2442 = vmatprep.subr.bf16.mxu0 0
  %2443 = vmatpush1.bf16.msra.mxu0 0
  %2444 = vmatprep.subr.bf16.mxu0 0
  %2445 = vmatpush1.bf16.msra.mxu0 0
  %2446 = vmatprep.subr.bf16.mxu0 0
  %2447 = vmatpush1.bf16.msra.mxu0 0
  %2448 = vmatprep.subr.bf16.mxu0 0
  %2449 = vmatpush1.bf16.msra.mxu0 0
  %2450 = vmatprep.subr.bf16.mxu0 0
  %2451 = vmatpush1.bf16.msra.mxu0 0
  %2452 = vmatprep.subr.bf16.mxu0 0
  %2453 = vmatpush1.bf16.msra.mxu0 0
  %2454 = vmatprep.subr.bf16.mxu0 0
  %2455 = vmatpush1.bf16.msra.mxu0 0
  %2456 = vmatprep.subr.bf16.mxu0 0
  %2457 = vmatpush1.bf16.msra.mxu0 0
  %2458 = vmatprep.mubr.bf16.mxu0 0
  %2459 = vmatmul.mubr.bf16.gmra.mrb[0].mxu0 %v499
  %v2460 = vpop.f32.mrb[0].mxu0
  %v2461 = vadd.f32 %v2389, %v2460
  %v2462 = vpop.f32.mrb[0].mxu0
  %v2463 = vpop.f32.mrb[0].mxu0
  %v2464 = vadd.f32 %v2392, %v2463
  %v2465 = vpop.f32.mrb[0].mxu0
  %2466 = vmatprep.mubr.bf16.mxu0 0
  %2467 = vmatmul.mubr.bf16.gmra.mrb[0].mxu0 %v508
  %v2468 = vpop.f32.mrb[0].mxu0
  %v2469 = vadd.f32 %v2397, %v2468
  %v2470 = vpop.f32.mrb[0].mxu0
  %v2471 = vpop.f32.mrb[0].mxu0
  %v2472 = vadd.f32 %v2400, %v2471
  %v2473 = vpop.f32.mrb[0].mxu0
  %2474 = vmatprep.mubr.bf16.mxu0 0
  %2475 = vmatmul.mubr.bf16.gmra.mrb[0].mxu0 %v517
  %v2476 = vpop.f32.mrb[0].mxu0
  %v2477 = vadd.f32 %v2405, %v2476
  %v2478 = vpop.f32.mrb[0].mxu0
  %v2479 = vpop.f32.mrb[0].mxu0
  %v2480 = vadd.f32 %v2408, %v2479
  %v2481 = vpop.f32.mrb[0].mxu0
  %2482 = vmatprep.mubr.bf16.mxu0 0
  %2483 = vmatmul.mubr.bf16.gmra.mrb[0].mxu0 %v526
  %v2484 = vpop.f32.mrb[0].mxu0
  %v2485 = vadd.f32 %v2413, %v2484
  %v2486 = vpop.f32.mrb[0].mxu0
  %v2487 = vpop.f32.mrb[0].mxu0
  %v2488 = vadd.f32 %v2416, %v2487
  %v2489 = vpop.f32.mrb[0].mxu0
  %2490 = vmatprep.mubr.bf16.mxu0 0
  %2491 = vmatmul.mubr.bf16.gmra.mrb[0].mxu0 %v535
  %v2492 = vpop.f32.mrb[0].mxu0
  %v2493 = vadd.f32 %v2421, %v2492
  %v2494 = vpop.f32.mrb[0].mxu0
  %v2495 = vpop.f32.mrb[0].mxu0
  %v2496 = vpop.f32.mrb[0].mxu0
  %2497 = vdwg.mxu0
  %v2498 = vmax.f32 %v2092, 0.0
  %v2499 = vmax.f32 %v2094, 0.0
  %v2500 = vmax.f32 %v2461, 0.0
  %v2501 = vmax.f32 %v2096, 0.0
  %v2502 = vmax.f32 %v2098, 0.0
  %v2503 = vmax.f32 %v2464, 0.0
  %v2504 = vmax.f32 %v2102, 0.0
  %v2505 = vmax.f32 %v2104, 0.0
  %v2506 = vmax.f32 %v2469, 0.0
  %v2507 = vmax.f32 %v2106, 0.0
  %v2508 = vmax.f32 %v2108, 0.0
  %v2509 = vmax.f32 %v2472, 0.0
  %v2510 = vmax.f32 %v2112, 0.0
  %v2511 = vmax.f32 %v2114, 0.0
  %v2512 = vmax.f32 %v2477, 0.0
  %v2513 = vmax.f32 %v2116, 0.0
  %v2514 = vmax.f32 %v2118, 0.0
  %v2515 = vmax.f32 %v2480, 0.0
  %v2516 = vmax.f32 %v2122, 0.0
  %v2517 = vmax.f32 %v2124, 0.0
  %v2518 = vmax.f32 %v2485, 0.0
  %v2519 = vmax.f32 %v2126, 0.0
  %v2520 = vmax.f32 %v2128, 0.0
  %v2521 = vmax.f32 %v2488, 0.0
  %v2522 = vmax.f32 %v2132, 0.0
  %v2523 = vmax.f32 %v2134, 0.0
  %v2524 = vmax.f32 %v2493, 0.0
  %v2525 = vpack.c.bf16 %v2501, %v2498
  %v2526 = vpack.c.bf16 %v2502, %v2499
  %v2527 = vpack.c.bf16 %v2503, %v2500
  %v2528 = vpack.c.bf16 %v2507, %v2504
  %v2529 = vpack.c.bf16 %v2508, %v2505
  %v2530 = vpack.c.bf16 %v2509, %v2506
  %v2531 = vpack.c.bf16 %v2513, %v2510
  %v2532 = vpack.c.bf16 %v2514, %v2511
  %v2533 = vpack.c.bf16 %v2515, %v2512
  %v2534 = vpack.c.bf16 %v2519, %v2516
  %v2535 = vpack.c.bf16 %v2520, %v2517
  %v2536 = vpack.c.bf16 %v2521, %v2518
  %v2537 = vpack.c.bf16 %v2522, %v2522
  %v2538 = vpack.c.bf16 %v2523, %v2523
  %v2539 = vpack.c.bf16 %v2524, %v2524
  %v2555 = vunpack.c.l.b16 %v2525
  %v2556 = vunpack.c.l.b16 %v2526
  %v2557 = vunpack.c.l.b16 %v2527
  %v2558 = vunpack.c.h.b16 %v2525
  %v2559 = vunpack.c.h.b16 %v2526
  %v2560 = vunpack.c.h.b16 %v2527
  %v2561 = vunpack.c.l.b16 %v2528
  %v2562 = vunpack.c.l.b16 %v2529
  %v2563 = vunpack.c.l.b16 %v2530
  %v2564 = vunpack.c.h.b16 %v2528
  %v2565 = vunpack.c.h.b16 %v2529
  %v2566 = vunpack.c.h.b16 %v2530
  %v2567 = vunpack.c.l.b16 %v2531
  %v2568 = vunpack.c.l.b16 %v2532
  %v2569 = vunpack.c.l.b16 %v2533
  %v2570 = vunpack.c.h.b16 %v2531
  %v2571 = vunpack.c.h.b16 %v2532
  %v2572 = vunpack.c.h.b16 %v2533
  %v2573 = vunpack.c.l.b16 %v2534
  %v2574 = vunpack.c.l.b16 %v2535
  %v2575 = vunpack.c.l.b16 %v2536
  %v2576 = vunpack.c.h.b16 %v2534
  %v2577 = vunpack.c.h.b16 %v2535
  %v2578 = vunpack.c.h.b16 %v2536
  %v2579 = vunpack.c.l.b16 %v2537
  %v2580 = vunpack.c.l.b16 %v2538
  %v2581 = vunpack.c.l.b16 %v2539
  %v2582 = vpack.c.b16 %v2556, %v2555
  %v2583 = vpack.c.b16 %v2557, %v2557
  %v2584 = vpack.c.b16 %v2559, %v2558
  %v2585 = vpack.c.b16 %v2560, %v2560
  %v2586 = vpack.c.b16 %v2562, %v2561
  %v2587 = vpack.c.b16 %v2563, %v2563
  %v2588 = vpack.c.b16 %v2565, %v2564
  %v2589 = vpack.c.b16 %v2566, %v2566
  %v2590 = vpack.c.b16 %v2568, %v2567
  %v2591 = vpack.c.b16 %v2569, %v2569
  %v2592 = vpack.c.b16 %v2571, %v2570
  %v2593 = vpack.c.b16 %v2572, %v2572
  %v2594 = vpack.c.b16 %v2574, %v2573
  %v2595 = vpack.c.b16 %v2575, %v2575
  %v2596 = vpack.c.b16 %v2577, %v2576
  %v2597 = vpack.c.b16 %v2578, %v2578
  %v2598 = vpack.c.b16 %v2580, %v2579
  %v2599 = vpack.c.b16 %v2581, %v2581
  %2618 = vst [vmem:[%s3] sm:$0xff] %v2582
  %2619 = vst [vmem:[%s3 + $0x8] sm:$0xf] %v2583
  %2620 = vst [vmem:[%s3 + $0xc] sm:$0xff] %v2584
  %2621 = vst [vmem:[%s3 + $0x14] sm:$0xf] %v2585
  %2622 = vst [vmem:[%s3 + $0x18] sm:$0xff] %v2586
  %2623 = vst [vmem:[%s3 + $0x20] sm:$0xf] %v2587
  %2624 = vst [vmem:[%s3 + $0x24] sm:$0xff] %v2588
  %2625 = vst [vmem:[%s3 + $0x2c] sm:$0xf] %v2589
  %2626 = vst [vmem:[%s3 + $0x30] sm:$0xff] %v2590
  %2627 = vst [vmem:[%s3 + $0x38] sm:$0xf] %v2591
  %2628 = vst [vmem:[%s3 + $0x3c] sm:$0xff] %v2592
  %2629 = vst [vmem:[%s3 + $0x44] sm:$0xf] %v2593
  %2630 = vst [vmem:[%s3 + $0x48] sm:$0xff] %v2594
  %2631 = vst [vmem:[%s3 + $0x50] sm:$0xf] %v2595
  %2632 = vst [vmem:[%s3 + $0x54] sm:$0xff] %v2596
  %2633 = vst [vmem:[%s3 + $0x5c] sm:$0xf] %v2597
  %2634 = vst [vmem:[%s3 + $0x60] sm:$0xff] %v2598
  %2635 = vst [vmem:[%s3 + $0x68] sm:$0xf] %v2599
  // Predicated region
  $region14: #{sparse_autoencoder_forward.7} parent=0 // pred_check
    _
  $region15: #{sparse_autoencoder_forward.7} parent=0 // pred_check_branch
    %2637 = sbr.rel (0) target = $region17
  $region16: #{sparse_autoencoder_forward.7} parent=0 // pred_region
    _
  $region17: #{sparse_autoencoder_forward.7} parent=0 // pred_fallthru
    _
  // Predicated region
  $region18: #{sparse_autoencoder_forward.7} parent=0 // pred_check
    _
  $region19: #{sparse_autoencoder_forward.7} parent=0 // pred_check_branch
    %2639 = sbr.rel (0) target = $region21
  $region20: #{sparse_autoencoder_forward.7} parent=0 // pred_region
    _
  $region21: #{sparse_autoencoder_forward.7} parent=0 // pred_fallthru
    _

// kernel: sparse_autoencoder_forward.8
$region0: #{sparse_autoencoder_forward.8}
  #allocation0 [shape = 'u32[]', space=smem, size = 0x4, offset = 0x4, fixed_abs, tag = 'smem constant byte address 0x4 - core index']
  #allocation1 [shape = 'u32[144,128]{1,0:T(1,128)}', space=vmem, size = 0x12000, scoped, tag = 'internal scratch']
  %s0 = inlined_call_operand.vmem [shape: bf16[32,3456], index: 0, kind: input, shape index: {}]
  %s1 = inlined_call_operand.vmem [shape: bf16[3456,128], index: 1, kind: input, shape index: {}]
  %s2 = inlined_call_operand.vmem [shape: f32[1,128], index: 2, kind: input, shape index: {}]
  %s3 = inlined_call_operand.vmem [shape: bf16[32,128], index: 3, kind: output, shape index: {}]
  %s4 = sld [smem:[#allocation0]]
  $region22: #{sparse_autoencoder_forward.8} parent=0
    _
  %s6 = ssub.s32 1, %s4
  %s7 = scalar_select 0, %s6, %s4
  // Predicated region
  $region2: #{sparse_autoencoder_forward.8} parent=0 // pred_check
    _
  $region3: #{sparse_autoencoder_forward.8} parent=0 // pred_check_branch
    %9 = sbr.rel (0) target = $region5
  $region4: #{sparse_autoencoder_forward.8} parent=0 // pred_region
    _
  $region5: #{sparse_autoencoder_forward.8} parent=0 // pred_fallthru
    _
  // Predicated region
  $region6: #{sparse_autoencoder_forward.8} parent=0 // pred_check
    _
  $region7: #{sparse_autoencoder_forward.8} parent=0 // pred_check_branch
    %11 = sbr.rel (0) target = $region9
  $region8: #{sparse_autoencoder_forward.8} parent=0 // pred_region
    _
  $region9: #{sparse_autoencoder_forward.8} parent=0 // pred_fallthru
    _
  // Predicated region
  $region10: #{sparse_autoencoder_forward.8} parent=0 // pred_check
    _
  $region11: #{sparse_autoencoder_forward.8} parent=0 // pred_check_branch
    %13 = sbr.rel (0) target = $region13
  $region12: #{sparse_autoencoder_forward.8} parent=0 // pred_region
    _
  $region13: #{sparse_autoencoder_forward.8} parent=0 // pred_fallthru
    _
  %v15 = vld [vmem:[%s0] sm:$0xff]
  %v16 = vld [vmem:[%s0 + $0x8] sm:$0xff]
  %v17 = vld [vmem:[%s0 + $0x10] sm:$0xff]
  %v18 = vld [vmem:[%s0 + $0x18] sm:$0xff]
  %v19 = vld [vmem:[%s0 + $0x20] sm:$0xff]
  %v20 = vld [vmem:[%s0 + $0x28] sm:$0xff]
  %v21 = vld [vmem:[%s0 + $0x30] sm:$0xff]
  %v22 = vld [vmem:[%s0 + $0x38] sm:$0xff]
  %v23 = vld [vmem:[%s0 + $0x40] sm:$0xff]
  %v24 = vld [vmem:[%s0 + $0x48] sm:$0xff]
  %v25 = vld [vmem:[%s0 + $0x50] sm:$0xff]
  %v26 = vld [vmem:[%s0 + $0x58] sm:$0xff]
  %v27 = vld [vmem:[%s0 + $0x60] sm:$0xff]
  %v28 = vld [vmem:[%s0 + $0x68] sm:$0xf]
  %v29 = vld [vmem:[%s0 + $0x6c] sm:$0xff]
  %v30 = vld [vmem:[%s0 + $0x74] sm:$0xff]
  %v31 = vld [vmem:[%s0 + $0x7c] sm:$0xff]
  %v32 = vld [vmem:[%s0 + $0x84] sm:$0xff]
  %v33 = vld [vmem:[%s0 + $0x8c] sm:$0xff]
  %v34 = vld [vmem:[%s0 + $0x94] sm:$0xff]
  %v35 = vld [vmem:[%s0 + $0x9c] sm:$0xff]
  %v36 = vld [vmem:[%s0 + $0xa4] sm:$0xff]
  %v37 = vld [vmem:[%s0 + $0xac] sm:$0xff]
  %v38 = vld [vmem:[%s0 + $0xb4] sm:$0xff]
  %v39 = vld [vmem:[%s0 + $0xbc] sm:$0xff]
  %v40 = vld [vmem:[%s0 + $0xc4] sm:$0xff]
  %v41 = vld [vmem:[%s0 + $0xcc] sm:$0xff]
  %v42 = vld [vmem:[%s0 + $0xd4] sm:$0xf]
  %v43 = vld [vmem:[%s0 + $0xd8] sm:$0xff]
  %v44 = vld [vmem:[%s0 + $0xe0] sm:$0xff]
  %v45 = vld [vmem:[%s0 + $0xe8] sm:$0xff]
  %v46 = vld [vmem:[%s0 + $0xf0] sm:$0xff]
  %v47 = vld [vmem:[%s0 + $0xf8] sm:$0xff]
  %v48 = vld [vmem:[%s0 + $0x100] sm:$0xff]
  %v49 = vld [vmem:[%s0 + $0x108] sm:$0xff]
  %v50 = vld [vmem:[%s0 + $0x110] sm:$0xff]
  %v51 = vld [vmem:[%s0 + $0x118] sm:$0xff]
  %v52 = vld [vmem:[%s0 + $0x120] sm:$0xff]
  %v53 = vld [vmem:[%s0 + $0x128] sm:$0xff]
  %v54 = vld [vmem:[%s0 + $0x130] sm:$0xff]
  %v55 = vld [vmem:[%s0 + $0x138] sm:$0xff]
  %v56 = vld [vmem:[%s0 + $0x140] sm:$0xf]
  %v57 = vld [vmem:[%s0 + $0x144] sm:$0xff]
  %v58 = vld [vmem:[%s0 + $0x14c] sm:$0xff]
  %v59 = vld [vmem:[%s0 + $0x154] sm:$0xff]
  %v60 = vld [vmem:[%s0 + $0x15c] sm:$0xff]
  %v61 = vld [vmem:[%s0 + $0x164] sm:$0xff]
  %v62 = vld [vmem:[%s0 + $0x16c] sm:$0xff]
  %v63 = vld [vmem:[%s0 + $0x174] sm:$0xff]
  %v64 = vld [vmem:[%s0 + $0x17c] sm:$0xff]
  %v65 = vld [vmem:[%s0 + $0x184] sm:$0xff]
  %v66 = vld [vmem:[%s0 + $0x18c] sm:$0xff]
  %v67 = vld [vmem:[%s0 + $0x194] sm:$0xff]
  %v68 = vld [vmem:[%s0 + $0x19c] sm:$0xff]
  %v69 = vld [vmem:[%s0 + $0x1a4] sm:$0xff]
  %v70 = vld [vmem:[%s0 + $0x1ac] sm:$0xf]
  %v71 = vld [vmem:[%s1] sm:$0xf]
  %v72 = vld [vmem:[%s1 + $0x4] sm:$0xf]
  %v73 = vld [vmem:[%s1 + $0x8] sm:$0xf]
  %v74 = vld [vmem:[%s1 + $0xc] sm:$0xf]
  %v75 = vld [vmem:[%s1 + $0x10] sm:$0xf]
  %v76 = vld [vmem:[%s1 + $0x14] sm:$0xf]
  %v77 = vld [vmem:[%s1 + $0x18] sm:$0xf]
  %v78 = vld [vmem:[%s1 + $0x1c] sm:$0xf]
  %v79 = vld [vmem:[%s1 + $0x20] sm:$0xf]
  %v80 = vld [vmem:[%s1 + $0x24] sm:$0xf]
  %v81 = vld [vmem:[%s1 + $0x28] sm:$0xf]
  %v82 = vld [vmem:[%s1 + $0x2c] sm:$0xf]
  %v83 = vld [vmem:[%s1 + $0x30] sm:$0xf]
  %v84 = vld [vmem:[%s1 + $0x34] sm:$0xf]
  %v85 = vld [vmem:[%s1 + $0x38] sm:$0xf]
  %v86 = vld [vmem:[%s1 + $0x3c] sm:$0xf]
  %v87 = vld [vmem:[%s1 + $0x40] sm:$0xf]
  %v88 = vld [vmem:[%s1 + $0x44] sm:$0xf]
  %v89 = vld [vmem:[%s1 + $0x48] sm:$0xf]
  %v90 = vld [vmem:[%s1 + $0x4c] sm:$0xf]
  %v91 = vld [vmem:[%s1 + $0x50] sm:$0xf]
  %v92 = vld [vmem:[%s1 + $0x54] sm:$0xf]
  %v93 = vld [vmem:[%s1 + $0x58] sm:$0xf]
  %v94 = vld [vmem:[%s1 + $0x5c] sm:$0xf]
  %v95 = vld [vmem:[%s1 + $0x60] sm:$0xf]
  %v96 = vld [vmem:[%s1 + $0x64] sm:$0xf]
  %v97 = vld [vmem:[%s1 + $0x68] sm:$0xf]
  %v98 = vld [vmem:[%s1 + $0x6c] sm:$0xf]
  %v99 = vld [vmem:[%s1 + $0x70] sm:$0xf]
  %v100 = vld [vmem:[%s1 + $0x74] sm:$0xf]
  %v101 = vld [vmem:[%s1 + $0x78] sm:$0xf]
  %v102 = vld [vmem:[%s1 + $0x7c] sm:$0xf]
  %v103 = vld [vmem:[%s1 + $0x80] sm:$0xf]
  %v104 = vld [vmem:[%s1 + $0x84] sm:$0xf]
  %v105 = vld [vmem:[%s1 + $0x88] sm:$0xf]
  %v106 = vld [vmem:[%s1 + $0x8c] sm:$0xf]
  %v107 = vld [vmem:[%s1 + $0x90] sm:$0xf]
  %v108 = vld [vmem:[%s1 + $0x94] sm:$0xf]
  %v109 = vld [vmem:[%s1 + $0x98] sm:$0xf]
  %v110 = vld [vmem:[%s1 + $0x9c] sm:$0xf]
  %v111 = vld [vmem:[%s1 + $0xa0] sm:$0xf]
  %v112 = vld [vmem:[%s1 + $0xa4] sm:$0xf]
  %v113 = vld [vmem:[%s1 + $0xa8] sm:$0xf]
  %v114 = vld [vmem:[%s1 + $0xac] sm:$0xf]
  %v115 = vld [vmem:[%s1 + $0xb0] sm:$0xf]
  %v116 = vld [vmem:[%s1 + $0xb4] sm:$0xf]
  %v117 = vld [vmem:[%s1 + $0xb8] sm:$0xf]
  %v118 = vld [vmem:[%s1 + $0xbc] sm:$0xf]
  %v119 = vld [vmem:[%s1 + $0xc0] sm:$0xf]
  %v120 = vld [vmem:[%s1 + $0xc4] sm:$0xf]
  %v121 = vld [vmem:[%s1 + $0xc8] sm:$0xf]
  %v122 = vld [vmem:[%s1 + $0xcc] sm:$0xf]
  %v123 = vld [vmem:[%s1 + $0xd0] sm:$0xf]
  %v124 = vld [vmem:[%s1 + $0xd4] sm:$0xf]
  %v125 = vld [vmem:[%s1 + $0xd8] sm:$0xf]
  %v126 = vld [vmem:[%s1 + $0xdc] sm:$0xf]
  %v127 = vld [vmem:[%s1 + $0xe0] sm:$0xf]
  %v128 = vld [vmem:[%s1 + $0xe4] sm:$0xf]
  %v129 = vld [vmem:[%s1 + $0xe8] sm:$0xf]
  %v130 = vld [vmem:[%s1 + $0xec] sm:$0xf]
  %v131 = vld [vmem:[%s1 + $0xf0] sm:$0xf]
  %v132 = vld [vmem:[%s1 + $0xf4] sm:$0xf]
  %v133 = vld [vmem:[%s1 + $0xf8] sm:$0xf]
  %v134 = vld [vmem:[%s1 + $0xfc] sm:$0xf]
  %v135 = vld [vmem:[%s1 + $0x100] sm:$0xf]
  %v136 = vld [vmem:[%s1 + $0x104] sm:$0xf]
  %v137 = vld [vmem:[%s1 + $0x108] sm:$0xf]
  %v138 = vld [vmem:[%s1 + $0x10c] sm:$0xf]
  %v139 = vld [vmem:[%s1 + $0x110] sm:$0xf]
  %v140 = vld [vmem:[%s1 + $0x114] sm:$0xf]
  %v141 = vld [vmem:[%s1 + $0x118] sm:$0xf]
  %v142 = vld [vmem:[%s1 + $0x11c] sm:$0xf]
  %v143 = vld [vmem:[%s1 + $0x120] sm:$0xf]
  %v144 = vld [vmem:[%s1 + $0x124] sm:$0xf]
  %v145 = vld [vmem:[%s1 + $0x128] sm:$0xf]
  %v146 = vld [vmem:[%s1 + $0x12c] sm:$0xf]
  %v147 = vld [vmem:[%s1 + $0x130] sm:$0xf]
  %v148 = vld [vmem:[%s1 + $0x134] sm:$0xf]
  %v149 = vld [vmem:[%s1 + $0x138] sm:$0xf]
  %v150 = vld [vmem:[%s1 + $0x13c] sm:$0xf]
  %v151 = vld [vmem:[%s1 + $0x140] sm:$0xf]
  %v152 = vld [vmem:[%s1 + $0x144] sm:$0xf]
  %v153 = vld [vmem:[%s1 + $0x148] sm:$0xf]
  %v154 = vld [vmem:[%s1 + $0x14c] sm:$0xf]
  %v155 = vld [vmem:[%s1 + $0x150] sm:$0xf]
  %v156 = vld [vmem:[%s1 + $0x154] sm:$0xf]
  %v157 = vld [vmem:[%s1 + $0x158] sm:$0xf]
  %v158 = vld [vmem:[%s1 + $0x15c] sm:$0xf]
  %v159 = vld [vmem:[%s1 + $0x160] sm:$0xf]
  %v160 = vld [vmem:[%s1 + $0x164] sm:$0xf]
  %v161 = vld [vmem:[%s1 + $0x168] sm:$0xf]
  %v162 = vld [vmem:[%s1 + $0x16c] sm:$0xf]
  %v163 = vld [vmem:[%s1 + $0x170] sm:$0xf]
  %v164 = vld [vmem:[%s1 + $0x174] sm:$0xf]
  %v165 = vld [vmem:[%s1 + $0x178] sm:$0xf]
  %v166 = vld [vmem:[%s1 + $0x17c] sm:$0xf]
  %v167 = vld [vmem:[%s1 + $0x180] sm:$0xf]
  %v168 = vld [vmem:[%s1 + $0x184] sm:$0xf]
  %v169 = vld [vmem:[%s1 + $0x188] sm:$0xf]
  %v170 = vld [vmem:[%s1 + $0x18c] sm:$0xf]
  %v171 = vld [vmem:[%s1 + $0x190] sm:$0xf]
  %v172 = vld [vmem:[%s1 + $0x194] sm:$0xf]
  %v173 = vld [vmem:[%s1 + $0x198] sm:$0xf]
  %v174 = vld [vmem:[%s1 + $0x19c] sm:$0xf]
  %v175 = vld [vmem:[%s1 + $0x1a0] sm:$0xf]
  %v176 = vld [vmem:[%s1 + $0x1a4] sm:$0xf]
  %v177 = vld [vmem:[%s1 + $0x1a8] sm:$0xf]
  %v178 = vld [vmem:[%s1 + $0x1ac] sm:$0xf]
  %v179 = vld [vmem:[%s1 + $0x1b0] sm:$0xf]
  %v180 = vld [vmem:[%s1 + $0x1b4] sm:$0xf]
  %v181 = vld [vmem:[%s1 + $0x1b8] sm:$0xf]
  %v182 = vld [vmem:[%s1 + $0x1bc] sm:$0xf]
  %v183 = vld [vmem:[%s1 + $0x1c0] sm:$0xf]
  %v184 = vld [vmem:[%s1 + $0x1c4] sm:$0xf]
  %v185 = vld [vmem:[%s1 + $0x1c8] sm:$0xf]
  %v186 = vld [vmem:[%s1 + $0x1cc] sm:$0xf]
  %v187 = vld [vmem:[%s1 + $0x1d0] sm:$0xf]
  %v188 = vld [vmem:[%s1 + $0x1d4] sm:$0xf]
  %v189 = vld [vmem:[%s1 + $0x1d8] sm:$0xf]
  %v190 = vld [vmem:[%s1 + $0x1dc] sm:$0xf]
  %v191 = vld [vmem:[%s1 + $0x1e0] sm:$0xf]
  %v192 = vld [vmem:[%s1 + $0x1e4] sm:$0xf]
  %v193 = vld [vmem:[%s1 + $0x1e8] sm:$0xf]
  %v194 = vld [vmem:[%s1 + $0x1ec] sm:$0xf]
  %v195 = vld [vmem:[%s1 + $0x1f0] sm:$0xf]
  %v196 = vld [vmem:[%s1 + $0x1f4] sm:$0xf]
  %v197 = vld [vmem:[%s1 + $0x1f8] sm:$0xf]
  %v198 = vld [vmem:[%s1 + $0x1fc] sm:$0xf]
  %v199 = vld [vmem:[%s1 + $0x200] sm:$0xf]
  %v200 = vld [vmem:[%s1 + $0x204] sm:$0xf]
  %v201 = vld [vmem:[%s1 + $0x208] sm:$0xf]
  %v202 = vld [vmem:[%s1 + $0x20c] sm:$0xf]
  %v203 = vld [vmem:[%s1 + $0x210] sm:$0xf]
  %v204 = vld [vmem:[%s1 + $0x214] sm:$0xf]
  %v205 = vld [vmem:[%s1 + $0x218] sm:$0xf]
  %v206 = vld [vmem:[%s1 + $0x21c] sm:$0xf]
  %v207 = vld [vmem:[%s1 + $0x220] sm:$0xf]
  %v208 = vld [vmem:[%s1 + $0x224] sm:$0xf]
  %v209 = vld [vmem:[%s1 + $0x228] sm:$0xf]
  %v210 = vld [vmem:[%s1 + $0x22c] sm:$0xf]
  %v211 = vld [vmem:[%s1 + $0x230] sm:$0xf]
  %v212 = vld [vmem:[%s1 + $0x234] sm:$0xf]
  %v213 = vld [vmem:[%s1 + $0x238] sm:$0xf]
  %v214 = vld [vmem:[%s1 + $0x23c] sm:$0xf]
  %v215 = vld [vmem:[%s1 + $0x240] sm:$0xf]
  %v216 = vld [vmem:[%s1 + $0x244] sm:$0xf]
  %v217 = vld [vmem:[%s1 + $0x248] sm:$0xf]
  %v218 = vld [vmem:[%s1 + $0x24c] sm:$0xf]
  %v219 = vld [vmem:[%s1 + $0x250] sm:$0xf]
  %v220 = vld [vmem:[%s1 + $0x254] sm:$0xf]
  %v221 = vld [vmem:[%s1 + $0x258] sm:$0xf]
  %v222 = vld [vmem:[%s1 + $0x25c] sm:$0xf]
  %v223 = vld [vmem:[%s1 + $0x260] sm:$0xf]
  %v224 = vld [vmem:[%s1 + $0x264] sm:$0xf]
  %v225 = vld [vmem:[%s1 + $0x268] sm:$0xf]
  %v226 = vld [vmem:[%s1 + $0x26c] sm:$0xf]
  %v227 = vld [vmem:[%s1 + $0x270] sm:$0xf]
  %v228 = vld [vmem:[%s1 + $0x274] sm:$0xf]
  %v229 = vld [vmem:[%s1 + $0x278] sm:$0xf]
  %v230 = vld [vmem:[%s1 + $0x27c] sm:$0xf]
  %v231 = vld [vmem:[%s1 + $0x280] sm:$0xf]
  %v232 = vld [vmem:[%s1 + $0x284] sm:$0xf]
  %v233 = vld [vmem:[%s1 + $0x288] sm:$0xf]
  %v234 = vld [vmem:[%s1 + $0x28c] sm:$0xf]
  %v235 = vld [vmem:[%s1 + $0x290] sm:$0xf]
  %v236 = vld [vmem:[%s1 + $0x294] sm:$0xf]
  %v237 = vld [vmem:[%s1 + $0x298] sm:$0xf]
  %v238 = vld [vmem:[%s1 + $0x29c] sm:$0xf]
  %v239 = vld [vmem:[%s1 + $0x2a0] sm:$0xf]
  %v240 = vld [vmem:[%s1 + $0x2a4] sm:$0xf]
  %v241 = vld [vmem:[%s1 + $0x2a8] sm:$0xf]
  %v242 = vld [vmem:[%s1 + $0x2ac] sm:$0xf]
  %v243 = vld [vmem:[%s1 + $0x2b0] sm:$0xf]
  %v244 = vld [vmem:[%s1 + $0x2b4] sm:$0xf]
  %v245 = vld [vmem:[%s1 + $0x2b8] sm:$0xf]
  %v246 = vld [vmem:[%s1 + $0x2bc] sm:$0xf]
  %v247 = vld [vmem:[%s1 + $0x2c0] sm:$0xf]
  %v248 = vld [vmem:[%s1 + $0x2c4] sm:$0xf]
  %v249 = vld [vmem:[%s1 + $0x2c8] sm:$0xf]
  %v250 = vld [vmem:[%s1 + $0x2cc] sm:$0xf]
  %v251 = vld [vmem:[%s1 + $0x2d0] sm:$0xf]
  %v252 = vld [vmem:[%s1 + $0x2d4] sm:$0xf]
  %v253 = vld [vmem:[%s1 + $0x2d8] sm:$0xf]
  %v254 = vld [vmem:[%s1 + $0x2dc] sm:$0xf]
  %v255 = vld [vmem:[%s1 + $0x2e0] sm:$0xf]
  %v256 = vld [vmem:[%s1 + $0x2e4] sm:$0xf]
  %v257 = vld [vmem:[%s1 + $0x2e8] sm:$0xf]
  %v258 = vld [vmem:[%s1 + $0x2ec] sm:$0xf]
  %v259 = vld [vmem:[%s1 + $0x2f0] sm:$0xf]
  %v260 = vld [vmem:[%s1 + $0x2f4] sm:$0xf]
  %v261 = vld [vmem:[%s1 + $0x2f8] sm:$0xf]
  %v262 = vld [vmem:[%s1 + $0x2fc] sm:$0xf]
  %v263 = vld [vmem:[%s1 + $0x300] sm:$0xf]
  %v264 = vld [vmem:[%s1 + $0x304] sm:$0xf]
  %v265 = vld [vmem:[%s1 + $0x308] sm:$0xf]
  %v266 = vld [vmem:[%s1 + $0x30c] sm:$0xf]
  %v267 = vld [vmem:[%s1 + $0x310] sm:$0xf]
  %v268 = vld [vmem:[%s1 + $0x314] sm:$0xf]
  %v269 = vld [vmem:[%s1 + $0x318] sm:$0xf]
  %v270 = vld [vmem:[%s1 + $0x31c] sm:$0xf]
  %v271 = vld [vmem:[%s1 + $0x320] sm:$0xf]
  %v272 = vld [vmem:[%s1 + $0x324] sm:$0xf]
  %v273 = vld [vmem:[%s1 + $0x328] sm:$0xf]
  %v274 = vld [vmem:[%s1 + $0x32c] sm:$0xf]
  %v275 = vld [vmem:[%s1 + $0x330] sm:$0xf]
  %v276 = vld [vmem:[%s1 + $0x334] sm:$0xf]
  %v277 = vld [vmem:[%s1 + $0x338] sm:$0xf]
  %v278 = vld [vmem:[%s1 + $0x33c] sm:$0xf]
  %v279 = vld [vmem:[%s1 + $0x340] sm:$0xf]
  %v280 = vld [vmem:[%s1 + $0x344] sm:$0xf]
  %v281 = vld [vmem:[%s1 + $0x348] sm:$0xf]
  %v282 = vld [vmem:[%s1 + $0x34c] sm:$0xf]
  %v283 = vld [vmem:[%s1 + $0x350] sm:$0xf]
  %v284 = vld [vmem:[%s1 + $0x354] sm:$0xf]
  %v285 = vld [vmem:[%s1 + $0x358] sm:$0xf]
  %v286 = vld [vmem:[%s1 + $0x35c] sm:$0xf]
  %v287 = vld [vmem:[%s1 + $0x360] sm:$0xf]
  %v288 = vld [vmem:[%s1 + $0x364] sm:$0xf]
  %v289 = vld [vmem:[%s1 + $0x368] sm:$0xf]
  %v290 = vld [vmem:[%s1 + $0x36c] sm:$0xf]
  %v291 = vld [vmem:[%s1 + $0x370] sm:$0xf]
  %v292 = vld [vmem:[%s1 + $0x374] sm:$0xf]
  %v293 = vld [vmem:[%s1 + $0x378] sm:$0xf]
  %v294 = vld [vmem:[%s1 + $0x37c] sm:$0xf]
  %v295 = vld [vmem:[%s1 + $0x380] sm:$0xf]
  %v296 = vld [vmem:[%s1 + $0x384] sm:$0xf]
  %v297 = vld [vmem:[%s1 + $0x388] sm:$0xf]
  %v298 = vld [vmem:[%s1 + $0x38c] sm:$0xf]
  %v299 = vld [vmem:[%s1 + $0x390] sm:$0xf]
  %v300 = vld [vmem:[%s1 + $0x394] sm:$0xf]
  %v301 = vld [vmem:[%s1 + $0x398] sm:$0xf]
  %v302 = vld [vmem:[%s1 + $0x39c] sm:$0xf]
  %v303 = vld [vmem:[%s1 + $0x3a0] sm:$0xf]
  %v304 = vld [vmem:[%s1 + $0x3a4] sm:$0xf]
  %v305 = vld [vmem:[%s1 + $0x3a8] sm:$0xf]
  %v306 = vld [vmem:[%s1 + $0x3ac] sm:$0xf]
  %v307 = vld [vmem:[%s1 + $0x3b0] sm:$0xf]
  %v308 = vld [vmem:[%s1 + $0x3b4] sm:$0xf]
  %v309 = vld [vmem:[%s1 + $0x3b8] sm:$0xf]
  %v310 = vld [vmem:[%s1 + $0x3bc] sm:$0xf]
  %v311 = vld [vmem:[%s1 + $0x3c0] sm:$0xf]
  %v312 = vld [vmem:[%s1 + $0x3c4] sm:$0xf]
  %v313 = vld [vmem:[%s1 + $0x3c8] sm:$0xf]
  %v314 = vld [vmem:[%s1 + $0x3cc] sm:$0xf]
  %v315 = vld [vmem:[%s1 + $0x3d0] sm:$0xf]
  %v316 = vld [vmem:[%s1 + $0x3d4] sm:$0xf]
  %v317 = vld [vmem:[%s1 + $0x3d8] sm:$0xf]
  %v318 = vld [vmem:[%s1 + $0x3dc] sm:$0xf]
  %v319 = vld [vmem:[%s1 + $0x3e0] sm:$0xf]
  %v320 = vld [vmem:[%s1 + $0x3e4] sm:$0xf]
  %v321 = vld [vmem:[%s1 + $0x3e8] sm:$0xf]
  %v322 = vld [vmem:[%s1 + $0x3ec] sm:$0xf]
  %v323 = vld [vmem:[%s1 + $0x3f0] sm:$0xf]
  %v324 = vld [vmem:[%s1 + $0x3f4] sm:$0xf]
  %v325 = vld [vmem:[%s1 + $0x3f8] sm:$0xf]
  %v326 = vld [vmem:[%s1 + $0x3fc] sm:$0xf]
  %v327 = vld [vmem:[%s1 + $0x400] sm:$0xf]
  %v328 = vld [vmem:[%s1 + $0x404] sm:$0xf]
  %v329 = vld [vmem:[%s1 + $0x408] sm:$0xf]
  %v330 = vld [vmem:[%s1 + $0x40c] sm:$0xf]
  %v331 = vld [vmem:[%s1 + $0x410] sm:$0xf]
  %v332 = vld [vmem:[%s1 + $0x414] sm:$0xf]
  %v333 = vld [vmem:[%s1 + $0x418] sm:$0xf]
  %v334 = vld [vmem:[%s1 + $0x41c] sm:$0xf]
  %v335 = vld [vmem:[%s1 + $0x420] sm:$0xf]
  %v336 = vld [vmem:[%s1 + $0x424] sm:$0xf]
  %v337 = vld [vmem:[%s1 + $0x428] sm:$0xf]
  %v338 = vld [vmem:[%s1 + $0x42c] sm:$0xf]
  %v339 = vld [vmem:[%s1 + $0x430] sm:$0xf]
  %v340 = vld [vmem:[%s1 + $0x434] sm:$0xf]
  %v341 = vld [vmem:[%s1 + $0x438] sm:$0xf]
  %v342 = vld [vmem:[%s1 + $0x43c] sm:$0xf]
  %v343 = vld [vmem:[%s1 + $0x440] sm:$0xf]
  %v344 = vld [vmem:[%s1 + $0x444] sm:$0xf]
  %v345 = vld [vmem:[%s1 + $0x448] sm:$0xf]
  %v346 = vld [vmem:[%s1 + $0x44c] sm:$0xf]
  %v347 = vld [vmem:[%s1 + $0x450] sm:$0xf]
  %v348 = vld [vmem:[%s1 + $0x454] sm:$0xf]
  %v349 = vld [vmem:[%s1 + $0x458] sm:$0xf]
  %v350 = vld [vmem:[%s1 + $0x45c] sm:$0xf]
  %v351 = vld [vmem:[%s1 + $0x460] sm:$0xf]
  %v352 = vld [vmem:[%s1 + $0x464] sm:$0xf]
  %v353 = vld [vmem:[%s1 + $0x468] sm:$0xf]
  %v354 = vld [vmem:[%s1 + $0x46c] sm:$0xf]
  %v355 = vld [vmem:[%s1 + $0x470] sm:$0xf]
  %v356 = vld [vmem:[%s1 + $0x474] sm:$0xf]
  %v357 = vld [vmem:[%s1 + $0x478] sm:$0xf]
  %v358 = vld [vmem:[%s1 + $0x47c] sm:$0xf]
  %v359 = vld [vmem:[%s1 + $0x480] sm:$0xf]
  %v360 = vld [vmem:[%s1 + $0x484] sm:$0xf]
  %v361 = vld [vmem:[%s1 + $0x488] sm:$0xf]
  %v362 = vld [vmem:[%s1 + $0x48c] sm:$0xf]
  %v363 = vld [vmem:[%s1 + $0x490] sm:$0xf]
  %v364 = vld [vmem:[%s1 + $0x494] sm:$0xf]
  %v365 = vld [vmem:[%s1 + $0x498] sm:$0xf]
  %v366 = vld [vmem:[%s1 + $0x49c] sm:$0xf]
  %v367 = vld [vmem:[%s1 + $0x4a0] sm:$0xf]
  %v368 = vld [vmem:[%s1 + $0x4a4] sm:$0xf]
  %v369 = vld [vmem:[%s1 + $0x4a8] sm:$0xf]
  %v370 = vld [vmem:[%s1 + $0x4ac] sm:$0xf]
  %v371 = vld [vmem:[%s1 + $0x4b0] sm:$0xf]
  %v372 = vld [vmem:[%s1 + $0x4b4] sm:$0xf]
  %v373 = vld [vmem:[%s1 + $0x4b8] sm:$0xf]
  %v374 = vld [vmem:[%s1 + $0x4bc] sm:$0xf]
  %v375 = vld [vmem:[%s1 + $0x4c0] sm:$0xf]
  %v376 = vld [vmem:[%s1 + $0x4c4] sm:$0xf]
  %v377 = vld [vmem:[%s1 + $0x4c8] sm:$0xf]
  %v378 = vld [vmem:[%s1 + $0x4cc] sm:$0xf]
  %v379 = vld [vmem:[%s1 + $0x4d0] sm:$0xf]
  %v380 = vld [vmem:[%s1 + $0x4d4] sm:$0xf]
  %v381 = vld [vmem:[%s1 + $0x4d8] sm:$0xf]
  %v382 = vld [vmem:[%s1 + $0x4dc] sm:$0xf]
  %v383 = vld [vmem:[%s1 + $0x4e0] sm:$0xf]
  %v384 = vld [vmem:[%s1 + $0x4e4] sm:$0xf]
  %v385 = vld [vmem:[%s1 + $0x4e8] sm:$0xf]
  %v386 = vld [vmem:[%s1 + $0x4ec] sm:$0xf]
  %v387 = vld [vmem:[%s1 + $0x4f0] sm:$0xf]
  %v388 = vld [vmem:[%s1 + $0x4f4] sm:$0xf]
  %v389 = vld [vmem:[%s1 + $0x4f8] sm:$0xf]
  %v390 = vld [vmem:[%s1 + $0x4fc] sm:$0xf]
  %v391 = vld [vmem:[%s1 + $0x500] sm:$0xf]
  %v392 = vld [vmem:[%s1 + $0x504] sm:$0xf]
  %v393 = vld [vmem:[%s1 + $0x508] sm:$0xf]
  %v394 = vld [vmem:[%s1 + $0x50c] sm:$0xf]
  %v395 = vld [vmem:[%s1 + $0x510] sm:$0xf]
  %v396 = vld [vmem:[%s1 + $0x514] sm:$0xf]
  %v397 = vld [vmem:[%s1 + $0x518] sm:$0xf]
  %v398 = vld [vmem:[%s1 + $0x51c] sm:$0xf]
  %v399 = vld [vmem:[%s1 + $0x520] sm:$0xf]
  %v400 = vld [vmem:[%s1 + $0x524] sm:$0xf]
  %v401 = vld [vmem:[%s1 + $0x528] sm:$0xf]
  %v402 = vld [vmem:[%s1 + $0x52c] sm:$0xf]
  %v403 = vld [vmem:[%s1 + $0x530] sm:$0xf]
  %v404 = vld [vmem:[%s1 + $0x534] sm:$0xf]
  %v405 = vld [vmem:[%s1 + $0x538] sm:$0xf]
  %v406 = vld [vmem:[%s1 + $0x53c] sm:$0xf]
  %v407 = vld [vmem:[%s1 + $0x540] sm:$0xf]
  %v408 = vld [vmem:[%s1 + $0x544] sm:$0xf]
  %v409 = vld [vmem:[%s1 + $0x548] sm:$0xf]
  %v410 = vld [vmem:[%s1 + $0x54c] sm:$0xf]
  %v411 = vld [vmem:[%s1 + $0x550] sm:$0xf]
  %v412 = vld [vmem:[%s1 + $0x554] sm:$0xf]
  %v413 = vld [vmem:[%s1 + $0x558] sm:$0xf]
  %v414 = vld [vmem:[%s1 + $0x55c] sm:$0xf]
  %v415 = vld [vmem:[%s1 + $0x560] sm:$0xf]
  %v416 = vld [vmem:[%s1 + $0x564] sm:$0xf]
  %v417 = vld [vmem:[%s1 + $0x568] sm:$0xf]
  %v418 = vld [vmem:[%s1 + $0x56c] sm:$0xf]
  %v419 = vld [vmem:[%s1 + $0x570] sm:$0xf]
  %v420 = vld [vmem:[%s1 + $0x574] sm:$0xf]
  %v421 = vld [vmem:[%s1 + $0x578] sm:$0xf]
  %v422 = vld [vmem:[%s1 + $0x57c] sm:$0xf]
  %v423 = vld [vmem:[%s1 + $0x580] sm:$0xf]
  %v424 = vld [vmem:[%s1 + $0x584] sm:$0xf]
  %v425 = vld [vmem:[%s1 + $0x588] sm:$0xf]
  %v426 = vld [vmem:[%s1 + $0x58c] sm:$0xf]
  %v427 = vld [vmem:[%s1 + $0x590] sm:$0xf]
  %v428 = vld [vmem:[%s1 + $0x594] sm:$0xf]
  %v429 = vld [vmem:[%s1 + $0x598] sm:$0xf]
  %v430 = vld [vmem:[%s1 + $0x59c] sm:$0xf]
  %v431 = vld [vmem:[%s1 + $0x5a0] sm:$0xf]
  %v432 = vld [vmem:[%s1 + $0x5a4] sm:$0xf]
  %v433 = vld [vmem:[%s1 + $0x5a8] sm:$0xf]
  %v434 = vld [vmem:[%s1 + $0x5ac] sm:$0xf]
  %v435 = vld [vmem:[%s1 + $0x5b0] sm:$0xf]
  %v436 = vld [vmem:[%s1 + $0x5b4] sm:$0xf]
  %v437 = vld [vmem:[%s1 + $0x5b8] sm:$0xf]
  %v438 = vld [vmem:[%s1 + $0x5bc] sm:$0xf]
  %v439 = vld [vmem:[%s1 + $0x5c0] sm:$0xf]
  %v440 = vld [vmem:[%s1 + $0x5c4] sm:$0xf]
  %v441 = vld [vmem:[%s1 + $0x5c8] sm:$0xf]
  %v442 = vld [vmem:[%s1 + $0x5cc] sm:$0xf]
  %v443 = vld [vmem:[%s1 + $0x5d0] sm:$0xf]
  %v444 = vld [vmem:[%s1 + $0x5d4] sm:$0xf]
  %v445 = vld [vmem:[%s1 + $0x5d8] sm:$0xf]
  %v446 = vld [vmem:[%s1 + $0x5dc] sm:$0xf]
  %v447 = vld [vmem:[%s1 + $0x5e0] sm:$0xf]
  %v448 = vld [vmem:[%s1 + $0x5e4] sm:$0xf]
  %v449 = vld [vmem:[%s1 + $0x5e8] sm:$0xf]
  %v450 = vld [vmem:[%s1 + $0x5ec] sm:$0xf]
  %v451 = vld [vmem:[%s1 + $0x5f0] sm:$0xf]
  %v452 = vld [vmem:[%s1 + $0x5f4] sm:$0xf]
  %v453 = vld [vmem:[%s1 + $0x5f8] sm:$0xf]
  %v454 = vld [vmem:[%s1 + $0x5fc] sm:$0xf]
  %v455 = vld [vmem:[%s1 + $0x600] sm:$0xf]
  %v456 = vld [vmem:[%s1 + $0x604] sm:$0xf]
  %v457 = vld [vmem:[%s1 + $0x608] sm:$0xf]
  %v458 = vld [vmem:[%s1 + $0x60c] sm:$0xf]
  %v459 = vld [vmem:[%s1 + $0x610] sm:$0xf]
  %v460 = vld [vmem:[%s1 + $0x614] sm:$0xf]
  %v461 = vld [vmem:[%s1 + $0x618] sm:$0xf]
  %v462 = vld [vmem:[%s1 + $0x61c] sm:$0xf]
  %v463 = vld [vmem:[%s1 + $0x620] sm:$0xf]
  %v464 = vld [vmem:[%s1 + $0x624] sm:$0xf]
  %v465 = vld [vmem:[%s1 + $0x628] sm:$0xf]
  %v466 = vld [vmem:[%s1 + $0x62c] sm:$0xf]
  %v467 = vld [vmem:[%s1 + $0x630] sm:$0xf]
  %v468 = vld [vmem:[%s1 + $0x634] sm:$0xf]
  %v469 = vld [vmem:[%s1 + $0x638] sm:$0xf]
  %v470 = vld [vmem:[%s1 + $0x63c] sm:$0xf]
  %v471 = vld [vmem:[%s1 + $0x640] sm:$0xf]
  %v472 = vld [vmem:[%s1 + $0x644] sm:$0xf]
  %v473 = vld [vmem:[%s1 + $0x648] sm:$0xf]
  %v474 = vld [vmem:[%s1 + $0x64c] sm:$0xf]
  %v475 = vld [vmem:[%s1 + $0x650] sm:$0xf]
  %v476 = vld [vmem:[%s1 + $0x654] sm:$0xf]
  %v477 = vld [vmem:[%s1 + $0x658] sm:$0xf]
  %v478 = vld [vmem:[%s1 + $0x65c] sm:$0xf]
  %v479 = vld [vmem:[%s1 + $0x660] sm:$0xf]
  %v480 = vld [vmem:[%s1 + $0x664] sm:$0xf]
  %v481 = vld [vmem:[%s1 + $0x668] sm:$0xf]
  %v482 = vld [vmem:[%s1 + $0x66c] sm:$0xf]
  %v483 = vld [vmem:[%s1 + $0x670] sm:$0xf]
  %v484 = vld [vmem:[%s1 + $0x674] sm:$0xf]
  %v485 = vld [vmem:[%s1 + $0x678] sm:$0xf]
  %v486 = vld [vmem:[%s1 + $0x67c] sm:$0xf]
  %v487 = vld [vmem:[%s1 + $0x680] sm:$0xf]
  %v488 = vld [vmem:[%s1 + $0x684] sm:$0xf]
  %v489 = vld [vmem:[%s1 + $0x688] sm:$0xf]
  %v490 = vld [vmem:[%s1 + $0x68c] sm:$0xf]
  %v491 = vld [vmem:[%s1 + $0x690] sm:$0xf]
  %v492 = vld [vmem:[%s1 + $0x694] sm:$0xf]
  %v493 = vld [vmem:[%s1 + $0x698] sm:$0xf]
  %v494 = vld [vmem:[%s1 + $0x69c] sm:$0xf]
  %v495 = vld [vmem:[%s1 + $0x6a0] sm:$0xf]
  %v496 = vld [vmem:[%s1 + $0x6a4] sm:$0xf]
  %v497 = vld [vmem:[%s1 + $0x6a8] sm:$0xf]
  %v498 = vld [vmem:[%s1 + $0x6ac] sm:$0xf]
  %v499 = vld [vmem:[%s1 + $0x6b0] sm:$0xf]
  %v500 = vld [vmem:[%s1 + $0x6b4] sm:$0xf]
  %v501 = vld [vmem:[%s1 + $0x6b8] sm:$0xf]
  %v502 = vld [vmem:[%s1 + $0x6bc] sm:$0xf]
  %v503 = vld [vmem:[%s2] sm:$0x1]
  %v505 = vlaneseq
  %v506 = vshrl.u32 %v505, 7
  %v507 = vsub.s32 0, %v506
  %v508 = vrot.slane %v503, %v507
  %v566 = vunpack.c.l.b16 %v15
  %v567 = vunpack.c.h.b16 %v15
  %v568 = vunpack.c.l.b16 %v16
  %v569 = vunpack.c.h.b16 %v16
  %v570 = vunpack.c.l.b16 %v17
  %v571 = vunpack.c.h.b16 %v17
  %v572 = vunpack.c.l.b16 %v18
  %v573 = vunpack.c.h.b16 %v18
  %v574 = vunpack.c.l.b16 %v19
  %v575 = vunpack.c.h.b16 %v19
  %v576 = vunpack.c.l.b16 %v20
  %v577 = vunpack.c.h.b16 %v20
  %v578 = vunpack.c.l.b16 %v21
  %v579 = vunpack.c.h.b16 %v21
  %v580 = vunpack.c.l.b16 %v22
  %v581 = vunpack.c.h.b16 %v22
  %v582 = vunpack.c.l.b16 %v23
  %v583 = vunpack.c.h.b16 %v23
  %v584 = vunpack.c.l.b16 %v24
  %v585 = vunpack.c.h.b16 %v24
  %v586 = vunpack.c.l.b16 %v25
  %v587 = vunpack.c.h.b16 %v25
  %v588 = vunpack.c.l.b16 %v26
  %v589 = vunpack.c.h.b16 %v26
  %v590 = vunpack.c.l.b16 %v27
  %v591 = vunpack.c.h.b16 %v27
  %v592 = vunpack.c.l.b16 %v28
  %v593 = vunpack.c.l.b16 %v29
  %v594 = vunpack.c.h.b16 %v29
  %v595 = vunpack.c.l.b16 %v30
  %v596 = vunpack.c.h.b16 %v30
  %v597 = vunpack.c.l.b16 %v31
  %v598 = vunpack.c.h.b16 %v31
  %v599 = vunpack.c.l.b16 %v32
  %v600 = vunpack.c.h.b16 %v32
  %v601 = vunpack.c.l.b16 %v33
  %v602 = vunpack.c.h.b16 %v33
  %v603 = vunpack.c.l.b16 %v34
  %v604 = vunpack.c.h.b16 %v34
  %v605 = vunpack.c.l.b16 %v35
  %v606 = vunpack.c.h.b16 %v35
  %v607 = vunpack.c.l.b16 %v36
  %v608 = vunpack.c.h.b16 %v36
  %v609 = vunpack.c.l.b16 %v37
  %v610 = vunpack.c.h.b16 %v37
  %v611 = vunpack.c.l.b16 %v38
  %v612 = vunpack.c.h.b16 %v38
  %v613 = vunpack.c.l.b16 %v39
  %v614 = vunpack.c.h.b16 %v39
  %v615 = vunpack.c.l.b16 %v40
  %v616 = vunpack.c.h.b16 %v40
  %v617 = vunpack.c.l.b16 %v41
  %v618 = vunpack.c.h.b16 %v41
  %v619 = vunpack.c.l.b16 %v42
  %v620 = vunpack.c.l.b16 %v43
  %v621 = vunpack.c.h.b16 %v43
  %v622 = vunpack.c.l.b16 %v44
  %v623 = vunpack.c.h.b16 %v44
  %v624 = vunpack.c.l.b16 %v45
  %v625 = vunpack.c.h.b16 %v45
  %v626 = vunpack.c.l.b16 %v46
  %v627 = vunpack.c.h.b16 %v46
  %v628 = vunpack.c.l.b16 %v47
  %v629 = vunpack.c.h.b16 %v47
  %v630 = vunpack.c.l.b16 %v48
  %v631 = vunpack.c.h.b16 %v48
  %v632 = vunpack.c.l.b16 %v49
  %v633 = vunpack.c.h.b16 %v49
  %v634 = vunpack.c.l.b16 %v50
  %v635 = vunpack.c.h.b16 %v50
  %v636 = vunpack.c.l.b16 %v51
  %v637 = vunpack.c.h.b16 %v51
  %v638 = vunpack.c.l.b16 %v52
  %v639 = vunpack.c.h.b16 %v52
  %v640 = vunpack.c.l.b16 %v53
  %v641 = vunpack.c.h.b16 %v53
  %v642 = vunpack.c.l.b16 %v54
  %v643 = vunpack.c.h.b16 %v54
  %v644 = vunpack.c.l.b16 %v55
  %v645 = vunpack.c.h.b16 %v55
  %v646 = vunpack.c.l.b16 %v56
  %v647 = vunpack.c.l.b16 %v57
  %v648 = vunpack.c.h.b16 %v57
  %v649 = vunpack.c.l.b16 %v58
  %v650 = vunpack.c.h.b16 %v58
  %v651 = vunpack.c.l.b16 %v59
  %v652 = vunpack.c.h.b16 %v59
  %v653 = vunpack.c.l.b16 %v60
  %v654 = vunpack.c.h.b16 %v60
  %v655 = vunpack.c.l.b16 %v61
  %v656 = vunpack.c.h.b16 %v61
  %v657 = vunpack.c.l.b16 %v62
  %v658 = vunpack.c.h.b16 %v62
  %v659 = vunpack.c.l.b16 %v63
  %v660 = vunpack.c.h.b16 %v63
  %v661 = vunpack.c.l.b16 %v64
  %v662 = vunpack.c.h.b16 %v64
  %v663 = vunpack.c.l.b16 %v65
  %v664 = vunpack.c.h.b16 %v65
  %v665 = vunpack.c.l.b16 %v66
  %v666 = vunpack.c.h.b16 %v66
  %v667 = vunpack.c.l.b16 %v67
  %v668 = vunpack.c.h.b16 %v67
  %v669 = vunpack.c.l.b16 %v68
  %v670 = vunpack.c.h.b16 %v68
  %v671 = vunpack.c.l.b16 %v69
  %v672 = vunpack.c.h.b16 %v69
  %v673 = vunpack.c.l.b16 %v70
  %v674 = vpack.c.b16 %v593, %v566
  %v675 = vpack.c.b16 %v594, %v567
  %v676 = vpack.c.b16 %v595, %v568
  %v677 = vpack.c.b16 %v596, %v569
  %v678 = vpack.c.b16 %v597, %v570
  %v679 = vpack.c.b16 %v598, %v571
  %v680 = vpack.c.b16 %v599, %v572
  %v681 = vpack.c.b16 %v600, %v573
  %v682 = vpack.c.b16 %v601, %v574
  %v683 = vpack.c.b16 %v602, %v575
  %v684 = vpack.c.b16 %v603, %v576
  %v685 = vpack.c.b16 %v604, %v577
  %v686 = vpack.c.b16 %v605, %v578
  %v687 = vpack.c.b16 %v606, %v579
  %v688 = vpack.c.b16 %v607, %v580
  %v689 = vpack.c.b16 %v608, %v581
  %v690 = vpack.c.b16 %v609, %v582
  %v691 = vpack.c.b16 %v610, %v583
  %v692 = vpack.c.b16 %v611, %v584
  %v693 = vpack.c.b16 %v612, %v585
  %v694 = vpack.c.b16 %v613, %v586
  %v695 = vpack.c.b16 %v614, %v587
  %v696 = vpack.c.b16 %v615, %v588
  %v697 = vpack.c.b16 %v616, %v589
  %v698 = vpack.c.b16 %v617, %v590
  %v699 = vpack.c.b16 %v618, %v591
  %v700 = vpack.c.b16 %v619, %v592
  %v701 = vpack.c.b16 %v647, %v620
  %v702 = vpack.c.b16 %v648, %v621
  %v703 = vpack.c.b16 %v649, %v622
  %v704 = vpack.c.b16 %v650, %v623
  %v705 = vpack.c.b16 %v651, %v624
  %v706 = vpack.c.b16 %v652, %v625
  %v707 = vpack.c.b16 %v653, %v626
  %v708 = vpack.c.b16 %v654, %v627
  %v709 = vpack.c.b16 %v655, %v628
  %v710 = vpack.c.b16 %v656, %v629
  %v711 = vpack.c.b16 %v657, %v630
  %v712 = vpack.c.b16 %v658, %v631
  %v713 = vpack.c.b16 %v659, %v632
  %v714 = vpack.c.b16 %v660, %v633
  %v715 = vpack.c.b16 %v661, %v634
  %v716 = vpack.c.b16 %v662, %v635
  %v717 = vpack.c.b16 %v663, %v636
  %v718 = vpack.c.b16 %v664, %v637
  %v719 = vpack.c.b16 %v665, %v638
  %v720 = vpack.c.b16 %v666, %v639
  %v721 = vpack.c.b16 %v667, %v640
  %v722 = vpack.c.b16 %v668, %v641
  %v723 = vpack.c.b16 %v669, %v642
  %v724 = vpack.c.b16 %v670, %v643
  %v725 = vpack.c.b16 %v671, %v644
  %v726 = vpack.c.b16 %v672, %v645
  %v727 = vpack.c.b16 %v673, %v646
  %v1214 = vunpack.c.l.b16 %v71
  %v1215 = vunpack.c.l.b16 %v72
  %v1216 = vunpack.c.l.b16 %v73
  %v1217 = vunpack.c.l.b16 %v74
  %v1218 = vunpack.c.l.b16 %v75
  %v1219 = vunpack.c.l.b16 %v76
  %v1220 = vunpack.c.l.b16 %v77
  %v1221 = vunpack.c.l.b16 %v78
  %v1222 = vunpack.c.l.b16 %v79
  %v1223 = vunpack.c.l.b16 %v80
  %v1224 = vunpack.c.l.b16 %v81
  %v1225 = vunpack.c.l.b16 %v82
  %v1226 = vunpack.c.l.b16 %v83
  %v1227 = vunpack.c.l.b16 %v84
  %v1228 = vunpack.c.l.b16 %v85
  %v1229 = vunpack.c.l.b16 %v86
  %v1230 = vunpack.c.l.b16 %v87
  %v1231 = vunpack.c.l.b16 %v88
  %v1232 = vunpack.c.l.b16 %v89
  %v1233 = vunpack.c.l.b16 %v90
  %v1234 = vunpack.c.l.b16 %v91
  %v1235 = vunpack.c.l.b16 %v92
  %v1236 = vunpack.c.l.b16 %v93
  %v1237 = vunpack.c.l.b16 %v94
  %v1238 = vunpack.c.l.b16 %v95
  %v1239 = vunpack.c.l.b16 %v96
  %v1240 = vunpack.c.l.b16 %v97
  %v1241 = vunpack.c.l.b16 %v98
  %v1242 = vunpack.c.l.b16 %v99
  %v1243 = vunpack.c.l.b16 %v100
  %v1244 = vunpack.c.l.b16 %v101
  %v1245 = vunpack.c.l.b16 %v102
  %v1246 = vunpack.c.l.b16 %v103
  %v1247 = vunpack.c.l.b16 %v104
  %v1248 = vunpack.c.l.b16 %v105
  %v1249 = vunpack.c.l.b16 %v106
  %v1250 = vunpack.c.l.b16 %v107
  %v1251 = vunpack.c.l.b16 %v108
  %v1252 = vunpack.c.l.b16 %v109
  %v1253 = vunpack.c.l.b16 %v110
  %v1254 = vunpack.c.l.b16 %v111
  %v1255 = vunpack.c.l.b16 %v112
  %v1256 = vunpack.c.l.b16 %v113
  %v1257 = vunpack.c.l.b16 %v114
  %v1258 = vunpack.c.l.b16 %v115
  %v1259 = vunpack.c.l.b16 %v116
  %v1260 = vunpack.c.l.b16 %v117
  %v1261 = vunpack.c.l.b16 %v118
  %v1262 = vunpack.c.l.b16 %v119
  %v1263 = vunpack.c.l.b16 %v120
  %v1264 = vunpack.c.l.b16 %v121
  %v1265 = vunpack.c.l.b16 %v122
  %v1266 = vunpack.c.l.b16 %v123
  %v1267 = vunpack.c.l.b16 %v124
  %v1268 = vunpack.c.l.b16 %v125
  %v1269 = vunpack.c.l.b16 %v126
  %v1270 = vunpack.c.l.b16 %v127
  %v1271 = vunpack.c.l.b16 %v128
  %v1272 = vunpack.c.l.b16 %v129
  %v1273 = vunpack.c.l.b16 %v130
  %v1274 = vunpack.c.l.b16 %v131
  %v1275 = vunpack.c.l.b16 %v132
  %v1276 = vunpack.c.l.b16 %v133
  %v1277 = vunpack.c.l.b16 %v134
  %v1278 = vunpack.c.l.b16 %v135
  %v1279 = vunpack.c.l.b16 %v136
  %v1280 = vunpack.c.l.b16 %v137
  %v1281 = vunpack.c.l.b16 %v138
  %v1282 = vunpack.c.l.b16 %v139
  %v1283 = vunpack.c.l.b16 %v140
  %v1284 = vunpack.c.l.b16 %v141
  %v1285 = vunpack.c.l.b16 %v142
  %v1286 = vunpack.c.l.b16 %v143
  %v1287 = vunpack.c.l.b16 %v144
  %v1288 = vunpack.c.l.b16 %v145
  %v1289 = vunpack.c.l.b16 %v146
  %v1290 = vunpack.c.l.b16 %v147
  %v1291 = vunpack.c.l.b16 %v148
  %v1292 = vunpack.c.l.b16 %v149
  %v1293 = vunpack.c.l.b16 %v150
  %v1294 = vunpack.c.l.b16 %v151
  %v1295 = vunpack.c.l.b16 %v152
  %v1296 = vunpack.c.l.b16 %v153
  %v1297 = vunpack.c.l.b16 %v154
  %v1298 = vunpack.c.l.b16 %v155
  %v1299 = vunpack.c.l.b16 %v156
  %v1300 = vunpack.c.l.b16 %v157
  %v1301 = vunpack.c.l.b16 %v158
  %v1302 = vunpack.c.l.b16 %v159
  %v1303 = vunpack.c.l.b16 %v160
  %v1304 = vunpack.c.l.b16 %v161
  %v1305 = vunpack.c.l.b16 %v162
  %v1306 = vunpack.c.l.b16 %v163
  %v1307 = vunpack.c.l.b16 %v164
  %v1308 = vunpack.c.l.b16 %v165
  %v1309 = vunpack.c.l.b16 %v166
  %v1310 = vunpack.c.l.b16 %v167
  %v1311 = vunpack.c.l.b16 %v168
  %v1312 = vunpack.c.l.b16 %v169
  %v1313 = vunpack.c.l.b16 %v170
  %v1314 = vunpack.c.l.b16 %v171
  %v1315 = vunpack.c.l.b16 %v172
  %v1316 = vunpack.c.l.b16 %v173
  %v1317 = vunpack.c.l.b16 %v174
  %v1318 = vunpack.c.l.b16 %v175
  %v1319 = vunpack.c.l.b16 %v176
  %v1320 = vunpack.c.l.b16 %v177
  %v1321 = vunpack.c.l.b16 %v178
  %v1322 = vunpack.c.l.b16 %v179
  %v1323 = vunpack.c.l.b16 %v180
  %v1324 = vunpack.c.l.b16 %v181
  %v1325 = vunpack.c.l.b16 %v182
  %v1326 = vunpack.c.l.b16 %v183
  %v1327 = vunpack.c.l.b16 %v184
  %v1328 = vunpack.c.l.b16 %v185
  %v1329 = vunpack.c.l.b16 %v186
  %v1330 = vunpack.c.l.b16 %v187
  %v1331 = vunpack.c.l.b16 %v188
  %v1332 = vunpack.c.l.b16 %v189
  %v1333 = vunpack.c.l.b16 %v190
  %v1334 = vunpack.c.l.b16 %v191
  %v1335 = vunpack.c.l.b16 %v192
  %v1336 = vunpack.c.l.b16 %v193
  %v1337 = vunpack.c.l.b16 %v194
  %v1338 = vunpack.c.l.b16 %v195
  %v1339 = vunpack.c.l.b16 %v196
  %v1340 = vunpack.c.l.b16 %v197
  %v1341 = vunpack.c.l.b16 %v198
  %v1342 = vunpack.c.l.b16 %v199
  %v1343 = vunpack.c.l.b16 %v200
  %v1344 = vunpack.c.l.b16 %v201
  %v1345 = vunpack.c.l.b16 %v202
  %v1346 = vunpack.c.l.b16 %v203
  %v1347 = vunpack.c.l.b16 %v204
  %v1348 = vunpack.c.l.b16 %v205
  %v1349 = vunpack.c.l.b16 %v206
  %v1350 = vunpack.c.l.b16 %v207
  %v1351 = vunpack.c.l.b16 %v208
  %v1352 = vunpack.c.l.b16 %v209
  %v1353 = vunpack.c.l.b16 %v210
  %v1354 = vunpack.c.l.b16 %v211
  %v1355 = vunpack.c.l.b16 %v212
  %v1356 = vunpack.c.l.b16 %v213
  %v1357 = vunpack.c.l.b16 %v214
  %v1358 = vunpack.c.l.b16 %v215
  %v1359 = vunpack.c.l.b16 %v216
  %v1360 = vunpack.c.l.b16 %v217
  %v1361 = vunpack.c.l.b16 %v218
  %v1362 = vunpack.c.l.b16 %v219
  %v1363 = vunpack.c.l.b16 %v220
  %v1364 = vunpack.c.l.b16 %v221
  %v1365 = vunpack.c.l.b16 %v222
  %v1366 = vunpack.c.l.b16 %v223
  %v1367 = vunpack.c.l.b16 %v224
  %v1368 = vunpack.c.l.b16 %v225
  %v1369 = vunpack.c.l.b16 %v226
  %v1370 = vunpack.c.l.b16 %v227
  %v1371 = vunpack.c.l.b16 %v228
  %v1372 = vunpack.c.l.b16 %v229
  %v1373 = vunpack.c.l.b16 %v230
  %v1374 = vunpack.c.l.b16 %v231
  %v1375 = vunpack.c.l.b16 %v232
  %v1376 = vunpack.c.l.b16 %v233
  %v1377 = vunpack.c.l.b16 %v234
  %v1378 = vunpack.c.l.b16 %v235
  %v1379 = vunpack.c.l.b16 %v236
  %v1380 = vunpack.c.l.b16 %v237
  %v1381 = vunpack.c.l.b16 %v238
  %v1382 = vunpack.c.l.b16 %v239
  %v1383 = vunpack.c.l.b16 %v240
  %v1384 = vunpack.c.l.b16 %v241
  %v1385 = vunpack.c.l.b16 %v242
  %v1386 = vunpack.c.l.b16 %v243
  %v1387 = vunpack.c.l.b16 %v244
  %v1388 = vunpack.c.l.b16 %v245
  %v1389 = vunpack.c.l.b16 %v246
  %v1390 = vunpack.c.l.b16 %v247
  %v1391 = vunpack.c.l.b16 %v248
  %v1392 = vunpack.c.l.b16 %v249
  %v1393 = vunpack.c.l.b16 %v250
  %v1394 = vunpack.c.l.b16 %v251
  %v1395 = vunpack.c.l.b16 %v252
  %v1396 = vunpack.c.l.b16 %v253
  %v1397 = vunpack.c.l.b16 %v254
  %v1398 = vunpack.c.l.b16 %v255
  %v1399 = vunpack.c.l.b16 %v256
  %v1400 = vunpack.c.l.b16 %v257
  %v1401 = vunpack.c.l.b16 %v258
  %v1402 = vunpack.c.l.b16 %v259
  %v1403 = vunpack.c.l.b16 %v260
  %v1404 = vunpack.c.l.b16 %v261
  %v1405 = vunpack.c.l.b16 %v262
  %v1406 = vunpack.c.l.b16 %v263
  %v1407 = vunpack.c.l.b16 %v264
  %v1408 = vunpack.c.l.b16 %v265
  %v1409 = vunpack.c.l.b16 %v266
  %v1410 = vunpack.c.l.b16 %v267
  %v1411 = vunpack.c.l.b16 %v268
  %v1412 = vunpack.c.l.b16 %v269
  %v1413 = vunpack.c.l.b16 %v270
  %v1414 = vunpack.c.l.b16 %v271
  %v1415 = vunpack.c.l.b16 %v272
  %v1416 = vunpack.c.l.b16 %v273
  %v1417 = vunpack.c.l.b16 %v274
  %v1418 = vunpack.c.l.b16 %v275
  %v1419 = vunpack.c.l.b16 %v276
  %v1420 = vunpack.c.l.b16 %v277
  %v1421 = vunpack.c.l.b16 %v278
  %v1422 = vunpack.c.l.b16 %v279
  %v1423 = vunpack.c.l.b16 %v280
  %v1424 = vunpack.c.l.b16 %v281
  %v1425 = vunpack.c.l.b16 %v282
  %v1426 = vunpack.c.l.b16 %v283
  %v1427 = vunpack.c.l.b16 %v284
  %v1428 = vunpack.c.l.b16 %v285
  %v1429 = vunpack.c.l.b16 %v286
  %v1430 = vunpack.c.l.b16 %v287
  %v1431 = vunpack.c.l.b16 %v288
  %v1432 = vunpack.c.l.b16 %v289
  %v1433 = vunpack.c.l.b16 %v290
  %v1434 = vunpack.c.l.b16 %v291
  %v1435 = vunpack.c.l.b16 %v292
  %v1436 = vunpack.c.l.b16 %v293
  %v1437 = vunpack.c.l.b16 %v294
  %v1438 = vunpack.c.l.b16 %v295
  %v1439 = vunpack.c.l.b16 %v296
  %v1440 = vunpack.c.l.b16 %v297
  %v1441 = vunpack.c.l.b16 %v298
  %v1442 = vunpack.c.l.b16 %v299
  %v1443 = vunpack.c.l.b16 %v300
  %v1444 = vunpack.c.l.b16 %v301
  %v1445 = vunpack.c.l.b16 %v302
  %v1446 = vunpack.c.l.b16 %v303
  %v1447 = vunpack.c.l.b16 %v304
  %v1448 = vunpack.c.l.b16 %v305
  %v1449 = vunpack.c.l.b16 %v306
  %v1450 = vunpack.c.l.b16 %v307
  %v1451 = vunpack.c.l.b16 %v308
  %v1452 = vunpack.c.l.b16 %v309
  %v1453 = vunpack.c.l.b16 %v310
  %v1454 = vunpack.c.l.b16 %v311
  %v1455 = vunpack.c.l.b16 %v312
  %v1456 = vunpack.c.l.b16 %v313
  %v1457 = vunpack.c.l.b16 %v314
  %v1458 = vunpack.c.l.b16 %v315
  %v1459 = vunpack.c.l.b16 %v316
  %v1460 = vunpack.c.l.b16 %v317
  %v1461 = vunpack.c.l.b16 %v318
  %v1462 = vunpack.c.l.b16 %v319
  %v1463 = vunpack.c.l.b16 %v320
  %v1464 = vunpack.c.l.b16 %v321
  %v1465 = vunpack.c.l.b16 %v322
  %v1466 = vunpack.c.l.b16 %v323
  %v1467 = vunpack.c.l.b16 %v324
  %v1468 = vunpack.c.l.b16 %v325
  %v1469 = vunpack.c.l.b16 %v326
  %v1470 = vunpack.c.l.b16 %v327
  %v1471 = vunpack.c.l.b16 %v328
  %v1472 = vunpack.c.l.b16 %v329
  %v1473 = vunpack.c.l.b16 %v330
  %v1474 = vunpack.c.l.b16 %v331
  %v1475 = vunpack.c.l.b16 %v332
  %v1476 = vunpack.c.l.b16 %v333
  %v1477 = vunpack.c.l.b16 %v334
  %v1478 = vunpack.c.l.b16 %v335
  %v1479 = vunpack.c.l.b16 %v336
  %v1480 = vunpack.c.l.b16 %v337
  %v1481 = vunpack.c.l.b16 %v338
  %v1482 = vunpack.c.l.b16 %v339
  %v1483 = vunpack.c.l.b16 %v340
  %v1484 = vunpack.c.l.b16 %v341
  %v1485 = vunpack.c.l.b16 %v342
  %v1486 = vunpack.c.l.b16 %v343
  %v1487 = vunpack.c.l.b16 %v344
  %v1488 = vunpack.c.l.b16 %v345
  %v1489 = vunpack.c.l.b16 %v346
  %v1490 = vunpack.c.l.b16 %v347
  %v1491 = vunpack.c.l.b16 %v348
  %v1492 = vunpack.c.l.b16 %v349
  %v1493 = vunpack.c.l.b16 %v350
  %v1494 = vunpack.c.l.b16 %v351
  %v1495 = vunpack.c.l.b16 %v352
  %v1496 = vunpack.c.l.b16 %v353
  %v1497 = vunpack.c.l.b16 %v354
  %v1498 = vunpack.c.l.b16 %v355
  %v1499 = vunpack.c.l.b16 %v356
  %v1500 = vunpack.c.l.b16 %v357
  %v1501 = vunpack.c.l.b16 %v358
  %v1502 = vunpack.c.l.b16 %v359
  %v1503 = vunpack.c.l.b16 %v360
  %v1504 = vunpack.c.l.b16 %v361
  %v1505 = vunpack.c.l.b16 %v362
  %v1506 = vunpack.c.l.b16 %v363
  %v1507 = vunpack.c.l.b16 %v364
  %v1508 = vunpack.c.l.b16 %v365
  %v1509 = vunpack.c.l.b16 %v366
  %v1510 = vunpack.c.l.b16 %v367
  %v1511 = vunpack.c.l.b16 %v368
  %v1512 = vunpack.c.l.b16 %v369
  %v1513 = vunpack.c.l.b16 %v370
  %v1514 = vunpack.c.l.b16 %v371
  %v1515 = vunpack.c.l.b16 %v372
  %v1516 = vunpack.c.l.b16 %v373
  %v1517 = vunpack.c.l.b16 %v374
  %v1518 = vunpack.c.l.b16 %v375
  %v1519 = vunpack.c.l.b16 %v376
  %v1520 = vunpack.c.l.b16 %v377
  %v1521 = vunpack.c.l.b16 %v378
  %v1522 = vunpack.c.l.b16 %v379
  %v1523 = vunpack.c.l.b16 %v380
  %v1524 = vunpack.c.l.b16 %v381
  %v1525 = vunpack.c.l.b16 %v382
  %v1526 = vunpack.c.l.b16 %v383
  %v1527 = vunpack.c.l.b16 %v384
  %v1528 = vunpack.c.l.b16 %v385
  %v1529 = vunpack.c.l.b16 %v386
  %v1530 = vunpack.c.l.b16 %v387
  %v1531 = vunpack.c.l.b16 %v388
  %v1532 = vunpack.c.l.b16 %v389
  %v1533 = vunpack.c.l.b16 %v390
  %v1534 = vunpack.c.l.b16 %v391
  %v1535 = vunpack.c.l.b16 %v392
  %v1536 = vunpack.c.l.b16 %v393
  %v1537 = vunpack.c.l.b16 %v394
  %v1538 = vunpack.c.l.b16 %v395
  %v1539 = vunpack.c.l.b16 %v396
  %v1540 = vunpack.c.l.b16 %v397
  %v1541 = vunpack.c.l.b16 %v398
  %v1542 = vunpack.c.l.b16 %v399
  %v1543 = vunpack.c.l.b16 %v400
  %v1544 = vunpack.c.l.b16 %v401
  %v1545 = vunpack.c.l.b16 %v402
  %v1546 = vunpack.c.l.b16 %v403
  %v1547 = vunpack.c.l.b16 %v404
  %v1548 = vunpack.c.l.b16 %v405
  %v1549 = vunpack.c.l.b16 %v406
  %v1550 = vunpack.c.l.b16 %v407
  %v1551 = vunpack.c.l.b16 %v408
  %v1552 = vunpack.c.l.b16 %v409
  %v1553 = vunpack.c.l.b16 %v410
  %v1554 = vunpack.c.l.b16 %v411
  %v1555 = vunpack.c.l.b16 %v412
  %v1556 = vunpack.c.l.b16 %v413
  %v1557 = vunpack.c.l.b16 %v414
  %v1558 = vunpack.c.l.b16 %v415
  %v1559 = vunpack.c.l.b16 %v416
  %v1560 = vunpack.c.l.b16 %v417
  %v1561 = vunpack.c.l.b16 %v418
  %v1562 = vunpack.c.l.b16 %v419
  %v1563 = vunpack.c.l.b16 %v420
  %v1564 = vunpack.c.l.b16 %v421
  %v1565 = vunpack.c.l.b16 %v422
  %v1566 = vunpack.c.l.b16 %v423
  %v1567 = vunpack.c.l.b16 %v424
  %v1568 = vunpack.c.l.b16 %v425
  %v1569 = vunpack.c.l.b16 %v426
  %v1570 = vunpack.c.l.b16 %v427
  %v1571 = vunpack.c.l.b16 %v428
  %v1572 = vunpack.c.l.b16 %v429
  %v1573 = vunpack.c.l.b16 %v430
  %v1574 = vunpack.c.l.b16 %v431
  %v1575 = vunpack.c.l.b16 %v432
  %v1576 = vunpack.c.l.b16 %v433
  %v1577 = vunpack.c.l.b16 %v434
  %v1578 = vunpack.c.l.b16 %v435
  %v1579 = vunpack.c.l.b16 %v436
  %v1580 = vunpack.c.l.b16 %v437
  %v1581 = vunpack.c.l.b16 %v438
  %v1582 = vunpack.c.l.b16 %v439
  %v1583 = vunpack.c.l.b16 %v440
  %v1584 = vunpack.c.l.b16 %v441
  %v1585 = vunpack.c.l.b16 %v442
  %v1586 = vunpack.c.l.b16 %v443
  %v1587 = vunpack.c.l.b16 %v444
  %v1588 = vunpack.c.l.b16 %v445
  %v1589 = vunpack.c.l.b16 %v446
  %v1590 = vunpack.c.l.b16 %v447
  %v1591 = vunpack.c.l.b16 %v448
  %v1592 = vunpack.c.l.b16 %v449
  %v1593 = vunpack.c.l.b16 %v450
  %v1594 = vunpack.c.l.b16 %v451
  %v1595 = vunpack.c.l.b16 %v452
  %v1596 = vunpack.c.l.b16 %v453
  %v1597 = vunpack.c.l.b16 %v454
  %v1598 = vunpack.c.l.b16 %v455
  %v1599 = vunpack.c.l.b16 %v456
  %v1600 = vunpack.c.l.b16 %v457
  %v1601 = vunpack.c.l.b16 %v458
  %v1602 = vunpack.c.l.b16 %v459
  %v1603 = vunpack.c.l.b16 %v460
  %v1604 = vunpack.c.l.b16 %v461
  %v1605 = vunpack.c.l.b16 %v462
  %v1606 = vunpack.c.l.b16 %v463
  %v1607 = vunpack.c.l.b16 %v464
  %v1608 = vunpack.c.l.b16 %v465
  %v1609 = vunpack.c.l.b16 %v466
  %v1610 = vunpack.c.l.b16 %v467
  %v1611 = vunpack.c.l.b16 %v468
  %v1612 = vunpack.c.l.b16 %v469
  %v1613 = vunpack.c.l.b16 %v470
  %v1614 = vunpack.c.l.b16 %v471
  %v1615 = vunpack.c.l.b16 %v472
  %v1616 = vunpack.c.l.b16 %v473
  %v1617 = vunpack.c.l.b16 %v474
  %v1618 = vunpack.c.l.b16 %v475
  %v1619 = vunpack.c.l.b16 %v476
  %v1620 = vunpack.c.l.b16 %v477
  %v1621 = vunpack.c.l.b16 %v478
  %v1622 = vunpack.c.l.b16 %v479
  %v1623 = vunpack.c.l.b16 %v480
  %v1624 = vunpack.c.l.b16 %v481
  %v1625 = vunpack.c.l.b16 %v482
  %v1626 = vunpack.c.l.b16 %v483
  %v1627 = vunpack.c.l.b16 %v484
  %v1628 = vunpack.c.l.b16 %v485
  %v1629 = vunpack.c.l.b16 %v486
  %v1630 = vunpack.c.l.b16 %v487
  %v1631 = vunpack.c.l.b16 %v488
  %v1632 = vunpack.c.l.b16 %v489
  %v1633 = vunpack.c.l.b16 %v490
  %v1634 = vunpack.c.l.b16 %v491
  %v1635 = vunpack.c.l.b16 %v492
  %v1636 = vunpack.c.l.b16 %v493
  %v1637 = vunpack.c.l.b16 %v494
  %v1638 = vunpack.c.l.b16 %v495
  %v1639 = vunpack.c.l.b16 %v496
  %v1640 = vunpack.c.l.b16 %v497
  %v1641 = vunpack.c.l.b16 %v498
  %v1642 = vunpack.c.l.b16 %v499
  %v1643 = vunpack.c.l.b16 %v500
  %v1644 = vunpack.c.l.b16 %v501
  %v1645 = vunpack.c.l.b16 %v502
  %v1646 = vpack.c.b16 %v1215, %v1214
  %v1647 = vpack.c.b16 %v1217, %v1216
  %v1648 = vpack.c.b16 %v1219, %v1218
  %v1649 = vpack.c.b16 %v1221, %v1220
  %v1650 = vpack.c.b16 %v1223, %v1222
  %v1651 = vpack.c.b16 %v1225, %v1224
  %v1652 = vpack.c.b16 %v1227, %v1226
  %v1653 = vpack.c.b16 %v1229, %v1228
  %v1654 = vpack.c.b16 %v1231, %v1230
  %v1655 = vpack.c.b16 %v1233, %v1232
  %v1656 = vpack.c.b16 %v1235, %v1234
  %v1657 = vpack.c.b16 %v1237, %v1236
  %v1658 = vpack.c.b16 %v1239, %v1238
  %v1659 = vpack.c.b16 %v1241, %v1240
  %v1660 = vpack.c.b16 %v1243, %v1242
  %v1661 = vpack.c.b16 %v1245, %v1244
  %v1662 = vpack.c.b16 %v1247, %v1246
  %v1663 = vpack.c.b16 %v1249, %v1248
  %v1664 = vpack.c.b16 %v1251, %v1250
  %v1665 = vpack.c.b16 %v1253, %v1252
  %v1666 = vpack.c.b16 %v1255, %v1254
  %v1667 = vpack.c.b16 %v1257, %v1256
  %v1668 = vpack.c.b16 %v1259, %v1258
  %v1669 = vpack.c.b16 %v1261, %v1260
  %v1670 = vpack.c.b16 %v1263, %v1262
  %v1671 = vpack.c.b16 %v1265, %v1264
  %v1672 = vpack.c.b16 %v1267, %v1266
  %v1673 = vpack.c.b16 %v1269, %v1268
  %v1674 = vpack.c.b16 %v1271, %v1270
  %v1675 = vpack.c.b16 %v1273, %v1272
  %v1676 = vpack.c.b16 %v1275, %v1274
  %v1677 = vpack.c.b16 %v1277, %v1276
  %v1678 = vpack.c.b16 %v1279, %v1278
  %v1679 = vpack.c.b16 %v1281, %v1280
  %v1680 = vpack.c.b16 %v1283, %v1282
  %v1681 = vpack.c.b16 %v1285, %v1284
  %v1682 = vpack.c.b16 %v1287, %v1286
  %v1683 = vpack.c.b16 %v1289, %v1288
  %v1684 = vpack.c.b16 %v1291, %v1290
  %v1685 = vpack.c.b16 %v1293, %v1292
  %v1686 = vpack.c.b16 %v1295, %v1294
  %v1687 = vpack.c.b16 %v1297, %v1296
  %v1688 = vpack.c.b16 %v1299, %v1298
  %v1689 = vpack.c.b16 %v1301, %v1300
  %v1690 = vpack.c.b16 %v1303, %v1302
  %v1691 = vpack.c.b16 %v1305, %v1304
  %v1692 = vpack.c.b16 %v1307, %v1306
  %v1693 = vpack.c.b16 %v1309, %v1308
  %v1694 = vpack.c.b16 %v1311, %v1310
  %v1695 = vpack.c.b16 %v1313, %v1312
  %v1696 = vpack.c.b16 %v1315, %v1314
  %v1697 = vpack.c.b16 %v1317, %v1316
  %v1698 = vpack.c.b16 %v1319, %v1318
  %v1699 = vpack.c.b16 %v1321, %v1320
  %v1700 = vpack.c.b16 %v1323, %v1322
  %v1701 = vpack.c.b16 %v1325, %v1324
  %v1702 = vpack.c.b16 %v1327, %v1326
  %v1703 = vpack.c.b16 %v1329, %v1328
  %v1704 = vpack.c.b16 %v1331, %v1330
  %v1705 = vpack.c.b16 %v1333, %v1332
  %v1706 = vpack.c.b16 %v1335, %v1334
  %v1707 = vpack.c.b16 %v1337, %v1336
  %v1708 = vpack.c.b16 %v1339, %v1338
  %v1709 = vpack.c.b16 %v1341, %v1340
  %v1710 = vpack.c.b16 %v1343, %v1342
  %v1711 = vpack.c.b16 %v1345, %v1344
  %v1712 = vpack.c.b16 %v1347, %v1346
  %v1713 = vpack.c.b16 %v1349, %v1348
  %v1714 = vpack.c.b16 %v1351, %v1350
  %v1715 = vpack.c.b16 %v1353, %v1352
  %v1716 = vpack.c.b16 %v1355, %v1354
  %v1717 = vpack.c.b16 %v1357, %v1356
  %v1718 = vpack.c.b16 %v1359, %v1358
  %v1719 = vpack.c.b16 %v1361, %v1360
  %v1720 = vpack.c.b16 %v1363, %v1362
  %v1721 = vpack.c.b16 %v1365, %v1364
  %v1722 = vpack.c.b16 %v1367, %v1366
  %v1723 = vpack.c.b16 %v1369, %v1368
  %v1724 = vpack.c.b16 %v1371, %v1370
  %v1725 = vpack.c.b16 %v1373, %v1372
  %v1726 = vpack.c.b16 %v1375, %v1374
  %v1727 = vpack.c.b16 %v1377, %v1376
  %v1728 = vpack.c.b16 %v1379, %v1378
  %v1729 = vpack.c.b16 %v1381, %v1380
  %v1730 = vpack.c.b16 %v1383, %v1382
  %v1731 = vpack.c.b16 %v1385, %v1384
  %v1732 = vpack.c.b16 %v1387, %v1386
  %v1733 = vpack.c.b16 %v1389, %v1388
  %v1734 = vpack.c.b16 %v1391, %v1390
  %v1735 = vpack.c.b16 %v1393, %v1392
  %v1736 = vpack.c.b16 %v1395, %v1394
  %v1737 = vpack.c.b16 %v1397, %v1396
  %v1738 = vpack.c.b16 %v1399, %v1398
  %v1739 = vpack.c.b16 %v1401, %v1400
  %v1740 = vpack.c.b16 %v1403, %v1402
  %v1741 = vpack.c.b16 %v1405, %v1404
  %v1742 = vpack.c.b16 %v1407, %v1406
  %v1743 = vpack.c.b16 %v1409, %v1408
  %v1744 = vpack.c.b16 %v1411, %v1410
  %v1745 = vpack.c.b16 %v1413, %v1412
  %v1746 = vpack.c.b16 %v1415, %v1414
  %v1747 = vpack.c.b16 %v1417, %v1416
  %v1748 = vpack.c.b16 %v1419, %v1418
  %v1749 = vpack.c.b16 %v1421, %v1420
  %v1750 = vpack.c.b16 %v1423, %v1422
  %v1751 = vpack.c.b16 %v1425, %v1424
  %v1752 = vpack.c.b16 %v1427, %v1426
  %v1753 = vpack.c.b16 %v1429, %v1428
  %v1754 = vpack.c.b16 %v1431, %v1430
  %v1755 = vpack.c.b16 %v1433, %v1432
  %v1756 = vpack.c.b16 %v1435, %v1434
  %v1757 = vpack.c.b16 %v1437, %v1436
  %v1758 = vpack.c.b16 %v1439, %v1438
  %v1759 = vpack.c.b16 %v1441, %v1440
  %v1760 = vpack.c.b16 %v1443, %v1442
  %v1761 = vpack.c.b16 %v1445, %v1444
  %v1762 = vpack.c.b16 %v1447, %v1446
  %v1763 = vpack.c.b16 %v1449, %v1448
  %v1764 = vpack.c.b16 %v1451, %v1450
  %v1765 = vpack.c.b16 %v1453, %v1452
  %v1766 = vpack.c.b16 %v1455, %v1454
  %v1767 = vpack.c.b16 %v1457, %v1456
  %v1768 = vpack.c.b16 %v1459, %v1458
  %v1769 = vpack.c.b16 %v1461, %v1460
  %v1770 = vpack.c.b16 %v1463, %v1462
  %v1771 = vpack.c.b16 %v1465, %v1464
  %v1772 = vpack.c.b16 %v1467, %v1466
  %v1773 = vpack.c.b16 %v1469, %v1468
  %v1774 = vpack.c.b16 %v1471, %v1470
  %v1775 = vpack.c.b16 %v1473, %v1472
  %v1776 = vpack.c.b16 %v1475, %v1474
  %v1777 = vpack.c.b16 %v1477, %v1476
  %v1778 = vpack.c.b16 %v1479, %v1478
  %v1779 = vpack.c.b16 %v1481, %v1480
  %v1780 = vpack.c.b16 %v1483, %v1482
  %v1781 = vpack.c.b16 %v1485, %v1484
  %v1782 = vpack.c.b16 %v1487, %v1486
  %v1783 = vpack.c.b16 %v1489, %v1488
  %v1784 = vpack.c.b16 %v1491, %v1490
  %v1785 = vpack.c.b16 %v1493, %v1492
  %v1786 = vpack.c.b16 %v1495, %v1494
  %v1787 = vpack.c.b16 %v1497, %v1496
  %v1788 = vpack.c.b16 %v1499, %v1498
  %v1789 = vpack.c.b16 %v1501, %v1500
  %v1790 = vpack.c.b16 %v1503, %v1502
  %v1791 = vpack.c.b16 %v1505, %v1504
  %v1792 = vpack.c.b16 %v1507, %v1506
  %v1793 = vpack.c.b16 %v1509, %v1508
  %v1794 = vpack.c.b16 %v1511, %v1510
  %v1795 = vpack.c.b16 %v1513, %v1512
  %v1796 = vpack.c.b16 %v1515, %v1514
  %v1797 = vpack.c.b16 %v1517, %v1516
  %v1798 = vpack.c.b16 %v1519, %v1518
  %v1799 = vpack.c.b16 %v1521, %v1520
  %v1800 = vpack.c.b16 %v1523, %v1522
  %v1801 = vpack.c.b16 %v1525, %v1524
  %v1802 = vpack.c.b16 %v1527, %v1526
  %v1803 = vpack.c.b16 %v1529, %v1528
  %v1804 = vpack.c.b16 %v1531, %v1530
  %v1805 = vpack.c.b16 %v1533, %v1532
  %v1806 = vpack.c.b16 %v1535, %v1534
  %v1807 = vpack.c.b16 %v1537, %v1536
  %v1808 = vpack.c.b16 %v1539, %v1538
  %v1809 = vpack.c.b16 %v1541, %v1540
  %v1810 = vpack.c.b16 %v1543, %v1542
  %v1811 = vpack.c.b16 %v1545, %v1544
  %v1812 = vpack.c.b16 %v1547, %v1546
  %v1813 = vpack.c.b16 %v1549, %v1548
  %v1814 = vpack.c.b16 %v1551, %v1550
  %v1815 = vpack.c.b16 %v1553, %v1552
  %v1816 = vpack.c.b16 %v1555, %v1554
  %v1817 = vpack.c.b16 %v1557, %v1556
  %v1818 = vpack.c.b16 %v1559, %v1558
  %v1819 = vpack.c.b16 %v1561, %v1560
  %v1820 = vpack.c.b16 %v1563, %v1562
  %v1821 = vpack.c.b16 %v1565, %v1564
  %v1822 = vpack.c.b16 %v1567, %v1566
  %v1823 = vpack.c.b16 %v1569, %v1568
  %v1824 = vpack.c.b16 %v1571, %v1570
  %v1825 = vpack.c.b16 %v1573, %v1572
  %v1826 = vpack.c.b16 %v1575, %v1574
  %v1827 = vpack.c.b16 %v1577, %v1576
  %v1828 = vpack.c.b16 %v1579, %v1578
  %v1829 = vpack.c.b16 %v1581, %v1580
  %v1830 = vpack.c.b16 %v1583, %v1582
  %v1831 = vpack.c.b16 %v1585, %v1584
  %v1832 = vpack.c.b16 %v1587, %v1586
  %v1833 = vpack.c.b16 %v1589, %v1588
  %v1834 = vpack.c.b16 %v1591, %v1590
  %v1835 = vpack.c.b16 %v1593, %v1592
  %v1836 = vpack.c.b16 %v1595, %v1594
  %v1837 = vpack.c.b16 %v1597, %v1596
  %v1838 = vpack.c.b16 %v1599, %v1598
  %v1839 = vpack.c.b16 %v1601, %v1600
  %v1840 = vpack.c.b16 %v1603, %v1602
  %v1841 = vpack.c.b16 %v1605, %v1604
  %v1842 = vpack.c.b16 %v1607, %v1606
  %v1843 = vpack.c.b16 %v1609, %v1608
  %v1844 = vpack.c.b16 %v1611, %v1610
  %v1845 = vpack.c.b16 %v1613, %v1612
  %v1846 = vpack.c.b16 %v1615, %v1614
  %v1847 = vpack.c.b16 %v1617, %v1616
  %v1848 = vpack.c.b16 %v1619, %v1618
  %v1849 = vpack.c.b16 %v1621, %v1620
  %v1850 = vpack.c.b16 %v1623, %v1622
  %v1851 = vpack.c.b16 %v1625, %v1624
  %v1852 = vpack.c.b16 %v1627, %v1626
  %v1853 = vpack.c.b16 %v1629, %v1628
  %v1854 = vpack.c.b16 %v1631, %v1630
  %v1855 = vpack.c.b16 %v1633, %v1632
  %v1856 = vpack.c.b16 %v1635, %v1634
  %v1857 = vpack.c.b16 %v1637, %v1636
  %v1858 = vpack.c.b16 %v1639, %v1638
  %v1859 = vpack.c.b16 %v1641, %v1640
  %v1860 = vpack.c.b16 %v1643, %v1642
  %v1861 = vpack.c.b16 %v1645, %v1644
  %2078 = vmatprep.subr.bf16.mxu0 0
  %2079 = vmatpush1.bf16.msra.mxu0 %v1646
  %2080 = vmatprep.subr.bf16.mxu0 0
  %2081 = vmatpush1.bf16.msra.mxu0 %v1647
  %2082 = vmatprep.subr.bf16.mxu0 0
  %2083 = vmatpush1.bf16.msra.mxu0 %v1648
  %2084 = vmatprep.subr.bf16.mxu0 0
  %2085 = vmatpush1.bf16.msra.mxu0 %v1649
  %2086 = vmatprep.subr.bf16.mxu0 0
  %2087 = vmatpush1.bf16.msra.mxu0 %v1650
  %2088 = vmatprep.subr.bf16.mxu0 0
  %2089 = vmatpush1.bf16.msra.mxu0 %v1651
  %2090 = vmatprep.subr.bf16.mxu0 0
  %2091 = vmatpush1.bf16.msra.mxu0 %v1652
  %2092 = vmatprep.subr.bf16.mxu0 0
  %2093 = vmatpush1.bf16.msra.mxu0 %v1653
  %2094 = vmatprep.subr.bf16.mxu0 0
  %2095 = vmatpush1.bf16.msra.mxu0 %v1654
  %2096 = vmatprep.subr.bf16.mxu0 0
  %2097 = vmatpush1.bf16.msra.mxu0 %v1655
  %2098 = vmatprep.subr.bf16.mxu0 0
  %2099 = vmatpush1.bf16.msra.mxu0 %v1656
  %2100 = vmatprep.subr.bf16.mxu0 0
  %2101 = vmatpush1.bf16.msra.mxu0 %v1657
  %2102 = vmatprep.subr.bf16.mxu0 0
  %2103 = vmatpush1.bf16.msra.mxu0 %v1658
  %2104 = vmatprep.subr.bf16.mxu0 0
  %2105 = vmatpush1.bf16.msra.mxu0 %v1659
  %2106 = vmatprep.subr.bf16.mxu0 0
  %2107 = vmatpush1.bf16.msra.mxu0 %v1660
  %2108 = vmatprep.subr.bf16.mxu0 0
  %2109 = vmatpush1.bf16.msra.mxu0 %v1661
  %2110 = vmatprep.mubr.bf16.mxu0 %v675
  %2111 = vmatmul.mubr.bf16.gmra.mrb[0].mxu0 %v674
  %v2112 = vpop.f32.mrb[0].mxu0
  %v2113 = vadd.f32 %v508, %v2112
  %v2114 = vpop.f32.mrb[0].mxu0
  %v2115 = vpop.f32.mrb[0].mxu0
  %v2116 = vadd.f32 %v508, %v2115
  %v2117 = vpop.f32.mrb[0].mxu0
  %2118 = vmatprep.mubr.bf16.mxu0 %v702
  %2119 = vmatmul.mubr.bf16.gmra.mrb[0].mxu0 %v701
  %v2120 = vpop.f32.mrb[0].mxu0
  %v2121 = vadd.f32 %v508, %v2120
  %v2122 = vpop.f32.mrb[0].mxu0
  %v2123 = vpop.f32.mrb[0].mxu0
  %v2124 = vadd.f32 %v508, %v2123
  %v2125 = vpop.f32.mrb[0].mxu0
  %2126 = vdwg.mxu0
  %2127 = vmatprep.subr.bf16.mxu0 0
  %2128 = vmatpush1.bf16.msra.mxu0 %v1662
  %2129 = vmatprep.subr.bf16.mxu0 0
  %2130 = vmatpush1.bf16.msra.mxu0 %v1663
  %2131 = vmatprep.subr.bf16.mxu0 0
  %2132 = vmatpush1.bf16.msra.mxu0 %v1664
  %2133 = vmatprep.subr.bf16.mxu0 0
  %2134 = vmatpush1.bf16.msra.mxu0 %v1665
  %2135 = vmatprep.subr.bf16.mxu0 0
  %2136 = vmatpush1.bf16.msra.mxu0 %v1666
  %2137 = vmatprep.subr.bf16.mxu0 0
  %2138 = vmatpush1.bf16.msra.mxu0 %v1667
  %2139 = vmatprep.subr.bf16.mxu0 0
  %2140 = vmatpush1.bf16.msra.mxu0 %v1668
  %2141 = vmatprep.subr.bf16.mxu0 0
  %2142 = vmatpush1.bf16.msra.mxu0 %v1669
  %2143 = vmatprep.subr.bf16.mxu0 0
  %2144 = vmatpush1.bf16.msra.mxu0 %v1670
  %2145 = vmatprep.subr.bf16.mxu0 0
  %2146 = vmatpush1.bf16.msra.mxu0 %v1671
  %2147 = vmatprep.subr.bf16.mxu0 0
  %2148 = vmatpush1.bf16.msra.mxu0 %v1672
  %2149 = vmatprep.subr.bf16.mxu0 0
  %2150 = vmatpush1.bf16.msra.mxu0 %v1673
  %2151 = vmatprep.subr.bf16.mxu0 0
  %2152 = vmatpush1.bf16.msra.mxu0 %v1674
  %2153 = vmatprep.subr.bf16.mxu0 0
  %2154 = vmatpush1.bf16.msra.mxu0 %v1675
  %2155 = vmatprep.subr.bf16.mxu0 0
  %2156 = vmatpush1.bf16.msra.mxu0 %v1676
  %2157 = vmatprep.subr.bf16.mxu0 0
  %2158 = vmatpush1.bf16.msra.mxu0 %v1677
  %2159 = vmatprep.mubr.bf16.mxu0 %v677
  %2160 = vmatmul.mubr.bf16.gmra.mrb[0].mxu0 %v676
  %v2161 = vpop.f32.mrb[0].mxu0
  %v2162 = vadd.f32 %v2113, %v2161
  %v2163 = vpop.f32.mrb[0].mxu0
  %v2164 = vpop.f32.mrb[0].mxu0
  %v2165 = vadd.f32 %v2116, %v2164
  %v2166 = vpop.f32.mrb[0].mxu0
  %2167 = vmatprep.mubr.bf16.mxu0 %v704
  %2168 = vmatmul.mubr.bf16.gmra.mrb[0].mxu0 %v703
  %v2169 = vpop.f32.mrb[0].mxu0
  %v2170 = vadd.f32 %v2121, %v2169
  %v2171 = vpop.f32.mrb[0].mxu0
  %v2172 = vpop.f32.mrb[0].mxu0
  %v2173 = vadd.f32 %v2124, %v2172
  %v2174 = vpop.f32.mrb[0].mxu0
  %2175 = vdwg.mxu0
  %2176 = vmatprep.subr.bf16.mxu0 0
  %2177 = vmatpush1.bf16.msra.mxu0 %v1678
  %2178 = vmatprep.subr.bf16.mxu0 0
  %2179 = vmatpush1.bf16.msra.mxu0 %v1679
  %2180 = vmatprep.subr.bf16.mxu0 0
  %2181 = vmatpush1.bf16.msra.mxu0 %v1680
  %2182 = vmatprep.subr.bf16.mxu0 0
  %2183 = vmatpush1.bf16.msra.mxu0 %v1681
  %2184 = vmatprep.subr.bf16.mxu0 0
  %2185 = vmatpush1.bf16.msra.mxu0 %v1682
  %2186 = vmatprep.subr.bf16.mxu0 0
  %2187 = vmatpush1.bf16.msra.mxu0 %v1683
  %2188 = vmatprep.subr.bf16.mxu0 0
  %2189 = vmatpush1.bf16.msra.mxu0 %v1684
  %2190 = vmatprep.subr.bf16.mxu0 0
  %2191 = vmatpush1.bf16.msra.mxu0 %v1685
  %2192 = vmatprep.subr.bf16.mxu0 0
  %2193 = vmatpush1.bf16.msra.mxu0 %v1686
  %2194 = vmatprep.subr.bf16.mxu0 0
  %2195 = vmatpush1.bf16.msra.mxu0 %v1687
  %2196 = vmatprep.subr.bf16.mxu0 0
  %2197 = vmatpush1.bf16.msra.mxu0 %v1688
  %2198 = vmatprep.subr.bf16.mxu0 0
  %2199 = vmatpush1.bf16.msra.mxu0 %v1689
  %2200 = vmatprep.subr.bf16.mxu0 0
  %2201 = vmatpush1.bf16.msra.mxu0 %v1690
  %2202 = vmatprep.subr.bf16.mxu0 0
  %2203 = vmatpush1.bf16.msra.mxu0 %v1691
  %2204 = vmatprep.subr.bf16.mxu0 0
  %2205 = vmatpush1.bf16.msra.mxu0 %v1692
  %2206 = vmatprep.subr.bf16.mxu0 0
  %2207 = vmatpush1.bf16.msra.mxu0 %v1693
  %2208 = vmatprep.mubr.bf16.mxu0 %v679
  %2209 = vmatmul.mubr.bf16.gmra.mrb[0].mxu0 %v678
  %v2210 = vpop.f32.mrb[0].mxu0
  %v2211 = vadd.f32 %v2162, %v2210
  %v2212 = vpop.f32.mrb[0].mxu0
  %v2213 = vpop.f32.mrb[0].mxu0
  %v2214 = vadd.f32 %v2165, %v2213
  %v2215 = vpop.f32.mrb[0].mxu0
  %2216 = vmatprep.mubr.bf16.mxu0 %v706
  %2217 = vmatmul.mubr.bf16.gmra.mrb[0].mxu0 %v705
  %v2218 = vpop.f32.mrb[0].mxu0
  %v2219 = vadd.f32 %v2170, %v2218
  %v2220 = vpop.f32.mrb[0].mxu0
  %v2221 = vpop.f32.mrb[0].mxu0
  %v2222 = vadd.f32 %v2173, %v2221
  %v2223 = vpop.f32.mrb[0].mxu0
  %2224 = vdwg.mxu0
  %2225 = vmatprep.subr.bf16.mxu0 0
  %2226 = vmatpush1.bf16.msra.mxu0 %v1694
  %2227 = vmatprep.subr.bf16.mxu0 0
  %2228 = vmatpush1.bf16.msra.mxu0 %v1695
  %2229 = vmatprep.subr.bf16.mxu0 0
  %2230 = vmatpush1.bf16.msra.mxu0 %v1696
  %2231 = vmatprep.subr.bf16.mxu0 0
  %2232 = vmatpush1.bf16.msra.mxu0 %v1697
  %2233 = vmatprep.subr.bf16.mxu0 0
  %2234 = vmatpush1.bf16.msra.mxu0 %v1698
  %2235 = vmatprep.subr.bf16.mxu0 0
  %2236 = vmatpush1.bf16.msra.mxu0 %v1699
  %2237 = vmatprep.subr.bf16.mxu0 0
  %2238 = vmatpush1.bf16.msra.mxu0 %v1700
  %2239 = vmatprep.subr.bf16.mxu0 0
  %2240 = vmatpush1.bf16.msra.mxu0 %v1701
  %2241 = vmatprep.subr.bf16.mxu0 0
  %2242 = vmatpush1.bf16.msra.mxu0 %v1702
  %2243 = vmatprep.subr.bf16.mxu0 0
  %2244 = vmatpush1.bf16.msra.mxu0 %v1703
  %2245 = vmatprep.subr.bf16.mxu0 0
  %2246 = vmatpush1.bf16.msra.mxu0 %v1704
  %2247 = vmatprep.subr.bf16.mxu0 0
  %2248 = vmatpush1.bf16.msra.mxu0 %v1705
  %2249 = vmatprep.subr.bf16.mxu0 0
  %2250 = vmatpush1.bf16.msra.mxu0 %v1706
  %2251 = vmatprep.subr.bf16.mxu0 0
  %2252 = vmatpush1.bf16.msra.mxu0 %v1707
  %2253 = vmatprep.subr.bf16.mxu0 0
  %2254 = vmatpush1.bf16.msra.mxu0 %v1708
  %2255 = vmatprep.subr.bf16.mxu0 0
  %2256 = vmatpush1.bf16.msra.mxu0 %v1709
  %2257 = vmatprep.mubr.bf16.mxu0 %v681
  %2258 = vmatmul.mubr.bf16.gmra.mrb[0].mxu0 %v680
  %v2259 = vpop.f32.mrb[0].mxu0
  %v2260 = vadd.f32 %v2211, %v2259
  %v2261 = vpop.f32.mrb[0].mxu0
  %v2262 = vpop.f32.mrb[0].mxu0
  %v2263 = vadd.f32 %v2214, %v2262
  %v2264 = vpop.f32.mrb[0].mxu0
  %2265 = vmatprep.mubr.bf16.mxu0 %v708
  %2266 = vmatmul.mubr.bf16.gmra.mrb[0].mxu0 %v707
  %v2267 = vpop.f32.mrb[0].mxu0
  %v2268 = vadd.f32 %v2219, %v2267
  %v2269 = vpop.f32.mrb[0].mxu0
  %v2270 = vpop.f32.mrb[0].mxu0
  %v2271 = vadd.f32 %v2222, %v2270
  %v2272 = vpop.f32.mrb[0].mxu0
  %2273 = vdwg.mxu0
  %2274 = vmatprep.subr.bf16.mxu0 0
  %2275 = vmatpush1.bf16.msra.mxu0 %v1710
  %2276 = vmatprep.subr.bf16.mxu0 0
  %2277 = vmatpush1.bf16.msra.mxu0 %v1711
  %2278 = vmatprep.subr.bf16.mxu0 0
  %2279 = vmatpush1.bf16.msra.mxu0 %v1712
  %2280 = vmatprep.subr.bf16.mxu0 0
  %2281 = vmatpush1.bf16.msra.mxu0 %v1713
  %2282 = vmatprep.subr.bf16.mxu0 0
  %2283 = vmatpush1.bf16.msra.mxu0 %v1714
  %2284 = vmatprep.subr.bf16.mxu0 0
  %2285 = vmatpush1.bf16.msra.mxu0 %v1715
  %2286 = vmatprep.subr.bf16.mxu0 0
  %2287 = vmatpush1.bf16.msra.mxu0 %v1716
  %2288 = vmatprep.subr.bf16.mxu0 0
  %2289 = vmatpush1.bf16.msra.mxu0 %v1717
  %2290 = vmatprep.subr.bf16.mxu0 0
  %2291 = vmatpush1.bf16.msra.mxu0 %v1718
  %2292 = vmatprep.subr.bf16.mxu0 0
  %2293 = vmatpush1.bf16.msra.mxu0 %v1719
  %2294 = vmatprep.subr.bf16.mxu0 0
  %2295 = vmatpush1.bf16.msra.mxu0 %v1720
  %2296 = vmatprep.subr.bf16.mxu0 0
  %2297 = vmatpush1.bf16.msra.mxu0 %v1721
  %2298 = vmatprep.subr.bf16.mxu0 0
  %2299 = vmatpush1.bf16.msra.mxu0 %v1722
  %2300 = vmatprep.subr.bf16.mxu0 0
  %2301 = vmatpush1.bf16.msra.mxu0 %v1723
  %2302 = vmatprep.subr.bf16.mxu0 0
  %2303 = vmatpush1.bf16.msra.mxu0 %v1724
  %2304 = vmatprep.subr.bf16.mxu0 0
  %2305 = vmatpush1.bf16.msra.mxu0 %v1725
  %2306 = vmatprep.mubr.bf16.mxu0 %v683
  %2307 = vmatmul.mubr.bf16.gmra.mrb[0].mxu0 %v682
  %v2308 = vpop.f32.mrb[0].mxu0
  %v2309 = vadd.f32 %v2260, %v2308
  %v2310 = vpop.f32.mrb[0].mxu0
  %v2311 = vpop.f32.mrb[0].mxu0
  %v2312 = vadd.f32 %v2263, %v2311
  %v2313 = vpop.f32.mrb[0].mxu0
  %2314 = vmatprep.mubr.bf16.mxu0 %v710
  %2315 = vmatmul.mubr.bf16.gmra.mrb[0].mxu0 %v709
  %v2316 = vpop.f32.mrb[0].mxu0
  %v2317 = vadd.f32 %v2268, %v2316
  %v2318 = vpop.f32.mrb[0].mxu0
  %v2319 = vpop.f32.mrb[0].mxu0
  %v2320 = vadd.f32 %v2271, %v2319
  %v2321 = vpop.f32.mrb[0].mxu0
  %2322 = vdwg.mxu0
  %2323 = vmatprep.subr.bf16.mxu0 0
  %2324 = vmatpush1.bf16.msra.mxu0 %v1726
  %2325 = vmatprep.subr.bf16.mxu0 0
  %2326 = vmatpush1.bf16.msra.mxu0 %v1727
  %2327 = vmatprep.subr.bf16.mxu0 0
  %2328 = vmatpush1.bf16.msra.mxu0 %v1728
  %2329 = vmatprep.subr.bf16.mxu0 0
  %2330 = vmatpush1.bf16.msra.mxu0 %v1729
  %2331 = vmatprep.subr.bf16.mxu0 0
  %2332 = vmatpush1.bf16.msra.mxu0 %v1730
  %2333 = vmatprep.subr.bf16.mxu0 0
  %2334 = vmatpush1.bf16.msra.mxu0 %v1731
  %2335 = vmatprep.subr.bf16.mxu0 0
  %2336 = vmatpush1.bf16.msra.mxu0 %v1732
  %2337 = vmatprep.subr.bf16.mxu0 0
  %2338 = vmatpush1.bf16.msra.mxu0 %v1733
  %2339 = vmatprep.subr.bf16.mxu0 0
  %2340 = vmatpush1.bf16.msra.mxu0 %v1734
  %2341 = vmatprep.subr.bf16.mxu0 0
  %2342 = vmatpush1.bf16.msra.mxu0 %v1735
  %2343 = vmatprep.subr.bf16.mxu0 0
  %2344 = vmatpush1.bf16.msra.mxu0 %v1736
  %2345 = vmatprep.subr.bf16.mxu0 0
  %2346 = vmatpush1.bf16.msra.mxu0 %v1737
  %2347 = vmatprep.subr.bf16.mxu0 0
  %2348 = vmatpush1.bf16.msra.mxu0 %v1738
  %2349 = vmatprep.subr.bf16.mxu0 0
  %2350 = vmatpush1.bf16.msra.mxu0 %v1739
  %2351 = vmatprep.subr.bf16.mxu0 0
  %2352 = vmatpush1.bf16.msra.mxu0 %v1740
  %2353 = vmatprep.subr.bf16.mxu0 0
  %2354 = vmatpush1.bf16.msra.mxu0 %v1741
  %2355 = vmatprep.mubr.bf16.mxu0 %v685
  %2356 = vmatmul.mubr.bf16.gmra.mrb[0].mxu0 %v684
  %v2357 = vpop.f32.mrb[0].mxu0
  %v2358 = vadd.f32 %v2309, %v2357
  %v2359 = vpop.f32.mrb[0].mxu0
  %v2360 = vpop.f32.mrb[0].mxu0
  %v2361 = vadd.f32 %v2312, %v2360
  %v2362 = vpop.f32.mrb[0].mxu0
  %2363 = vmatprep.mubr.bf16.mxu0 %v712
  %2364 = vmatmul.mubr.bf16.gmra.mrb[0].mxu0 %v711
  %v2365 = vpop.f32.mrb[0].mxu0
  %v2366 = vadd.f32 %v2317, %v2365
  %v2367 = vpop.f32.mrb[0].mxu0
  %v2368 = vpop.f32.mrb[0].mxu0
  %v2369 = vadd.f32 %v2320, %v2368
  %v2370 = vpop.f32.mrb[0].mxu0
  %2371 = vdwg.mxu0
  %2372 = vmatprep.subr.bf16.mxu0 0
  %2373 = vmatpush1.bf16.msra.mxu0 %v1742
  %2374 = vmatprep.subr.bf16.mxu0 0
  %2375 = vmatpush1.bf16.msra.mxu0 %v1743
  %2376 = vmatprep.subr.bf16.mxu0 0
  %2377 = vmatpush1.bf16.msra.mxu0 %v1744
  %2378 = vmatprep.subr.bf16.mxu0 0
  %2379 = vmatpush1.bf16.msra.mxu0 %v1745
  %2380 = vmatprep.subr.bf16.mxu0 0
  %2381 = vmatpush1.bf16.msra.mxu0 %v1746
  %2382 = vmatprep.subr.bf16.mxu0 0
  %2383 = vmatpush1.bf16.msra.mxu0 %v1747
  %2384 = vmatprep.subr.bf16.mxu0 0
  %2385 = vmatpush1.bf16.msra.mxu0 %v1748
  %2386 = vmatprep.subr.bf16.mxu0 0
  %2387 = vmatpush1.bf16.msra.mxu0 %v1749
  %2388 = vmatprep.subr.bf16.mxu0 0
  %2389 = vmatpush1.bf16.msra.mxu0 %v1750
  %2390 = vmatprep.subr.bf16.mxu0 0
  %2391 = vmatpush1.bf16.msra.mxu0 %v1751
  %2392 = vmatprep.subr.bf16.mxu0 0
  %2393 = vmatpush1.bf16.msra.mxu0 %v1752
  %2394 = vmatprep.subr.bf16.mxu0 0
  %2395 = vmatpush1.bf16.msra.mxu0 %v1753
  %2396 = vmatprep.subr.bf16.mxu0 0
  %2397 = vmatpush1.bf16.msra.mxu0 %v1754
  %2398 = vmatprep.subr.bf16.mxu0 0
  %2399 = vmatpush1.bf16.msra.mxu0 %v1755
  %2400 = vmatprep.subr.bf16.mxu0 0
  %2401 = vmatpush1.bf16.msra.mxu0 %v1756
  %2402 = vmatprep.subr.bf16.mxu0 0
  %2403 = vmatpush1.bf16.msra.mxu0 %v1757
  %2404 = vmatprep.mubr.bf16.mxu0 %v687
  %2405 = vmatmul.mubr.bf16.gmra.mrb[0].mxu0 %v686
  %v2406 = vpop.f32.mrb[0].mxu0
  %v2407 = vadd.f32 %v2358, %v2406
  %v2408 = vpop.f32.mrb[0].mxu0
  %v2409 = vpop.f32.mrb[0].mxu0
  %v2410 = vadd.f32 %v2361, %v2409
  %v2411 = vpop.f32.mrb[0].mxu0
  %2412 = vmatprep.mubr.bf16.mxu0 %v714
  %2413 = vmatmul.mubr.bf16.gmra.mrb[0].mxu0 %v713
  %v2414 = vpop.f32.mrb[0].mxu0
  %v2415 = vadd.f32 %v2366, %v2414
  %v2416 = vpop.f32.mrb[0].mxu0
  %v2417 = vpop.f32.mrb[0].mxu0
  %v2418 = vadd.f32 %v2369, %v2417
  %v2419 = vpop.f32.mrb[0].mxu0
  %2420 = vdwg.mxu0
  %2421 = vmatprep.subr.bf16.mxu0 0
  %2422 = vmatpush1.bf16.msra.mxu0 %v1758
  %2423 = vmatprep.subr.bf16.mxu0 0
  %2424 = vmatpush1.bf16.msra.mxu0 %v1759
  %2425 = vmatprep.subr.bf16.mxu0 0
  %2426 = vmatpush1.bf16.msra.mxu0 %v1760
  %2427 = vmatprep.subr.bf16.mxu0 0
  %2428 = vmatpush1.bf16.msra.mxu0 %v1761
  %2429 = vmatprep.subr.bf16.mxu0 0
  %2430 = vmatpush1.bf16.msra.mxu0 %v1762
  %2431 = vmatprep.subr.bf16.mxu0 0
  %2432 = vmatpush1.bf16.msra.mxu0 %v1763
  %2433 = vmatprep.subr.bf16.mxu0 0
  %2434 = vmatpush1.bf16.msra.mxu0 %v1764
  %2435 = vmatprep.subr.bf16.mxu0 0
  %2436 = vmatpush1.bf16.msra.mxu0 %v1765
  %2437 = vmatprep.subr.bf16.mxu0 0
  %2438 = vmatpush1.bf16.msra.mxu0 %v1766
  %2439 = vmatprep.subr.bf16.mxu0 0
  %2440 = vmatpush1.bf16.msra.mxu0 %v1767
  %2441 = vmatprep.subr.bf16.mxu0 0
  %2442 = vmatpush1.bf16.msra.mxu0 %v1768
  %2443 = vmatprep.subr.bf16.mxu0 0
  %2444 = vmatpush1.bf16.msra.mxu0 %v1769
  %2445 = vmatprep.subr.bf16.mxu0 0
  %2446 = vmatpush1.bf16.msra.mxu0 %v1770
  %2447 = vmatprep.subr.bf16.mxu0 0
  %2448 = vmatpush1.bf16.msra.mxu0 %v1771
  %2449 = vmatprep.subr.bf16.mxu0 0
  %2450 = vmatpush1.bf16.msra.mxu0 %v1772
  %2451 = vmatprep.subr.bf16.mxu0 0
  %2452 = vmatpush1.bf16.msra.mxu0 %v1773
  %2453 = vmatprep.mubr.bf16.mxu0 %v689
  %2454 = vmatmul.mubr.bf16.gmra.mrb[0].mxu0 %v688
  %v2455 = vpop.f32.mrb[0].mxu0
  %v2456 = vadd.f32 %v2407, %v2455
  %v2457 = vpop.f32.mrb[0].mxu0
  %v2458 = vpop.f32.mrb[0].mxu0
  %v2459 = vadd.f32 %v2410, %v2458
  %v2460 = vpop.f32.mrb[0].mxu0
  %2461 = vmatprep.mubr.bf16.mxu0 %v716
  %2462 = vmatmul.mubr.bf16.gmra.mrb[0].mxu0 %v715
  %v2463 = vpop.f32.mrb[0].mxu0
  %v2464 = vadd.f32 %v2415, %v2463
  %v2465 = vpop.f32.mrb[0].mxu0
  %v2466 = vpop.f32.mrb[0].mxu0
  %v2467 = vadd.f32 %v2418, %v2466
  %v2468 = vpop.f32.mrb[0].mxu0
  %2469 = vdwg.mxu0
  %2470 = vmatprep.subr.bf16.mxu0 0
  %2471 = vmatpush1.bf16.msra.mxu0 %v1774
  %2472 = vmatprep.subr.bf16.mxu0 0
  %2473 = vmatpush1.bf16.msra.mxu0 %v1775
  %2474 = vmatprep.subr.bf16.mxu0 0
  %2475 = vmatpush1.bf16.msra.mxu0 %v1776
  %2476 = vmatprep.subr.bf16.mxu0 0
  %2477 = vmatpush1.bf16.msra.mxu0 %v1777
  %2478 = vmatprep.subr.bf16.mxu0 0
  %2479 = vmatpush1.bf16.msra.mxu0 %v1778
  %2480 = vmatprep.subr.bf16.mxu0 0
  %2481 = vmatpush1.bf16.msra.mxu0 %v1779
  %2482 = vmatprep.subr.bf16.mxu0 0
  %2483 = vmatpush1.bf16.msra.mxu0 %v1780
  %2484 = vmatprep.subr.bf16.mxu0 0
  %2485 = vmatpush1.bf16.msra.mxu0 %v1781
  %2486 = vmatprep.subr.bf16.mxu0 0
  %2487 = vmatpush1.bf16.msra.mxu0 %v1782
  %2488 = vmatprep.subr.bf16.mxu0 0
  %2489 = vmatpush1.bf16.msra.mxu0 %v1783
  %2490 = vmatprep.subr.bf16.mxu0 0
  %2491 = vmatpush1.bf16.msra.mxu0 %v1784
  %2492 = vmatprep.subr.bf16.mxu0 0
  %2493 = vmatpush1.bf16.msra.mxu0 %v1785
  %2494 = vmatprep.subr.bf16.mxu0 0
  %2495 = vmatpush1.bf16.msra.mxu0 %v1786
  %2496 = vmatprep.subr.bf16.mxu0 0
  %2497 = vmatpush1.bf16.msra.mxu0 %v1787
  %2498 = vmatprep.subr.bf16.mxu0 0
  %2499 = vmatpush1.bf16.msra.mxu0 %v1788
  %2500 = vmatprep.subr.bf16.mxu0 0
  %2501 = vmatpush1.bf16.msra.mxu0 %v1789
  %2502 = vmatprep.mubr.bf16.mxu0 %v691
  %2503 = vmatmul.mubr.bf16.gmra.mrb[0].mxu0 %v690
  %v2504 = vpop.f32.mrb[0].mxu0
  %v2505 = vadd.f32 %v2456, %v2504
  %v2506 = vpop.f32.mrb[0].mxu0
  %v2507 = vpop.f32.mrb[0].mxu0
  %v2508 = vadd.f32 %v2459, %v2507
  %v2509 = vpop.f32.mrb[0].mxu0
  %2510 = vmatprep.mubr.bf16.mxu0 %v718
  %2511 = vmatmul.mubr.bf16.gmra.mrb[0].mxu0 %v717
  %v2512 = vpop.f32.mrb[0].mxu0
  %v2513 = vadd.f32 %v2464, %v2512
  %v2514 = vpop.f32.mrb[0].mxu0
  %v2515 = vpop.f32.mrb[0].mxu0
  %v2516 = vadd.f32 %v2467, %v2515
  %v2517 = vpop.f32.mrb[0].mxu0
  %2518 = vdwg.mxu0
  %2519 = vmatprep.subr.bf16.mxu0 0
  %2520 = vmatpush1.bf16.msra.mxu0 %v1790
  %2521 = vmatprep.subr.bf16.mxu0 0
  %2522 = vmatpush1.bf16.msra.mxu0 %v1791
  %2523 = vmatprep.subr.bf16.mxu0 0
  %2524 = vmatpush1.bf16.msra.mxu0 %v1792
  %2525 = vmatprep.subr.bf16.mxu0 0
  %2526 = vmatpush1.bf16.msra.mxu0 %v1793
  %2527 = vmatprep.subr.bf16.mxu0 0
  %2528 = vmatpush1.bf16.msra.mxu0 %v1794
  %2529 = vmatprep.subr.bf16.mxu0 0
  %2530 = vmatpush1.bf16.msra.mxu0 %v1795
  %2531 = vmatprep.subr.bf16.mxu0 0
  %2532 = vmatpush1.bf16.msra.mxu0 %v1796
  %2533 = vmatprep.subr.bf16.mxu0 0
  %2534 = vmatpush1.bf16.msra.mxu0 %v1797
  %2535 = vmatprep.subr.bf16.mxu0 0
  %2536 = vmatpush1.bf16.msra.mxu0 %v1798
  %2537 = vmatprep.subr.bf16.mxu0 0
  %2538 = vmatpush1.bf16.msra.mxu0 %v1799
  %2539 = vmatprep.subr.bf16.mxu0 0
  %2540 = vmatpush1.bf16.msra.mxu0 %v1800
  %2541 = vmatprep.subr.bf16.mxu0 0
  %2542 = vmatpush1.bf16.msra.mxu0 %v1801
  %2543 = vmatprep.subr.bf16.mxu0 0
  %2544 = vmatpush1.bf16.msra.mxu0 %v1802
  %2545 = vmatprep.subr.bf16.mxu0 0
  %2546 = vmatpush1.bf16.msra.mxu0 %v1803
  %2547 = vmatprep.subr.bf16.mxu0 0
  %2548 = vmatpush1.bf16.msra.mxu0 %v1804
  %2549 = vmatprep.subr.bf16.mxu0 0
  %2550 = vmatpush1.bf16.msra.mxu0 %v1805
  %2551 = vmatprep.mubr.bf16.mxu0 %v693
  %2552 = vmatmul.mubr.bf16.gmra.mrb[0].mxu0 %v692
  %v2553 = vpop.f32.mrb[0].mxu0
  %v2554 = vadd.f32 %v2505, %v2553
  %v2555 = vpop.f32.mrb[0].mxu0
  %v2556 = vpop.f32.mrb[0].mxu0
  %v2557 = vadd.f32 %v2508, %v2556
  %v2558 = vpop.f32.mrb[0].mxu0
  %2559 = vmatprep.mubr.bf16.mxu0 %v720
  %2560 = vmatmul.mubr.bf16.gmra.mrb[0].mxu0 %v719
  %v2561 = vpop.f32.mrb[0].mxu0
  %v2562 = vadd.f32 %v2513, %v2561
  %v2563 = vpop.f32.mrb[0].mxu0
  %v2564 = vpop.f32.mrb[0].mxu0
  %v2565 = vadd.f32 %v2516, %v2564
  %v2566 = vpop.f32.mrb[0].mxu0
  %2567 = vdwg.mxu0
  %2568 = vmatprep.subr.bf16.mxu0 0
  %2569 = vmatpush1.bf16.msra.mxu0 %v1806
  %2570 = vmatprep.subr.bf16.mxu0 0
  %2571 = vmatpush1.bf16.msra.mxu0 %v1807
  %2572 = vmatprep.subr.bf16.mxu0 0
  %2573 = vmatpush1.bf16.msra.mxu0 %v1808
  %2574 = vmatprep.subr.bf16.mxu0 0
  %2575 = vmatpush1.bf16.msra.mxu0 %v1809
  %2576 = vmatprep.subr.bf16.mxu0 0
  %2577 = vmatpush1.bf16.msra.mxu0 %v1810
  %2578 = vmatprep.subr.bf16.mxu0 0
  %2579 = vmatpush1.bf16.msra.mxu0 %v1811
  %2580 = vmatprep.subr.bf16.mxu0 0
  %2581 = vmatpush1.bf16.msra.mxu0 %v1812
  %2582 = vmatprep.subr.bf16.mxu0 0
  %2583 = vmatpush1.bf16.msra.mxu0 %v1813
  %2584 = vmatprep.subr.bf16.mxu0 0
  %2585 = vmatpush1.bf16.msra.mxu0 %v1814
  %2586 = vmatprep.subr.bf16.mxu0 0
  %2587 = vmatpush1.bf16.msra.mxu0 %v1815
  %2588 = vmatprep.subr.bf16.mxu0 0
  %2589 = vmatpush1.bf16.msra.mxu0 %v1816
  %2590 = vmatprep.subr.bf16.mxu0 0
  %2591 = vmatpush1.bf16.msra.mxu0 %v1817
  %2592 = vmatprep.subr.bf16.mxu0 0
  %2593 = vmatpush1.bf16.msra.mxu0 %v1818
  %2594 = vmatprep.subr.bf16.mxu0 0
  %2595 = vmatpush1.bf16.msra.mxu0 %v1819
  %2596 = vmatprep.subr.bf16.mxu0 0
  %2597 = vmatpush1.bf16.msra.mxu0 %v1820
  %2598 = vmatprep.subr.bf16.mxu0 0
  %2599 = vmatpush1.bf16.msra.mxu0 %v1821
  %2600 = vmatprep.mubr.bf16.mxu0 %v695
  %2601 = vmatmul.mubr.bf16.gmra.mrb[0].mxu0 %v694
  %v2602 = vpop.f32.mrb[0].mxu0
  %v2603 = vadd.f32 %v2554, %v2602
  %v2604 = vpop.f32.mrb[0].mxu0
  %v2605 = vpop.f32.mrb[0].mxu0
  %v2606 = vadd.f32 %v2557, %v2605
  %v2607 = vpop.f32.mrb[0].mxu0
  %2608 = vmatprep.mubr.bf16.mxu0 %v722
  %2609 = vmatmul.mubr.bf16.gmra.mrb[0].mxu0 %v721
  %v2610 = vpop.f32.mrb[0].mxu0
  %v2611 = vadd.f32 %v2562, %v2610
  %v2612 = vpop.f32.mrb[0].mxu0
  %v2613 = vpop.f32.mrb[0].mxu0
  %v2614 = vadd.f32 %v2565, %v2613
  %v2615 = vpop.f32.mrb[0].mxu0
  %2616 = vdwg.mxu0
  %2617 = vmatprep.subr.bf16.mxu0 0
  %2618 = vmatpush1.bf16.msra.mxu0 %v1822
  %2619 = vmatprep.subr.bf16.mxu0 0
  %2620 = vmatpush1.bf16.msra.mxu0 %v1823
  %2621 = vmatprep.subr.bf16.mxu0 0
  %2622 = vmatpush1.bf16.msra.mxu0 %v1824
  %2623 = vmatprep.subr.bf16.mxu0 0
  %2624 = vmatpush1.bf16.msra.mxu0 %v1825
  %2625 = vmatprep.subr.bf16.mxu0 0
  %2626 = vmatpush1.bf16.msra.mxu0 %v1826
  %2627 = vmatprep.subr.bf16.mxu0 0
  %2628 = vmatpush1.bf16.msra.mxu0 %v1827
  %2629 = vmatprep.subr.bf16.mxu0 0
  %2630 = vmatpush1.bf16.msra.mxu0 %v1828
  %2631 = vmatprep.subr.bf16.mxu0 0
  %2632 = vmatpush1.bf16.msra.mxu0 %v1829
  %2633 = vmatprep.subr.bf16.mxu0 0
  %2634 = vmatpush1.bf16.msra.mxu0 %v1830
  %2635 = vmatprep.subr.bf16.mxu0 0
  %2636 = vmatpush1.bf16.msra.mxu0 %v1831
  %2637 = vmatprep.subr.bf16.mxu0 0
  %2638 = vmatpush1.bf16.msra.mxu0 %v1832
  %2639 = vmatprep.subr.bf16.mxu0 0
  %2640 = vmatpush1.bf16.msra.mxu0 %v1833
  %2641 = vmatprep.subr.bf16.mxu0 0
  %2642 = vmatpush1.bf16.msra.mxu0 %v1834
  %2643 = vmatprep.subr.bf16.mxu0 0
  %2644 = vmatpush1.bf16.msra.mxu0 %v1835
  %2645 = vmatprep.subr.bf16.mxu0 0
  %2646 = vmatpush1.bf16.msra.mxu0 %v1836
  %2647 = vmatprep.subr.bf16.mxu0 0
  %2648 = vmatpush1.bf16.msra.mxu0 %v1837
  %2649 = vmatprep.mubr.bf16.mxu0 %v697
  %2650 = vmatmul.mubr.bf16.gmra.mrb[0].mxu0 %v696
  %v2651 = vpop.f32.mrb[0].mxu0
  %v2652 = vadd.f32 %v2603, %v2651
  %v2653 = vpop.f32.mrb[0].mxu0
  %v2654 = vpop.f32.mrb[0].mxu0
  %v2655 = vadd.f32 %v2606, %v2654
  %v2656 = vpop.f32.mrb[0].mxu0
  %2657 = vmatprep.mubr.bf16.mxu0 %v724
  %2658 = vmatmul.mubr.bf16.gmra.mrb[0].mxu0 %v723
  %v2659 = vpop.f32.mrb[0].mxu0
  %v2660 = vadd.f32 %v2611, %v2659
  %v2661 = vpop.f32.mrb[0].mxu0
  %v2662 = vpop.f32.mrb[0].mxu0
  %v2663 = vadd.f32 %v2614, %v2662
  %v2664 = vpop.f32.mrb[0].mxu0
  %2665 = vdwg.mxu0
  %2666 = vmatprep.subr.bf16.mxu0 0
  %2667 = vmatpush1.bf16.msra.mxu0 %v1838
  %2668 = vmatprep.subr.bf16.mxu0 0
  %2669 = vmatpush1.bf16.msra.mxu0 %v1839
  %2670 = vmatprep.subr.bf16.mxu0 0
  %2671 = vmatpush1.bf16.msra.mxu0 %v1840
  %2672 = vmatprep.subr.bf16.mxu0 0
  %2673 = vmatpush1.bf16.msra.mxu0 %v1841
  %2674 = vmatprep.subr.bf16.mxu0 0
  %2675 = vmatpush1.bf16.msra.mxu0 %v1842
  %2676 = vmatprep.subr.bf16.mxu0 0
  %2677 = vmatpush1.bf16.msra.mxu0 %v1843
  %2678 = vmatprep.subr.bf16.mxu0 0
  %2679 = vmatpush1.bf16.msra.mxu0 %v1844
  %2680 = vmatprep.subr.bf16.mxu0 0
  %2681 = vmatpush1.bf16.msra.mxu0 %v1845
  %2682 = vmatprep.subr.bf16.mxu0 0
  %2683 = vmatpush1.bf16.msra.mxu0 %v1846
  %2684 = vmatprep.subr.bf16.mxu0 0
  %2685 = vmatpush1.bf16.msra.mxu0 %v1847
  %2686 = vmatprep.subr.bf16.mxu0 0
  %2687 = vmatpush1.bf16.msra.mxu0 %v1848
  %2688 = vmatprep.subr.bf16.mxu0 0
  %2689 = vmatpush1.bf16.msra.mxu0 %v1849
  %2690 = vmatprep.subr.bf16.mxu0 0
  %2691 = vmatpush1.bf16.msra.mxu0 %v1850
  %2692 = vmatprep.subr.bf16.mxu0 0
  %2693 = vmatpush1.bf16.msra.mxu0 %v1851
  %2694 = vmatprep.subr.bf16.mxu0 0
  %2695 = vmatpush1.bf16.msra.mxu0 %v1852
  %2696 = vmatprep.subr.bf16.mxu0 0
  %2697 = vmatpush1.bf16.msra.mxu0 %v1853
  %2698 = vmatprep.mubr.bf16.mxu0 %v699
  %2699 = vmatmul.mubr.bf16.gmra.mrb[0].mxu0 %v698
  %v2700 = vpop.f32.mrb[0].mxu0
  %v2701 = vadd.f32 %v2652, %v2700
  %v2702 = vpop.f32.mrb[0].mxu0
  %v2703 = vpop.f32.mrb[0].mxu0
  %v2704 = vadd.f32 %v2655, %v2703
  %v2705 = vpop.f32.mrb[0].mxu0
  %2706 = vmatprep.mubr.bf16.mxu0 %v726
  %2707 = vmatmul.mubr.bf16.gmra.mrb[0].mxu0 %v725
  %v2708 = vpop.f32.mrb[0].mxu0
  %v2709 = vadd.f32 %v2660, %v2708
  %v2710 = vpop.f32.mrb[0].mxu0
  %v2711 = vpop.f32.mrb[0].mxu0
  %v2712 = vadd.f32 %v2663, %v2711
  %v2713 = vpop.f32.mrb[0].mxu0
  %2714 = vdwg.mxu0
  %2715 = vmatprep.subr.bf16.mxu0 0
  %2716 = vmatpush1.bf16.msra.mxu0 %v1854
  %2717 = vmatprep.subr.bf16.mxu0 0
  %2718 = vmatpush1.bf16.msra.mxu0 %v1855
  %2719 = vmatprep.subr.bf16.mxu0 0
  %2720 = vmatpush1.bf16.msra.mxu0 %v1856
  %2721 = vmatprep.subr.bf16.mxu0 0
  %2722 = vmatpush1.bf16.msra.mxu0 %v1857
  %2723 = vmatprep.subr.bf16.mxu0 0
  %2724 = vmatpush1.bf16.msra.mxu0 %v1858
  %2725 = vmatprep.subr.bf16.mxu0 0
  %2726 = vmatpush1.bf16.msra.mxu0 %v1859
  %2727 = vmatprep.subr.bf16.mxu0 0
  %2728 = vmatpush1.bf16.msra.mxu0 %v1860
  %2729 = vmatprep.subr.bf16.mxu0 0
  %2730 = vmatpush1.bf16.msra.mxu0 %v1861
  %2731 = vmatprep.subr.bf16.mxu0 0
  %2732 = vmatpush1.bf16.msra.mxu0 0
  %2733 = vmatprep.subr.bf16.mxu0 0
  %2734 = vmatpush1.bf16.msra.mxu0 0
  %2735 = vmatprep.subr.bf16.mxu0 0
  %2736 = vmatpush1.bf16.msra.mxu0 0
  %2737 = vmatprep.subr.bf16.mxu0 0
  %2738 = vmatpush1.bf16.msra.mxu0 0
  %2739 = vmatprep.subr.bf16.mxu0 0
  %2740 = vmatpush1.bf16.msra.mxu0 0
  %2741 = vmatprep.subr.bf16.mxu0 0
  %2742 = vmatpush1.bf16.msra.mxu0 0
  %2743 = vmatprep.subr.bf16.mxu0 0
  %2744 = vmatpush1.bf16.msra.mxu0 0
  %2745 = vmatprep.subr.bf16.mxu0 0
  %2746 = vmatpush1.bf16.msra.mxu0 0
  %2747 = vmatprep.mubr.bf16.mxu0 0
  %2748 = vmatmul.mubr.bf16.gmra.mrb[0].mxu0 %v700
  %v2749 = vpop.f32.mrb[0].mxu0
  %v2750 = vadd.f32 %v2701, %v2749
  %v2751 = vpop.f32.mrb[0].mxu0
  %v2752 = vpop.f32.mrb[0].mxu0
  %v2753 = vadd.f32 %v2704, %v2752
  %v2754 = vpop.f32.mrb[0].mxu0
  %2755 = vmatprep.mubr.bf16.mxu0 0
  %2756 = vmatmul.mubr.bf16.gmra.mrb[0].mxu0 %v727
  %v2757 = vpop.f32.mrb[0].mxu0
  %v2758 = vadd.f32 %v2709, %v2757
  %v2759 = vpop.f32.mrb[0].mxu0
  %v2760 = vpop.f32.mrb[0].mxu0
  %v2761 = vadd.f32 %v2712, %v2760
  %v2762 = vpop.f32.mrb[0].mxu0
  %2763 = vdwg.mxu0
  %v2764 = vmax.f32 %v2750, 0.0
  %v2765 = vmax.f32 %v2753, 0.0
  %v2766 = vmax.f32 %v2758, 0.0
  %v2767 = vmax.f32 %v2761, 0.0
  %2768 = vmax.xlane.f32.xlu0 %v2764
  %v2769 = vpop.xlane.xlu0 %2768
  %2770 = vmax.xlane.f32.xlu0 %v2765
  %v2771 = vpop.xlane.xlu0 %2770
  %2772 = vmax.xlane.f32.xlu0 %v2766
  %v2773 = vpop.xlane.xlu0 %2772
  %2774 = vmax.xlane.f32.xlu0 %v2767
  %v2775 = vpop.xlane.xlu0 %2774
  %vm2776 = vcmp.ge.f32.partialorder %v2764, %v2769
  %vm2777 = vcmp.ge.f32.partialorder %v2765, %v2771
  %vm2778 = vcmp.ge.f32.partialorder %v2766, %v2773
  %vm2779 = vcmp.ge.f32.partialorder %v2767, %v2775
  %v2780 = vsel %vm2776, -1.0, %v2764
  %v2781 = vsel %vm2777, -1.0, %v2765
  %v2782 = vsel %vm2778, -1.0, %v2766
  %v2783 = vsel %vm2779, -1.0, %v2767
  %2784 = vmax.xlane.f32.xlu0 %v2780
  %v2785 = vpop.xlane.xlu0 %2784
  %2786 = vmax.xlane.f32.xlu0 %v2781
  %v2787 = vpop.xlane.xlu0 %2786
  %2788 = vmax.xlane.f32.xlu0 %v2782
  %v2789 = vpop.xlane.xlu0 %2788
  %2790 = vmax.xlane.f32.xlu0 %v2783
  %v2791 = vpop.xlane.xlu0 %2790
  %vm2792 = vcmp.ge.f32.partialorder %v2780, %v2785
  %vm2793 = vcmp.ge.f32.partialorder %v2781, %v2787
  %vm2794 = vcmp.ge.f32.partialorder %v2782, %v2789
  %vm2795 = vcmp.ge.f32.partialorder %v2783, %v2791
  %v2796 = vsel %vm2792, -1.0, %v2780
  %v2797 = vsel %vm2793, -1.0, %v2781
  %v2798 = vsel %vm2794, -1.0, %v2782
  %v2799 = vsel %vm2795, -1.0, %v2783
  %2800 = vmax.xlane.f32.xlu0 %v2796
  %v2801 = vpop.xlane.xlu0 %2800
  %2802 = vmax.xlane.f32.xlu0 %v2797
  %v2803 = vpop.xlane.xlu0 %2802
  %2804 = vmax.xlane.f32.xlu0 %v2798
  %v2805 = vpop.xlane.xlu0 %2804
  %2806 = vmax.xlane.f32.xlu0 %v2799
  %v2807 = vpop.xlane.xlu0 %2806
  %vm2808 = vcmp.ge.f32.partialorder %v2796, %v2801
  %vm2809 = vcmp.ge.f32.partialorder %v2797, %v2803
  %vm2810 = vcmp.ge.f32.partialorder %v2798, %v2805
  %vm2811 = vcmp.ge.f32.partialorder %v2799, %v2807
  %v2812 = vsel %vm2808, -1.0, %v2796
  %v2813 = vsel %vm2809, -1.0, %v2797
  %v2814 = vsel %vm2810, -1.0, %v2798
  %v2815 = vsel %vm2811, -1.0, %v2799
  %2816 = vmax.xlane.f32.xlu0 %v2812
  %v2817 = vpop.xlane.xlu0 %2816
  %2818 = vmax.xlane.f32.xlu0 %v2813
  %v2819 = vpop.xlane.xlu0 %2818
  %2820 = vmax.xlane.f32.xlu0 %v2814
  %v2821 = vpop.xlane.xlu0 %2820
  %2822 = vmax.xlane.f32.xlu0 %v2815
  %v2823 = vpop.xlane.xlu0 %2822
  %vm2824 = vcmp.ge.f32.partialorder %v2812, %v2817
  %vm2825 = vcmp.ge.f32.partialorder %v2813, %v2819
  %vm2826 = vcmp.ge.f32.partialorder %v2814, %v2821
  %vm2827 = vcmp.ge.f32.partialorder %v2815, %v2823
  %v2828 = vsel %vm2824, -1.0, %v2812
  %v2829 = vsel %vm2825, -1.0, %v2813
  %v2830 = vsel %vm2826, -1.0, %v2814
  %v2831 = vsel %vm2827, -1.0, %v2815
  %2832 = vmax.xlane.f32.xlu0 %v2828
  %v2833 = vpop.xlane.xlu0 %2832
  %2834 = vmax.xlane.f32.xlu0 %v2829
  %v2835 = vpop.xlane.xlu0 %2834
  %2836 = vmax.xlane.f32.xlu0 %v2830
  %v2837 = vpop.xlane.xlu0 %2836
  %2838 = vmax.xlane.f32.xlu0 %v2831
  %v2839 = vpop.xlane.xlu0 %2838
  %vm2840 = vcmp.ge.f32.partialorder %v2764, %v2833
  %vm2841 = vcmp.ge.f32.partialorder %v2765, %v2835
  %vm2842 = vcmp.ge.f32.partialorder %v2766, %v2837
  %vm2843 = vcmp.ge.f32.partialorder %v2767, %v2839
  %v2844 = vsel %vm2840, %v2764, 0.0
  %v2845 = vsel %vm2841, %v2765, 0.0
  %v2846 = vsel %vm2842, %v2766, 0.0
  %v2847 = vsel %vm2843, %v2767, 0.0
  %v2848 = vpack.c.bf16 %v2845, %v2844
  %v2849 = vpack.c.bf16 %v2847, %v2846
  %v2852 = vunpack.c.l.b16 %v2848
  %v2853 = vunpack.c.h.b16 %v2848
  %v2854 = vunpack.c.l.b16 %v2849
  %v2855 = vunpack.c.h.b16 %v2849
  %v2856 = vpack.c.b16 %v2852, %v2852
  %v2857 = vpack.c.b16 %v2853, %v2853
  %v2858 = vpack.c.b16 %v2854, %v2854
  %v2859 = vpack.c.b16 %v2855, %v2855
  %2864 = vst [vmem:[%s3] sm:$0xf] %v2856
  %2865 = vst [vmem:[%s3 + $0x4] sm:$0xf] %v2857
  %2866 = vst [vmem:[%s3 + $0x8] sm:$0xf] %v2858
  %2867 = vst [vmem:[%s3 + $0xc] sm:$0xf] %v2859
  // Predicated region
  $region14: #{sparse_autoencoder_forward.8} parent=0 // pred_check
    _
  $region15: #{sparse_autoencoder_forward.8} parent=0 // pred_check_branch
    %2869 = sbr.rel (0) target = $region17
  $region16: #{sparse_autoencoder_forward.8} parent=0 // pred_region
    _
  $region17: #{sparse_autoencoder_forward.8} parent=0 // pred_fallthru
    _
  // Predicated region
  $region18: #{sparse_autoencoder_forward.8} parent=0 // pred_check
    _
  $region19: #{sparse_autoencoder_forward.8} parent=0 // pred_check_branch
    %2871 = sbr.rel (0) target = $region21
  $region20: #{sparse_autoencoder_forward.8} parent=0 // pred_region
    _
  $region21: #{sparse_autoencoder_forward.8} parent=0 // pred_fallthru
    _

// kernel: sparse_autoencoder_forward.10
$region0: #{sparse_autoencoder_forward.10}
  #allocation0 [shape = 'u32[]', space=smem, size = 0x4, offset = 0x4, fixed_abs, tag = 'smem constant byte address 0x4 - core index']
  #allocation1 [shape = 'u32[144,128]{1,0:T(1,128)}', space=vmem, size = 0x12000, scoped, tag = 'internal scratch']
  %s0 = inlined_call_operand.vmem [shape: bf16[128,3456], index: 0, kind: input, shape index: {}]
  %s1 = inlined_call_operand.vmem [shape: bf16[3456,128], index: 1, kind: input, shape index: {}]
  %s2 = inlined_call_operand.vmem [shape: f32[1,128], index: 2, kind: input, shape index: {}]
  %s3 = inlined_call_operand.vmem [shape: bf16[128,128], index: 3, kind: output, shape index: {}]
  %s4 = sld [smem:[#allocation0]]
  $region22: #{sparse_autoencoder_forward.10} parent=0
    _
  %s6 = ssub.s32 1, %s4
  %s7 = scalar_select 0, %s6, %s4
  // Predicated region
  $region2: #{sparse_autoencoder_forward.10} parent=0 // pred_check
    _
  $region3: #{sparse_autoencoder_forward.10} parent=0 // pred_check_branch
    %9 = sbr.rel (0) target = $region5
  $region4: #{sparse_autoencoder_forward.10} parent=0 // pred_region
    _
  $region5: #{sparse_autoencoder_forward.10} parent=0 // pred_fallthru
    _
  // Predicated region
  $region6: #{sparse_autoencoder_forward.10} parent=0 // pred_check
    _
  $region7: #{sparse_autoencoder_forward.10} parent=0 // pred_check_branch
    %11 = sbr.rel (0) target = $region9
  $region8: #{sparse_autoencoder_forward.10} parent=0 // pred_region
    _
  $region9: #{sparse_autoencoder_forward.10} parent=0 // pred_fallthru
    _
  // Predicated region
  $region10: #{sparse_autoencoder_forward.10} parent=0 // pred_check
    _
  $region11: #{sparse_autoencoder_forward.10} parent=0 // pred_check_branch
    %13 = sbr.rel (0) target = $region13
  $region12: #{sparse_autoencoder_forward.10} parent=0 // pred_region
    _
  $region13: #{sparse_autoencoder_forward.10} parent=0 // pred_fallthru
    _
  %v15 = vld [vmem:[%s0] sm:$0xff]
  %v16 = vld [vmem:[%s0 + $0x8] sm:$0xff]
  %v17 = vld [vmem:[%s0 + $0x10] sm:$0xff]
  %v18 = vld [vmem:[%s0 + $0x18] sm:$0xff]
  %v19 = vld [vmem:[%s0 + $0x20] sm:$0xff]
  %v20 = vld [vmem:[%s0 + $0x28] sm:$0xff]
  %v21 = vld [vmem:[%s0 + $0x30] sm:$0xff]
  %v22 = vld [vmem:[%s0 + $0x38] sm:$0xff]
  %v23 = vld [vmem:[%s0 + $0x40] sm:$0xff]
  %v24 = vld [vmem:[%s0 + $0x48] sm:$0xff]
  %v25 = vld [vmem:[%s0 + $0x50] sm:$0xff]
  %v26 = vld [vmem:[%s0 + $0x58] sm:$0xff]
  %v27 = vld [vmem:[%s0 + $0x60] sm:$0xff]
  %v28 = vld [vmem:[%s0 + $0x68] sm:$0xf]
  %v29 = vld [vmem:[%s0 + $0x6c] sm:$0xff]
  %v30 = vld [vmem:[%s0 + $0x74] sm:$0xff]
  %v31 = vld [vmem:[%s0 + $0x7c] sm:$0xff]
  %v32 = vld [vmem:[%s0 + $0x84] sm:$0xff]
  %v33 = vld [vmem:[%s0 + $0x8c] sm:$0xff]
  %v34 = vld [vmem:[%s0 + $0x94] sm:$0xff]
  %v35 = vld [vmem:[%s0 + $0x9c] sm:$0xff]
  %v36 = vld [vmem:[%s0 + $0xa4] sm:$0xff]
  %v37 = vld [vmem:[%s0 + $0xac] sm:$0xff]
  %v38 = vld [vmem:[%s0 + $0xb4] sm:$0xff]
  %v39 = vld [vmem:[%s0 + $0xbc] sm:$0xff]
  %v40 = vld [vmem:[%s0 + $0xc4] sm:$0xff]
  %v41 = vld [vmem:[%s0 + $0xcc] sm:$0xff]
  %v42 = vld [vmem:[%s0 + $0xd4] sm:$0xf]
  %v43 = vld [vmem:[%s0 + $0xd8] sm:$0xff]
  %v44 = vld [vmem:[%s0 + $0xe0] sm:$0xff]
  %v45 = vld [vmem:[%s0 + $0xe8] sm:$0xff]
  %v46 = vld [vmem:[%s0 + $0xf0] sm:$0xff]
  %v47 = vld [vmem:[%s0 + $0xf8] sm:$0xff]
  %v48 = vld [vmem:[%s0 + $0x100] sm:$0xff]
  %v49 = vld [vmem:[%s0 + $0x108] sm:$0xff]
  %v50 = vld [vmem:[%s0 + $0x110] sm:$0xff]
  %v51 = vld [vmem:[%s0 + $0x118] sm:$0xff]
  %v52 = vld [vmem:[%s0 + $0x120] sm:$0xff]
  %v53 = vld [vmem:[%s0 + $0x128] sm:$0xff]
  %v54 = vld [vmem:[%s0 + $0x130] sm:$0xff]
  %v55 = vld [vmem:[%s0 + $0x138] sm:$0xff]
  %v56 = vld [vmem:[%s0 + $0x140] sm:$0xf]
  %v57 = vld [vmem:[%s0 + $0x144] sm:$0xff]
  %v58 = vld [vmem:[%s0 + $0x14c] sm:$0xff]
  %v59 = vld [vmem:[%s0 + $0x154] sm:$0xff]
  %v60 = vld [vmem:[%s0 + $0x15c] sm:$0xff]
  %v61 = vld [vmem:[%s0 + $0x164] sm:$0xff]
  %v62 = vld [vmem:[%s0 + $0x16c] sm:$0xff]
  %v63 = vld [vmem:[%s0 + $0x174] sm:$0xff]
  %v64 = vld [vmem:[%s0 + $0x17c] sm:$0xff]
  %v65 = vld [vmem:[%s0 + $0x184] sm:$0xff]
  %v66 = vld [vmem:[%s0 + $0x18c] sm:$0xff]
  %v67 = vld [vmem:[%s0 + $0x194] sm:$0xff]
  %v68 = vld [vmem:[%s0 + $0x19c] sm:$0xff]
  %v69 = vld [vmem:[%s0 + $0x1a4] sm:$0xff]
  %v70 = vld [vmem:[%s0 + $0x1ac] sm:$0xf]
  %v71 = vld [vmem:[%s0 + $0x1b0] sm:$0xff]
  %v72 = vld [vmem:[%s0 + $0x1b8] sm:$0xff]
  %v73 = vld [vmem:[%s0 + $0x1c0] sm:$0xff]
  %v74 = vld [vmem:[%s0 + $0x1c8] sm:$0xff]
  %v75 = vld [vmem:[%s0 + $0x1d0] sm:$0xff]
  %v76 = vld [vmem:[%s0 + $0x1d8] sm:$0xff]
  %v77 = vld [vmem:[%s0 + $0x1e0] sm:$0xff]
  %v78 = vld [vmem:[%s0 + $0x1e8] sm:$0xff]
  %v79 = vld [vmem:[%s0 + $0x1f0] sm:$0xff]
  %v80 = vld [vmem:[%s0 + $0x1f8] sm:$0xff]
  %v81 = vld [vmem:[%s0 + $0x200] sm:$0xff]
  %v82 = vld [vmem:[%s0 + $0x208] sm:$0xff]
  %v83 = vld [vmem:[%s0 + $0x210] sm:$0xff]
  %v84 = vld [vmem:[%s0 + $0x218] sm:$0xf]
  %v85 = vld [vmem:[%s0 + $0x21c] sm:$0xff]
  %v86 = vld [vmem:[%s0 + $0x224] sm:$0xff]
  %v87 = vld [vmem:[%s0 + $0x22c] sm:$0xff]
  %v88 = vld [vmem:[%s0 + $0x234] sm:$0xff]
  %v89 = vld [vmem:[%s0 + $0x23c] sm:$0xff]
  %v90 = vld [vmem:[%s0 + $0x244] sm:$0xff]
  %v91 = vld [vmem:[%s0 + $0x24c] sm:$0xff]
  %v92 = vld [vmem:[%s0 + $0x254] sm:$0xff]
  %v93 = vld [vmem:[%s0 + $0x25c] sm:$0xff]
  %v94 = vld [vmem:[%s0 + $0x264] sm:$0xff]
  %v95 = vld [vmem:[%s0 + $0x26c] sm:$0xff]
  %v96 = vld [vmem:[%s0 + $0x274] sm:$0xff]
  %v97 = vld [vmem:[%s0 + $0x27c] sm:$0xff]
  %v98 = vld [vmem:[%s0 + $0x284] sm:$0xf]
  %v99 = vld [vmem:[%s0 + $0x288] sm:$0xff]
  %v100 = vld [vmem:[%s0 + $0x290] sm:$0xff]
  %v101 = vld [vmem:[%s0 + $0x298] sm:$0xff]
  %v102 = vld [vmem:[%s0 + $0x2a0] sm:$0xff]
  %v103 = vld [vmem:[%s0 + $0x2a8] sm:$0xff]
  %v104 = vld [vmem:[%s0 + $0x2b0] sm:$0xff]
  %v105 = vld [vmem:[%s0 + $0x2b8] sm:$0xff]
  %v106 = vld [vmem:[%s0 + $0x2c0] sm:$0xff]
  %v107 = vld [vmem:[%s0 + $0x2c8] sm:$0xff]
  %v108 = vld [vmem:[%s0 + $0x2d0] sm:$0xff]
  %v109 = vld [vmem:[%s0 + $0x2d8] sm:$0xff]
  %v110 = vld [vmem:[%s0 + $0x2e0] sm:$0xff]
  %v111 = vld [vmem:[%s0 + $0x2e8] sm:$0xff]
  %v112 = vld [vmem:[%s0 + $0x2f0] sm:$0xf]
  %v113 = vld [vmem:[%s0 + $0x2f4] sm:$0xff]
  %v114 = vld [vmem:[%s0 + $0x2fc] sm:$0xff]
  %v115 = vld [vmem:[%s0 + $0x304] sm:$0xff]
  %v116 = vld [vmem:[%s0 + $0x30c] sm:$0xff]
  %v117 = vld [vmem:[%s0 + $0x314] sm:$0xff]
  %v118 = vld [vmem:[%s0 + $0x31c] sm:$0xff]
  %v119 = vld [vmem:[%s0 + $0x324] sm:$0xff]
  %v120 = vld [vmem:[%s0 + $0x32c] sm:$0xff]
  %v121 = vld [vmem:[%s0 + $0x334] sm:$0xff]
  %v122 = vld [vmem:[%s0 + $0x33c] sm:$0xff]
  %v123 = vld [vmem:[%s0 + $0x344] sm:$0xff]
  %v124 = vld [vmem:[%s0 + $0x34c] sm:$0xff]
  %v125 = vld [vmem:[%s0 + $0x354] sm:$0xff]
  %v126 = vld [vmem:[%s0 + $0x35c] sm:$0xf]
  %v127 = vld [vmem:[%s0 + $0x360] sm:$0xff]
  %v128 = vld [vmem:[%s0 + $0x368] sm:$0xff]
  %v129 = vld [vmem:[%s0 + $0x370] sm:$0xff]
  %v130 = vld [vmem:[%s0 + $0x378] sm:$0xff]
  %v131 = vld [vmem:[%s0 + $0x380] sm:$0xff]
  %v132 = vld [vmem:[%s0 + $0x388] sm:$0xff]
  %v133 = vld [vmem:[%s0 + $0x390] sm:$0xff]
  %v134 = vld [vmem:[%s0 + $0x398] sm:$0xff]
  %v135 = vld [vmem:[%s0 + $0x3a0] sm:$0xff]
  %v136 = vld [vmem:[%s0 + $0x3a8] sm:$0xff]
  %v137 = vld [vmem:[%s0 + $0x3b0] sm:$0xff]
  %v138 = vld [vmem:[%s0 + $0x3b8] sm:$0xff]
  %v139 = vld [vmem:[%s0 + $0x3c0] sm:$0xff]
  %v140 = vld [vmem:[%s0 + $0x3c8] sm:$0xf]
  %v141 = vld [vmem:[%s0 + $0x3cc] sm:$0xff]
  %v142 = vld [vmem:[%s0 + $0x3d4] sm:$0xff]
  %v143 = vld [vmem:[%s0 + $0x3dc] sm:$0xff]
  %v144 = vld [vmem:[%s0 + $0x3e4] sm:$0xff]
  %v145 = vld [vmem:[%s0 + $0x3ec] sm:$0xff]
  %v146 = vld [vmem:[%s0 + $0x3f4] sm:$0xff]
  %v147 = vld [vmem:[%s0 + $0x3fc] sm:$0xff]
  %v148 = vld [vmem:[%s0 + $0x404] sm:$0xff]
  %v149 = vld [vmem:[%s0 + $0x40c] sm:$0xff]
  %v150 = vld [vmem:[%s0 + $0x414] sm:$0xff]
  %v151 = vld [vmem:[%s0 + $0x41c] sm:$0xff]
  %v152 = vld [vmem:[%s0 + $0x424] sm:$0xff]
  %v153 = vld [vmem:[%s0 + $0x42c] sm:$0xff]
  %v154 = vld [vmem:[%s0 + $0x434] sm:$0xf]
  %v155 = vld [vmem:[%s0 + $0x438] sm:$0xff]
  %v156 = vld [vmem:[%s0 + $0x440] sm:$0xff]
  %v157 = vld [vmem:[%s0 + $0x448] sm:$0xff]
  %v158 = vld [vmem:[%s0 + $0x450] sm:$0xff]
  %v159 = vld [vmem:[%s0 + $0x458] sm:$0xff]
  %v160 = vld [vmem:[%s0 + $0x460] sm:$0xff]
  %v161 = vld [vmem:[%s0 + $0x468] sm:$0xff]
  %v162 = vld [vmem:[%s0 + $0x470] sm:$0xff]
  %v163 = vld [vmem:[%s0 + $0x478] sm:$0xff]
  %v164 = vld [vmem:[%s0 + $0x480] sm:$0xff]
  %v165 = vld [vmem:[%s0 + $0x488] sm:$0xff]
  %v166 = vld [vmem:[%s0 + $0x490] sm:$0xff]
  %v167 = vld [vmem:[%s0 + $0x498] sm:$0xff]
  %v168 = vld [vmem:[%s0 + $0x4a0] sm:$0xf]
  %v169 = vld [vmem:[%s0 + $0x4a4] sm:$0xff]
  %v170 = vld [vmem:[%s0 + $0x4ac] sm:$0xff]
  %v171 = vld [vmem:[%s0 + $0x4b4] sm:$0xff]
  %v172 = vld [vmem:[%s0 + $0x4bc] sm:$0xff]
  %v173 = vld [vmem:[%s0 + $0x4c4] sm:$0xff]
  %v174 = vld [vmem:[%s0 + $0x4cc] sm:$0xff]
  %v175 = vld [vmem:[%s0 + $0x4d4] sm:$0xff]
  %v176 = vld [vmem:[%s0 + $0x4dc] sm:$0xff]
  %v177 = vld [vmem:[%s0 + $0x4e4] sm:$0xff]
  %v178 = vld [vmem:[%s0 + $0x4ec] sm:$0xff]
  %v179 = vld [vmem:[%s0 + $0x4f4] sm:$0xff]
  %v180 = vld [vmem:[%s0 + $0x4fc] sm:$0xff]
  %v181 = vld [vmem:[%s0 + $0x504] sm:$0xff]
  %v182 = vld [vmem:[%s0 + $0x50c] sm:$0xf]
  %v183 = vld [vmem:[%s0 + $0x510] sm:$0xff]
  %v184 = vld [vmem:[%s0 + $0x518] sm:$0xff]
  %v185 = vld [vmem:[%s0 + $0x520] sm:$0xff]
  %v186 = vld [vmem:[%s0 + $0x528] sm:$0xff]
  %v187 = vld [vmem:[%s0 + $0x530] sm:$0xff]
  %v188 = vld [vmem:[%s0 + $0x538] sm:$0xff]
  %v189 = vld [vmem:[%s0 + $0x540] sm:$0xff]
  %v190 = vld [vmem:[%s0 + $0x548] sm:$0xff]
  %v191 = vld [vmem:[%s0 + $0x550] sm:$0xff]
  %v192 = vld [vmem:[%s0 + $0x558] sm:$0xff]
  %v193 = vld [vmem:[%s0 + $0x560] sm:$0xff]
  %v194 = vld [vmem:[%s0 + $0x568] sm:$0xff]
  %v195 = vld [vmem:[%s0 + $0x570] sm:$0xff]
  %v196 = vld [vmem:[%s0 + $0x578] sm:$0xf]
  %v197 = vld [vmem:[%s0 + $0x57c] sm:$0xff]
  %v198 = vld [vmem:[%s0 + $0x584] sm:$0xff]
  %v199 = vld [vmem:[%s0 + $0x58c] sm:$0xff]
  %v200 = vld [vmem:[%s0 + $0x594] sm:$0xff]
  %v201 = vld [vmem:[%s0 + $0x59c] sm:$0xff]
  %v202 = vld [vmem:[%s0 + $0x5a4] sm:$0xff]
  %v203 = vld [vmem:[%s0 + $0x5ac] sm:$0xff]
  %v204 = vld [vmem:[%s0 + $0x5b4] sm:$0xff]
  %v205 = vld [vmem:[%s0 + $0x5bc] sm:$0xff]
  %v206 = vld [vmem:[%s0 + $0x5c4] sm:$0xff]
  %v207 = vld [vmem:[%s0 + $0x5cc] sm:$0xff]
  %v208 = vld [vmem:[%s0 + $0x5d4] sm:$0xff]
  %v209 = vld [vmem:[%s0 + $0x5dc] sm:$0xff]
  %v210 = vld [vmem:[%s0 + $0x5e4] sm:$0xf]
  %v211 = vld [vmem:[%s0 + $0x5e8] sm:$0xff]
  %v212 = vld [vmem:[%s0 + $0x5f0] sm:$0xff]
  %v213 = vld [vmem:[%s0 + $0x5f8] sm:$0xff]
  %v214 = vld [vmem:[%s0 + $0x600] sm:$0xff]
  %v215 = vld [vmem:[%s0 + $0x608] sm:$0xff]
  %v216 = vld [vmem:[%s0 + $0x610] sm:$0xff]
  %v217 = vld [vmem:[%s0 + $0x618] sm:$0xff]
  %v218 = vld [vmem:[%s0 + $0x620] sm:$0xff]
  %v219 = vld [vmem:[%s0 + $0x628] sm:$0xff]
  %v220 = vld [vmem:[%s0 + $0x630] sm:$0xff]
  %v221 = vld [vmem:[%s0 + $0x638] sm:$0xff]
  %v222 = vld [vmem:[%s0 + $0x640] sm:$0xff]
  %v223 = vld [vmem:[%s0 + $0x648] sm:$0xff]
  %v224 = vld [vmem:[%s0 + $0x650] sm:$0xf]
  %v225 = vld [vmem:[%s0 + $0x654] sm:$0xff]
  %v226 = vld [vmem:[%s0 + $0x65c] sm:$0xff]
  %v227 = vld [vmem:[%s0 + $0x664] sm:$0xff]
  %v228 = vld [vmem:[%s0 + $0x66c] sm:$0xff]
  %v229 = vld [vmem:[%s0 + $0x674] sm:$0xff]
  %v230 = vld [vmem:[%s0 + $0x67c] sm:$0xff]
  %v231 = vld [vmem:[%s0 + $0x684] sm:$0xff]
  %v232 = vld [vmem:[%s0 + $0x68c] sm:$0xff]
  %v233 = vld [vmem:[%s0 + $0x694] sm:$0xff]
  %v234 = vld [vmem:[%s0 + $0x69c] sm:$0xff]
  %v235 = vld [vmem:[%s0 + $0x6a4] sm:$0xff]
  %v236 = vld [vmem:[%s0 + $0x6ac] sm:$0xff]
  %v237 = vld [vmem:[%s0 + $0x6b4] sm:$0xff]
  %v238 = vld [vmem:[%s0 + $0x6bc] sm:$0xf]
  %v239 = vld [vmem:[%s1] sm:$0xf]
  %v240 = vld [vmem:[%s1 + $0x4] sm:$0xf]
  %v241 = vld [vmem:[%s1 + $0x8] sm:$0xf]
  %v242 = vld [vmem:[%s1 + $0xc] sm:$0xf]
  %v243 = vld [vmem:[%s1 + $0x10] sm:$0xf]
  %v244 = vld [vmem:[%s1 + $0x14] sm:$0xf]
  %v245 = vld [vmem:[%s1 + $0x18] sm:$0xf]
  %v246 = vld [vmem:[%s1 + $0x1c] sm:$0xf]
  %v247 = vld [vmem:[%s1 + $0x20] sm:$0xf]
  %v248 = vld [vmem:[%s1 + $0x24] sm:$0xf]
  %v249 = vld [vmem:[%s1 + $0x28] sm:$0xf]
  %v250 = vld [vmem:[%s1 + $0x2c] sm:$0xf]
  %v251 = vld [vmem:[%s1 + $0x30] sm:$0xf]
  %v252 = vld [vmem:[%s1 + $0x34] sm:$0xf]
  %v253 = vld [vmem:[%s1 + $0x38] sm:$0xf]
  %v254 = vld [vmem:[%s1 + $0x3c] sm:$0xf]
  %v255 = vld [vmem:[%s1 + $0x40] sm:$0xf]
  %v256 = vld [vmem:[%s1 + $0x44] sm:$0xf]
  %v257 = vld [vmem:[%s1 + $0x48] sm:$0xf]
  %v258 = vld [vmem:[%s1 + $0x4c] sm:$0xf]
  %v259 = vld [vmem:[%s1 + $0x50] sm:$0xf]
  %v260 = vld [vmem:[%s1 + $0x54] sm:$0xf]
  %v261 = vld [vmem:[%s1 + $0x58] sm:$0xf]
  %v262 = vld [vmem:[%s1 + $0x5c] sm:$0xf]
  %v263 = vld [vmem:[%s1 + $0x60] sm:$0xf]
  %v264 = vld [vmem:[%s1 + $0x64] sm:$0xf]
  %v265 = vld [vmem:[%s1 + $0x68] sm:$0xf]
  %v266 = vld [vmem:[%s1 + $0x6c] sm:$0xf]
  %v267 = vld [vmem:[%s1 + $0x70] sm:$0xf]
  %v268 = vld [vmem:[%s1 + $0x74] sm:$0xf]
  %v269 = vld [vmem:[%s1 + $0x78] sm:$0xf]
  %v270 = vld [vmem:[%s1 + $0x7c] sm:$0xf]
  %v271 = vld [vmem:[%s1 + $0x80] sm:$0xf]
  %v272 = vld [vmem:[%s1 + $0x84] sm:$0xf]
  %v273 = vld [vmem:[%s1 + $0x88] sm:$0xf]
  %v274 = vld [vmem:[%s1 + $0x8c] sm:$0xf]
  %v275 = vld [vmem:[%s1 + $0x90] sm:$0xf]
  %v276 = vld [vmem:[%s1 + $0x94] sm:$0xf]
  %v277 = vld [vmem:[%s1 + $0x98] sm:$0xf]
  %v278 = vld [vmem:[%s1 + $0x9c] sm:$0xf]
  %v279 = vld [vmem:[%s1 + $0xa0] sm:$0xf]
  %v280 = vld [vmem:[%s1 + $0xa4] sm:$0xf]
  %v281 = vld [vmem:[%s1 + $0xa8] sm:$0xf]
  %v282 = vld [vmem:[%s1 + $0xac] sm:$0xf]
  %v283 = vld [vmem:[%s1 + $0xb0] sm:$0xf]
  %v284 = vld [vmem:[%s1 + $0xb4] sm:$0xf]
  %v285 = vld [vmem:[%s1 + $0xb8] sm:$0xf]
  %v286 = vld [vmem:[%s1 + $0xbc] sm:$0xf]
  %v287 = vld [vmem:[%s1 + $0xc0] sm:$0xf]
  %v288 = vld [vmem:[%s1 + $0xc4] sm:$0xf]
  %v289 = vld [vmem:[%s1 + $0xc8] sm:$0xf]
  %v290 = vld [vmem:[%s1 + $0xcc] sm:$0xf]
  %v291 = vld [vmem:[%s1 + $0xd0] sm:$0xf]
  %v292 = vld [vmem:[%s1 + $0xd4] sm:$0xf]
  %v293 = vld [vmem:[%s1 + $0xd8] sm:$0xf]
  %v294 = vld [vmem:[%s1 + $0xdc] sm:$0xf]
  %v295 = vld [vmem:[%s1 + $0xe0] sm:$0xf]
  %v296 = vld [vmem:[%s1 + $0xe4] sm:$0xf]
  %v297 = vld [vmem:[%s1 + $0xe8] sm:$0xf]
  %v298 = vld [vmem:[%s1 + $0xec] sm:$0xf]
  %v299 = vld [vmem:[%s1 + $0xf0] sm:$0xf]
  %v300 = vld [vmem:[%s1 + $0xf4] sm:$0xf]
  %v301 = vld [vmem:[%s1 + $0xf8] sm:$0xf]
  %v302 = vld [vmem:[%s1 + $0xfc] sm:$0xf]
  %v303 = vld [vmem:[%s1 + $0x100] sm:$0xf]
  %v304 = vld [vmem:[%s1 + $0x104] sm:$0xf]
  %v305 = vld [vmem:[%s1 + $0x108] sm:$0xf]
  %v306 = vld [vmem:[%s1 + $0x10c] sm:$0xf]
  %v307 = vld [vmem:[%s1 + $0x110] sm:$0xf]
  %v308 = vld [vmem:[%s1 + $0x114] sm:$0xf]
  %v309 = vld [vmem:[%s1 + $0x118] sm:$0xf]
  %v310 = vld [vmem:[%s1 + $0x11c] sm:$0xf]
  %v311 = vld [vmem:[%s1 + $0x120] sm:$0xf]
  %v312 = vld [vmem:[%s1 + $0x124] sm:$0xf]
  %v313 = vld [vmem:[%s1 + $0x128] sm:$0xf]
  %v314 = vld [vmem:[%s1 + $0x12c] sm:$0xf]
  %v315 = vld [vmem:[%s1 + $0x130] sm:$0xf]
  %v316 = vld [vmem:[%s1 + $0x134] sm:$0xf]
  %v317 = vld [vmem:[%s1 + $0x138] sm:$0xf]
  %v318 = vld [vmem:[%s1 + $0x13c] sm:$0xf]
  %v319 = vld [vmem:[%s1 + $0x140] sm:$0xf]
  %v320 = vld [vmem:[%s1 + $0x144] sm:$0xf]
  %v321 = vld [vmem:[%s1 + $0x148] sm:$0xf]
  %v322 = vld [vmem:[%s1 + $0x14c] sm:$0xf]
  %v323 = vld [vmem:[%s1 + $0x150] sm:$0xf]
  %v324 = vld [vmem:[%s1 + $0x154] sm:$0xf]
  %v325 = vld [vmem:[%s1 + $0x158] sm:$0xf]
  %v326 = vld [vmem:[%s1 + $0x15c] sm:$0xf]
  %v327 = vld [vmem:[%s1 + $0x160] sm:$0xf]
  %v328 = vld [vmem:[%s1 + $0x164] sm:$0xf]
  %v329 = vld [vmem:[%s1 + $0x168] sm:$0xf]
  %v330 = vld [vmem:[%s1 + $0x16c] sm:$0xf]
  %v331 = vld [vmem:[%s1 + $0x170] sm:$0xf]
  %v332 = vld [vmem:[%s1 + $0x174] sm:$0xf]
  %v333 = vld [vmem:[%s1 + $0x178] sm:$0xf]
  %v334 = vld [vmem:[%s1 + $0x17c] sm:$0xf]
  %v335 = vld [vmem:[%s1 + $0x180] sm:$0xf]
  %v336 = vld [vmem:[%s1 + $0x184] sm:$0xf]
  %v337 = vld [vmem:[%s1 + $0x188] sm:$0xf]
  %v338 = vld [vmem:[%s1 + $0x18c] sm:$0xf]
  %v339 = vld [vmem:[%s1 + $0x190] sm:$0xf]
  %v340 = vld [vmem:[%s1 + $0x194] sm:$0xf]
  %v341 = vld [vmem:[%s1 + $0x198] sm:$0xf]
  %v342 = vld [vmem:[%s1 + $0x19c] sm:$0xf]
  %v343 = vld [vmem:[%s1 + $0x1a0] sm:$0xf]
  %v344 = vld [vmem:[%s1 + $0x1a4] sm:$0xf]
  %v345 = vld [vmem:[%s1 + $0x1a8] sm:$0xf]
  %v346 = vld [vmem:[%s1 + $0x1ac] sm:$0xf]
  %v347 = vld [vmem:[%s1 + $0x1b0] sm:$0xf]
  %v348 = vld [vmem:[%s1 + $0x1b4] sm:$0xf]
  %v349 = vld [vmem:[%s1 + $0x1b8] sm:$0xf]
  %v350 = vld [vmem:[%s1 + $0x1bc] sm:$0xf]
  %v351 = vld [vmem:[%s1 + $0x1c0] sm:$0xf]
  %v352 = vld [vmem:[%s1 + $0x1c4] sm:$0xf]
  %v353 = vld [vmem:[%s1 + $0x1c8] sm:$0xf]
  %v354 = vld [vmem:[%s1 + $0x1cc] sm:$0xf]
  %v355 = vld [vmem:[%s1 + $0x1d0] sm:$0xf]
  %v356 = vld [vmem:[%s1 + $0x1d4] sm:$0xf]
  %v357 = vld [vmem:[%s1 + $0x1d8] sm:$0xf]
  %v358 = vld [vmem:[%s1 + $0x1dc] sm:$0xf]
  %v359 = vld [vmem:[%s1 + $0x1e0] sm:$0xf]
  %v360 = vld [vmem:[%s1 + $0x1e4] sm:$0xf]
  %v361 = vld [vmem:[%s1 + $0x1e8] sm:$0xf]
  %v362 = vld [vmem:[%s1 + $0x1ec] sm:$0xf]
  %v363 = vld [vmem:[%s1 + $0x1f0] sm:$0xf]
  %v364 = vld [vmem:[%s1 + $0x1f4] sm:$0xf]
  %v365 = vld [vmem:[%s1 + $0x1f8] sm:$0xf]
  %v366 = vld [vmem:[%s1 + $0x1fc] sm:$0xf]
  %v367 = vld [vmem:[%s1 + $0x200] sm:$0xf]
  %v368 = vld [vmem:[%s1 + $0x204] sm:$0xf]
  %v369 = vld [vmem:[%s1 + $0x208] sm:$0xf]
  %v370 = vld [vmem:[%s1 + $0x20c] sm:$0xf]
  %v371 = vld [vmem:[%s1 + $0x210] sm:$0xf]
  %v372 = vld [vmem:[%s1 + $0x214] sm:$0xf]
  %v373 = vld [vmem:[%s1 + $0x218] sm:$0xf]
  %v374 = vld [vmem:[%s1 + $0x21c] sm:$0xf]
  %v375 = vld [vmem:[%s1 + $0x220] sm:$0xf]
  %v376 = vld [vmem:[%s1 + $0x224] sm:$0xf]
  %v377 = vld [vmem:[%s1 + $0x228] sm:$0xf]
  %v378 = vld [vmem:[%s1 + $0x22c] sm:$0xf]
  %v379 = vld [vmem:[%s1 + $0x230] sm:$0xf]
  %v380 = vld [vmem:[%s1 + $0x234] sm:$0xf]
  %v381 = vld [vmem:[%s1 + $0x238] sm:$0xf]
  %v382 = vld [vmem:[%s1 + $0x23c] sm:$0xf]
  %v383 = vld [vmem:[%s1 + $0x240] sm:$0xf]
  %v384 = vld [vmem:[%s1 + $0x244] sm:$0xf]
  %v385 = vld [vmem:[%s1 + $0x248] sm:$0xf]
  %v386 = vld [vmem:[%s1 + $0x24c] sm:$0xf]
  %v387 = vld [vmem:[%s1 + $0x250] sm:$0xf]
  %v388 = vld [vmem:[%s1 + $0x254] sm:$0xf]
  %v389 = vld [vmem:[%s1 + $0x258] sm:$0xf]
  %v390 = vld [vmem:[%s1 + $0x25c] sm:$0xf]
  %v391 = vld [vmem:[%s1 + $0x260] sm:$0xf]
  %v392 = vld [vmem:[%s1 + $0x264] sm:$0xf]
  %v393 = vld [vmem:[%s1 + $0x268] sm:$0xf]
  %v394 = vld [vmem:[%s1 + $0x26c] sm:$0xf]
  %v395 = vld [vmem:[%s1 + $0x270] sm:$0xf]
  %v396 = vld [vmem:[%s1 + $0x274] sm:$0xf]
  %v397 = vld [vmem:[%s1 + $0x278] sm:$0xf]
  %v398 = vld [vmem:[%s1 + $0x27c] sm:$0xf]
  %v399 = vld [vmem:[%s1 + $0x280] sm:$0xf]
  %v400 = vld [vmem:[%s1 + $0x284] sm:$0xf]
  %v401 = vld [vmem:[%s1 + $0x288] sm:$0xf]
  %v402 = vld [vmem:[%s1 + $0x28c] sm:$0xf]
  %v403 = vld [vmem:[%s1 + $0x290] sm:$0xf]
  %v404 = vld [vmem:[%s1 + $0x294] sm:$0xf]
  %v405 = vld [vmem:[%s1 + $0x298] sm:$0xf]
  %v406 = vld [vmem:[%s1 + $0x29c] sm:$0xf]
  %v407 = vld [vmem:[%s1 + $0x2a0] sm:$0xf]
  %v408 = vld [vmem:[%s1 + $0x2a4] sm:$0xf]
  %v409 = vld [vmem:[%s1 + $0x2a8] sm:$0xf]
  %v410 = vld [vmem:[%s1 + $0x2ac] sm:$0xf]
  %v411 = vld [vmem:[%s1 + $0x2b0] sm:$0xf]
  %v412 = vld [vmem:[%s1 + $0x2b4] sm:$0xf]
  %v413 = vld [vmem:[%s1 + $0x2b8] sm:$0xf]
  %v414 = vld [vmem:[%s1 + $0x2bc] sm:$0xf]
  %v415 = vld [vmem:[%s1 + $0x2c0] sm:$0xf]
  %v416 = vld [vmem:[%s1 + $0x2c4] sm:$0xf]
  %v417 = vld [vmem:[%s1 + $0x2c8] sm:$0xf]
  %v418 = vld [vmem:[%s1 + $0x2cc] sm:$0xf]
  %v419 = vld [vmem:[%s1 + $0x2d0] sm:$0xf]
  %v420 = vld [vmem:[%s1 + $0x2d4] sm:$0xf]
  %v421 = vld [vmem:[%s1 + $0x2d8] sm:$0xf]
  %v422 = vld [vmem:[%s1 + $0x2dc] sm:$0xf]
  %v423 = vld [vmem:[%s1 + $0x2e0] sm:$0xf]
  %v424 = vld [vmem:[%s1 + $0x2e4] sm:$0xf]
  %v425 = vld [vmem:[%s1 + $0x2e8] sm:$0xf]
  %v426 = vld [vmem:[%s1 + $0x2ec] sm:$0xf]
  %v427 = vld [vmem:[%s1 + $0x2f0] sm:$0xf]
  %v428 = vld [vmem:[%s1 + $0x2f4] sm:$0xf]
  %v429 = vld [vmem:[%s1 + $0x2f8] sm:$0xf]
  %v430 = vld [vmem:[%s1 + $0x2fc] sm:$0xf]
  %v431 = vld [vmem:[%s1 + $0x300] sm:$0xf]
  %v432 = vld [vmem:[%s1 + $0x304] sm:$0xf]
  %v433 = vld [vmem:[%s1 + $0x308] sm:$0xf]
  %v434 = vld [vmem:[%s1 + $0x30c] sm:$0xf]
  %v435 = vld [vmem:[%s1 + $0x310] sm:$0xf]
  %v436 = vld [vmem:[%s1 + $0x314] sm:$0xf]
  %v437 = vld [vmem:[%s1 + $0x318] sm:$0xf]
  %v438 = vld [vmem:[%s1 + $0x31c] sm:$0xf]
  %v439 = vld [vmem:[%s1 + $0x320] sm:$0xf]
  %v440 = vld [vmem:[%s1 + $0x324] sm:$0xf]
  %v441 = vld [vmem:[%s1 + $0x328] sm:$0xf]
  %v442 = vld [vmem:[%s1 + $0x32c] sm:$0xf]
  %v443 = vld [vmem:[%s1 + $0x330] sm:$0xf]
  %v444 = vld [vmem:[%s1 + $0x334] sm:$0xf]
  %v445 = vld [vmem:[%s1 + $0x338] sm:$0xf]
  %v446 = vld [vmem:[%s1 + $0x33c] sm:$0xf]
  %v447 = vld [vmem:[%s1 + $0x340] sm:$0xf]
  %v448 = vld [vmem:[%s1 + $0x344] sm:$0xf]
  %v449 = vld [vmem:[%s1 + $0x348] sm:$0xf]
  %v450 = vld [vmem:[%s1 + $0x34c] sm:$0xf]
  %v451 = vld [vmem:[%s1 + $0x350] sm:$0xf]
  %v452 = vld [vmem:[%s1 + $0x354] sm:$0xf]
  %v453 = vld [vmem:[%s1 + $0x358] sm:$0xf]
  %v454 = vld [vmem:[%s1 + $0x35c] sm:$0xf]
  %v455 = vld [vmem:[%s1 + $0x360] sm:$0xf]
  %v456 = vld [vmem:[%s1 + $0x364] sm:$0xf]
  %v457 = vld [vmem:[%s1 + $0x368] sm:$0xf]
  %v458 = vld [vmem:[%s1 + $0x36c] sm:$0xf]
  %v459 = vld [vmem:[%s1 + $0x370] sm:$0xf]
  %v460 = vld [vmem:[%s1 + $0x374] sm:$0xf]
  %v461 = vld [vmem:[%s1 + $0x378] sm:$0xf]
  %v462 = vld [vmem:[%s1 + $0x37c] sm:$0xf]
  %v463 = vld [vmem:[%s1 + $0x380] sm:$0xf]
  %v464 = vld [vmem:[%s1 + $0x384] sm:$0xf]
  %v465 = vld [vmem:[%s1 + $0x388] sm:$0xf]
  %v466 = vld [vmem:[%s1 + $0x38c] sm:$0xf]
  %v467 = vld [vmem:[%s1 + $0x390] sm:$0xf]
  %v468 = vld [vmem:[%s1 + $0x394] sm:$0xf]
  %v469 = vld [vmem:[%s1 + $0x398] sm:$0xf]
  %v470 = vld [vmem:[%s1 + $0x39c] sm:$0xf]
  %v471 = vld [vmem:[%s1 + $0x3a0] sm:$0xf]
  %v472 = vld [vmem:[%s1 + $0x3a4] sm:$0xf]
  %v473 = vld [vmem:[%s1 + $0x3a8] sm:$0xf]
  %v474 = vld [vmem:[%s1 + $0x3ac] sm:$0xf]
  %v475 = vld [vmem:[%s1 + $0x3b0] sm:$0xf]
  %v476 = vld [vmem:[%s1 + $0x3b4] sm:$0xf]
  %v477 = vld [vmem:[%s1 + $0x3b8] sm:$0xf]
  %v478 = vld [vmem:[%s1 + $0x3bc] sm:$0xf]
  %v479 = vld [vmem:[%s1 + $0x3c0] sm:$0xf]
  %v480 = vld [vmem:[%s1 + $0x3c4] sm:$0xf]
  %v481 = vld [vmem:[%s1 + $0x3c8] sm:$0xf]
  %v482 = vld [vmem:[%s1 + $0x3cc] sm:$0xf]
  %v483 = vld [vmem:[%s1 + $0x3d0] sm:$0xf]
  %v484 = vld [vmem:[%s1 + $0x3d4] sm:$0xf]
  %v485 = vld [vmem:[%s1 + $0x3d8] sm:$0xf]
  %v486 = vld [vmem:[%s1 + $0x3dc] sm:$0xf]
  %v487 = vld [vmem:[%s1 + $0x3e0] sm:$0xf]
  %v488 = vld [vmem:[%s1 + $0x3e4] sm:$0xf]
  %v489 = vld [vmem:[%s1 + $0x3e8] sm:$0xf]
  %v490 = vld [vmem:[%s1 + $0x3ec] sm:$0xf]
  %v491 = vld [vmem:[%s1 + $0x3f0] sm:$0xf]
  %v492 = vld [vmem:[%s1 + $0x3f4] sm:$0xf]
  %v493 = vld [vmem:[%s1 + $0x3f8] sm:$0xf]
  %v494 = vld [vmem:[%s1 + $0x3fc] sm:$0xf]
  %v495 = vld [vmem:[%s1 + $0x400] sm:$0xf]
  %v496 = vld [vmem:[%s1 + $0x404] sm:$0xf]
  %v497 = vld [vmem:[%s1 + $0x408] sm:$0xf]
  %v498 = vld [vmem:[%s1 + $0x40c] sm:$0xf]
  %v499 = vld [vmem:[%s1 + $0x410] sm:$0xf]
  %v500 = vld [vmem:[%s1 + $0x414] sm:$0xf]
  %v501 = vld [vmem:[%s1 + $0x418] sm:$0xf]
  %v502 = vld [vmem:[%s1 + $0x41c] sm:$0xf]
  %v503 = vld [vmem:[%s1 + $0x420] sm:$0xf]
  %v504 = vld [vmem:[%s1 + $0x424] sm:$0xf]
  %v505 = vld [vmem:[%s1 + $0x428] sm:$0xf]
  %v506 = vld [vmem:[%s1 + $0x42c] sm:$0xf]
  %v507 = vld [vmem:[%s1 + $0x430] sm:$0xf]
  %v508 = vld [vmem:[%s1 + $0x434] sm:$0xf]
  %v509 = vld [vmem:[%s1 + $0x438] sm:$0xf]
  %v510 = vld [vmem:[%s1 + $0x43c] sm:$0xf]
  %v511 = vld [vmem:[%s1 + $0x440] sm:$0xf]
  %v512 = vld [vmem:[%s1 + $0x444] sm:$0xf]
  %v513 = vld [vmem:[%s1 + $0x448] sm:$0xf]
  %v514 = vld [vmem:[%s1 + $0x44c] sm:$0xf]
  %v515 = vld [vmem:[%s1 + $0x450] sm:$0xf]
  %v516 = vld [vmem:[%s1 + $0x454] sm:$0xf]
  %v517 = vld [vmem:[%s1 + $0x458] sm:$0xf]
  %v518 = vld [vmem:[%s1 + $0x45c] sm:$0xf]
  %v519 = vld [vmem:[%s1 + $0x460] sm:$0xf]
  %v520 = vld [vmem:[%s1 + $0x464] sm:$0xf]
  %v521 = vld [vmem:[%s1 + $0x468] sm:$0xf]
  %v522 = vld [vmem:[%s1 + $0x46c] sm:$0xf]
  %v523 = vld [vmem:[%s1 + $0x470] sm:$0xf]
  %v524 = vld [vmem:[%s1 + $0x474] sm:$0xf]
  %v525 = vld [vmem:[%s1 + $0x478] sm:$0xf]
  %v526 = vld [vmem:[%s1 + $0x47c] sm:$0xf]
  %v527 = vld [vmem:[%s1 + $0x480] sm:$0xf]
  %v528 = vld [vmem:[%s1 + $0x484] sm:$0xf]
  %v529 = vld [vmem:[%s1 + $0x488] sm:$0xf]
  %v530 = vld [vmem:[%s1 + $0x48c] sm:$0xf]
  %v531 = vld [vmem:[%s1 + $0x490] sm:$0xf]
  %v532 = vld [vmem:[%s1 + $0x494] sm:$0xf]
  %v533 = vld [vmem:[%s1 + $0x498] sm:$0xf]
  %v534 = vld [vmem:[%s1 + $0x49c] sm:$0xf]
  %v535 = vld [vmem:[%s1 + $0x4a0] sm:$0xf]
  %v536 = vld [vmem:[%s1 + $0x4a4] sm:$0xf]
  %v537 = vld [vmem:[%s1 + $0x4a8] sm:$0xf]
  %v538 = vld [vmem:[%s1 + $0x4ac] sm:$0xf]
  %v539 = vld [vmem:[%s1 + $0x4b0] sm:$0xf]
  %v540 = vld [vmem:[%s1 + $0x4b4] sm:$0xf]
  %v541 = vld [vmem:[%s1 + $0x4b8] sm:$0xf]
  %v542 = vld [vmem:[%s1 + $0x4bc] sm:$0xf]
  %v543 = vld [vmem:[%s1 + $0x4c0] sm:$0xf]
  %v544 = vld [vmem:[%s1 + $0x4c4] sm:$0xf]
  %v545 = vld [vmem:[%s1 + $0x4c8] sm:$0xf]
  %v546 = vld [vmem:[%s1 + $0x4cc] sm:$0xf]
  %v547 = vld [vmem:[%s1 + $0x4d0] sm:$0xf]
  %v548 = vld [vmem:[%s1 + $0x4d4] sm:$0xf]
  %v549 = vld [vmem:[%s1 + $0x4d8] sm:$0xf]
  %v550 = vld [vmem:[%s1 + $0x4dc] sm:$0xf]
  %v551 = vld [vmem:[%s1 + $0x4e0] sm:$0xf]
  %v552 = vld [vmem:[%s1 + $0x4e4] sm:$0xf]
  %v553 = vld [vmem:[%s1 + $0x4e8] sm:$0xf]
  %v554 = vld [vmem:[%s1 + $0x4ec] sm:$0xf]
  %v555 = vld [vmem:[%s1 + $0x4f0] sm:$0xf]
  %v556 = vld [vmem:[%s1 + $0x4f4] sm:$0xf]
  %v557 = vld [vmem:[%s1 + $0x4f8] sm:$0xf]
  %v558 = vld [vmem:[%s1 + $0x4fc] sm:$0xf]
  %v559 = vld [vmem:[%s1 + $0x500] sm:$0xf]
  %v560 = vld [vmem:[%s1 + $0x504] sm:$0xf]
  %v561 = vld [vmem:[%s1 + $0x508] sm:$0xf]
  %v562 = vld [vmem:[%s1 + $0x50c] sm:$0xf]
  %v563 = vld [vmem:[%s1 + $0x510] sm:$0xf]
  %v564 = vld [vmem:[%s1 + $0x514] sm:$0xf]
  %v565 = vld [vmem:[%s1 + $0x518] sm:$0xf]
  %v566 = vld [vmem:[%s1 + $0x51c] sm:$0xf]
  %v567 = vld [vmem:[%s1 + $0x520] sm:$0xf]
  %v568 = vld [vmem:[%s1 + $0x524] sm:$0xf]
  %v569 = vld [vmem:[%s1 + $0x528] sm:$0xf]
  %v570 = vld [vmem:[%s1 + $0x52c] sm:$0xf]
  %v571 = vld [vmem:[%s1 + $0x530] sm:$0xf]
  %v572 = vld [vmem:[%s1 + $0x534] sm:$0xf]
  %v573 = vld [vmem:[%s1 + $0x538] sm:$0xf]
  %v574 = vld [vmem:[%s1 + $0x53c] sm:$0xf]
  %v575 = vld [vmem:[%s1 + $0x540] sm:$0xf]
  %v576 = vld [vmem:[%s1 + $0x544] sm:$0xf]
  %v577 = vld [vmem:[%s1 + $0x548] sm:$0xf]
  %v578 = vld [vmem:[%s1 + $0x54c] sm:$0xf]
  %v579 = vld [vmem:[%s1 + $0x550] sm:$0xf]
  %v580 = vld [vmem:[%s1 + $0x554] sm:$0xf]
  %v581 = vld [vmem:[%s1 + $0x558] sm:$0xf]
  %v582 = vld [vmem:[%s1 + $0x55c] sm:$0xf]
  %v583 = vld [vmem:[%s1 + $0x560] sm:$0xf]
  %v584 = vld [vmem:[%s1 + $0x564] sm:$0xf]
  %v585 = vld [vmem:[%s1 + $0x568] sm:$0xf]
  %v586 = vld [vmem:[%s1 + $0x56c] sm:$0xf]
  %v587 = vld [vmem:[%s1 + $0x570] sm:$0xf]
  %v588 = vld [vmem:[%s1 + $0x574] sm:$0xf]
  %v589 = vld [vmem:[%s1 + $0x578] sm:$0xf]
  %v590 = vld [vmem:[%s1 + $0x57c] sm:$0xf]
  %v591 = vld [vmem:[%s1 + $0x580] sm:$0xf]
  %v592 = vld [vmem:[%s1 + $0x584] sm:$0xf]
  %v593 = vld [vmem:[%s1 + $0x588] sm:$0xf]
  %v594 = vld [vmem:[%s1 + $0x58c] sm:$0xf]
  %v595 = vld [vmem:[%s1 + $0x590] sm:$0xf]
  %v596 = vld [vmem:[%s1 + $0x594] sm:$0xf]
  %v597 = vld [vmem:[%s1 + $0x598] sm:$0xf]
  %v598 = vld [vmem:[%s1 + $0x59c] sm:$0xf]
  %v599 = vld [vmem:[%s1 + $0x5a0] sm:$0xf]
  %v600 = vld [vmem:[%s1 + $0x5a4] sm:$0xf]
  %v601 = vld [vmem:[%s1 + $0x5a8] sm:$0xf]
  %v602 = vld [vmem:[%s1 + $0x5ac] sm:$0xf]
  %v603 = vld [vmem:[%s1 + $0x5b0] sm:$0xf]
  %v604 = vld [vmem:[%s1 + $0x5b4] sm:$0xf]
  %v605 = vld [vmem:[%s1 + $0x5b8] sm:$0xf]
  %v606 = vld [vmem:[%s1 + $0x5bc] sm:$0xf]
  %v607 = vld [vmem:[%s1 + $0x5c0] sm:$0xf]
  %v608 = vld [vmem:[%s1 + $0x5c4] sm:$0xf]
  %v609 = vld [vmem:[%s1 + $0x5c8] sm:$0xf]
  %v610 = vld [vmem:[%s1 + $0x5cc] sm:$0xf]
  %v611 = vld [vmem:[%s1 + $0x5d0] sm:$0xf]
  %v612 = vld [vmem:[%s1 + $0x5d4] sm:$0xf]
  %v613 = vld [vmem:[%s1 + $0x5d8] sm:$0xf]
  %v614 = vld [vmem:[%s1 + $0x5dc] sm:$0xf]
  %v615 = vld [vmem:[%s1 + $0x5e0] sm:$0xf]
  %v616 = vld [vmem:[%s1 + $0x5e4] sm:$0xf]
  %v617 = vld [vmem:[%s1 + $0x5e8] sm:$0xf]
  %v618 = vld [vmem:[%s1 + $0x5ec] sm:$0xf]
  %v619 = vld [vmem:[%s1 + $0x5f0] sm:$0xf]
  %v620 = vld [vmem:[%s1 + $0x5f4] sm:$0xf]
  %v621 = vld [vmem:[%s1 + $0x5f8] sm:$0xf]
  %v622 = vld [vmem:[%s1 + $0x5fc] sm:$0xf]
  %v623 = vld [vmem:[%s1 + $0x600] sm:$0xf]
  %v624 = vld [vmem:[%s1 + $0x604] sm:$0xf]
  %v625 = vld [vmem:[%s1 + $0x608] sm:$0xf]
  %v626 = vld [vmem:[%s1 + $0x60c] sm:$0xf]
  %v627 = vld [vmem:[%s1 + $0x610] sm:$0xf]
  %v628 = vld [vmem:[%s1 + $0x614] sm:$0xf]
  %v629 = vld [vmem:[%s1 + $0x618] sm:$0xf]
  %v630 = vld [vmem:[%s1 + $0x61c] sm:$0xf]
  %v631 = vld [vmem:[%s1 + $0x620] sm:$0xf]
  %v632 = vld [vmem:[%s1 + $0x624] sm:$0xf]
  %v633 = vld [vmem:[%s1 + $0x628] sm:$0xf]
  %v634 = vld [vmem:[%s1 + $0x62c] sm:$0xf]
  %v635 = vld [vmem:[%s1 + $0x630] sm:$0xf]
  %v636 = vld [vmem:[%s1 + $0x634] sm:$0xf]
  %v637 = vld [vmem:[%s1 + $0x638] sm:$0xf]
  %v638 = vld [vmem:[%s1 + $0x63c] sm:$0xf]
  %v639 = vld [vmem:[%s1 + $0x640] sm:$0xf]
  %v640 = vld [vmem:[%s1 + $0x644] sm:$0xf]
  %v641 = vld [vmem:[%s1 + $0x648] sm:$0xf]
  %v642 = vld [vmem:[%s1 + $0x64c] sm:$0xf]
  %v643 = vld [vmem:[%s1 + $0x650] sm:$0xf]
  %v644 = vld [vmem:[%s1 + $0x654] sm:$0xf]
  %v645 = vld [vmem:[%s1 + $0x658] sm:$0xf]
  %v646 = vld [vmem:[%s1 + $0x65c] sm:$0xf]
  %v647 = vld [vmem:[%s1 + $0x660] sm:$0xf]
  %v648 = vld [vmem:[%s1 + $0x664] sm:$0xf]
  %v649 = vld [vmem:[%s1 + $0x668] sm:$0xf]
  %v650 = vld [vmem:[%s1 + $0x66c] sm:$0xf]
  %v651 = vld [vmem:[%s1 + $0x670] sm:$0xf]
  %v652 = vld [vmem:[%s1 + $0x674] sm:$0xf]
  %v653 = vld [vmem:[%s1 + $0x678] sm:$0xf]
  %v654 = vld [vmem:[%s1 + $0x67c] sm:$0xf]
  %v655 = vld [vmem:[%s1 + $0x680] sm:$0xf]
  %v656 = vld [vmem:[%s1 + $0x684] sm:$0xf]
  %v657 = vld [vmem:[%s1 + $0x688] sm:$0xf]
  %v658 = vld [vmem:[%s1 + $0x68c] sm:$0xf]
  %v659 = vld [vmem:[%s1 + $0x690] sm:$0xf]
  %v660 = vld [vmem:[%s1 + $0x694] sm:$0xf]
  %v661 = vld [vmem:[%s1 + $0x698] sm:$0xf]
  %v662 = vld [vmem:[%s1 + $0x69c] sm:$0xf]
  %v663 = vld [vmem:[%s1 + $0x6a0] sm:$0xf]
  %v664 = vld [vmem:[%s1 + $0x6a4] sm:$0xf]
  %v665 = vld [vmem:[%s1 + $0x6a8] sm:$0xf]
  %v666 = vld [vmem:[%s1 + $0x6ac] sm:$0xf]
  %v667 = vld [vmem:[%s1 + $0x6b0] sm:$0xf]
  %v668 = vld [vmem:[%s1 + $0x6b4] sm:$0xf]
  %v669 = vld [vmem:[%s1 + $0x6b8] sm:$0xf]
  %v670 = vld [vmem:[%s1 + $0x6bc] sm:$0xf]
  %v671 = vld [vmem:[%s2] sm:$0x1]
  %v673 = vlaneseq
  %v674 = vshrl.u32 %v673, 7
  %v675 = vsub.s32 0, %v674
  %v676 = vrot.slane %v671, %v675
  %v902 = vunpack.c.l.b16 %v15
  %v903 = vunpack.c.h.b16 %v15
  %v904 = vunpack.c.l.b16 %v16
  %v905 = vunpack.c.h.b16 %v16
  %v906 = vunpack.c.l.b16 %v17
  %v907 = vunpack.c.h.b16 %v17
  %v908 = vunpack.c.l.b16 %v18
  %v909 = vunpack.c.h.b16 %v18
  %v910 = vunpack.c.l.b16 %v19
  %v911 = vunpack.c.h.b16 %v19
  %v912 = vunpack.c.l.b16 %v20
  %v913 = vunpack.c.h.b16 %v20
  %v914 = vunpack.c.l.b16 %v21
  %v915 = vunpack.c.h.b16 %v21
  %v916 = vunpack.c.l.b16 %v22
  %v917 = vunpack.c.h.b16 %v22
  %v918 = vunpack.c.l.b16 %v23
  %v919 = vunpack.c.h.b16 %v23
  %v920 = vunpack.c.l.b16 %v24
  %v921 = vunpack.c.h.b16 %v24
  %v922 = vunpack.c.l.b16 %v25
  %v923 = vunpack.c.h.b16 %v25
  %v924 = vunpack.c.l.b16 %v26
  %v925 = vunpack.c.h.b16 %v26
  %v926 = vunpack.c.l.b16 %v27
  %v927 = vunpack.c.h.b16 %v27
  %v928 = vunpack.c.l.b16 %v28
  %v929 = vunpack.c.l.b16 %v29
  %v930 = vunpack.c.h.b16 %v29
  %v931 = vunpack.c.l.b16 %v30
  %v932 = vunpack.c.h.b16 %v30
  %v933 = vunpack.c.l.b16 %v31
  %v934 = vunpack.c.h.b16 %v31
  %v935 = vunpack.c.l.b16 %v32
  %v936 = vunpack.c.h.b16 %v32
  %v937 = vunpack.c.l.b16 %v33
  %v938 = vunpack.c.h.b16 %v33
  %v939 = vunpack.c.l.b16 %v34
  %v940 = vunpack.c.h.b16 %v34
  %v941 = vunpack.c.l.b16 %v35
  %v942 = vunpack.c.h.b16 %v35
  %v943 = vunpack.c.l.b16 %v36
  %v944 = vunpack.c.h.b16 %v36
  %v945 = vunpack.c.l.b16 %v37
  %v946 = vunpack.c.h.b16 %v37
  %v947 = vunpack.c.l.b16 %v38
  %v948 = vunpack.c.h.b16 %v38
  %v949 = vunpack.c.l.b16 %v39
  %v950 = vunpack.c.h.b16 %v39
  %v951 = vunpack.c.l.b16 %v40
  %v952 = vunpack.c.h.b16 %v40
  %v953 = vunpack.c.l.b16 %v41
  %v954 = vunpack.c.h.b16 %v41
  %v955 = vunpack.c.l.b16 %v42
  %v956 = vunpack.c.l.b16 %v43
  %v957 = vunpack.c.h.b16 %v43
  %v958 = vunpack.c.l.b16 %v44
  %v959 = vunpack.c.h.b16 %v44
  %v960 = vunpack.c.l.b16 %v45
  %v961 = vunpack.c.h.b16 %v45
  %v962 = vunpack.c.l.b16 %v46
  %v963 = vunpack.c.h.b16 %v46
  %v964 = vunpack.c.l.b16 %v47
  %v965 = vunpack.c.h.b16 %v47
  %v966 = vunpack.c.l.b16 %v48
  %v967 = vunpack.c.h.b16 %v48
  %v968 = vunpack.c.l.b16 %v49
  %v969 = vunpack.c.h.b16 %v49
  %v970 = vunpack.c.l.b16 %v50
  %v971 = vunpack.c.h.b16 %v50
  %v972 = vunpack.c.l.b16 %v51
  %v973 = vunpack.c.h.b16 %v51
  %v974 = vunpack.c.l.b16 %v52
  %v975 = vunpack.c.h.b16 %v52
  %v976 = vunpack.c.l.b16 %v53
  %v977 = vunpack.c.h.b16 %v53
  %v978 = vunpack.c.l.b16 %v54
  %v979 = vunpack.c.h.b16 %v54
  %v980 = vunpack.c.l.b16 %v55
  %v981 = vunpack.c.h.b16 %v55
  %v982 = vunpack.c.l.b16 %v56
  %v983 = vunpack.c.l.b16 %v57
  %v984 = vunpack.c.h.b16 %v57
  %v985 = vunpack.c.l.b16 %v58
  %v986 = vunpack.c.h.b16 %v58
  %v987 = vunpack.c.l.b16 %v59
  %v988 = vunpack.c.h.b16 %v59
  %v989 = vunpack.c.l.b16 %v60
  %v990 = vunpack.c.h.b16 %v60
  %v991 = vunpack.c.l.b16 %v61
  %v992 = vunpack.c.h.b16 %v61
  %v993 = vunpack.c.l.b16 %v62
  %v994 = vunpack.c.h.b16 %v62
  %v995 = vunpack.c.l.b16 %v63
  %v996 = vunpack.c.h.b16 %v63
  %v997 = vunpack.c.l.b16 %v64
  %v998 = vunpack.c.h.b16 %v64
  %v999 = vunpack.c.l.b16 %v65
  %v1000 = vunpack.c.h.b16 %v65
  %v1001 = vunpack.c.l.b16 %v66
  %v1002 = vunpack.c.h.b16 %v66
  %v1003 = vunpack.c.l.b16 %v67
  %v1004 = vunpack.c.h.b16 %v67
  %v1005 = vunpack.c.l.b16 %v68
  %v1006 = vunpack.c.h.b16 %v68
  %v1007 = vunpack.c.l.b16 %v69
  %v1008 = vunpack.c.h.b16 %v69
  %v1009 = vunpack.c.l.b16 %v70
  %v1010 = vunpack.c.l.b16 %v71
  %v1011 = vunpack.c.h.b16 %v71
  %v1012 = vunpack.c.l.b16 %v72
  %v1013 = vunpack.c.h.b16 %v72
  %v1014 = vunpack.c.l.b16 %v73
  %v1015 = vunpack.c.h.b16 %v73
  %v1016 = vunpack.c.l.b16 %v74
  %v1017 = vunpack.c.h.b16 %v74
  %v1018 = vunpack.c.l.b16 %v75
  %v1019 = vunpack.c.h.b16 %v75
  %v1020 = vunpack.c.l.b16 %v76
  %v1021 = vunpack.c.h.b16 %v76
  %v1022 = vunpack.c.l.b16 %v77
  %v1023 = vunpack.c.h.b16 %v77
  %v1024 = vunpack.c.l.b16 %v78
  %v1025 = vunpack.c.h.b16 %v78
  %v1026 = vunpack.c.l.b16 %v79
  %v1027 = vunpack.c.h.b16 %v79
  %v1028 = vunpack.c.l.b16 %v80
  %v1029 = vunpack.c.h.b16 %v80
  %v1030 = vunpack.c.l.b16 %v81
  %v1031 = vunpack.c.h.b16 %v81
  %v1032 = vunpack.c.l.b16 %v82
  %v1033 = vunpack.c.h.b16 %v82
  %v1034 = vunpack.c.l.b16 %v83
  %v1035 = vunpack.c.h.b16 %v83
  %v1036 = vunpack.c.l.b16 %v84
  %v1037 = vunpack.c.l.b16 %v85
  %v1038 = vunpack.c.h.b16 %v85
  %v1039 = vunpack.c.l.b16 %v86
  %v1040 = vunpack.c.h.b16 %v86
  %v1041 = vunpack.c.l.b16 %v87
  %v1042 = vunpack.c.h.b16 %v87
  %v1043 = vunpack.c.l.b16 %v88
  %v1044 = vunpack.c.h.b16 %v88
  %v1045 = vunpack.c.l.b16 %v89
  %v1046 = vunpack.c.h.b16 %v89
  %v1047 = vunpack.c.l.b16 %v90
  %v1048 = vunpack.c.h.b16 %v90
  %v1049 = vunpack.c.l.b16 %v91
  %v1050 = vunpack.c.h.b16 %v91
  %v1051 = vunpack.c.l.b16 %v92
  %v1052 = vunpack.c.h.b16 %v92
  %v1053 = vunpack.c.l.b16 %v93
  %v1054 = vunpack.c.h.b16 %v93
  %v1055 = vunpack.c.l.b16 %v94
  %v1056 = vunpack.c.h.b16 %v94
  %v1057 = vunpack.c.l.b16 %v95
  %v1058 = vunpack.c.h.b16 %v95
  %v1059 = vunpack.c.l.b16 %v96
  %v1060 = vunpack.c.h.b16 %v96
  %v1061 = vunpack.c.l.b16 %v97
  %v1062 = vunpack.c.h.b16 %v97
  %v1063 = vunpack.c.l.b16 %v98
  %v1064 = vunpack.c.l.b16 %v99
  %v1065 = vunpack.c.h.b16 %v99
  %v1066 = vunpack.c.l.b16 %v100
  %v1067 = vunpack.c.h.b16 %v100
  %v1068 = vunpack.c.l.b16 %v101
  %v1069 = vunpack.c.h.b16 %v101
  %v1070 = vunpack.c.l.b16 %v102
  %v1071 = vunpack.c.h.b16 %v102
  %v1072 = vunpack.c.l.b16 %v103
  %v1073 = vunpack.c.h.b16 %v103
  %v1074 = vunpack.c.l.b16 %v104
  %v1075 = vunpack.c.h.b16 %v104
  %v1076 = vunpack.c.l.b16 %v105
  %v1077 = vunpack.c.h.b16 %v105
  %v1078 = vunpack.c.l.b16 %v106
  %v1079 = vunpack.c.h.b16 %v106
  %v1080 = vunpack.c.l.b16 %v107
  %v1081 = vunpack.c.h.b16 %v107
  %v1082 = vunpack.c.l.b16 %v108
  %v1083 = vunpack.c.h.b16 %v108
  %v1084 = vunpack.c.l.b16 %v109
  %v1085 = vunpack.c.h.b16 %v109
  %v1086 = vunpack.c.l.b16 %v110
  %v1087 = vunpack.c.h.b16 %v110
  %v1088 = vunpack.c.l.b16 %v111
  %v1089 = vunpack.c.h.b16 %v111
  %v1090 = vunpack.c.l.b16 %v112
  %v1091 = vunpack.c.l.b16 %v113
  %v1092 = vunpack.c.h.b16 %v113
  %v1093 = vunpack.c.l.b16 %v114
  %v1094 = vunpack.c.h.b16 %v114
  %v1095 = vunpack.c.l.b16 %v115
  %v1096 = vunpack.c.h.b16 %v115
  %v1097 = vunpack.c.l.b16 %v116
  %v1098 = vunpack.c.h.b16 %v116
  %v1099 = vunpack.c.l.b16 %v117
  %v1100 = vunpack.c.h.b16 %v117
  %v1101 = vunpack.c.l.b16 %v118
  %v1102 = vunpack.c.h.b16 %v118
  %v1103 = vunpack.c.l.b16 %v119
  %v1104 = vunpack.c.h.b16 %v119
  %v1105 = vunpack.c.l.b16 %v120
  %v1106 = vunpack.c.h.b16 %v120
  %v1107 = vunpack.c.l.b16 %v121
  %v1108 = vunpack.c.h.b16 %v121
  %v1109 = vunpack.c.l.b16 %v122
  %v1110 = vunpack.c.h.b16 %v122
  %v1111 = vunpack.c.l.b16 %v123
  %v1112 = vunpack.c.h.b16 %v123
  %v1113 = vunpack.c.l.b16 %v124
  %v1114 = vunpack.c.h.b16 %v124
  %v1115 = vunpack.c.l.b16 %v125
  %v1116 = vunpack.c.h.b16 %v125
  %v1117 = vunpack.c.l.b16 %v126
  %v1118 = vunpack.c.l.b16 %v127
  %v1119 = vunpack.c.h.b16 %v127
  %v1120 = vunpack.c.l.b16 %v128
  %v1121 = vunpack.c.h.b16 %v128
  %v1122 = vunpack.c.l.b16 %v129
  %v1123 = vunpack.c.h.b16 %v129
  %v1124 = vunpack.c.l.b16 %v130
  %v1125 = vunpack.c.h.b16 %v130
  %v1126 = vunpack.c.l.b16 %v131
  %v1127 = vunpack.c.h.b16 %v131
  %v1128 = vunpack.c.l.b16 %v132
  %v1129 = vunpack.c.h.b16 %v132
  %v1130 = vunpack.c.l.b16 %v133
  %v1131 = vunpack.c.h.b16 %v133
  %v1132 = vunpack.c.l.b16 %v134
  %v1133 = vunpack.c.h.b16 %v134
  %v1134 = vunpack.c.l.b16 %v135
  %v1135 = vunpack.c.h.b16 %v135
  %v1136 = vunpack.c.l.b16 %v136
  %v1137 = vunpack.c.h.b16 %v136
  %v1138 = vunpack.c.l.b16 %v137
  %v1139 = vunpack.c.h.b16 %v137
  %v1140 = vunpack.c.l.b16 %v138
  %v1141 = vunpack.c.h.b16 %v138
  %v1142 = vunpack.c.l.b16 %v139
  %v1143 = vunpack.c.h.b16 %v139
  %v1144 = vunpack.c.l.b16 %v140
  %v1145 = vunpack.c.l.b16 %v141
  %v1146 = vunpack.c.h.b16 %v141
  %v1147 = vunpack.c.l.b16 %v142
  %v1148 = vunpack.c.h.b16 %v142
  %v1149 = vunpack.c.l.b16 %v143
  %v1150 = vunpack.c.h.b16 %v143
  %v1151 = vunpack.c.l.b16 %v144
  %v1152 = vunpack.c.h.b16 %v144
  %v1153 = vunpack.c.l.b16 %v145
  %v1154 = vunpack.c.h.b16 %v145
  %v1155 = vunpack.c.l.b16 %v146
  %v1156 = vunpack.c.h.b16 %v146
  %v1157 = vunpack.c.l.b16 %v147
  %v1158 = vunpack.c.h.b16 %v147
  %v1159 = vunpack.c.l.b16 %v148
  %v1160 = vunpack.c.h.b16 %v148
  %v1161 = vunpack.c.l.b16 %v149
  %v1162 = vunpack.c.h.b16 %v149
  %v1163 = vunpack.c.l.b16 %v150
  %v1164 = vunpack.c.h.b16 %v150
  %v1165 = vunpack.c.l.b16 %v151
  %v1166 = vunpack.c.h.b16 %v151
  %v1167 = vunpack.c.l.b16 %v152
  %v1168 = vunpack.c.h.b16 %v152
  %v1169 = vunpack.c.l.b16 %v153
  %v1170 = vunpack.c.h.b16 %v153
  %v1171 = vunpack.c.l.b16 %v154
  %v1172 = vunpack.c.l.b16 %v155
  %v1173 = vunpack.c.h.b16 %v155
  %v1174 = vunpack.c.l.b16 %v156
  %v1175 = vunpack.c.h.b16 %v156
  %v1176 = vunpack.c.l.b16 %v157
  %v1177 = vunpack.c.h.b16 %v157
  %v1178 = vunpack.c.l.b16 %v158
  %v1179 = vunpack.c.h.b16 %v158
  %v1180 = vunpack.c.l.b16 %v159
  %v1181 = vunpack.c.h.b16 %v159
  %v1182 = vunpack.c.l.b16 %v160
  %v1183 = vunpack.c.h.b16 %v160
  %v1184 = vunpack.c.l.b16 %v161
  %v1185 = vunpack.c.h.b16 %v161
  %v1186 = vunpack.c.l.b16 %v162
  %v1187 = vunpack.c.h.b16 %v162
  %v1188 = vunpack.c.l.b16 %v163
  %v1189 = vunpack.c.h.b16 %v163
  %v1190 = vunpack.c.l.b16 %v164
  %v1191 = vunpack.c.h.b16 %v164
  %v1192 = vunpack.c.l.b16 %v165
  %v1193 = vunpack.c.h.b16 %v165
  %v1194 = vunpack.c.l.b16 %v166
  %v1195 = vunpack.c.h.b16 %v166
  %v1196 = vunpack.c.l.b16 %v167
  %v1197 = vunpack.c.h.b16 %v167
  %v1198 = vunpack.c.l.b16 %v168
  %v1199 = vunpack.c.l.b16 %v169
  %v1200 = vunpack.c.h.b16 %v169
  %v1201 = vunpack.c.l.b16 %v170
  %v1202 = vunpack.c.h.b16 %v170
  %v1203 = vunpack.c.l.b16 %v171
  %v1204 = vunpack.c.h.b16 %v171
  %v1205 = vunpack.c.l.b16 %v172
  %v1206 = vunpack.c.h.b16 %v172
  %v1207 = vunpack.c.l.b16 %v173
  %v1208 = vunpack.c.h.b16 %v173
  %v1209 = vunpack.c.l.b16 %v174
  %v1210 = vunpack.c.h.b16 %v174
  %v1211 = vunpack.c.l.b16 %v175
  %v1212 = vunpack.c.h.b16 %v175
  %v1213 = vunpack.c.l.b16 %v176
  %v1214 = vunpack.c.h.b16 %v176
  %v1215 = vunpack.c.l.b16 %v177
  %v1216 = vunpack.c.h.b16 %v177
  %v1217 = vunpack.c.l.b16 %v178
  %v1218 = vunpack.c.h.b16 %v178
  %v1219 = vunpack.c.l.b16 %v179
  %v1220 = vunpack.c.h.b16 %v179
  %v1221 = vunpack.c.l.b16 %v180
  %v1222 = vunpack.c.h.b16 %v180
  %v1223 = vunpack.c.l.b16 %v181
  %v1224 = vunpack.c.h.b16 %v181
  %v1225 = vunpack.c.l.b16 %v182
  %v1226 = vunpack.c.l.b16 %v183
  %v1227 = vunpack.c.h.b16 %v183
  %v1228 = vunpack.c.l.b16 %v184
  %v1229 = vunpack.c.h.b16 %v184
  %v1230 = vunpack.c.l.b16 %v185
  %v1231 = vunpack.c.h.b16 %v185
  %v1232 = vunpack.c.l.b16 %v186
  %v1233 = vunpack.c.h.b16 %v186
  %v1234 = vunpack.c.l.b16 %v187
  %v1235 = vunpack.c.h.b16 %v187
  %v1236 = vunpack.c.l.b16 %v188
  %v1237 = vunpack.c.h.b16 %v188
  %v1238 = vunpack.c.l.b16 %v189
  %v1239 = vunpack.c.h.b16 %v189
  %v1240 = vunpack.c.l.b16 %v190
  %v1241 = vunpack.c.h.b16 %v190
  %v1242 = vunpack.c.l.b16 %v191
  %v1243 = vunpack.c.h.b16 %v191
  %v1244 = vunpack.c.l.b16 %v192
  %v1245 = vunpack.c.h.b16 %v192
  %v1246 = vunpack.c.l.b16 %v193
  %v1247 = vunpack.c.h.b16 %v193
  %v1248 = vunpack.c.l.b16 %v194
  %v1249 = vunpack.c.h.b16 %v194
  %v1250 = vunpack.c.l.b16 %v195
  %v1251 = vunpack.c.h.b16 %v195
  %v1252 = vunpack.c.l.b16 %v196
  %v1253 = vunpack.c.l.b16 %v197
  %v1254 = vunpack.c.h.b16 %v197
  %v1255 = vunpack.c.l.b16 %v198
  %v1256 = vunpack.c.h.b16 %v198
  %v1257 = vunpack.c.l.b16 %v199
  %v1258 = vunpack.c.h.b16 %v199
  %v1259 = vunpack.c.l.b16 %v200
  %v1260 = vunpack.c.h.b16 %v200
  %v1261 = vunpack.c.l.b16 %v201
  %v1262 = vunpack.c.h.b16 %v201
  %v1263 = vunpack.c.l.b16 %v202
  %v1264 = vunpack.c.h.b16 %v202
  %v1265 = vunpack.c.l.b16 %v203
  %v1266 = vunpack.c.h.b16 %v203
  %v1267 = vunpack.c.l.b16 %v204
  %v1268 = vunpack.c.h.b16 %v204
  %v1269 = vunpack.c.l.b16 %v205
  %v1270 = vunpack.c.h.b16 %v205
  %v1271 = vunpack.c.l.b16 %v206
  %v1272 = vunpack.c.h.b16 %v206
  %v1273 = vunpack.c.l.b16 %v207
  %v1274 = vunpack.c.h.b16 %v207
  %v1275 = vunpack.c.l.b16 %v208
  %v1276 = vunpack.c.h.b16 %v208
  %v1277 = vunpack.c.l.b16 %v209
  %v1278 = vunpack.c.h.b16 %v209
  %v1279 = vunpack.c.l.b16 %v210
  %v1280 = vunpack.c.l.b16 %v211
  %v1281 = vunpack.c.h.b16 %v211
  %v1282 = vunpack.c.l.b16 %v212
  %v1283 = vunpack.c.h.b16 %v212
  %v1284 = vunpack.c.l.b16 %v213
  %v1285 = vunpack.c.h.b16 %v213
  %v1286 = vunpack.c.l.b16 %v214
  %v1287 = vunpack.c.h.b16 %v214
  %v1288 = vunpack.c.l.b16 %v215
  %v1289 = vunpack.c.h.b16 %v215
  %v1290 = vunpack.c.l.b16 %v216
  %v1291 = vunpack.c.h.b16 %v216
  %v1292 = vunpack.c.l.b16 %v217
  %v1293 = vunpack.c.h.b16 %v217
  %v1294 = vunpack.c.l.b16 %v218
  %v1295 = vunpack.c.h.b16 %v218
  %v1296 = vunpack.c.l.b16 %v219
  %v1297 = vunpack.c.h.b16 %v219
  %v1298 = vunpack.c.l.b16 %v220
  %v1299 = vunpack.c.h.b16 %v220
  %v1300 = vunpack.c.l.b16 %v221
  %v1301 = vunpack.c.h.b16 %v221
  %v1302 = vunpack.c.l.b16 %v222
  %v1303 = vunpack.c.h.b16 %v222
  %v1304 = vunpack.c.l.b16 %v223
  %v1305 = vunpack.c.h.b16 %v223
  %v1306 = vunpack.c.l.b16 %v224
  %v1307 = vunpack.c.l.b16 %v225
  %v1308 = vunpack.c.h.b16 %v225
  %v1309 = vunpack.c.l.b16 %v226
  %v1310 = vunpack.c.h.b16 %v226
  %v1311 = vunpack.c.l.b16 %v227
  %v1312 = vunpack.c.h.b16 %v227
  %v1313 = vunpack.c.l.b16 %v228
  %v1314 = vunpack.c.h.b16 %v228
  %v1315 = vunpack.c.l.b16 %v229
  %v1316 = vunpack.c.h.b16 %v229
  %v1317 = vunpack.c.l.b16 %v230
  %v1318 = vunpack.c.h.b16 %v230
  %v1319 = vunpack.c.l.b16 %v231
  %v1320 = vunpack.c.h.b16 %v231
  %v1321 = vunpack.c.l.b16 %v232
  %v1322 = vunpack.c.h.b16 %v232
  %v1323 = vunpack.c.l.b16 %v233
  %v1324 = vunpack.c.h.b16 %v233
  %v1325 = vunpack.c.l.b16 %v234
  %v1326 = vunpack.c.h.b16 %v234
  %v1327 = vunpack.c.l.b16 %v235
  %v1328 = vunpack.c.h.b16 %v235
  %v1329 = vunpack.c.l.b16 %v236
  %v1330 = vunpack.c.h.b16 %v236
  %v1331 = vunpack.c.l.b16 %v237
  %v1332 = vunpack.c.h.b16 %v237
  %v1333 = vunpack.c.l.b16 %v238
  %v1334 = vpack.c.b16 %v929, %v902
  %v1335 = vpack.c.b16 %v930, %v903
  %v1336 = vpack.c.b16 %v931, %v904
  %v1337 = vpack.c.b16 %v932, %v905
  %v1338 = vpack.c.b16 %v933, %v906
  %v1339 = vpack.c.b16 %v934, %v907
  %v1340 = vpack.c.b16 %v935, %v908
  %v1341 = vpack.c.b16 %v936, %v909
  %v1342 = vpack.c.b16 %v937, %v910
  %v1343 = vpack.c.b16 %v938, %v911
  %v1344 = vpack.c.b16 %v939, %v912
  %v1345 = vpack.c.b16 %v940, %v913
  %v1346 = vpack.c.b16 %v941, %v914
  %v1347 = vpack.c.b16 %v942, %v915
  %v1348 = vpack.c.b16 %v943, %v916
  %v1349 = vpack.c.b16 %v944, %v917
  %v1350 = vpack.c.b16 %v945, %v918
  %v1351 = vpack.c.b16 %v946, %v919
  %v1352 = vpack.c.b16 %v947, %v920
  %v1353 = vpack.c.b16 %v948, %v921
  %v1354 = vpack.c.b16 %v949, %v922
  %v1355 = vpack.c.b16 %v950, %v923
  %v1356 = vpack.c.b16 %v951, %v924
  %v1357 = vpack.c.b16 %v952, %v925
  %v1358 = vpack.c.b16 %v953, %v926
  %v1359 = vpack.c.b16 %v954, %v927
  %v1360 = vpack.c.b16 %v955, %v928
  %v1361 = vpack.c.b16 %v983, %v956
  %v1362 = vpack.c.b16 %v984, %v957
  %v1363 = vpack.c.b16 %v985, %v958
  %v1364 = vpack.c.b16 %v986, %v959
  %v1365 = vpack.c.b16 %v987, %v960
  %v1366 = vpack.c.b16 %v988, %v961
  %v1367 = vpack.c.b16 %v989, %v962
  %v1368 = vpack.c.b16 %v990, %v963
  %v1369 = vpack.c.b16 %v991, %v964
  %v1370 = vpack.c.b16 %v992, %v965
  %v1371 = vpack.c.b16 %v993, %v966
  %v1372 = vpack.c.b16 %v994, %v967
  %v1373 = vpack.c.b16 %v995, %v968
  %v1374 = vpack.c.b16 %v996, %v969
  %v1375 = vpack.c.b16 %v997, %v970
  %v1376 = vpack.c.b16 %v998, %v971
  %v1377 = vpack.c.b16 %v999, %v972
  %v1378 = vpack.c.b16 %v1000, %v973
  %v1379 = vpack.c.b16 %v1001, %v974
  %v1380 = vpack.c.b16 %v1002, %v975
  %v1381 = vpack.c.b16 %v1003, %v976
  %v1382 = vpack.c.b16 %v1004, %v977
  %v1383 = vpack.c.b16 %v1005, %v978
  %v1384 = vpack.c.b16 %v1006, %v979
  %v1385 = vpack.c.b16 %v1007, %v980
  %v1386 = vpack.c.b16 %v1008, %v981
  %v1387 = vpack.c.b16 %v1009, %v982
  %v1388 = vpack.c.b16 %v1037, %v1010
  %v1389 = vpack.c.b16 %v1038, %v1011
  %v1390 = vpack.c.b16 %v1039, %v1012
  %v1391 = vpack.c.b16 %v1040, %v1013
  %v1392 = vpack.c.b16 %v1041, %v1014
  %v1393 = vpack.c.b16 %v1042, %v1015
  %v1394 = vpack.c.b16 %v1043, %v1016
  %v1395 = vpack.c.b16 %v1044, %v1017
  %v1396 = vpack.c.b16 %v1045, %v1018
  %v1397 = vpack.c.b16 %v1046, %v1019
  %v1398 = vpack.c.b16 %v1047, %v1020
  %v1399 = vpack.c.b16 %v1048, %v1021
  %v1400 = vpack.c.b16 %v1049, %v1022
  %v1401 = vpack.c.b16 %v1050, %v1023
  %v1402 = vpack.c.b16 %v1051, %v1024
  %v1403 = vpack.c.b16 %v1052, %v1025
  %v1404 = vpack.c.b16 %v1053, %v1026
  %v1405 = vpack.c.b16 %v1054, %v1027
  %v1406 = vpack.c.b16 %v1055, %v1028
  %v1407 = vpack.c.b16 %v1056, %v1029
  %v1408 = vpack.c.b16 %v1057, %v1030
  %v1409 = vpack.c.b16 %v1058, %v1031
  %v1410 = vpack.c.b16 %v1059, %v1032
  %v1411 = vpack.c.b16 %v1060, %v1033
  %v1412 = vpack.c.b16 %v1061, %v1034
  %v1413 = vpack.c.b16 %v1062, %v1035
  %v1414 = vpack.c.b16 %v1063, %v1036
  %v1415 = vpack.c.b16 %v1091, %v1064
  %v1416 = vpack.c.b16 %v1092, %v1065
  %v1417 = vpack.c.b16 %v1093, %v1066
  %v1418 = vpack.c.b16 %v1094, %v1067
  %v1419 = vpack.c.b16 %v1095, %v1068
  %v1420 = vpack.c.b16 %v1096, %v1069
  %v1421 = vpack.c.b16 %v1097, %v1070
  %v1422 = vpack.c.b16 %v1098, %v1071
  %v1423 = vpack.c.b16 %v1099, %v1072
  %v1424 = vpack.c.b16 %v1100, %v1073
  %v1425 = vpack.c.b16 %v1101, %v1074
  %v1426 = vpack.c.b16 %v1102, %v1075
  %v1427 = vpack.c.b16 %v1103, %v1076
  %v1428 = vpack.c.b16 %v1104, %v1077
  %v1429 = vpack.c.b16 %v1105, %v1078
  %v1430 = vpack.c.b16 %v1106, %v1079
  %v1431 = vpack.c.b16 %v1107, %v1080
  %v1432 = vpack.c.b16 %v1108, %v1081
  %v1433 = vpack.c.b16 %v1109, %v1082
  %v1434 = vpack.c.b16 %v1110, %v1083
  %v1435 = vpack.c.b16 %v1111, %v1084
  %v1436 = vpack.c.b16 %v1112, %v1085
  %v1437 = vpack.c.b16 %v1113, %v1086
  %v1438 = vpack.c.b16 %v1114, %v1087
  %v1439 = vpack.c.b16 %v1115, %v1088
  %v1440 = vpack.c.b16 %v1116, %v1089
  %v1441 = vpack.c.b16 %v1117, %v1090
  %v1442 = vpack.c.b16 %v1145, %v1118
  %v1443 = vpack.c.b16 %v1146, %v1119
  %v1444 = vpack.c.b16 %v1147, %v1120
  %v1445 = vpack.c.b16 %v1148, %v1121
  %v1446 = vpack.c.b16 %v1149, %v1122
  %v1447 = vpack.c.b16 %v1150, %v1123
  %v1448 = vpack.c.b16 %v1151, %v1124
  %v1449 = vpack.c.b16 %v1152, %v1125
  %v1450 = vpack.c.b16 %v1153, %v1126
  %v1451 = vpack.c.b16 %v1154, %v1127
  %v1452 = vpack.c.b16 %v1155, %v1128
  %v1453 = vpack.c.b16 %v1156, %v1129
  %v1454 = vpack.c.b16 %v1157, %v1130
  %v1455 = vpack.c.b16 %v1158, %v1131
  %v1456 = vpack.c.b16 %v1159, %v1132
  %v1457 = vpack.c.b16 %v1160, %v1133
  %v1458 = vpack.c.b16 %v1161, %v1134
  %v1459 = vpack.c.b16 %v1162, %v1135
  %v1460 = vpack.c.b16 %v1163, %v1136
  %v1461 = vpack.c.b16 %v1164, %v1137
  %v1462 = vpack.c.b16 %v1165, %v1138
  %v1463 = vpack.c.b16 %v1166, %v1139
  %v1464 = vpack.c.b16 %v1167, %v1140
  %v1465 = vpack.c.b16 %v1168, %v1141
  %v1466 = vpack.c.b16 %v1169, %v1142
  %v1467 = vpack.c.b16 %v1170, %v1143
  %v1468 = vpack.c.b16 %v1171, %v1144
  %v1469 = vpack.c.b16 %v1199, %v1172
  %v1470 = vpack.c.b16 %v1200, %v1173
  %v1471 = vpack.c.b16 %v1201, %v1174
  %v1472 = vpack.c.b16 %v1202, %v1175
  %v1473 = vpack.c.b16 %v1203, %v1176
  %v1474 = vpack.c.b16 %v1204, %v1177
  %v1475 = vpack.c.b16 %v1205, %v1178
  %v1476 = vpack.c.b16 %v1206, %v1179
  %v1477 = vpack.c.b16 %v1207, %v1180
  %v1478 = vpack.c.b16 %v1208, %v1181
  %v1479 = vpack.c.b16 %v1209, %v1182
  %v1480 = vpack.c.b16 %v1210, %v1183
  %v1481 = vpack.c.b16 %v1211, %v1184
  %v1482 = vpack.c.b16 %v1212, %v1185
  %v1483 = vpack.c.b16 %v1213, %v1186
  %v1484 = vpack.c.b16 %v1214, %v1187
  %v1485 = vpack.c.b16 %v1215, %v1188
  %v1486 = vpack.c.b16 %v1216, %v1189
  %v1487 = vpack.c.b16 %v1217, %v1190
  %v1488 = vpack.c.b16 %v1218, %v1191
  %v1489 = vpack.c.b16 %v1219, %v1192
  %v1490 = vpack.c.b16 %v1220, %v1193
  %v1491 = vpack.c.b16 %v1221, %v1194
  %v1492 = vpack.c.b16 %v1222, %v1195
  %v1493 = vpack.c.b16 %v1223, %v1196
  %v1494 = vpack.c.b16 %v1224, %v1197
  %v1495 = vpack.c.b16 %v1225, %v1198
  %v1496 = vpack.c.b16 %v1253, %v1226
  %v1497 = vpack.c.b16 %v1254, %v1227
  %v1498 = vpack.c.b16 %v1255, %v1228
  %v1499 = vpack.c.b16 %v1256, %v1229
  %v1500 = vpack.c.b16 %v1257, %v1230
  %v1501 = vpack.c.b16 %v1258, %v1231
  %v1502 = vpack.c.b16 %v1259, %v1232
  %v1503 = vpack.c.b16 %v1260, %v1233
  %v1504 = vpack.c.b16 %v1261, %v1234
  %v1505 = vpack.c.b16 %v1262, %v1235
  %v1506 = vpack.c.b16 %v1263, %v1236
  %v1507 = vpack.c.b16 %v1264, %v1237
  %v1508 = vpack.c.b16 %v1265, %v1238
  %v1509 = vpack.c.b16 %v1266, %v1239
  %v1510 = vpack.c.b16 %v1267, %v1240
  %v1511 = vpack.c.b16 %v1268, %v1241
  %v1512 = vpack.c.b16 %v1269, %v1242
  %v1513 = vpack.c.b16 %v1270, %v1243
  %v1514 = vpack.c.b16 %v1271, %v1244
  %v1515 = vpack.c.b16 %v1272, %v1245
  %v1516 = vpack.c.b16 %v1273, %v1246
  %v1517 = vpack.c.b16 %v1274, %v1247
  %v1518 = vpack.c.b16 %v1275, %v1248
  %v1519 = vpack.c.b16 %v1276, %v1249
  %v1520 = vpack.c.b16 %v1277, %v1250
  %v1521 = vpack.c.b16 %v1278, %v1251
  %v1522 = vpack.c.b16 %v1279, %v1252
  %v1523 = vpack.c.b16 %v1307, %v1280
  %v1524 = vpack.c.b16 %v1308, %v1281
  %v1525 = vpack.c.b16 %v1309, %v1282
  %v1526 = vpack.c.b16 %v1310, %v1283
  %v1527 = vpack.c.b16 %v1311, %v1284
  %v1528 = vpack.c.b16 %v1312, %v1285
  %v1529 = vpack.c.b16 %v1313, %v1286
  %v1530 = vpack.c.b16 %v1314, %v1287
  %v1531 = vpack.c.b16 %v1315, %v1288
  %v1532 = vpack.c.b16 %v1316, %v1289
  %v1533 = vpack.c.b16 %v1317, %v1290
  %v1534 = vpack.c.b16 %v1318, %v1291
  %v1535 = vpack.c.b16 %v1319, %v1292
  %v1536 = vpack.c.b16 %v1320, %v1293
  %v1537 = vpack.c.b16 %v1321, %v1294
  %v1538 = vpack.c.b16 %v1322, %v1295
  %v1539 = vpack.c.b16 %v1323, %v1296
  %v1540 = vpack.c.b16 %v1324, %v1297
  %v1541 = vpack.c.b16 %v1325, %v1298
  %v1542 = vpack.c.b16 %v1326, %v1299
  %v1543 = vpack.c.b16 %v1327, %v1300
  %v1544 = vpack.c.b16 %v1328, %v1301
  %v1545 = vpack.c.b16 %v1329, %v1302
  %v1546 = vpack.c.b16 %v1330, %v1303
  %v1547 = vpack.c.b16 %v1331, %v1304
  %v1548 = vpack.c.b16 %v1332, %v1305
  %v1549 = vpack.c.b16 %v1333, %v1306
  %v2198 = vunpack.c.l.b16 %v239
  %v2199 = vunpack.c.l.b16 %v240
  %v2200 = vunpack.c.l.b16 %v241
  %v2201 = vunpack.c.l.b16 %v242
  %v2202 = vunpack.c.l.b16 %v243
  %v2203 = vunpack.c.l.b16 %v244
  %v2204 = vunpack.c.l.b16 %v245
  %v2205 = vunpack.c.l.b16 %v246
  %v2206 = vunpack.c.l.b16 %v247
  %v2207 = vunpack.c.l.b16 %v248
  %v2208 = vunpack.c.l.b16 %v249
  %v2209 = vunpack.c.l.b16 %v250
  %v2210 = vunpack.c.l.b16 %v251
  %v2211 = vunpack.c.l.b16 %v252
  %v2212 = vunpack.c.l.b16 %v253
  %v2213 = vunpack.c.l.b16 %v254
  %v2214 = vunpack.c.l.b16 %v255
  %v2215 = vunpack.c.l.b16 %v256
  %v2216 = vunpack.c.l.b16 %v257
  %v2217 = vunpack.c.l.b16 %v258
  %v2218 = vunpack.c.l.b16 %v259
  %v2219 = vunpack.c.l.b16 %v260
  %v2220 = vunpack.c.l.b16 %v261
  %v2221 = vunpack.c.l.b16 %v262
  %v2222 = vunpack.c.l.b16 %v263
  %v2223 = vunpack.c.l.b16 %v264
  %v2224 = vunpack.c.l.b16 %v265
  %v2225 = vunpack.c.l.b16 %v266
  %v2226 = vunpack.c.l.b16 %v267
  %v2227 = vunpack.c.l.b16 %v268
  %v2228 = vunpack.c.l.b16 %v269
  %v2229 = vunpack.c.l.b16 %v270
  %v2230 = vunpack.c.l.b16 %v271
  %v2231 = vunpack.c.l.b16 %v272
  %v2232 = vunpack.c.l.b16 %v273
  %v2233 = vunpack.c.l.b16 %v274
  %v2234 = vunpack.c.l.b16 %v275
  %v2235 = vunpack.c.l.b16 %v276
  %v2236 = vunpack.c.l.b16 %v277
  %v2237 = vunpack.c.l.b16 %v278
  %v2238 = vunpack.c.l.b16 %v279
  %v2239 = vunpack.c.l.b16 %v280
  %v2240 = vunpack.c.l.b16 %v281
  %v2241 = vunpack.c.l.b16 %v282
  %v2242 = vunpack.c.l.b16 %v283
  %v2243 = vunpack.c.l.b16 %v284
  %v2244 = vunpack.c.l.b16 %v285
  %v2245 = vunpack.c.l.b16 %v286
  %v2246 = vunpack.c.l.b16 %v287
  %v2247 = vunpack.c.l.b16 %v288
  %v2248 = vunpack.c.l.b16 %v289
  %v2249 = vunpack.c.l.b16 %v290
  %v2250 = vunpack.c.l.b16 %v291
  %v2251 = vunpack.c.l.b16 %v292
  %v2252 = vunpack.c.l.b16 %v293
  %v2253 = vunpack.c.l.b16 %v294
  %v2254 = vunpack.c.l.b16 %v295
  %v2255 = vunpack.c.l.b16 %v296
  %v2256 = vunpack.c.l.b16 %v297
  %v2257 = vunpack.c.l.b16 %v298
  %v2258 = vunpack.c.l.b16 %v299
  %v2259 = vunpack.c.l.b16 %v300
  %v2260 = vunpack.c.l.b16 %v301
  %v2261 = vunpack.c.l.b16 %v302
  %v2262 = vunpack.c.l.b16 %v303
  %v2263 = vunpack.c.l.b16 %v304
  %v2264 = vunpack.c.l.b16 %v305
  %v2265 = vunpack.c.l.b16 %v306
  %v2266 = vunpack.c.l.b16 %v307
  %v2267 = vunpack.c.l.b16 %v308
  %v2268 = vunpack.c.l.b16 %v309
  %v2269 = vunpack.c.l.b16 %v310
  %v2270 = vunpack.c.l.b16 %v311
  %v2271 = vunpack.c.l.b16 %v312
  %v2272 = vunpack.c.l.b16 %v313
  %v2273 = vunpack.c.l.b16 %v314
  %v2274 = vunpack.c.l.b16 %v315
  %v2275 = vunpack.c.l.b16 %v316
  %v2276 = vunpack.c.l.b16 %v317
  %v2277 = vunpack.c.l.b16 %v318
  %v2278 = vunpack.c.l.b16 %v319
  %v2279 = vunpack.c.l.b16 %v320
  %v2280 = vunpack.c.l.b16 %v321
  %v2281 = vunpack.c.l.b16 %v322
  %v2282 = vunpack.c.l.b16 %v323
  %v2283 = vunpack.c.l.b16 %v324
  %v2284 = vunpack.c.l.b16 %v325
  %v2285 = vunpack.c.l.b16 %v326
  %v2286 = vunpack.c.l.b16 %v327
  %v2287 = vunpack.c.l.b16 %v328
  %v2288 = vunpack.c.l.b16 %v329
  %v2289 = vunpack.c.l.b16 %v330
  %v2290 = vunpack.c.l.b16 %v331
  %v2291 = vunpack.c.l.b16 %v332
  %v2292 = vunpack.c.l.b16 %v333
  %v2293 = vunpack.c.l.b16 %v334
  %v2294 = vunpack.c.l.b16 %v335
  %v2295 = vunpack.c.l.b16 %v336
  %v2296 = vunpack.c.l.b16 %v337
  %v2297 = vunpack.c.l.b16 %v338
  %v2298 = vunpack.c.l.b16 %v339
  %v2299 = vunpack.c.l.b16 %v340
  %v2300 = vunpack.c.l.b16 %v341
  %v2301 = vunpack.c.l.b16 %v342
  %v2302 = vunpack.c.l.b16 %v343
  %v2303 = vunpack.c.l.b16 %v344
  %v2304 = vunpack.c.l.b16 %v345
  %v2305 = vunpack.c.l.b16 %v346
  %v2306 = vunpack.c.l.b16 %v347
  %v2307 = vunpack.c.l.b16 %v348
  %v2308 = vunpack.c.l.b16 %v349
  %v2309 = vunpack.c.l.b16 %v350
  %v2310 = vunpack.c.l.b16 %v351
  %v2311 = vunpack.c.l.b16 %v352
  %v2312 = vunpack.c.l.b16 %v353
  %v2313 = vunpack.c.l.b16 %v354
  %v2314 = vunpack.c.l.b16 %v355
  %v2315 = vunpack.c.l.b16 %v356
  %v2316 = vunpack.c.l.b16 %v357
  %v2317 = vunpack.c.l.b16 %v358
  %v2318 = vunpack.c.l.b16 %v359
  %v2319 = vunpack.c.l.b16 %v360
  %v2320 = vunpack.c.l.b16 %v361
  %v2321 = vunpack.c.l.b16 %v362
  %v2322 = vunpack.c.l.b16 %v363
  %v2323 = vunpack.c.l.b16 %v364
  %v2324 = vunpack.c.l.b16 %v365
  %v2325 = vunpack.c.l.b16 %v366
  %v2326 = vunpack.c.l.b16 %v367
  %v2327 = vunpack.c.l.b16 %v368
  %v2328 = vunpack.c.l.b16 %v369
  %v2329 = vunpack.c.l.b16 %v370
  %v2330 = vunpack.c.l.b16 %v371
  %v2331 = vunpack.c.l.b16 %v372
  %v2332 = vunpack.c.l.b16 %v373
  %v2333 = vunpack.c.l.b16 %v374
  %v2334 = vunpack.c.l.b16 %v375
  %v2335 = vunpack.c.l.b16 %v376
  %v2336 = vunpack.c.l.b16 %v377
  %v2337 = vunpack.c.l.b16 %v378
  %v2338 = vunpack.c.l.b16 %v379
  %v2339 = vunpack.c.l.b16 %v380
  %v2340 = vunpack.c.l.b16 %v381
  %v2341 = vunpack.c.l.b16 %v382
  %v2342 = vunpack.c.l.b16 %v383
  %v2343 = vunpack.c.l.b16 %v384
  %v2344 = vunpack.c.l.b16 %v385
  %v2345 = vunpack.c.l.b16 %v386
  %v2346 = vunpack.c.l.b16 %v387
  %v2347 = vunpack.c.l.b16 %v388
  %v2348 = vunpack.c.l.b16 %v389
  %v2349 = vunpack.c.l.b16 %v390
  %v2350 = vunpack.c.l.b16 %v391
  %v2351 = vunpack.c.l.b16 %v392
  %v2352 = vunpack.c.l.b16 %v393
  %v2353 = vunpack.c.l.b16 %v394
  %v2354 = vunpack.c.l.b16 %v395
  %v2355 = vunpack.c.l.b16 %v396
  %v2356 = vunpack.c.l.b16 %v397
  %v2357 = vunpack.c.l.b16 %v398
  %v2358 = vunpack.c.l.b16 %v399
  %v2359 = vunpack.c.l.b16 %v400
  %v2360 = vunpack.c.l.b16 %v401
  %v2361 = vunpack.c.l.b16 %v402
  %v2362 = vunpack.c.l.b16 %v403
  %v2363 = vunpack.c.l.b16 %v404
  %v2364 = vunpack.c.l.b16 %v405
  %v2365 = vunpack.c.l.b16 %v406
  %v2366 = vunpack.c.l.b16 %v407
  %v2367 = vunpack.c.l.b16 %v408
  %v2368 = vunpack.c.l.b16 %v409
  %v2369 = vunpack.c.l.b16 %v410
  %v2370 = vunpack.c.l.b16 %v411
  %v2371 = vunpack.c.l.b16 %v412
  %v2372 = vunpack.c.l.b16 %v413
  %v2373 = vunpack.c.l.b16 %v414
  %v2374 = vunpack.c.l.b16 %v415
  %v2375 = vunpack.c.l.b16 %v416
  %v2376 = vunpack.c.l.b16 %v417
  %v2377 = vunpack.c.l.b16 %v418
  %v2378 = vunpack.c.l.b16 %v419
  %v2379 = vunpack.c.l.b16 %v420
  %v2380 = vunpack.c.l.b16 %v421
  %v2381 = vunpack.c.l.b16 %v422
  %v2382 = vunpack.c.l.b16 %v423
  %v2383 = vunpack.c.l.b16 %v424
  %v2384 = vunpack.c.l.b16 %v425
  %v2385 = vunpack.c.l.b16 %v426
  %v2386 = vunpack.c.l.b16 %v427
  %v2387 = vunpack.c.l.b16 %v428
  %v2388 = vunpack.c.l.b16 %v429
  %v2389 = vunpack.c.l.b16 %v430
  %v2390 = vunpack.c.l.b16 %v431
  %v2391 = vunpack.c.l.b16 %v432
  %v2392 = vunpack.c.l.b16 %v433
  %v2393 = vunpack.c.l.b16 %v434
  %v2394 = vunpack.c.l.b16 %v435
  %v2395 = vunpack.c.l.b16 %v436
  %v2396 = vunpack.c.l.b16 %v437
  %v2397 = vunpack.c.l.b16 %v438
  %v2398 = vunpack.c.l.b16 %v439
  %v2399 = vunpack.c.l.b16 %v440
  %v2400 = vunpack.c.l.b16 %v441
  %v2401 = vunpack.c.l.b16 %v442
  %v2402 = vunpack.c.l.b16 %v443
  %v2403 = vunpack.c.l.b16 %v444
  %v2404 = vunpack.c.l.b16 %v445
  %v2405 = vunpack.c.l.b16 %v446
  %v2406 = vunpack.c.l.b16 %v447
  %v2407 = vunpack.c.l.b16 %v448
  %v2408 = vunpack.c.l.b16 %v449
  %v2409 = vunpack.c.l.b16 %v450
  %v2410 = vunpack.c.l.b16 %v451
  %v2411 = vunpack.c.l.b16 %v452
  %v2412 = vunpack.c.l.b16 %v453
  %v2413 = vunpack.c.l.b16 %v454
  %v2414 = vunpack.c.l.b16 %v455
  %v2415 = vunpack.c.l.b16 %v456
  %v2416 = vunpack.c.l.b16 %v457
  %v2417 = vunpack.c.l.b16 %v458
  %v2418 = vunpack.c.l.b16 %v459
  %v2419 = vunpack.c.l.b16 %v460
  %v2420 = vunpack.c.l.b16 %v461
  %v2421 = vunpack.c.l.b16 %v462
  %v2422 = vunpack.c.l.b16 %v463
  %v2423 = vunpack.c.l.b16 %v464
  %v2424 = vunpack.c.l.b16 %v465
  %v2425 = vunpack.c.l.b16 %v466
  %v2426 = vunpack.c.l.b16 %v467
  %v2427 = vunpack.c.l.b16 %v468
  %v2428 = vunpack.c.l.b16 %v469
  %v2429 = vunpack.c.l.b16 %v470
  %v2430 = vunpack.c.l.b16 %v471
  %v2431 = vunpack.c.l.b16 %v472
  %v2432 = vunpack.c.l.b16 %v473
  %v2433 = vunpack.c.l.b16 %v474
  %v2434 = vunpack.c.l.b16 %v475
  %v2435 = vunpack.c.l.b16 %v476
  %v2436 = vunpack.c.l.b16 %v477
  %v2437 = vunpack.c.l.b16 %v478
  %v2438 = vunpack.c.l.b16 %v479
  %v2439 = vunpack.c.l.b16 %v480
  %v2440 = vunpack.c.l.b16 %v481
  %v2441 = vunpack.c.l.b16 %v482
  %v2442 = vunpack.c.l.b16 %v483
  %v2443 = vunpack.c.l.b16 %v484
  %v2444 = vunpack.c.l.b16 %v485
  %v2445 = vunpack.c.l.b16 %v486
  %v2446 = vunpack.c.l.b16 %v487
  %v2447 = vunpack.c.l.b16 %v488
  %v2448 = vunpack.c.l.b16 %v489
  %v2449 = vunpack.c.l.b16 %v490
  %v2450 = vunpack.c.l.b16 %v491
  %v2451 = vunpack.c.l.b16 %v492
  %v2452 = vunpack.c.l.b16 %v493
  %v2453 = vunpack.c.l.b16 %v494
  %v2454 = vunpack.c.l.b16 %v495
  %v2455 = vunpack.c.l.b16 %v496
  %v2456 = vunpack.c.l.b16 %v497
  %v2457 = vunpack.c.l.b16 %v498
  %v2458 = vunpack.c.l.b16 %v499
  %v2459 = vunpack.c.l.b16 %v500
  %v2460 = vunpack.c.l.b16 %v501
  %v2461 = vunpack.c.l.b16 %v502
  %v2462 = vunpack.c.l.b16 %v503
  %v2463 = vunpack.c.l.b16 %v504
  %v2464 = vunpack.c.l.b16 %v505
  %v2465 = vunpack.c.l.b16 %v506
  %v2466 = vunpack.c.l.b16 %v507
  %v2467 = vunpack.c.l.b16 %v508
  %v2468 = vunpack.c.l.b16 %v509
  %v2469 = vunpack.c.l.b16 %v510
  %v2470 = vunpack.c.l.b16 %v511
  %v2471 = vunpack.c.l.b16 %v512
  %v2472 = vunpack.c.l.b16 %v513
  %v2473 = vunpack.c.l.b16 %v514
  %v2474 = vunpack.c.l.b16 %v515
  %v2475 = vunpack.c.l.b16 %v516
  %v2476 = vunpack.c.l.b16 %v517
  %v2477 = vunpack.c.l.b16 %v518
  %v2478 = vunpack.c.l.b16 %v519
  %v2479 = vunpack.c.l.b16 %v520
  %v2480 = vunpack.c.l.b16 %v521
  %v2481 = vunpack.c.l.b16 %v522
  %v2482 = vunpack.c.l.b16 %v523
  %v2483 = vunpack.c.l.b16 %v524
  %v2484 = vunpack.c.l.b16 %v525
  %v2485 = vunpack.c.l.b16 %v526
  %v2486 = vunpack.c.l.b16 %v527
  %v2487 = vunpack.c.l.b16 %v528
  %v2488 = vunpack.c.l.b16 %v529
  %v2489 = vunpack.c.l.b16 %v530
  %v2490 = vunpack.c.l.b16 %v531
  %v2491 = vunpack.c.l.b16 %v532
  %v2492 = vunpack.c.l.b16 %v533
  %v2493 = vunpack.c.l.b16 %v534
  %v2494 = vunpack.c.l.b16 %v535
  %v2495 = vunpack.c.l.b16 %v536
  %v2496 = vunpack.c.l.b16 %v537
  %v2497 = vunpack.c.l.b16 %v538
  %v2498 = vunpack.c.l.b16 %v539
  %v2499 = vunpack.c.l.b16 %v540
  %v2500 = vunpack.c.l.b16 %v541
  %v2501 = vunpack.c.l.b16 %v542
  %v2502 = vunpack.c.l.b16 %v543
  %v2503 = vunpack.c.l.b16 %v544
  %v2504 = vunpack.c.l.b16 %v545
  %v2505 = vunpack.c.l.b16 %v546
  %v2506 = vunpack.c.l.b16 %v547
  %v2507 = vunpack.c.l.b16 %v548
  %v2508 = vunpack.c.l.b16 %v549
  %v2509 = vunpack.c.l.b16 %v550
  %v2510 = vunpack.c.l.b16 %v551
  %v2511 = vunpack.c.l.b16 %v552
  %v2512 = vunpack.c.l.b16 %v553
  %v2513 = vunpack.c.l.b16 %v554
  %v2514 = vunpack.c.l.b16 %v555
  %v2515 = vunpack.c.l.b16 %v556
  %v2516 = vunpack.c.l.b16 %v557
  %v2517 = vunpack.c.l.b16 %v558
  %v2518 = vunpack.c.l.b16 %v559
  %v2519 = vunpack.c.l.b16 %v560
  %v2520 = vunpack.c.l.b16 %v561
  %v2521 = vunpack.c.l.b16 %v562
  %v2522 = vunpack.c.l.b16 %v563
  %v2523 = vunpack.c.l.b16 %v564
  %v2524 = vunpack.c.l.b16 %v565
  %v2525 = vunpack.c.l.b16 %v566
  %v2526 = vunpack.c.l.b16 %v567
  %v2527 = vunpack.c.l.b16 %v568
  %v2528 = vunpack.c.l.b16 %v569
  %v2529 = vunpack.c.l.b16 %v570
  %v2530 = vunpack.c.l.b16 %v571
  %v2531 = vunpack.c.l.b16 %v572
  %v2532 = vunpack.c.l.b16 %v573
  %v2533 = vunpack.c.l.b16 %v574
  %v2534 = vunpack.c.l.b16 %v575
  %v2535 = vunpack.c.l.b16 %v576
  %v2536 = vunpack.c.l.b16 %v577
  %v2537 = vunpack.c.l.b16 %v578
  %v2538 = vunpack.c.l.b16 %v579
  %v2539 = vunpack.c.l.b16 %v580
  %v2540 = vunpack.c.l.b16 %v581
  %v2541 = vunpack.c.l.b16 %v582
  %v2542 = vunpack.c.l.b16 %v583
  %v2543 = vunpack.c.l.b16 %v584
  %v2544 = vunpack.c.l.b16 %v585
  %v2545 = vunpack.c.l.b16 %v586
  %v2546 = vunpack.c.l.b16 %v587
  %v2547 = vunpack.c.l.b16 %v588
  %v2548 = vunpack.c.l.b16 %v589
  %v2549 = vunpack.c.l.b16 %v590
  %v2550 = vunpack.c.l.b16 %v591
  %v2551 = vunpack.c.l.b16 %v592
  %v2552 = vunpack.c.l.b16 %v593
  %v2553 = vunpack.c.l.b16 %v594
  %v2554 = vunpack.c.l.b16 %v595
  %v2555 = vunpack.c.l.b16 %v596
  %v2556 = vunpack.c.l.b16 %v597
  %v2557 = vunpack.c.l.b16 %v598
  %v2558 = vunpack.c.l.b16 %v599
  %v2559 = vunpack.c.l.b16 %v600
  %v2560 = vunpack.c.l.b16 %v601
  %v2561 = vunpack.c.l.b16 %v602
  %v2562 = vunpack.c.l.b16 %v603
  %v2563 = vunpack.c.l.b16 %v604
  %v2564 = vunpack.c.l.b16 %v605
  %v2565 = vunpack.c.l.b16 %v606
  %v2566 = vunpack.c.l.b16 %v607
  %v2567 = vunpack.c.l.b16 %v608
  %v2568 = vunpack.c.l.b16 %v609
  %v2569 = vunpack.c.l.b16 %v610
  %v2570 = vunpack.c.l.b16 %v611
  %v2571 = vunpack.c.l.b16 %v612
  %v2572 = vunpack.c.l.b16 %v613
  %v2573 = vunpack.c.l.b16 %v614
  %v2574 = vunpack.c.l.b16 %v615
  %v2575 = vunpack.c.l.b16 %v616
  %v2576 = vunpack.c.l.b16 %v617
  %v2577 = vunpack.c.l.b16 %v618
  %v2578 = vunpack.c.l.b16 %v619
  %v2579 = vunpack.c.l.b16 %v620
  %v2580 = vunpack.c.l.b16 %v621
  %v2581 = vunpack.c.l.b16 %v622
  %v2582 = vunpack.c.l.b16 %v623
  %v2583 = vunpack.c.l.b16 %v624
  %v2584 = vunpack.c.l.b16 %v625
  %v2585 = vunpack.c.l.b16 %v626
  %v2586 = vunpack.c.l.b16 %v627
  %v2587 = vunpack.c.l.b16 %v628
  %v2588 = vunpack.c.l.b16 %v629
  %v2589 = vunpack.c.l.b16 %v630
  %v2590 = vunpack.c.l.b16 %v631
  %v2591 = vunpack.c.l.b16 %v632
  %v2592 = vunpack.c.l.b16 %v633
  %v2593 = vunpack.c.l.b16 %v634
  %v2594 = vunpack.c.l.b16 %v635
  %v2595 = vunpack.c.l.b16 %v636
  %v2596 = vunpack.c.l.b16 %v637
  %v2597 = vunpack.c.l.b16 %v638
  %v2598 = vunpack.c.l.b16 %v639
  %v2599 = vunpack.c.l.b16 %v640
  %v2600 = vunpack.c.l.b16 %v641
  %v2601 = vunpack.c.l.b16 %v642
  %v2602 = vunpack.c.l.b16 %v643
  %v2603 = vunpack.c.l.b16 %v644
  %v2604 = vunpack.c.l.b16 %v645
  %v2605 = vunpack.c.l.b16 %v646
  %v2606 = vunpack.c.l.b16 %v647
  %v2607 = vunpack.c.l.b16 %v648
  %v2608 = vunpack.c.l.b16 %v649
  %v2609 = vunpack.c.l.b16 %v650
  %v2610 = vunpack.c.l.b16 %v651
  %v2611 = vunpack.c.l.b16 %v652
  %v2612 = vunpack.c.l.b16 %v653
  %v2613 = vunpack.c.l.b16 %v654
  %v2614 = vunpack.c.l.b16 %v655
  %v2615 = vunpack.c.l.b16 %v656
  %v2616 = vunpack.c.l.b16 %v657
  %v2617 = vunpack.c.l.b16 %v658
  %v2618 = vunpack.c.l.b16 %v659
  %v2619 = vunpack.c.l.b16 %v660
  %v2620 = vunpack.c.l.b16 %v661
  %v2621 = vunpack.c.l.b16 %v662
  %v2622 = vunpack.c.l.b16 %v663
  %v2623 = vunpack.c.l.b16 %v664
  %v2624 = vunpack.c.l.b16 %v665
  %v2625 = vunpack.c.l.b16 %v666
  %v2626 = vunpack.c.l.b16 %v667
  %v2627 = vunpack.c.l.b16 %v668
  %v2628 = vunpack.c.l.b16 %v669
  %v2629 = vunpack.c.l.b16 %v670
  %v2630 = vpack.c.b16 %v2199, %v2198
  %v2631 = vpack.c.b16 %v2201, %v2200
  %v2632 = vpack.c.b16 %v2203, %v2202
  %v2633 = vpack.c.b16 %v2205, %v2204
  %v2634 = vpack.c.b16 %v2207, %v2206
  %v2635 = vpack.c.b16 %v2209, %v2208
  %v2636 = vpack.c.b16 %v2211, %v2210
  %v2637 = vpack.c.b16 %v2213, %v2212
  %v2638 = vpack.c.b16 %v2215, %v2214
  %v2639 = vpack.c.b16 %v2217, %v2216
  %v2640 = vpack.c.b16 %v2219, %v2218
  %v2641 = vpack.c.b16 %v2221, %v2220
  %v2642 = vpack.c.b16 %v2223, %v2222
  %v2643 = vpack.c.b16 %v2225, %v2224
  %v2644 = vpack.c.b16 %v2227, %v2226
  %v2645 = vpack.c.b16 %v2229, %v2228
  %v2646 = vpack.c.b16 %v2231, %v2230
  %v2647 = vpack.c.b16 %v2233, %v2232
  %v2648 = vpack.c.b16 %v2235, %v2234
  %v2649 = vpack.c.b16 %v2237, %v2236
  %v2650 = vpack.c.b16 %v2239, %v2238
  %v2651 = vpack.c.b16 %v2241, %v2240
  %v2652 = vpack.c.b16 %v2243, %v2242
  %v2653 = vpack.c.b16 %v2245, %v2244
  %v2654 = vpack.c.b16 %v2247, %v2246
  %v2655 = vpack.c.b16 %v2249, %v2248
  %v2656 = vpack.c.b16 %v2251, %v2250
  %v2657 = vpack.c.b16 %v2253, %v2252
  %v2658 = vpack.c.b16 %v2255, %v2254
  %v2659 = vpack.c.b16 %v2257, %v2256
  %v2660 = vpack.c.b16 %v2259, %v2258
  %v2661 = vpack.c.b16 %v2261, %v2260
  %v2662 = vpack.c.b16 %v2263, %v2262
  %v2663 = vpack.c.b16 %v2265, %v2264
  %v2664 = vpack.c.b16 %v2267, %v2266
  %v2665 = vpack.c.b16 %v2269, %v2268
  %v2666 = vpack.c.b16 %v2271, %v2270
  %v2667 = vpack.c.b16 %v2273, %v2272
  %v2668 = vpack.c.b16 %v2275, %v2274
  %v2669 = vpack.c.b16 %v2277, %v2276
  %v2670 = vpack.c.b16 %v2279, %v2278
  %v2671 = vpack.c.b16 %v2281, %v2280
  %v2672 = vpack.c.b16 %v2283, %v2282
  %v2673 = vpack.c.b16 %v2285, %v2284
  %v2674 = vpack.c.b16 %v2287, %v2286
  %v2675 = vpack.c.b16 %v2289, %v2288
  %v2676 = vpack.c.b16 %v2291, %v2290
  %v2677 = vpack.c.b16 %v2293, %v2292
  %v2678 = vpack.c.b16 %v2295, %v2294
  %v2679 = vpack.c.b16 %v2297, %v2296
  %v2680 = vpack.c.b16 %v2299, %v2298
  %v2681 = vpack.c.b16 %v2301, %v2300
  %v2682 = vpack.c.b16 %v2303, %v2302
  %v2683 = vpack.c.b16 %v2305, %v2304
  %v2684 = vpack.c.b16 %v2307, %v2306
  %v2685 = vpack.c.b16 %v2309, %v2308
  %v2686 = vpack.c.b16 %v2311, %v2310
  %v2687 = vpack.c.b16 %v2313, %v2312
  %v2688 = vpack.c.b16 %v2315, %v2314
  %v2689 = vpack.c.b16 %v2317, %v2316
  %v2690 = vpack.c.b16 %v2319, %v2318
  %v2691 = vpack.c.b16 %v2321, %v2320
  %v2692 = vpack.c.b16 %v2323, %v2322
  %v2693 = vpack.c.b16 %v2325, %v2324
  %v2694 = vpack.c.b16 %v2327, %v2326
  %v2695 = vpack.c.b16 %v2329, %v2328
  %v2696 = vpack.c.b16 %v2331, %v2330
  %v2697 = vpack.c.b16 %v2333, %v2332
  %v2698 = vpack.c.b16 %v2335, %v2334
  %v2699 = vpack.c.b16 %v2337, %v2336
  %v2700 = vpack.c.b16 %v2339, %v2338
  %v2701 = vpack.c.b16 %v2341, %v2340
  %v2702 = vpack.c.b16 %v2343, %v2342
  %v2703 = vpack.c.b16 %v2345, %v2344
  %v2704 = vpack.c.b16 %v2347, %v2346
  %v2705 = vpack.c.b16 %v2349, %v2348
  %v2706 = vpack.c.b16 %v2351, %v2350
  %v2707 = vpack.c.b16 %v2353, %v2352
  %v2708 = vpack.c.b16 %v2355, %v2354
  %v2709 = vpack.c.b16 %v2357, %v2356
  %v2710 = vpack.c.b16 %v2359, %v2358
  %v2711 = vpack.c.b16 %v2361, %v2360
  %v2712 = vpack.c.b16 %v2363, %v2362
  %v2713 = vpack.c.b16 %v2365, %v2364
  %v2714 = vpack.c.b16 %v2367, %v2366
  %v2715 = vpack.c.b16 %v2369, %v2368
  %v2716 = vpack.c.b16 %v2371, %v2370
  %v2717 = vpack.c.b16 %v2373, %v2372
  %v2718 = vpack.c.b16 %v2375, %v2374
  %v2719 = vpack.c.b16 %v2377, %v2376
  %v2720 = vpack.c.b16 %v2379, %v2378
  %v2721 = vpack.c.b16 %v2381, %v2380
  %v2722 = vpack.c.b16 %v2383, %v2382
  %v2723 = vpack.c.b16 %v2385, %v2384
  %v2724 = vpack.c.b16 %v2387, %v2386
  %v2725 = vpack.c.b16 %v2389, %v2388
  %v2726 = vpack.c.b16 %v2391, %v2390
  %v2727 = vpack.c.b16 %v2393, %v2392
  %v2728 = vpack.c.b16 %v2395, %v2394
  %v2729 = vpack.c.b16 %v2397, %v2396
  %v2730 = vpack.c.b16 %v2399, %v2398
  %v2731 = vpack.c.b16 %v2401, %v2400
  %v2732 = vpack.c.b16 %v2403, %v2402
  %v2733 = vpack.c.b16 %v2405, %v2404
  %v2734 = vpack.c.b16 %v2407, %v2406
  %v2735 = vpack.c.b16 %v2409, %v2408
  %v2736 = vpack.c.b16 %v2411, %v2410
  %v2737 = vpack.c.b16 %v2413, %v2412
  %v2738 = vpack.c.b16 %v2415, %v2414
  %v2739 = vpack.c.b16 %v2417, %v2416
  %v2740 = vpack.c.b16 %v2419, %v2418
  %v2741 = vpack.c.b16 %v2421, %v2420
  %v2742 = vpack.c.b16 %v2423, %v2422
  %v2743 = vpack.c.b16 %v2425, %v2424
  %v2744 = vpack.c.b16 %v2427, %v2426
  %v2745 = vpack.c.b16 %v2429, %v2428
  %v2746 = vpack.c.b16 %v2431, %v2430
  %v2747 = vpack.c.b16 %v2433, %v2432
  %v2748 = vpack.c.b16 %v2435, %v2434
  %v2749 = vpack.c.b16 %v2437, %v2436
  %v2750 = vpack.c.b16 %v2439, %v2438
  %v2751 = vpack.c.b16 %v2441, %v2440
  %v2752 = vpack.c.b16 %v2443, %v2442
  %v2753 = vpack.c.b16 %v2445, %v2444
  %v2754 = vpack.c.b16 %v2447, %v2446
  %v2755 = vpack.c.b16 %v2449, %v2448
  %v2756 = vpack.c.b16 %v2451, %v2450
  %v2757 = vpack.c.b16 %v2453, %v2452
  %v2758 = vpack.c.b16 %v2455, %v2454
  %v2759 = vpack.c.b16 %v2457, %v2456
  %v2760 = vpack.c.b16 %v2459, %v2458
  %v2761 = vpack.c.b16 %v2461, %v2460
  %v2762 = vpack.c.b16 %v2463, %v2462
  %v2763 = vpack.c.b16 %v2465, %v2464
  %v2764 = vpack.c.b16 %v2467, %v2466
  %v2765 = vpack.c.b16 %v2469, %v2468
  %v2766 = vpack.c.b16 %v2471, %v2470
  %v2767 = vpack.c.b16 %v2473, %v2472
  %v2768 = vpack.c.b16 %v2475, %v2474
  %v2769 = vpack.c.b16 %v2477, %v2476
  %v2770 = vpack.c.b16 %v2479, %v2478
  %v2771 = vpack.c.b16 %v2481, %v2480
  %v2772 = vpack.c.b16 %v2483, %v2482
  %v2773 = vpack.c.b16 %v2485, %v2484
  %v2774 = vpack.c.b16 %v2487, %v2486
  %v2775 = vpack.c.b16 %v2489, %v2488
  %v2776 = vpack.c.b16 %v2491, %v2490
  %v2777 = vpack.c.b16 %v2493, %v2492
  %v2778 = vpack.c.b16 %v2495, %v2494
  %v2779 = vpack.c.b16 %v2497, %v2496
  %v2780 = vpack.c.b16 %v2499, %v2498
  %v2781 = vpack.c.b16 %v2501, %v2500
  %v2782 = vpack.c.b16 %v2503, %v2502
  %v2783 = vpack.c.b16 %v2505, %v2504
  %v2784 = vpack.c.b16 %v2507, %v2506
  %v2785 = vpack.c.b16 %v2509, %v2508
  %v2786 = vpack.c.b16 %v2511, %v2510
  %v2787 = vpack.c.b16 %v2513, %v2512
  %v2788 = vpack.c.b16 %v2515, %v2514
  %v2789 = vpack.c.b16 %v2517, %v2516
  %v2790 = vpack.c.b16 %v2519, %v2518
  %v2791 = vpack.c.b16 %v2521, %v2520
  %v2792 = vpack.c.b16 %v2523, %v2522
  %v2793 = vpack.c.b16 %v2525, %v2524
  %v2794 = vpack.c.b16 %v2527, %v2526
  %v2795 = vpack.c.b16 %v2529, %v2528
  %v2796 = vpack.c.b16 %v2531, %v2530
  %v2797 = vpack.c.b16 %v2533, %v2532
  %v2798 = vpack.c.b16 %v2535, %v2534
  %v2799 = vpack.c.b16 %v2537, %v2536
  %v2800 = vpack.c.b16 %v2539, %v2538
  %v2801 = vpack.c.b16 %v2541, %v2540
  %v2802 = vpack.c.b16 %v2543, %v2542
  %v2803 = vpack.c.b16 %v2545, %v2544
  %v2804 = vpack.c.b16 %v2547, %v2546
  %v2805 = vpack.c.b16 %v2549, %v2548
  %v2806 = vpack.c.b16 %v2551, %v2550
  %v2807 = vpack.c.b16 %v2553, %v2552
  %v2808 = vpack.c.b16 %v2555, %v2554
  %v2809 = vpack.c.b16 %v2557, %v2556
  %v2810 = vpack.c.b16 %v2559, %v2558
  %v2811 = vpack.c.b16 %v2561, %v2560
  %v2812 = vpack.c.b16 %v2563, %v2562
  %v2813 = vpack.c.b16 %v2565, %v2564
  %v2814 = vpack.c.b16 %v2567, %v2566
  %v2815 = vpack.c.b16 %v2569, %v2568
  %v2816 = vpack.c.b16 %v2571, %v2570
  %v2817 = vpack.c.b16 %v2573, %v2572
  %v2818 = vpack.c.b16 %v2575, %v2574
  %v2819 = vpack.c.b16 %v2577, %v2576
  %v2820 = vpack.c.b16 %v2579, %v2578
  %v2821 = vpack.c.b16 %v2581, %v2580
  %v2822 = vpack.c.b16 %v2583, %v2582
  %v2823 = vpack.c.b16 %v2585, %v2584
  %v2824 = vpack.c.b16 %v2587, %v2586
  %v2825 = vpack.c.b16 %v2589, %v2588
  %v2826 = vpack.c.b16 %v2591, %v2590
  %v2827 = vpack.c.b16 %v2593, %v2592
  %v2828 = vpack.c.b16 %v2595, %v2594
  %v2829 = vpack.c.b16 %v2597, %v2596
  %v2830 = vpack.c.b16 %v2599, %v2598
  %v2831 = vpack.c.b16 %v2601, %v2600
  %v2832 = vpack.c.b16 %v2603, %v2602
  %v2833 = vpack.c.b16 %v2605, %v2604
  %v2834 = vpack.c.b16 %v2607, %v2606
  %v2835 = vpack.c.b16 %v2609, %v2608
  %v2836 = vpack.c.b16 %v2611, %v2610
  %v2837 = vpack.c.b16 %v2613, %v2612
  %v2838 = vpack.c.b16 %v2615, %v2614
  %v2839 = vpack.c.b16 %v2617, %v2616
  %v2840 = vpack.c.b16 %v2619, %v2618
  %v2841 = vpack.c.b16 %v2621, %v2620
  %v2842 = vpack.c.b16 %v2623, %v2622
  %v2843 = vpack.c.b16 %v2625, %v2624
  %v2844 = vpack.c.b16 %v2627, %v2626
  %v2845 = vpack.c.b16 %v2629, %v2628
  %3062 = vmatprep.subr.bf16.mxu0 0
  %3063 = vmatpush1.bf16.msra.mxu0 %v2630
  %3064 = vmatprep.subr.bf16.mxu0 0
  %3065 = vmatpush1.bf16.msra.mxu0 %v2631
  %3066 = vmatprep.subr.bf16.mxu0 0
  %3067 = vmatpush1.bf16.msra.mxu0 %v2632
  %3068 = vmatprep.subr.bf16.mxu0 0
  %3069 = vmatpush1.bf16.msra.mxu0 %v2633
  %3070 = vmatprep.subr.bf16.mxu0 0
  %3071 = vmatpush1.bf16.msra.mxu0 %v2634
  %3072 = vmatprep.subr.bf16.mxu0 0
  %3073 = vmatpush1.bf16.msra.mxu0 %v2635
  %3074 = vmatprep.subr.bf16.mxu0 0
  %3075 = vmatpush1.bf16.msra.mxu0 %v2636
  %3076 = vmatprep.subr.bf16.mxu0 0
  %3077 = vmatpush1.bf16.msra.mxu0 %v2637
  %3078 = vmatprep.subr.bf16.mxu0 0
  %3079 = vmatpush1.bf16.msra.mxu0 %v2638
  %3080 = vmatprep.subr.bf16.mxu0 0
  %3081 = vmatpush1.bf16.msra.mxu0 %v2639
  %3082 = vmatprep.subr.bf16.mxu0 0
  %3083 = vmatpush1.bf16.msra.mxu0 %v2640
  %3084 = vmatprep.subr.bf16.mxu0 0
  %3085 = vmatpush1.bf16.msra.mxu0 %v2641
  %3086 = vmatprep.subr.bf16.mxu0 0
  %3087 = vmatpush1.bf16.msra.mxu0 %v2642
  %3088 = vmatprep.subr.bf16.mxu0 0
  %3089 = vmatpush1.bf16.msra.mxu0 %v2643
  %3090 = vmatprep.subr.bf16.mxu0 0
  %3091 = vmatpush1.bf16.msra.mxu0 %v2644
  %3092 = vmatprep.subr.bf16.mxu0 0
  %3093 = vmatpush1.bf16.msra.mxu0 %v2645
  %3094 = vmatprep.mubr.bf16.mxu0 %v1335
  %3095 = vmatmul.mubr.bf16.gmra.mrb[0].mxu0 %v1334
  %v3096 = vpop.f32.mrb[0].mxu0
  %v3097 = vadd.f32 %v676, %v3096
  %v3098 = vpop.f32.mrb[0].mxu0
  %v3099 = vpop.f32.mrb[0].mxu0
  %v3100 = vadd.f32 %v676, %v3099
  %v3101 = vpop.f32.mrb[0].mxu0
  %3102 = vmatprep.mubr.bf16.mxu0 %v1362
  %3103 = vmatmul.mubr.bf16.gmra.mrb[0].mxu0 %v1361
  %v3104 = vpop.f32.mrb[0].mxu0
  %v3105 = vadd.f32 %v676, %v3104
  %v3106 = vpop.f32.mrb[0].mxu0
  %v3107 = vpop.f32.mrb[0].mxu0
  %v3108 = vadd.f32 %v676, %v3107
  %v3109 = vpop.f32.mrb[0].mxu0
  %3110 = vmatprep.mubr.bf16.mxu0 %v1389
  %3111 = vmatmul.mubr.bf16.gmra.mrb[0].mxu0 %v1388
  %v3112 = vpop.f32.mrb[0].mxu0
  %v3113 = vadd.f32 %v676, %v3112
  %v3114 = vpop.f32.mrb[0].mxu0
  %v3115 = vpop.f32.mrb[0].mxu0
  %v3116 = vadd.f32 %v676, %v3115
  %v3117 = vpop.f32.mrb[0].mxu0
  %3118 = vmatprep.mubr.bf16.mxu0 %v1416
  %3119 = vmatmul.mubr.bf16.gmra.mrb[0].mxu0 %v1415
  %v3120 = vpop.f32.mrb[0].mxu0
  %v3121 = vadd.f32 %v676, %v3120
  %v3122 = vpop.f32.mrb[0].mxu0
  %v3123 = vpop.f32.mrb[0].mxu0
  %v3124 = vadd.f32 %v676, %v3123
  %v3125 = vpop.f32.mrb[0].mxu0
  %3126 = vmatprep.mubr.bf16.mxu0 %v1443
  %3127 = vmatmul.mubr.bf16.gmra.mrb[0].mxu0 %v1442
  %v3128 = vpop.f32.mrb[0].mxu0
  %v3129 = vadd.f32 %v676, %v3128
  %v3130 = vpop.f32.mrb[0].mxu0
  %v3131 = vpop.f32.mrb[0].mxu0
  %v3132 = vadd.f32 %v676, %v3131
  %v3133 = vpop.f32.mrb[0].mxu0
  %3134 = vmatprep.mubr.bf16.mxu0 %v1470
  %3135 = vmatmul.mubr.bf16.gmra.mrb[0].mxu0 %v1469
  %v3136 = vpop.f32.mrb[0].mxu0
  %v3137 = vadd.f32 %v676, %v3136
  %v3138 = vpop.f32.mrb[0].mxu0
  %v3139 = vpop.f32.mrb[0].mxu0
  %v3140 = vadd.f32 %v676, %v3139
  %v3141 = vpop.f32.mrb[0].mxu0
  %3142 = vmatprep.mubr.bf16.mxu0 %v1497
  %3143 = vmatmul.mubr.bf16.gmra.mrb[0].mxu0 %v1496
  %v3144 = vpop.f32.mrb[0].mxu0
  %v3145 = vadd.f32 %v676, %v3144
  %v3146 = vpop.f32.mrb[0].mxu0
  %v3147 = vpop.f32.mrb[0].mxu0
  %v3148 = vadd.f32 %v676, %v3147
  %v3149 = vpop.f32.mrb[0].mxu0
  %3150 = vmatprep.mubr.bf16.mxu0 %v1524
  %3151 = vmatmul.mubr.bf16.gmra.mrb[0].mxu0 %v1523
  %v3152 = vpop.f32.mrb[0].mxu0
  %v3153 = vadd.f32 %v676, %v3152
  %v3154 = vpop.f32.mrb[0].mxu0
  %v3155 = vpop.f32.mrb[0].mxu0
  %v3156 = vadd.f32 %v676, %v3155
  %v3157 = vpop.f32.mrb[0].mxu0
  %3158 = vdwg.mxu0
  %3159 = vmatprep.subr.bf16.mxu0 0
  %3160 = vmatpush1.bf16.msra.mxu0 %v2646
  %3161 = vmatprep.subr.bf16.mxu0 0
  %3162 = vmatpush1.bf16.msra.mxu0 %v2647
  %3163 = vmatprep.subr.bf16.mxu0 0
  %3164 = vmatpush1.bf16.msra.mxu0 %v2648
  %3165 = vmatprep.subr.bf16.mxu0 0
  %3166 = vmatpush1.bf16.msra.mxu0 %v2649
  %3167 = vmatprep.subr.bf16.mxu0 0
  %3168 = vmatpush1.bf16.msra.mxu0 %v2650
  %3169 = vmatprep.subr.bf16.mxu0 0
  %3170 = vmatpush1.bf16.msra.mxu0 %v2651
  %3171 = vmatprep.subr.bf16.mxu0 0
  %3172 = vmatpush1.bf16.msra.mxu0 %v2652
  %3173 = vmatprep.subr.bf16.mxu0 0
  %3174 = vmatpush1.bf16.msra.mxu0 %v2653
  %3175 = vmatprep.subr.bf16.mxu0 0
  %3176 = vmatpush1.bf16.msra.mxu0 %v2654
  %3177 = vmatprep.subr.bf16.mxu0 0
  %3178 = vmatpush1.bf16.msra.mxu0 %v2655
  %3179 = vmatprep.subr.bf16.mxu0 0
  %3180 = vmatpush1.bf16.msra.mxu0 %v2656
  %3181 = vmatprep.subr.bf16.mxu0 0
  %3182 = vmatpush1.bf16.msra.mxu0 %v2657
  %3183 = vmatprep.subr.bf16.mxu0 0
  %3184 = vmatpush1.bf16.msra.mxu0 %v2658
  %3185 = vmatprep.subr.bf16.mxu0 0
  %3186 = vmatpush1.bf16.msra.mxu0 %v2659
  %3187 = vmatprep.subr.bf16.mxu0 0
  %3188 = vmatpush1.bf16.msra.mxu0 %v2660
  %3189 = vmatprep.subr.bf16.mxu0 0
  %3190 = vmatpush1.bf16.msra.mxu0 %v2661
  %3191 = vmatprep.mubr.bf16.mxu0 %v1337
  %3192 = vmatmul.mubr.bf16.gmra.mrb[0].mxu0 %v1336
  %v3193 = vpop.f32.mrb[0].mxu0
  %v3194 = vadd.f32 %v3097, %v3193
  %v3195 = vpop.f32.mrb[0].mxu0
  %v3196 = vpop.f32.mrb[0].mxu0
  %v3197 = vadd.f32 %v3100, %v3196
  %v3198 = vpop.f32.mrb[0].mxu0
  %3199 = vmatprep.mubr.bf16.mxu0 %v1364
  %3200 = vmatmul.mubr.bf16.gmra.mrb[0].mxu0 %v1363
  %v3201 = vpop.f32.mrb[0].mxu0
  %v3202 = vadd.f32 %v3105, %v3201
  %v3203 = vpop.f32.mrb[0].mxu0
  %v3204 = vpop.f32.mrb[0].mxu0
  %v3205 = vadd.f32 %v3108, %v3204
  %v3206 = vpop.f32.mrb[0].mxu0
  %3207 = vmatprep.mubr.bf16.mxu0 %v1391
  %3208 = vmatmul.mubr.bf16.gmra.mrb[0].mxu0 %v1390
  %v3209 = vpop.f32.mrb[0].mxu0
  %v3210 = vadd.f32 %v3113, %v3209
  %v3211 = vpop.f32.mrb[0].mxu0
  %v3212 = vpop.f32.mrb[0].mxu0
  %v3213 = vadd.f32 %v3116, %v3212
  %v3214 = vpop.f32.mrb[0].mxu0
  %3215 = vmatprep.mubr.bf16.mxu0 %v1418
  %3216 = vmatmul.mubr.bf16.gmra.mrb[0].mxu0 %v1417
  %v3217 = vpop.f32.mrb[0].mxu0
  %v3218 = vadd.f32 %v3121, %v3217
  %v3219 = vpop.f32.mrb[0].mxu0
  %v3220 = vpop.f32.mrb[0].mxu0
  %v3221 = vadd.f32 %v3124, %v3220
  %v3222 = vpop.f32.mrb[0].mxu0
  %3223 = vmatprep.mubr.bf16.mxu0 %v1445
  %3224 = vmatmul.mubr.bf16.gmra.mrb[0].mxu0 %v1444
  %v3225 = vpop.f32.mrb[0].mxu0
  %v3226 = vadd.f32 %v3129, %v3225
  %v3227 = vpop.f32.mrb[0].mxu0
  %v3228 = vpop.f32.mrb[0].mxu0
  %v3229 = vadd.f32 %v3132, %v3228
  %v3230 = vpop.f32.mrb[0].mxu0
  %3231 = vmatprep.mubr.bf16.mxu0 %v1472
  %3232 = vmatmul.mubr.bf16.gmra.mrb[0].mxu0 %v1471
  %v3233 = vpop.f32.mrb[0].mxu0
  %v3234 = vadd.f32 %v3137, %v3233
  %v3235 = vpop.f32.mrb[0].mxu0
  %v3236 = vpop.f32.mrb[0].mxu0
  %v3237 = vadd.f32 %v3140, %v3236
  %v3238 = vpop.f32.mrb[0].mxu0
  %3239 = vmatprep.mubr.bf16.mxu0 %v1499
  %3240 = vmatmul.mubr.bf16.gmra.mrb[0].mxu0 %v1498
  %v3241 = vpop.f32.mrb[0].mxu0
  %v3242 = vadd.f32 %v3145, %v3241
  %v3243 = vpop.f32.mrb[0].mxu0
  %v3244 = vpop.f32.mrb[0].mxu0
  %v3245 = vadd.f32 %v3148, %v3244
  %v3246 = vpop.f32.mrb[0].mxu0
  %3247 = vmatprep.mubr.bf16.mxu0 %v1526
  %3248 = vmatmul.mubr.bf16.gmra.mrb[0].mxu0 %v1525
  %v3249 = vpop.f32.mrb[0].mxu0
  %v3250 = vadd.f32 %v3153, %v3249
  %v3251 = vpop.f32.mrb[0].mxu0
  %v3252 = vpop.f32.mrb[0].mxu0
  %v3253 = vadd.f32 %v3156, %v3252
  %v3254 = vpop.f32.mrb[0].mxu0
  %3255 = vdwg.mxu0
  %3256 = vmatprep.subr.bf16.mxu0 0
  %3257 = vmatpush1.bf16.msra.mxu0 %v2662
  %3258 = vmatprep.subr.bf16.mxu0 0
  %3259 = vmatpush1.bf16.msra.mxu0 %v2663
  %3260 = vmatprep.subr.bf16.mxu0 0
  %3261 = vmatpush1.bf16.msra.mxu0 %v2664
  %3262 = vmatprep.subr.bf16.mxu0 0
  %3263 = vmatpush1.bf16.msra.mxu0 %v2665
  %3264 = vmatprep.subr.bf16.mxu0 0
  %3265 = vmatpush1.bf16.msra.mxu0 %v2666
  %3266 = vmatprep.subr.bf16.mxu0 0
  %3267 = vmatpush1.bf16.msra.mxu0 %v2667
  %3268 = vmatprep.subr.bf16.mxu0 0
  %3269 = vmatpush1.bf16.msra.mxu0 %v2668
  %3270 = vmatprep.subr.bf16.mxu0 0
  %3271 = vmatpush1.bf16.msra.mxu0 %v2669
  %3272 = vmatprep.subr.bf16.mxu0 0
  %3273 = vmatpush1.bf16.msra.mxu0 %v2670
  %3274 = vmatprep.subr.bf16.mxu0 0
  %3275 = vmatpush1.bf16.msra.mxu0 %v2671
  %3276 = vmatprep.subr.bf16.mxu0 0
  %3277 = vmatpush1.bf16.msra.mxu0 %v2672
  %3278 = vmatprep.subr.bf16.mxu0 0
  %3279 = vmatpush1.bf16.msra.mxu0 %v2673
  %3280 = vmatprep.subr.bf16.mxu0 0
  %3281 = vmatpush1.bf16.msra.mxu0 %v2674
  %3282 = vmatprep.subr.bf16.mxu0 0
  %3283 = vmatpush1.bf16.msra.mxu0 %v2675
  %3284 = vmatprep.subr.bf16.mxu0 0
  %3285 = vmatpush1.bf16.msra.mxu0 %v2676
  %3286 = vmatprep.subr.bf16.mxu0 0
  %3287 = vmatpush1.bf16.msra.mxu0 %v2677
  %3288 = vmatprep.mubr.bf16.mxu0 %v1339
  %3289 = vmatmul.mubr.bf16.gmra.mrb[0].mxu0 %v1338
  %v3290 = vpop.f32.mrb[0].mxu0
  %v3291 = vadd.f32 %v3194, %v3290
  %v3292 = vpop.f32.mrb[0].mxu0
  %v3293 = vpop.f32.mrb[0].mxu0
  %v3294 = vadd.f32 %v3197, %v3293
  %v3295 = vpop.f32.mrb[0].mxu0
  %3296 = vmatprep.mubr.bf16.mxu0 %v1366
  %3297 = vmatmul.mubr.bf16.gmra.mrb[0].mxu0 %v1365
  %v3298 = vpop.f32.mrb[0].mxu0
  %v3299 = vadd.f32 %v3202, %v3298
  %v3300 = vpop.f32.mrb[0].mxu0
  %v3301 = vpop.f32.mrb[0].mxu0
  %v3302 = vadd.f32 %v3205, %v3301
  %v3303 = vpop.f32.mrb[0].mxu0
  %3304 = vmatprep.mubr.bf16.mxu0 %v1393
  %3305 = vmatmul.mubr.bf16.gmra.mrb[0].mxu0 %v1392
  %v3306 = vpop.f32.mrb[0].mxu0
  %v3307 = vadd.f32 %v3210, %v3306
  %v3308 = vpop.f32.mrb[0].mxu0
  %v3309 = vpop.f32.mrb[0].mxu0
  %v3310 = vadd.f32 %v3213, %v3309
  %v3311 = vpop.f32.mrb[0].mxu0
  %3312 = vmatprep.mubr.bf16.mxu0 %v1420
  %3313 = vmatmul.mubr.bf16.gmra.mrb[0].mxu0 %v1419
  %v3314 = vpop.f32.mrb[0].mxu0
  %v3315 = vadd.f32 %v3218, %v3314
  %v3316 = vpop.f32.mrb[0].mxu0
  %v3317 = vpop.f32.mrb[0].mxu0
  %v3318 = vadd.f32 %v3221, %v3317
  %v3319 = vpop.f32.mrb[0].mxu0
  %3320 = vmatprep.mubr.bf16.mxu0 %v1447
  %3321 = vmatmul.mubr.bf16.gmra.mrb[0].mxu0 %v1446
  %v3322 = vpop.f32.mrb[0].mxu0
  %v3323 = vadd.f32 %v3226, %v3322
  %v3324 = vpop.f32.mrb[0].mxu0
  %v3325 = vpop.f32.mrb[0].mxu0
  %v3326 = vadd.f32 %v3229, %v3325
  %v3327 = vpop.f32.mrb[0].mxu0
  %3328 = vmatprep.mubr.bf16.mxu0 %v1474
  %3329 = vmatmul.mubr.bf16.gmra.mrb[0].mxu0 %v1473
  %v3330 = vpop.f32.mrb[0].mxu0
  %v3331 = vadd.f32 %v3234, %v3330
  %v3332 = vpop.f32.mrb[0].mxu0
  %v3333 = vpop.f32.mrb[0].mxu0
  %v3334 = vadd.f32 %v3237, %v3333
  %v3335 = vpop.f32.mrb[0].mxu0
  %3336 = vmatprep.mubr.bf16.mxu0 %v1501
  %3337 = vmatmul.mubr.bf16.gmra.mrb[0].mxu0 %v1500
  %v3338 = vpop.f32.mrb[0].mxu0
  %v3339 = vadd.f32 %v3242, %v3338
  %v3340 = vpop.f32.mrb[0].mxu0
  %v3341 = vpop.f32.mrb[0].mxu0
  %v3342 = vadd.f32 %v3245, %v3341
  %v3343 = vpop.f32.mrb[0].mxu0
  %3344 = vmatprep.mubr.bf16.mxu0 %v1528
  %3345 = vmatmul.mubr.bf16.gmra.mrb[0].mxu0 %v1527
  %v3346 = vpop.f32.mrb[0].mxu0
  %v3347 = vadd.f32 %v3250, %v3346
  %v3348 = vpop.f32.mrb[0].mxu0
  %v3349 = vpop.f32.mrb[0].mxu0
  %v3350 = vadd.f32 %v3253, %v3349
  %v3351 = vpop.f32.mrb[0].mxu0
  %3352 = vdwg.mxu0
  %3353 = vmatprep.subr.bf16.mxu0 0
  %3354 = vmatpush1.bf16.msra.mxu0 %v2678
  %3355 = vmatprep.subr.bf16.mxu0 0
  %3356 = vmatpush1.bf16.msra.mxu0 %v2679
  %3357 = vmatprep.subr.bf16.mxu0 0
  %3358 = vmatpush1.bf16.msra.mxu0 %v2680
  %3359 = vmatprep.subr.bf16.mxu0 0
  %3360 = vmatpush1.bf16.msra.mxu0 %v2681
  %3361 = vmatprep.subr.bf16.mxu0 0
  %3362 = vmatpush1.bf16.msra.mxu0 %v2682
  %3363 = vmatprep.subr.bf16.mxu0 0
  %3364 = vmatpush1.bf16.msra.mxu0 %v2683
  %3365 = vmatprep.subr.bf16.mxu0 0
  %3366 = vmatpush1.bf16.msra.mxu0 %v2684
  %3367 = vmatprep.subr.bf16.mxu0 0
  %3368 = vmatpush1.bf16.msra.mxu0 %v2685
  %3369 = vmatprep.subr.bf16.mxu0 0
  %3370 = vmatpush1.bf16.msra.mxu0 %v2686
  %3371 = vmatprep.subr.bf16.mxu0 0
  %3372 = vmatpush1.bf16.msra.mxu0 %v2687
  %3373 = vmatprep.subr.bf16.mxu0 0
  %3374 = vmatpush1.bf16.msra.mxu0 %v2688
  %3375 = vmatprep.subr.bf16.mxu0 0
  %3376 = vmatpush1.bf16.msra.mxu0 %v2689
  %3377 = vmatprep.subr.bf16.mxu0 0
  %3378 = vmatpush1.bf16.msra.mxu0 %v2690
  %3379 = vmatprep.subr.bf16.mxu0 0
  %3380 = vmatpush1.bf16.msra.mxu0 %v2691
  %3381 = vmatprep.subr.bf16.mxu0 0
  %3382 = vmatpush1.bf16.msra.mxu0 %v2692
  %3383 = vmatprep.subr.bf16.mxu0 0
  %3384 = vmatpush1.bf16.msra.mxu0 %v2693
  %3385 = vmatprep.mubr.bf16.mxu0 %v1341
  %3386 = vmatmul.mubr.bf16.gmra.mrb[0].mxu0 %v1340
  %v3387 = vpop.f32.mrb[0].mxu0
  %v3388 = vadd.f32 %v3291, %v3387
  %v3389 = vpop.f32.mrb[0].mxu0
  %v3390 = vpop.f32.mrb[0].mxu0
  %v3391 = vadd.f32 %v3294, %v3390
  %v3392 = vpop.f32.mrb[0].mxu0
  %3393 = vmatprep.mubr.bf16.mxu0 %v1368
  %3394 = vmatmul.mubr.bf16.gmra.mrb[0].mxu0 %v1367
  %v3395 = vpop.f32.mrb[0].mxu0
  %v3396 = vadd.f32 %v3299, %v3395
  %v3397 = vpop.f32.mrb[0].mxu0
  %v3398 = vpop.f32.mrb[0].mxu0
  %v3399 = vadd.f32 %v3302, %v3398
  %v3400 = vpop.f32.mrb[0].mxu0
  %3401 = vmatprep.mubr.bf16.mxu0 %v1395
  %3402 = vmatmul.mubr.bf16.gmra.mrb[0].mxu0 %v1394
  %v3403 = vpop.f32.mrb[0].mxu0
  %v3404 = vadd.f32 %v3307, %v3403
  %v3405 = vpop.f32.mrb[0].mxu0
  %v3406 = vpop.f32.mrb[0].mxu0
  %v3407 = vadd.f32 %v3310, %v3406
  %v3408 = vpop.f32.mrb[0].mxu0
  %3409 = vmatprep.mubr.bf16.mxu0 %v1422
  %3410 = vmatmul.mubr.bf16.gmra.mrb[0].mxu0 %v1421
  %v3411 = vpop.f32.mrb[0].mxu0
  %v3412 = vadd.f32 %v3315, %v3411
  %v3413 = vpop.f32.mrb[0].mxu0
  %v3414 = vpop.f32.mrb[0].mxu0
  %v3415 = vadd.f32 %v3318, %v3414
  %v3416 = vpop.f32.mrb[0].mxu0
  %3417 = vmatprep.mubr.bf16.mxu0 %v1449
  %3418 = vmatmul.mubr.bf16.gmra.mrb[0].mxu0 %v1448
  %v3419 = vpop.f32.mrb[0].mxu0
  %v3420 = vadd.f32 %v3323, %v3419
  %v3421 = vpop.f32.mrb[0].mxu0
  %v3422 = vpop.f32.mrb[0].mxu0
  %v3423 = vadd.f32 %v3326, %v3422
  %v3424 = vpop.f32.mrb[0].mxu0
  %3425 = vmatprep.mubr.bf16.mxu0 %v1476
  %3426 = vmatmul.mubr.bf16.gmra.mrb[0].mxu0 %v1475
  %v3427 = vpop.f32.mrb[0].mxu0
  %v3428 = vadd.f32 %v3331, %v3427
  %v3429 = vpop.f32.mrb[0].mxu0
  %v3430 = vpop.f32.mrb[0].mxu0
  %v3431 = vadd.f32 %v3334, %v3430
  %v3432 = vpop.f32.mrb[0].mxu0
  %3433 = vmatprep.mubr.bf16.mxu0 %v1503
  %3434 = vmatmul.mubr.bf16.gmra.mrb[0].mxu0 %v1502
  %v3435 = vpop.f32.mrb[0].mxu0
  %v3436 = vadd.f32 %v3339, %v3435
  %v3437 = vpop.f32.mrb[0].mxu0
  %v3438 = vpop.f32.mrb[0].mxu0
  %v3439 = vadd.f32 %v3342, %v3438
  %v3440 = vpop.f32.mrb[0].mxu0
  %3441 = vmatprep.mubr.bf16.mxu0 %v1530
  %3442 = vmatmul.mubr.bf16.gmra.mrb[0].mxu0 %v1529
  %v3443 = vpop.f32.mrb[0].mxu0
  %v3444 = vadd.f32 %v3347, %v3443
  %v3445 = vpop.f32.mrb[0].mxu0
  %v3446 = vpop.f32.mrb[0].mxu0
  %v3447 = vadd.f32 %v3350, %v3446
  %v3448 = vpop.f32.mrb[0].mxu0
  %3449 = vdwg.mxu0
  %3450 = vmatprep.subr.bf16.mxu0 0
  %3451 = vmatpush1.bf16.msra.mxu0 %v2694
  %3452 = vmatprep.subr.bf16.mxu0 0
  %3453 = vmatpush1.bf16.msra.mxu0 %v2695
  %3454 = vmatprep.subr.bf16.mxu0 0
  %3455 = vmatpush1.bf16.msra.mxu0 %v2696
  %3456 = vmatprep.subr.bf16.mxu0 0
  %3457 = vmatpush1.bf16.msra.mxu0 %v2697
  %3458 = vmatprep.subr.bf16.mxu0 0
  %3459 = vmatpush1.bf16.msra.mxu0 %v2698
  %3460 = vmatprep.subr.bf16.mxu0 0
  %3461 = vmatpush1.bf16.msra.mxu0 %v2699
  %3462 = vmatprep.subr.bf16.mxu0 0
  %3463 = vmatpush1.bf16.msra.mxu0 %v2700
  %3464 = vmatprep.subr.bf16.mxu0 0
  %3465 = vmatpush1.bf16.msra.mxu0 %v2701
  %3466 = vmatprep.subr.bf16.mxu0 0
  %3467 = vmatpush1.bf16.msra.mxu0 %v2702
  %3468 = vmatprep.subr.bf16.mxu0 0
  %3469 = vmatpush1.bf16.msra.mxu0 %v2703
  %3470 = vmatprep.subr.bf16.mxu0 0
  %3471 = vmatpush1.bf16.msra.mxu0 %v2704
  %3472 = vmatprep.subr.bf16.mxu0 0
  %3473 = vmatpush1.bf16.msra.mxu0 %v2705
  %3474 = vmatprep.subr.bf16.mxu0 0
  %3475 = vmatpush1.bf16.msra.mxu0 %v2706
  %3476 = vmatprep.subr.bf16.mxu0 0
  %3477 = vmatpush1.bf16.msra.mxu0 %v2707
  %3478 = vmatprep.subr.bf16.mxu0 0
  %3479 = vmatpush1.bf16.msra.mxu0 %v2708
  %3480 = vmatprep.subr.bf16.mxu0 0
  %3481 = vmatpush1.bf16.msra.mxu0 %v2709
  %3482 = vmatprep.mubr.bf16.mxu0 %v1343
  %3483 = vmatmul.mubr.bf16.gmra.mrb[0].mxu0 %v1342
  %v3484 = vpop.f32.mrb[0].mxu0
  %v3485 = vadd.f32 %v3388, %v3484
  %v3486 = vpop.f32.mrb[0].mxu0
  %v3487 = vpop.f32.mrb[0].mxu0
  %v3488 = vadd.f32 %v3391, %v3487
  %v3489 = vpop.f32.mrb[0].mxu0
  %3490 = vmatprep.mubr.bf16.mxu0 %v1370
  %3491 = vmatmul.mubr.bf16.gmra.mrb[0].mxu0 %v1369
  %v3492 = vpop.f32.mrb[0].mxu0
  %v3493 = vadd.f32 %v3396, %v3492
  %v3494 = vpop.f32.mrb[0].mxu0
  %v3495 = vpop.f32.mrb[0].mxu0
  %v3496 = vadd.f32 %v3399, %v3495
  %v3497 = vpop.f32.mrb[0].mxu0
  %3498 = vmatprep.mubr.bf16.mxu0 %v1397
  %3499 = vmatmul.mubr.bf16.gmra.mrb[0].mxu0 %v1396
  %v3500 = vpop.f32.mrb[0].mxu0
  %v3501 = vadd.f32 %v3404, %v3500
  %v3502 = vpop.f32.mrb[0].mxu0
  %v3503 = vpop.f32.mrb[0].mxu0
  %v3504 = vadd.f32 %v3407, %v3503
  %v3505 = vpop.f32.mrb[0].mxu0
  %3506 = vmatprep.mubr.bf16.mxu0 %v1424
  %3507 = vmatmul.mubr.bf16.gmra.mrb[0].mxu0 %v1423
  %v3508 = vpop.f32.mrb[0].mxu0
  %v3509 = vadd.f32 %v3412, %v3508
  %v3510 = vpop.f32.mrb[0].mxu0
  %v3511 = vpop.f32.mrb[0].mxu0
  %v3512 = vadd.f32 %v3415, %v3511
  %v3513 = vpop.f32.mrb[0].mxu0
  %3514 = vmatprep.mubr.bf16.mxu0 %v1451
  %3515 = vmatmul.mubr.bf16.gmra.mrb[0].mxu0 %v1450
  %v3516 = vpop.f32.mrb[0].mxu0
  %v3517 = vadd.f32 %v3420, %v3516
  %v3518 = vpop.f32.mrb[0].mxu0
  %v3519 = vpop.f32.mrb[0].mxu0
  %v3520 = vadd.f32 %v3423, %v3519
  %v3521 = vpop.f32.mrb[0].mxu0
  %3522 = vmatprep.mubr.bf16.mxu0 %v1478
  %3523 = vmatmul.mubr.bf16.gmra.mrb[0].mxu0 %v1477
  %v3524 = vpop.f32.mrb[0].mxu0
  %v3525 = vadd.f32 %v3428, %v3524
  %v3526 = vpop.f32.mrb[0].mxu0
  %v3527 = vpop.f32.mrb[0].mxu0
  %v3528 = vadd.f32 %v3431, %v3527
  %v3529 = vpop.f32.mrb[0].mxu0
  %3530 = vmatprep.mubr.bf16.mxu0 %v1505
  %3531 = vmatmul.mubr.bf16.gmra.mrb[0].mxu0 %v1504
  %v3532 = vpop.f32.mrb[0].mxu0
  %v3533 = vadd.f32 %v3436, %v3532
  %v3534 = vpop.f32.mrb[0].mxu0
  %v3535 = vpop.f32.mrb[0].mxu0
  %v3536 = vadd.f32 %v3439, %v3535
  %v3537 = vpop.f32.mrb[0].mxu0
  %3538 = vmatprep.mubr.bf16.mxu0 %v1532
  %3539 = vmatmul.mubr.bf16.gmra.mrb[0].mxu0 %v1531
  %v3540 = vpop.f32.mrb[0].mxu0
  %v3541 = vadd.f32 %v3444, %v3540
  %v3542 = vpop.f32.mrb[0].mxu0
  %v3543 = vpop.f32.mrb[0].mxu0
  %v3544 = vadd.f32 %v3447, %v3543
  %v3545 = vpop.f32.mrb[0].mxu0
  %3546 = vdwg.mxu0
  %3547 = vmatprep.subr.bf16.mxu0 0
  %3548 = vmatpush1.bf16.msra.mxu0 %v2710
  %3549 = vmatprep.subr.bf16.mxu0 0
  %3550 = vmatpush1.bf16.msra.mxu0 %v2711
  %3551 = vmatprep.subr.bf16.mxu0 0
  %3552 = vmatpush1.bf16.msra.mxu0 %v2712
  %3553 = vmatprep.subr.bf16.mxu0 0
  %3554 = vmatpush1.bf16.msra.mxu0 %v2713
  %3555 = vmatprep.subr.bf16.mxu0 0
  %3556 = vmatpush1.bf16.msra.mxu0 %v2714
  %3557 = vmatprep.subr.bf16.mxu0 0
  %3558 = vmatpush1.bf16.msra.mxu0 %v2715
  %3559 = vmatprep.subr.bf16.mxu0 0
  %3560 = vmatpush1.bf16.msra.mxu0 %v2716
  %3561 = vmatprep.subr.bf16.mxu0 0
  %3562 = vmatpush1.bf16.msra.mxu0 %v2717
  %3563 = vmatprep.subr.bf16.mxu0 0
  %3564 = vmatpush1.bf16.msra.mxu0 %v2718
  %3565 = vmatprep.subr.bf16.mxu0 0
  %3566 = vmatpush1.bf16.msra.mxu0 %v2719
  %3567 = vmatprep.subr.bf16.mxu0 0
  %3568 = vmatpush1.bf16.msra.mxu0 %v2720
  %3569 = vmatprep.subr.bf16.mxu0 0
  %3570 = vmatpush1.bf16.msra.mxu0 %v2721
  %3571 = vmatprep.subr.bf16.mxu0 0
  %3572 = vmatpush1.bf16.msra.mxu0 %v2722
  %3573 = vmatprep.subr.bf16.mxu0 0
  %3574 = vmatpush1.bf16.msra.mxu0 %v2723
  %3575 = vmatprep.subr.bf16.mxu0 0
  %3576 = vmatpush1.bf16.msra.mxu0 %v2724
  %3577 = vmatprep.subr.bf16.mxu0 0
  %3578 = vmatpush1.bf16.msra.mxu0 %v2725
  %3579 = vmatprep.mubr.bf16.mxu0 %v1345
  %3580 = vmatmul.mubr.bf16.gmra.mrb[0].mxu0 %v1344
  %v3581 = vpop.f32.mrb[0].mxu0
  %v3582 = vadd.f32 %v3485, %v3581
  %v3583 = vpop.f32.mrb[0].mxu0
  %v3584 = vpop.f32.mrb[0].mxu0
  %v3585 = vadd.f32 %v3488, %v3584
  %v3586 = vpop.f32.mrb[0].mxu0
  %3587 = vmatprep.mubr.bf16.mxu0 %v1372
  %3588 = vmatmul.mubr.bf16.gmra.mrb[0].mxu0 %v1371
  %v3589 = vpop.f32.mrb[0].mxu0
  %v3590 = vadd.f32 %v3493, %v3589
  %v3591 = vpop.f32.mrb[0].mxu0
  %v3592 = vpop.f32.mrb[0].mxu0
  %v3593 = vadd.f32 %v3496, %v3592
  %v3594 = vpop.f32.mrb[0].mxu0
  %3595 = vmatprep.mubr.bf16.mxu0 %v1399
  %3596 = vmatmul.mubr.bf16.gmra.mrb[0].mxu0 %v1398
  %v3597 = vpop.f32.mrb[0].mxu0
  %v3598 = vadd.f32 %v3501, %v3597
  %v3599 = vpop.f32.mrb[0].mxu0
  %v3600 = vpop.f32.mrb[0].mxu0
  %v3601 = vadd.f32 %v3504, %v3600
  %v3602 = vpop.f32.mrb[0].mxu0
  %3603 = vmatprep.mubr.bf16.mxu0 %v1426
  %3604 = vmatmul.mubr.bf16.gmra.mrb[0].mxu0 %v1425
  %v3605 = vpop.f32.mrb[0].mxu0
  %v3606 = vadd.f32 %v3509, %v3605
  %v3607 = vpop.f32.mrb[0].mxu0
  %v3608 = vpop.f32.mrb[0].mxu0
  %v3609 = vadd.f32 %v3512, %v3608
  %v3610 = vpop.f32.mrb[0].mxu0
  %3611 = vmatprep.mubr.bf16.mxu0 %v1453
  %3612 = vmatmul.mubr.bf16.gmra.mrb[0].mxu0 %v1452
  %v3613 = vpop.f32.mrb[0].mxu0
  %v3614 = vadd.f32 %v3517, %v3613
  %v3615 = vpop.f32.mrb[0].mxu0
  %v3616 = vpop.f32.mrb[0].mxu0
  %v3617 = vadd.f32 %v3520, %v3616
  %v3618 = vpop.f32.mrb[0].mxu0
  %3619 = vmatprep.mubr.bf16.mxu0 %v1480
  %3620 = vmatmul.mubr.bf16.gmra.mrb[0].mxu0 %v1479
  %v3621 = vpop.f32.mrb[0].mxu0
  %v3622 = vadd.f32 %v3525, %v3621
  %v3623 = vpop.f32.mrb[0].mxu0
  %v3624 = vpop.f32.mrb[0].mxu0
  %v3625 = vadd.f32 %v3528, %v3624
  %v3626 = vpop.f32.mrb[0].mxu0
  %3627 = vmatprep.mubr.bf16.mxu0 %v1507
  %3628 = vmatmul.mubr.bf16.gmra.mrb[0].mxu0 %v1506
  %v3629 = vpop.f32.mrb[0].mxu0
  %v3630 = vadd.f32 %v3533, %v3629
  %v3631 = vpop.f32.mrb[0].mxu0
  %v3632 = vpop.f32.mrb[0].mxu0
  %v3633 = vadd.f32 %v3536, %v3632
  %v3634 = vpop.f32.mrb[0].mxu0
  %3635 = vmatprep.mubr.bf16.mxu0 %v1534
  %3636 = vmatmul.mubr.bf16.gmra.mrb[0].mxu0 %v1533
  %v3637 = vpop.f32.mrb[0].mxu0
  %v3638 = vadd.f32 %v3541, %v3637
  %v3639 = vpop.f32.mrb[0].mxu0
  %v3640 = vpop.f32.mrb[0].mxu0
  %v3641 = vadd.f32 %v3544, %v3640
  %v3642 = vpop.f32.mrb[0].mxu0
  %3643 = vdwg.mxu0
  %3644 = vmatprep.subr.bf16.mxu0 0
  %3645 = vmatpush1.bf16.msra.mxu0 %v2726
  %3646 = vmatprep.subr.bf16.mxu0 0
  %3647 = vmatpush1.bf16.msra.mxu0 %v2727
  %3648 = vmatprep.subr.bf16.mxu0 0
  %3649 = vmatpush1.bf16.msra.mxu0 %v2728
  %3650 = vmatprep.subr.bf16.mxu0 0
  %3651 = vmatpush1.bf16.msra.mxu0 %v2729
  %3652 = vmatprep.subr.bf16.mxu0 0
  %3653 = vmatpush1.bf16.msra.mxu0 %v2730
  %3654 = vmatprep.subr.bf16.mxu0 0
  %3655 = vmatpush1.bf16.msra.mxu0 %v2731
  %3656 = vmatprep.subr.bf16.mxu0 0
  %3657 = vmatpush1.bf16.msra.mxu0 %v2732
  %3658 = vmatprep.subr.bf16.mxu0 0
  %3659 = vmatpush1.bf16.msra.mxu0 %v2733
  %3660 = vmatprep.subr.bf16.mxu0 0
  %3661 = vmatpush1.bf16.msra.mxu0 %v2734
  %3662 = vmatprep.subr.bf16.mxu0 0
  %3663 = vmatpush1.bf16.msra.mxu0 %v2735
  %3664 = vmatprep.subr.bf16.mxu0 0
  %3665 = vmatpush1.bf16.msra.mxu0 %v2736
  %3666 = vmatprep.subr.bf16.mxu0 0
  %3667 = vmatpush1.bf16.msra.mxu0 %v2737
  %3668 = vmatprep.subr.bf16.mxu0 0
  %3669 = vmatpush1.bf16.msra.mxu0 %v2738
  %3670 = vmatprep.subr.bf16.mxu0 0
  %3671 = vmatpush1.bf16.msra.mxu0 %v2739
  %3672 = vmatprep.subr.bf16.mxu0 0
  %3673 = vmatpush1.bf16.msra.mxu0 %v2740
  %3674 = vmatprep.subr.bf16.mxu0 0
  %3675 = vmatpush1.bf16.msra.mxu0 %v2741
  %3676 = vmatprep.mubr.bf16.mxu0 %v1347
  %3677 = vmatmul.mubr.bf16.gmra.mrb[0].mxu0 %v1346
  %v3678 = vpop.f32.mrb[0].mxu0
  %v3679 = vadd.f32 %v3582, %v3678
  %v3680 = vpop.f32.mrb[0].mxu0
  %v3681 = vpop.f32.mrb[0].mxu0
  %v3682 = vadd.f32 %v3585, %v3681
  %v3683 = vpop.f32.mrb[0].mxu0
  %3684 = vmatprep.mubr.bf16.mxu0 %v1374
  %3685 = vmatmul.mubr.bf16.gmra.mrb[0].mxu0 %v1373
  %v3686 = vpop.f32.mrb[0].mxu0
  %v3687 = vadd.f32 %v3590, %v3686
  %v3688 = vpop.f32.mrb[0].mxu0
  %v3689 = vpop.f32.mrb[0].mxu0
  %v3690 = vadd.f32 %v3593, %v3689
  %v3691 = vpop.f32.mrb[0].mxu0
  %3692 = vmatprep.mubr.bf16.mxu0 %v1401
  %3693 = vmatmul.mubr.bf16.gmra.mrb[0].mxu0 %v1400
  %v3694 = vpop.f32.mrb[0].mxu0
  %v3695 = vadd.f32 %v3598, %v3694
  %v3696 = vpop.f32.mrb[0].mxu0
  %v3697 = vpop.f32.mrb[0].mxu0
  %v3698 = vadd.f32 %v3601, %v3697
  %v3699 = vpop.f32.mrb[0].mxu0
  %3700 = vmatprep.mubr.bf16.mxu0 %v1428
  %3701 = vmatmul.mubr.bf16.gmra.mrb[0].mxu0 %v1427
  %v3702 = vpop.f32.mrb[0].mxu0
  %v3703 = vadd.f32 %v3606, %v3702
  %v3704 = vpop.f32.mrb[0].mxu0
  %v3705 = vpop.f32.mrb[0].mxu0
  %v3706 = vadd.f32 %v3609, %v3705
  %v3707 = vpop.f32.mrb[0].mxu0
  %3708 = vmatprep.mubr.bf16.mxu0 %v1455
  %3709 = vmatmul.mubr.bf16.gmra.mrb[0].mxu0 %v1454
  %v3710 = vpop.f32.mrb[0].mxu0
  %v3711 = vadd.f32 %v3614, %v3710
  %v3712 = vpop.f32.mrb[0].mxu0
  %v3713 = vpop.f32.mrb[0].mxu0
  %v3714 = vadd.f32 %v3617, %v3713
  %v3715 = vpop.f32.mrb[0].mxu0
  %3716 = vmatprep.mubr.bf16.mxu0 %v1482
  %3717 = vmatmul.mubr.bf16.gmra.mrb[0].mxu0 %v1481
  %v3718 = vpop.f32.mrb[0].mxu0
  %v3719 = vadd.f32 %v3622, %v3718
  %v3720 = vpop.f32.mrb[0].mxu0
  %v3721 = vpop.f32.mrb[0].mxu0
  %v3722 = vadd.f32 %v3625, %v3721
  %v3723 = vpop.f32.mrb[0].mxu0
  %3724 = vmatprep.mubr.bf16.mxu0 %v1509
  %3725 = vmatmul.mubr.bf16.gmra.mrb[0].mxu0 %v1508
  %v3726 = vpop.f32.mrb[0].mxu0
  %v3727 = vadd.f32 %v3630, %v3726
  %v3728 = vpop.f32.mrb[0].mxu0
  %v3729 = vpop.f32.mrb[0].mxu0
  %v3730 = vadd.f32 %v3633, %v3729
  %v3731 = vpop.f32.mrb[0].mxu0
  %3732 = vmatprep.mubr.bf16.mxu0 %v1536
  %3733 = vmatmul.mubr.bf16.gmra.mrb[0].mxu0 %v1535
  %v3734 = vpop.f32.mrb[0].mxu0
  %v3735 = vadd.f32 %v3638, %v3734
  %v3736 = vpop.f32.mrb[0].mxu0
  %v3737 = vpop.f32.mrb[0].mxu0
  %v3738 = vadd.f32 %v3641, %v3737
  %v3739 = vpop.f32.mrb[0].mxu0
  %3740 = vdwg.mxu0
  %3741 = vmatprep.subr.bf16.mxu0 0
  %3742 = vmatpush1.bf16.msra.mxu0 %v2742
  %3743 = vmatprep.subr.bf16.mxu0 0
  %3744 = vmatpush1.bf16.msra.mxu0 %v2743
  %3745 = vmatprep.subr.bf16.mxu0 0
  %3746 = vmatpush1.bf16.msra.mxu0 %v2744
  %3747 = vmatprep.subr.bf16.mxu0 0
  %3748 = vmatpush1.bf16.msra.mxu0 %v2745
  %3749 = vmatprep.subr.bf16.mxu0 0
  %3750 = vmatpush1.bf16.msra.mxu0 %v2746
  %3751 = vmatprep.subr.bf16.mxu0 0
  %3752 = vmatpush1.bf16.msra.mxu0 %v2747
  %3753 = vmatprep.subr.bf16.mxu0 0
  %3754 = vmatpush1.bf16.msra.mxu0 %v2748
  %3755 = vmatprep.subr.bf16.mxu0 0
  %3756 = vmatpush1.bf16.msra.mxu0 %v2749
  %3757 = vmatprep.subr.bf16.mxu0 0
  %3758 = vmatpush1.bf16.msra.mxu0 %v2750
  %3759 = vmatprep.subr.bf16.mxu0 0
  %3760 = vmatpush1.bf16.msra.mxu0 %v2751
  %3761 = vmatprep.subr.bf16.mxu0 0
  %3762 = vmatpush1.bf16.msra.mxu0 %v2752
  %3763 = vmatprep.subr.bf16.mxu0 0
  %3764 = vmatpush1.bf16.msra.mxu0 %v2753
  %3765 = vmatprep.subr.bf16.mxu0 0
  %3766 = vmatpush1.bf16.msra.mxu0 %v2754
  %3767 = vmatprep.subr.bf16.mxu0 0
  %3768 = vmatpush1.bf16.msra.mxu0 %v2755
  %3769 = vmatprep.subr.bf16.mxu0 0
  %3770 = vmatpush1.bf16.msra.mxu0 %v2756
  %3771 = vmatprep.subr.bf16.mxu0 0
  %3772 = vmatpush1.bf16.msra.mxu0 %v2757
  %3773 = vmatprep.mubr.bf16.mxu0 %v1349
  %3774 = vmatmul.mubr.bf16.gmra.mrb[0].mxu0 %v1348
  %v3775 = vpop.f32.mrb[0].mxu0
  %v3776 = vadd.f32 %v3679, %v3775
  %v3777 = vpop.f32.mrb[0].mxu0
  %v3778 = vpop.f32.mrb[0].mxu0
  %v3779 = vadd.f32 %v3682, %v3778
  %v3780 = vpop.f32.mrb[0].mxu0
  %3781 = vmatprep.mubr.bf16.mxu0 %v1376
  %3782 = vmatmul.mubr.bf16.gmra.mrb[0].mxu0 %v1375
  %v3783 = vpop.f32.mrb[0].mxu0
  %v3784 = vadd.f32 %v3687, %v3783
  %v3785 = vpop.f32.mrb[0].mxu0
  %v3786 = vpop.f32.mrb[0].mxu0
  %v3787 = vadd.f32 %v3690, %v3786
  %v3788 = vpop.f32.mrb[0].mxu0
  %3789 = vmatprep.mubr.bf16.mxu0 %v1403
  %3790 = vmatmul.mubr.bf16.gmra.mrb[0].mxu0 %v1402
  %v3791 = vpop.f32.mrb[0].mxu0
  %v3792 = vadd.f32 %v3695, %v3791
  %v3793 = vpop.f32.mrb[0].mxu0
  %v3794 = vpop.f32.mrb[0].mxu0
  %v3795 = vadd.f32 %v3698, %v3794
  %v3796 = vpop.f32.mrb[0].mxu0
  %3797 = vmatprep.mubr.bf16.mxu0 %v1430
  %3798 = vmatmul.mubr.bf16.gmra.mrb[0].mxu0 %v1429
  %v3799 = vpop.f32.mrb[0].mxu0
  %v3800 = vadd.f32 %v3703, %v3799
  %v3801 = vpop.f32.mrb[0].mxu0
  %v3802 = vpop.f32.mrb[0].mxu0
  %v3803 = vadd.f32 %v3706, %v3802
  %v3804 = vpop.f32.mrb[0].mxu0
  %3805 = vmatprep.mubr.bf16.mxu0 %v1457
  %3806 = vmatmul.mubr.bf16.gmra.mrb[0].mxu0 %v1456
  %v3807 = vpop.f32.mrb[0].mxu0
  %v3808 = vadd.f32 %v3711, %v3807
  %v3809 = vpop.f32.mrb[0].mxu0
  %v3810 = vpop.f32.mrb[0].mxu0
  %v3811 = vadd.f32 %v3714, %v3810
  %v3812 = vpop.f32.mrb[0].mxu0
  %3813 = vmatprep.mubr.bf16.mxu0 %v1484
  %3814 = vmatmul.mubr.bf16.gmra.mrb[0].mxu0 %v1483
  %v3815 = vpop.f32.mrb[0].mxu0
  %v3816 = vadd.f32 %v3719, %v3815
  %v3817 = vpop.f32.mrb[0].mxu0
  %v3818 = vpop.f32.mrb[0].mxu0
  %v3819 = vadd.f32 %v3722, %v3818
  %v3820 = vpop.f32.mrb[0].mxu0
  %3821 = vmatprep.mubr.bf16.mxu0 %v1511
  %3822 = vmatmul.mubr.bf16.gmra.mrb[0].mxu0 %v1510
  %v3823 = vpop.f32.mrb[0].mxu0
  %v3824 = vadd.f32 %v3727, %v3823
  %v3825 = vpop.f32.mrb[0].mxu0
  %v3826 = vpop.f32.mrb[0].mxu0
  %v3827 = vadd.f32 %v3730, %v3826
  %v3828 = vpop.f32.mrb[0].mxu0
  %3829 = vmatprep.mubr.bf16.mxu0 %v1538
  %3830 = vmatmul.mubr.bf16.gmra.mrb[0].mxu0 %v1537
  %v3831 = vpop.f32.mrb[0].mxu0
  %v3832 = vadd.f32 %v3735, %v3831
  %v3833 = vpop.f32.mrb[0].mxu0
  %v3834 = vpop.f32.mrb[0].mxu0
  %v3835 = vadd.f32 %v3738, %v3834
  %v3836 = vpop.f32.mrb[0].mxu0
  %3837 = vdwg.mxu0
  %3838 = vmatprep.subr.bf16.mxu0 0
  %3839 = vmatpush1.bf16.msra.mxu0 %v2758
  %3840 = vmatprep.subr.bf16.mxu0 0
  %3841 = vmatpush1.bf16.msra.mxu0 %v2759
  %3842 = vmatprep.subr.bf16.mxu0 0
  %3843 = vmatpush1.bf16.msra.mxu0 %v2760
  %3844 = vmatprep.subr.bf16.mxu0 0
  %3845 = vmatpush1.bf16.msra.mxu0 %v2761
  %3846 = vmatprep.subr.bf16.mxu0 0
  %3847 = vmatpush1.bf16.msra.mxu0 %v2762
  %3848 = vmatprep.subr.bf16.mxu0 0
  %3849 = vmatpush1.bf16.msra.mxu0 %v2763
  %3850 = vmatprep.subr.bf16.mxu0 0
  %3851 = vmatpush1.bf16.msra.mxu0 %v2764
  %3852 = vmatprep.subr.bf16.mxu0 0
  %3853 = vmatpush1.bf16.msra.mxu0 %v2765
  %3854 = vmatprep.subr.bf16.mxu0 0
  %3855 = vmatpush1.bf16.msra.mxu0 %v2766
  %3856 = vmatprep.subr.bf16.mxu0 0
  %3857 = vmatpush1.bf16.msra.mxu0 %v2767
  %3858 = vmatprep.subr.bf16.mxu0 0
  %3859 = vmatpush1.bf16.msra.mxu0 %v2768
  %3860 = vmatprep.subr.bf16.mxu0 0
  %3861 = vmatpush1.bf16.msra.mxu0 %v2769
  %3862 = vmatprep.subr.bf16.mxu0 0
  %3863 = vmatpush1.bf16.msra.mxu0 %v2770
  %3864 = vmatprep.subr.bf16.mxu0 0
  %3865 = vmatpush1.bf16.msra.mxu0 %v2771
  %3866 = vmatprep.subr.bf16.mxu0 0
  %3867 = vmatpush1.bf16.msra.mxu0 %v2772
  %3868 = vmatprep.subr.bf16.mxu0 0
  %3869 = vmatpush1.bf16.msra.mxu0 %v2773
  %3870 = vmatprep.mubr.bf16.mxu0 %v1351
  %3871 = vmatmul.mubr.bf16.gmra.mrb[0].mxu0 %v1350
  %v3872 = vpop.f32.mrb[0].mxu0
  %v3873 = vadd.f32 %v3776, %v3872
  %v3874 = vpop.f32.mrb[0].mxu0
  %v3875 = vpop.f32.mrb[0].mxu0
  %v3876 = vadd.f32 %v3779, %v3875
  %v3877 = vpop.f32.mrb[0].mxu0
  %3878 = vmatprep.mubr.bf16.mxu0 %v1378
  %3879 = vmatmul.mubr.bf16.gmra.mrb[0].mxu0 %v1377
  %v3880 = vpop.f32.mrb[0].mxu0
  %v3881 = vadd.f32 %v3784, %v3880
  %v3882 = vpop.f32.mrb[0].mxu0
  %v3883 = vpop.f32.mrb[0].mxu0
  %v3884 = vadd.f32 %v3787, %v3883
  %v3885 = vpop.f32.mrb[0].mxu0
  %3886 = vmatprep.mubr.bf16.mxu0 %v1405
  %3887 = vmatmul.mubr.bf16.gmra.mrb[0].mxu0 %v1404
  %v3888 = vpop.f32.mrb[0].mxu0
  %v3889 = vadd.f32 %v3792, %v3888
  %v3890 = vpop.f32.mrb[0].mxu0
  %v3891 = vpop.f32.mrb[0].mxu0
  %v3892 = vadd.f32 %v3795, %v3891
  %v3893 = vpop.f32.mrb[0].mxu0
  %3894 = vmatprep.mubr.bf16.mxu0 %v1432
  %3895 = vmatmul.mubr.bf16.gmra.mrb[0].mxu0 %v1431
  %v3896 = vpop.f32.mrb[0].mxu0
  %v3897 = vadd.f32 %v3800, %v3896
  %v3898 = vpop.f32.mrb[0].mxu0
  %v3899 = vpop.f32.mrb[0].mxu0
  %v3900 = vadd.f32 %v3803, %v3899
  %v3901 = vpop.f32.mrb[0].mxu0
  %3902 = vmatprep.mubr.bf16.mxu0 %v1459
  %3903 = vmatmul.mubr.bf16.gmra.mrb[0].mxu0 %v1458
  %v3904 = vpop.f32.mrb[0].mxu0
  %v3905 = vadd.f32 %v3808, %v3904
  %v3906 = vpop.f32.mrb[0].mxu0
  %v3907 = vpop.f32.mrb[0].mxu0
  %v3908 = vadd.f32 %v3811, %v3907
  %v3909 = vpop.f32.mrb[0].mxu0
  %3910 = vmatprep.mubr.bf16.mxu0 %v1486
  %3911 = vmatmul.mubr.bf16.gmra.mrb[0].mxu0 %v1485
  %v3912 = vpop.f32.mrb[0].mxu0
  %v3913 = vadd.f32 %v3816, %v3912
  %v3914 = vpop.f32.mrb[0].mxu0
  %v3915 = vpop.f32.mrb[0].mxu0
  %v3916 = vadd.f32 %v3819, %v3915
  %v3917 = vpop.f32.mrb[0].mxu0
  %3918 = vmatprep.mubr.bf16.mxu0 %v1513
  %3919 = vmatmul.mubr.bf16.gmra.mrb[0].mxu0 %v1512
  %v3920 = vpop.f32.mrb[0].mxu0
  %v3921 = vadd.f32 %v3824, %v3920
  %v3922 = vpop.f32.mrb[0].mxu0
  %v3923 = vpop.f32.mrb[0].mxu0
  %v3924 = vadd.f32 %v3827, %v3923
  %v3925 = vpop.f32.mrb[0].mxu0
  %3926 = vmatprep.mubr.bf16.mxu0 %v1540
  %3927 = vmatmul.mubr.bf16.gmra.mrb[0].mxu0 %v1539
  %v3928 = vpop.f32.mrb[0].mxu0
  %v3929 = vadd.f32 %v3832, %v3928
  %v3930 = vpop.f32.mrb[0].mxu0
  %v3931 = vpop.f32.mrb[0].mxu0
  %v3932 = vadd.f32 %v3835, %v3931
  %v3933 = vpop.f32.mrb[0].mxu0
  %3934 = vdwg.mxu0
  %3935 = vmatprep.subr.bf16.mxu0 0
  %3936 = vmatpush1.bf16.msra.mxu0 %v2774
  %3937 = vmatprep.subr.bf16.mxu0 0
  %3938 = vmatpush1.bf16.msra.mxu0 %v2775
  %3939 = vmatprep.subr.bf16.mxu0 0
  %3940 = vmatpush1.bf16.msra.mxu0 %v2776
  %3941 = vmatprep.subr.bf16.mxu0 0
  %3942 = vmatpush1.bf16.msra.mxu0 %v2777
  %3943 = vmatprep.subr.bf16.mxu0 0
  %3944 = vmatpush1.bf16.msra.mxu0 %v2778
  %3945 = vmatprep.subr.bf16.mxu0 0
  %3946 = vmatpush1.bf16.msra.mxu0 %v2779
  %3947 = vmatprep.subr.bf16.mxu0 0
  %3948 = vmatpush1.bf16.msra.mxu0 %v2780
  %3949 = vmatprep.subr.bf16.mxu0 0
  %3950 = vmatpush1.bf16.msra.mxu0 %v2781
  %3951 = vmatprep.subr.bf16.mxu0 0
  %3952 = vmatpush1.bf16.msra.mxu0 %v2782
  %3953 = vmatprep.subr.bf16.mxu0 0
  %3954 = vmatpush1.bf16.msra.mxu0 %v2783
  %3955 = vmatprep.subr.bf16.mxu0 0
  %3956 = vmatpush1.bf16.msra.mxu0 %v2784
  %3957 = vmatprep.subr.bf16.mxu0 0
  %3958 = vmatpush1.bf16.msra.mxu0 %v2785
  %3959 = vmatprep.subr.bf16.mxu0 0
  %3960 = vmatpush1.bf16.msra.mxu0 %v2786
  %3961 = vmatprep.subr.bf16.mxu0 0
  %3962 = vmatpush1.bf16.msra.mxu0 %v2787
  %3963 = vmatprep.subr.bf16.mxu0 0
  %3964 = vmatpush1.bf16.msra.mxu0 %v2788
  %3965 = vmatprep.subr.bf16.mxu0 0
  %3966 = vmatpush1.bf16.msra.mxu0 %v2789
  %3967 = vmatprep.mubr.bf16.mxu0 %v1353
  %3968 = vmatmul.mubr.bf16.gmra.mrb[0].mxu0 %v1352
  %v3969 = vpop.f32.mrb[0].mxu0
  %v3970 = vadd.f32 %v3873, %v3969
  %v3971 = vpop.f32.mrb[0].mxu0
  %v3972 = vpop.f32.mrb[0].mxu0
  %v3973 = vadd.f32 %v3876, %v3972
  %v3974 = vpop.f32.mrb[0].mxu0
  %3975 = vmatprep.mubr.bf16.mxu0 %v1380
  %3976 = vmatmul.mubr.bf16.gmra.mrb[0].mxu0 %v1379
  %v3977 = vpop.f32.mrb[0].mxu0
  %v3978 = vadd.f32 %v3881, %v3977
  %v3979 = vpop.f32.mrb[0].mxu0
  %v3980 = vpop.f32.mrb[0].mxu0
  %v3981 = vadd.f32 %v3884, %v3980
  %v3982 = vpop.f32.mrb[0].mxu0
  %3983 = vmatprep.mubr.bf16.mxu0 %v1407
  %3984 = vmatmul.mubr.bf16.gmra.mrb[0].mxu0 %v1406
  %v3985 = vpop.f32.mrb[0].mxu0
  %v3986 = vadd.f32 %v3889, %v3985
  %v3987 = vpop.f32.mrb[0].mxu0
  %v3988 = vpop.f32.mrb[0].mxu0
  %v3989 = vadd.f32 %v3892, %v3988
  %v3990 = vpop.f32.mrb[0].mxu0
  %3991 = vmatprep.mubr.bf16.mxu0 %v1434
  %3992 = vmatmul.mubr.bf16.gmra.mrb[0].mxu0 %v1433
  %v3993 = vpop.f32.mrb[0].mxu0
  %v3994 = vadd.f32 %v3897, %v3993
  %v3995 = vpop.f32.mrb[0].mxu0
  %v3996 = vpop.f32.mrb[0].mxu0
  %v3997 = vadd.f32 %v3900, %v3996
  %v3998 = vpop.f32.mrb[0].mxu0
  %3999 = vmatprep.mubr.bf16.mxu0 %v1461
  %4000 = vmatmul.mubr.bf16.gmra.mrb[0].mxu0 %v1460
  %v4001 = vpop.f32.mrb[0].mxu0
  %v4002 = vadd.f32 %v3905, %v4001
  %v4003 = vpop.f32.mrb[0].mxu0
  %v4004 = vpop.f32.mrb[0].mxu0
  %v4005 = vadd.f32 %v3908, %v4004
  %v4006 = vpop.f32.mrb[0].mxu0
  %4007 = vmatprep.mubr.bf16.mxu0 %v1488
  %4008 = vmatmul.mubr.bf16.gmra.mrb[0].mxu0 %v1487
  %v4009 = vpop.f32.mrb[0].mxu0
  %v4010 = vadd.f32 %v3913, %v4009
  %v4011 = vpop.f32.mrb[0].mxu0
  %v4012 = vpop.f32.mrb[0].mxu0
  %v4013 = vadd.f32 %v3916, %v4012
  %v4014 = vpop.f32.mrb[0].mxu0
  %4015 = vmatprep.mubr.bf16.mxu0 %v1515
  %4016 = vmatmul.mubr.bf16.gmra.mrb[0].mxu0 %v1514
  %v4017 = vpop.f32.mrb[0].mxu0
  %v4018 = vadd.f32 %v3921, %v4017
  %v4019 = vpop.f32.mrb[0].mxu0
  %v4020 = vpop.f32.mrb[0].mxu0
  %v4021 = vadd.f32 %v3924, %v4020
  %v4022 = vpop.f32.mrb[0].mxu0
  %4023 = vmatprep.mubr.bf16.mxu0 %v1542
  %4024 = vmatmul.mubr.bf16.gmra.mrb[0].mxu0 %v1541
  %v4025 = vpop.f32.mrb[0].mxu0
  %v4026 = vadd.f32 %v3929, %v4025
  %v4027 = vpop.f32.mrb[0].mxu0
  %v4028 = vpop.f32.mrb[0].mxu0
  %v4029 = vadd.f32 %v3932, %v4028
  %v4030 = vpop.f32.mrb[0].mxu0
  %4031 = vdwg.mxu0
  %4032 = vmatprep.subr.bf16.mxu0 0
  %4033 = vmatpush1.bf16.msra.mxu0 %v2790
  %4034 = vmatprep.subr.bf16.mxu0 0
  %4035 = vmatpush1.bf16.msra.mxu0 %v2791
  %4036 = vmatprep.subr.bf16.mxu0 0
  %4037 = vmatpush1.bf16.msra.mxu0 %v2792
  %4038 = vmatprep.subr.bf16.mxu0 0
  %4039 = vmatpush1.bf16.msra.mxu0 %v2793
  %4040 = vmatprep.subr.bf16.mxu0 0
  %4041 = vmatpush1.bf16.msra.mxu0 %v2794
  %4042 = vmatprep.subr.bf16.mxu0 0
  %4043 = vmatpush1.bf16.msra.mxu0 %v2795
  %4044 = vmatprep.subr.bf16.mxu0 0
  %4045 = vmatpush1.bf16.msra.mxu0 %v2796
  %4046 = vmatprep.subr.bf16.mxu0 0
  %4047 = vmatpush1.bf16.msra.mxu0 %v2797
  %4048 = vmatprep.subr.bf16.mxu0 0
  %4049 = vmatpush1.bf16.msra.mxu0 %v2798
  %4050 = vmatprep.subr.bf16.mxu0 0
  %4051 = vmatpush1.bf16.msra.mxu0 %v2799
  %4052 = vmatprep.subr.bf16.mxu0 0
  %4053 = vmatpush1.bf16.msra.mxu0 %v2800
  %4054 = vmatprep.subr.bf16.mxu0 0
  %4055 = vmatpush1.bf16.msra.mxu0 %v2801
  %4056 = vmatprep.subr.bf16.mxu0 0
  %4057 = vmatpush1.bf16.msra.mxu0 %v2802
  %4058 = vmatprep.subr.bf16.mxu0 0
  %4059 = vmatpush1.bf16.msra.mxu0 %v2803
  %4060 = vmatprep.subr.bf16.mxu0 0
  %4061 = vmatpush1.bf16.msra.mxu0 %v2804
  %4062 = vmatprep.subr.bf16.mxu0 0
  %4063 = vmatpush1.bf16.msra.mxu0 %v2805
  %4064 = vmatprep.mubr.bf16.mxu0 %v1355
  %4065 = vmatmul.mubr.bf16.gmra.mrb[0].mxu0 %v1354
  %v4066 = vpop.f32.mrb[0].mxu0
  %v4067 = vadd.f32 %v3970, %v4066
  %v4068 = vpop.f32.mrb[0].mxu0
  %v4069 = vpop.f32.mrb[0].mxu0
  %v4070 = vadd.f32 %v3973, %v4069
  %v4071 = vpop.f32.mrb[0].mxu0
  %4072 = vmatprep.mubr.bf16.mxu0 %v1382
  %4073 = vmatmul.mubr.bf16.gmra.mrb[0].mxu0 %v1381
  %v4074 = vpop.f32.mrb[0].mxu0
  %v4075 = vadd.f32 %v3978, %v4074
  %v4076 = vpop.f32.mrb[0].mxu0
  %v4077 = vpop.f32.mrb[0].mxu0
  %v4078 = vadd.f32 %v3981, %v4077
  %v4079 = vpop.f32.mrb[0].mxu0
  %4080 = vmatprep.mubr.bf16.mxu0 %v1409
  %4081 = vmatmul.mubr.bf16.gmra.mrb[0].mxu0 %v1408
  %v4082 = vpop.f32.mrb[0].mxu0
  %v4083 = vadd.f32 %v3986, %v4082
  %v4084 = vpop.f32.mrb[0].mxu0
  %v4085 = vpop.f32.mrb[0].mxu0
  %v4086 = vadd.f32 %v3989, %v4085
  %v4087 = vpop.f32.mrb[0].mxu0
  %4088 = vmatprep.mubr.bf16.mxu0 %v1436
  %4089 = vmatmul.mubr.bf16.gmra.mrb[0].mxu0 %v1435
  %v4090 = vpop.f32.mrb[0].mxu0
  %v4091 = vadd.f32 %v3994, %v4090
  %v4092 = vpop.f32.mrb[0].mxu0
  %v4093 = vpop.f32.mrb[0].mxu0
  %v4094 = vadd.f32 %v3997, %v4093
  %v4095 = vpop.f32.mrb[0].mxu0
  %4096 = vmatprep.mubr.bf16.mxu0 %v1463
  %4097 = vmatmul.mubr.bf16.gmra.mrb[0].mxu0 %v1462
  %v4098 = vpop.f32.mrb[0].mxu0
  %v4099 = vadd.f32 %v4002, %v4098
  %v4100 = vpop.f32.mrb[0].mxu0
  %v4101 = vpop.f32.mrb[0].mxu0
  %v4102 = vadd.f32 %v4005, %v4101
  %v4103 = vpop.f32.mrb[0].mxu0
  %4104 = vmatprep.mubr.bf16.mxu0 %v1490
  %4105 = vmatmul.mubr.bf16.gmra.mrb[0].mxu0 %v1489
  %v4106 = vpop.f32.mrb[0].mxu0
  %v4107 = vadd.f32 %v4010, %v4106
  %v4108 = vpop.f32.mrb[0].mxu0
  %v4109 = vpop.f32.mrb[0].mxu0
  %v4110 = vadd.f32 %v4013, %v4109
  %v4111 = vpop.f32.mrb[0].mxu0
  %4112 = vmatprep.mubr.bf16.mxu0 %v1517
  %4113 = vmatmul.mubr.bf16.gmra.mrb[0].mxu0 %v1516
  %v4114 = vpop.f32.mrb[0].mxu0
  %v4115 = vadd.f32 %v4018, %v4114
  %v4116 = vpop.f32.mrb[0].mxu0
  %v4117 = vpop.f32.mrb[0].mxu0
  %v4118 = vadd.f32 %v4021, %v4117
  %v4119 = vpop.f32.mrb[0].mxu0
  %4120 = vmatprep.mubr.bf16.mxu0 %v1544
  %4121 = vmatmul.mubr.bf16.gmra.mrb[0].mxu0 %v1543
  %v4122 = vpop.f32.mrb[0].mxu0
  %v4123 = vadd.f32 %v4026, %v4122
  %v4124 = vpop.f32.mrb[0].mxu0
  %v4125 = vpop.f32.mrb[0].mxu0
  %v4126 = vadd.f32 %v4029, %v4125
  %v4127 = vpop.f32.mrb[0].mxu0
  %4128 = vdwg.mxu0
  %4129 = vmatprep.subr.bf16.mxu0 0
  %4130 = vmatpush1.bf16.msra.mxu0 %v2806
  %4131 = vmatprep.subr.bf16.mxu0 0
  %4132 = vmatpush1.bf16.msra.mxu0 %v2807
  %4133 = vmatprep.subr.bf16.mxu0 0
  %4134 = vmatpush1.bf16.msra.mxu0 %v2808
  %4135 = vmatprep.subr.bf16.mxu0 0
  %4136 = vmatpush1.bf16.msra.mxu0 %v2809
  %4137 = vmatprep.subr.bf16.mxu0 0
  %4138 = vmatpush1.bf16.msra.mxu0 %v2810
  %4139 = vmatprep.subr.bf16.mxu0 0
  %4140 = vmatpush1.bf16.msra.mxu0 %v2811
  %4141 = vmatprep.subr.bf16.mxu0 0
  %4142 = vmatpush1.bf16.msra.mxu0 %v2812
  %4143 = vmatprep.subr.bf16.mxu0 0
  %4144 = vmatpush1.bf16.msra.mxu0 %v2813
  %4145 = vmatprep.subr.bf16.mxu0 0
  %4146 = vmatpush1.bf16.msra.mxu0 %v2814
  %4147 = vmatprep.subr.bf16.mxu0 0
  %4148 = vmatpush1.bf16.msra.mxu0 %v2815
  %4149 = vmatprep.subr.bf16.mxu0 0
  %4150 = vmatpush1.bf16.msra.mxu0 %v2816
  %4151 = vmatprep.subr.bf16.mxu0 0
  %4152 = vmatpush1.bf16.msra.mxu0 %v2817
  %4153 = vmatprep.subr.bf16.mxu0 0
  %4154 = vmatpush1.bf16.msra.mxu0 %v2818
  %4155 = vmatprep.subr.bf16.mxu0 0
  %4156 = vmatpush1.bf16.msra.mxu0 %v2819
  %4157 = vmatprep.subr.bf16.mxu0 0
  %4158 = vmatpush1.bf16.msra.mxu0 %v2820
  %4159 = vmatprep.subr.bf16.mxu0 0
  %4160 = vmatpush1.bf16.msra.mxu0 %v2821
  %4161 = vmatprep.mubr.bf16.mxu0 %v1357
  %4162 = vmatmul.mubr.bf16.gmra.mrb[0].mxu0 %v1356
  %v4163 = vpop.f32.mrb[0].mxu0
  %v4164 = vadd.f32 %v4067, %v4163
  %v4165 = vpop.f32.mrb[0].mxu0
  %v4166 = vpop.f32.mrb[0].mxu0
  %v4167 = vadd.f32 %v4070, %v4166
  %v4168 = vpop.f32.mrb[0].mxu0
  %4169 = vmatprep.mubr.bf16.mxu0 %v1384
  %4170 = vmatmul.mubr.bf16.gmra.mrb[0].mxu0 %v1383
  %v4171 = vpop.f32.mrb[0].mxu0
  %v4172 = vadd.f32 %v4075, %v4171
  %v4173 = vpop.f32.mrb[0].mxu0
  %v4174 = vpop.f32.mrb[0].mxu0
  %v4175 = vadd.f32 %v4078, %v4174
  %v4176 = vpop.f32.mrb[0].mxu0
  %4177 = vmatprep.mubr.bf16.mxu0 %v1411
  %4178 = vmatmul.mubr.bf16.gmra.mrb[0].mxu0 %v1410
  %v4179 = vpop.f32.mrb[0].mxu0
  %v4180 = vadd.f32 %v4083, %v4179
  %v4181 = vpop.f32.mrb[0].mxu0
  %v4182 = vpop.f32.mrb[0].mxu0
  %v4183 = vadd.f32 %v4086, %v4182
  %v4184 = vpop.f32.mrb[0].mxu0
  %4185 = vmatprep.mubr.bf16.mxu0 %v1438
  %4186 = vmatmul.mubr.bf16.gmra.mrb[0].mxu0 %v1437
  %v4187 = vpop.f32.mrb[0].mxu0
  %v4188 = vadd.f32 %v4091, %v4187
  %v4189 = vpop.f32.mrb[0].mxu0
  %v4190 = vpop.f32.mrb[0].mxu0
  %v4191 = vadd.f32 %v4094, %v4190
  %v4192 = vpop.f32.mrb[0].mxu0
  %4193 = vmatprep.mubr.bf16.mxu0 %v1465
  %4194 = vmatmul.mubr.bf16.gmra.mrb[0].mxu0 %v1464
  %v4195 = vpop.f32.mrb[0].mxu0
  %v4196 = vadd.f32 %v4099, %v4195
  %v4197 = vpop.f32.mrb[0].mxu0
  %v4198 = vpop.f32.mrb[0].mxu0
  %v4199 = vadd.f32 %v4102, %v4198
  %v4200 = vpop.f32.mrb[0].mxu0
  %4201 = vmatprep.mubr.bf16.mxu0 %v1492
  %4202 = vmatmul.mubr.bf16.gmra.mrb[0].mxu0 %v1491
  %v4203 = vpop.f32.mrb[0].mxu0
  %v4204 = vadd.f32 %v4107, %v4203
  %v4205 = vpop.f32.mrb[0].mxu0
  %v4206 = vpop.f32.mrb[0].mxu0
  %v4207 = vadd.f32 %v4110, %v4206
  %v4208 = vpop.f32.mrb[0].mxu0
  %4209 = vmatprep.mubr.bf16.mxu0 %v1519
  %4210 = vmatmul.mubr.bf16.gmra.mrb[0].mxu0 %v1518
  %v4211 = vpop.f32.mrb[0].mxu0
  %v4212 = vadd.f32 %v4115, %v4211
  %v4213 = vpop.f32.mrb[0].mxu0
  %v4214 = vpop.f32.mrb[0].mxu0
  %v4215 = vadd.f32 %v4118, %v4214
  %v4216 = vpop.f32.mrb[0].mxu0
  %4217 = vmatprep.mubr.bf16.mxu0 %v1546
  %4218 = vmatmul.mubr.bf16.gmra.mrb[0].mxu0 %v1545
  %v4219 = vpop.f32.mrb[0].mxu0
  %v4220 = vadd.f32 %v4123, %v4219
  %v4221 = vpop.f32.mrb[0].mxu0
  %v4222 = vpop.f32.mrb[0].mxu0
  %v4223 = vadd.f32 %v4126, %v4222
  %v4224 = vpop.f32.mrb[0].mxu0
  %4225 = vdwg.mxu0
  %4226 = vmatprep.subr.bf16.mxu0 0
  %4227 = vmatpush1.bf16.msra.mxu0 %v2822
  %4228 = vmatprep.subr.bf16.mxu0 0
  %4229 = vmatpush1.bf16.msra.mxu0 %v2823
  %4230 = vmatprep.subr.bf16.mxu0 0
  %4231 = vmatpush1.bf16.msra.mxu0 %v2824
  %4232 = vmatprep.subr.bf16.mxu0 0
  %4233 = vmatpush1.bf16.msra.mxu0 %v2825
  %4234 = vmatprep.subr.bf16.mxu0 0
  %4235 = vmatpush1.bf16.msra.mxu0 %v2826
  %4236 = vmatprep.subr.bf16.mxu0 0
  %4237 = vmatpush1.bf16.msra.mxu0 %v2827
  %4238 = vmatprep.subr.bf16.mxu0 0
  %4239 = vmatpush1.bf16.msra.mxu0 %v2828
  %4240 = vmatprep.subr.bf16.mxu0 0
  %4241 = vmatpush1.bf16.msra.mxu0 %v2829
  %4242 = vmatprep.subr.bf16.mxu0 0
  %4243 = vmatpush1.bf16.msra.mxu0 %v2830
  %4244 = vmatprep.subr.bf16.mxu0 0
  %4245 = vmatpush1.bf16.msra.mxu0 %v2831
  %4246 = vmatprep.subr.bf16.mxu0 0
  %4247 = vmatpush1.bf16.msra.mxu0 %v2832
  %4248 = vmatprep.subr.bf16.mxu0 0
  %4249 = vmatpush1.bf16.msra.mxu0 %v2833
  %4250 = vmatprep.subr.bf16.mxu0 0
  %4251 = vmatpush1.bf16.msra.mxu0 %v2834
  %4252 = vmatprep.subr.bf16.mxu0 0
  %4253 = vmatpush1.bf16.msra.mxu0 %v2835
  %4254 = vmatprep.subr.bf16.mxu0 0
  %4255 = vmatpush1.bf16.msra.mxu0 %v2836
  %4256 = vmatprep.subr.bf16.mxu0 0
  %4257 = vmatpush1.bf16.msra.mxu0 %v2837
  %4258 = vmatprep.mubr.bf16.mxu0 %v1359
  %4259 = vmatmul.mubr.bf16.gmra.mrb[0].mxu0 %v1358
  %v4260 = vpop.f32.mrb[0].mxu0
  %v4261 = vadd.f32 %v4164, %v4260
  %v4262 = vpop.f32.mrb[0].mxu0
  %v4263 = vpop.f32.mrb[0].mxu0
  %v4264 = vadd.f32 %v4167, %v4263
  %v4265 = vpop.f32.mrb[0].mxu0
  %4266 = vmatprep.mubr.bf16.mxu0 %v1386
  %4267 = vmatmul.mubr.bf16.gmra.mrb[0].mxu0 %v1385
  %v4268 = vpop.f32.mrb[0].mxu0
  %v4269 = vadd.f32 %v4172, %v4268
  %v4270 = vpop.f32.mrb[0].mxu0
  %v4271 = vpop.f32.mrb[0].mxu0
  %v4272 = vadd.f32 %v4175, %v4271
  %v4273 = vpop.f32.mrb[0].mxu0
  %4274 = vmatprep.mubr.bf16.mxu0 %v1413
  %4275 = vmatmul.mubr.bf16.gmra.mrb[0].mxu0 %v1412
  %v4276 = vpop.f32.mrb[0].mxu0
  %v4277 = vadd.f32 %v4180, %v4276
  %v4278 = vpop.f32.mrb[0].mxu0
  %v4279 = vpop.f32.mrb[0].mxu0
  %v4280 = vadd.f32 %v4183, %v4279
  %v4281 = vpop.f32.mrb[0].mxu0
  %4282 = vmatprep.mubr.bf16.mxu0 %v1440
  %4283 = vmatmul.mubr.bf16.gmra.mrb[0].mxu0 %v1439
  %v4284 = vpop.f32.mrb[0].mxu0
  %v4285 = vadd.f32 %v4188, %v4284
  %v4286 = vpop.f32.mrb[0].mxu0
  %v4287 = vpop.f32.mrb[0].mxu0
  %v4288 = vadd.f32 %v4191, %v4287
  %v4289 = vpop.f32.mrb[0].mxu0
  %4290 = vmatprep.mubr.bf16.mxu0 %v1467
  %4291 = vmatmul.mubr.bf16.gmra.mrb[0].mxu0 %v1466
  %v4292 = vpop.f32.mrb[0].mxu0
  %v4293 = vadd.f32 %v4196, %v4292
  %v4294 = vpop.f32.mrb[0].mxu0
  %v4295 = vpop.f32.mrb[0].mxu0
  %v4296 = vadd.f32 %v4199, %v4295
  %v4297 = vpop.f32.mrb[0].mxu0
  %4298 = vmatprep.mubr.bf16.mxu0 %v1494
  %4299 = vmatmul.mubr.bf16.gmra.mrb[0].mxu0 %v1493
  %v4300 = vpop.f32.mrb[0].mxu0
  %v4301 = vadd.f32 %v4204, %v4300
  %v4302 = vpop.f32.mrb[0].mxu0
  %v4303 = vpop.f32.mrb[0].mxu0
  %v4304 = vadd.f32 %v4207, %v4303
  %v4305 = vpop.f32.mrb[0].mxu0
  %4306 = vmatprep.mubr.bf16.mxu0 %v1521
  %4307 = vmatmul.mubr.bf16.gmra.mrb[0].mxu0 %v1520
  %v4308 = vpop.f32.mrb[0].mxu0
  %v4309 = vadd.f32 %v4212, %v4308
  %v4310 = vpop.f32.mrb[0].mxu0
  %v4311 = vpop.f32.mrb[0].mxu0
  %v4312 = vadd.f32 %v4215, %v4311
  %v4313 = vpop.f32.mrb[0].mxu0
  %4314 = vmatprep.mubr.bf16.mxu0 %v1548
  %4315 = vmatmul.mubr.bf16.gmra.mrb[0].mxu0 %v1547
  %v4316 = vpop.f32.mrb[0].mxu0
  %v4317 = vadd.f32 %v4220, %v4316
  %v4318 = vpop.f32.mrb[0].mxu0
  %v4319 = vpop.f32.mrb[0].mxu0
  %v4320 = vadd.f32 %v4223, %v4319
  %v4321 = vpop.f32.mrb[0].mxu0
  %4322 = vdwg.mxu0
  %4323 = vmatprep.subr.bf16.mxu0 0
  %4324 = vmatpush1.bf16.msra.mxu0 %v2838
  %4325 = vmatprep.subr.bf16.mxu0 0
  %4326 = vmatpush1.bf16.msra.mxu0 %v2839
  %4327 = vmatprep.subr.bf16.mxu0 0
  %4328 = vmatpush1.bf16.msra.mxu0 %v2840
  %4329 = vmatprep.subr.bf16.mxu0 0
  %4330 = vmatpush1.bf16.msra.mxu0 %v2841
  %4331 = vmatprep.subr.bf16.mxu0 0
  %4332 = vmatpush1.bf16.msra.mxu0 %v2842
  %4333 = vmatprep.subr.bf16.mxu0 0
  %4334 = vmatpush1.bf16.msra.mxu0 %v2843
  %4335 = vmatprep.subr.bf16.mxu0 0
  %4336 = vmatpush1.bf16.msra.mxu0 %v2844
  %4337 = vmatprep.subr.bf16.mxu0 0
  %4338 = vmatpush1.bf16.msra.mxu0 %v2845
  %4339 = vmatprep.subr.bf16.mxu0 0
  %4340 = vmatpush1.bf16.msra.mxu0 0
  %4341 = vmatprep.subr.bf16.mxu0 0
  %4342 = vmatpush1.bf16.msra.mxu0 0
  %4343 = vmatprep.subr.bf16.mxu0 0
  %4344 = vmatpush1.bf16.msra.mxu0 0
  %4345 = vmatprep.subr.bf16.mxu0 0
  %4346 = vmatpush1.bf16.msra.mxu0 0
  %4347 = vmatprep.subr.bf16.mxu0 0
  %4348 = vmatpush1.bf16.msra.mxu0 0
  %4349 = vmatprep.subr.bf16.mxu0 0
  %4350 = vmatpush1.bf16.msra.mxu0 0
  %4351 = vmatprep.subr.bf16.mxu0 0
  %4352 = vmatpush1.bf16.msra.mxu0 0
  %4353 = vmatprep.subr.bf16.mxu0 0
  %4354 = vmatpush1.bf16.msra.mxu0 0
  %4355 = vmatprep.mubr.bf16.mxu0 0
  %4356 = vmatmul.mubr.bf16.gmra.mrb[0].mxu0 %v1360
  %v4357 = vpop.f32.mrb[0].mxu0
  %v4358 = vadd.f32 %v4261, %v4357
  %v4359 = vpop.f32.mrb[0].mxu0
  %v4360 = vpop.f32.mrb[0].mxu0
  %v4361 = vadd.f32 %v4264, %v4360
  %v4362 = vpop.f32.mrb[0].mxu0
  %4363 = vmatprep.mubr.bf16.mxu0 0
  %4364 = vmatmul.mubr.bf16.gmra.mrb[0].mxu0 %v1387
  %v4365 = vpop.f32.mrb[0].mxu0
  %v4366 = vadd.f32 %v4269, %v4365
  %v4367 = vpop.f32.mrb[0].mxu0
  %v4368 = vpop.f32.mrb[0].mxu0
  %v4369 = vadd.f32 %v4272, %v4368
  %v4370 = vpop.f32.mrb[0].mxu0
  %4371 = vmatprep.mubr.bf16.mxu0 0
  %4372 = vmatmul.mubr.bf16.gmra.mrb[0].mxu0 %v1414
  %v4373 = vpop.f32.mrb[0].mxu0
  %v4374 = vadd.f32 %v4277, %v4373
  %v4375 = vpop.f32.mrb[0].mxu0
  %v4376 = vpop.f32.mrb[0].mxu0
  %v4377 = vadd.f32 %v4280, %v4376
  %v4378 = vpop.f32.mrb[0].mxu0
  %4379 = vmatprep.mubr.bf16.mxu0 0
  %4380 = vmatmul.mubr.bf16.gmra.mrb[0].mxu0 %v1441
  %v4381 = vpop.f32.mrb[0].mxu0
  %v4382 = vadd.f32 %v4285, %v4381
  %v4383 = vpop.f32.mrb[0].mxu0
  %v4384 = vpop.f32.mrb[0].mxu0
  %v4385 = vadd.f32 %v4288, %v4384
  %v4386 = vpop.f32.mrb[0].mxu0
  %4387 = vmatprep.mubr.bf16.mxu0 0
  %4388 = vmatmul.mubr.bf16.gmra.mrb[0].mxu0 %v1468
  %v4389 = vpop.f32.mrb[0].mxu0
  %v4390 = vadd.f32 %v4293, %v4389
  %v4391 = vpop.f32.mrb[0].mxu0
  %v4392 = vpop.f32.mrb[0].mxu0
  %v4393 = vadd.f32 %v4296, %v4392
  %v4394 = vpop.f32.mrb[0].mxu0
  %4395 = vmatprep.mubr.bf16.mxu0 0
  %4396 = vmatmul.mubr.bf16.gmra.mrb[0].mxu0 %v1495
  %v4397 = vpop.f32.mrb[0].mxu0
  %v4398 = vadd.f32 %v4301, %v4397
  %v4399 = vpop.f32.mrb[0].mxu0
  %v4400 = vpop.f32.mrb[0].mxu0
  %v4401 = vadd.f32 %v4304, %v4400
  %v4402 = vpop.f32.mrb[0].mxu0
  %4403 = vmatprep.mubr.bf16.mxu0 0
  %4404 = vmatmul.mubr.bf16.gmra.mrb[0].mxu0 %v1522
  %v4405 = vpop.f32.mrb[0].mxu0
  %v4406 = vadd.f32 %v4309, %v4405
  %v4407 = vpop.f32.mrb[0].mxu0
  %v4408 = vpop.f32.mrb[0].mxu0
  %v4409 = vadd.f32 %v4312, %v4408
  %v4410 = vpop.f32.mrb[0].mxu0
  %4411 = vmatprep.mubr.bf16.mxu0 0
  %4412 = vmatmul.mubr.bf16.gmra.mrb[0].mxu0 %v1549
  %v4413 = vpop.f32.mrb[0].mxu0
  %v4414 = vadd.f32 %v4317, %v4413
  %v4415 = vpop.f32.mrb[0].mxu0
  %v4416 = vpop.f32.mrb[0].mxu0
  %v4417 = vadd.f32 %v4320, %v4416
  %v4418 = vpop.f32.mrb[0].mxu0
  %4419 = vdwg.mxu0
  %v4420 = vmax.f32 %v4358, 0.0
  %v4421 = vmax.f32 %v4361, 0.0
  %v4422 = vmax.f32 %v4366, 0.0
  %v4423 = vmax.f32 %v4369, 0.0
  %v4424 = vmax.f32 %v4374, 0.0
  %v4425 = vmax.f32 %v4377, 0.0
  %v4426 = vmax.f32 %v4382, 0.0
  %v4427 = vmax.f32 %v4385, 0.0
  %v4428 = vmax.f32 %v4390, 0.0
  %v4429 = vmax.f32 %v4393, 0.0
  %v4430 = vmax.f32 %v4398, 0.0
  %v4431 = vmax.f32 %v4401, 0.0
  %v4432 = vmax.f32 %v4406, 0.0
  %v4433 = vmax.f32 %v4409, 0.0
  %v4434 = vmax.f32 %v4414, 0.0
  %v4435 = vmax.f32 %v4417, 0.0
  %v4436 = vpack.c.bf16 %v4421, %v4420
  %v4437 = vpack.c.bf16 %v4423, %v4422
  %v4438 = vpack.c.bf16 %v4425, %v4424
  %v4439 = vpack.c.bf16 %v4427, %v4426
  %v4440 = vpack.c.bf16 %v4429, %v4428
  %v4441 = vpack.c.bf16 %v4431, %v4430
  %v4442 = vpack.c.bf16 %v4433, %v4432
  %v4443 = vpack.c.bf16 %v4435, %v4434
  %v4452 = vunpack.c.l.b16 %v4436
  %v4453 = vunpack.c.h.b16 %v4436
  %v4454 = vunpack.c.l.b16 %v4437
  %v4455 = vunpack.c.h.b16 %v4437
  %v4456 = vunpack.c.l.b16 %v4438
  %v4457 = vunpack.c.h.b16 %v4438
  %v4458 = vunpack.c.l.b16 %v4439
  %v4459 = vunpack.c.h.b16 %v4439
  %v4460 = vunpack.c.l.b16 %v4440
  %v4461 = vunpack.c.h.b16 %v4440
  %v4462 = vunpack.c.l.b16 %v4441
  %v4463 = vunpack.c.h.b16 %v4441
  %v4464 = vunpack.c.l.b16 %v4442
  %v4465 = vunpack.c.h.b16 %v4442
  %v4466 = vunpack.c.l.b16 %v4443
  %v4467 = vunpack.c.h.b16 %v4443
  %v4468 = vpack.c.b16 %v4452, %v4452
  %v4469 = vpack.c.b16 %v4453, %v4453
  %v4470 = vpack.c.b16 %v4454, %v4454
  %v4471 = vpack.c.b16 %v4455, %v4455
  %v4472 = vpack.c.b16 %v4456, %v4456
  %v4473 = vpack.c.b16 %v4457, %v4457
  %v4474 = vpack.c.b16 %v4458, %v4458
  %v4475 = vpack.c.b16 %v4459, %v4459
  %v4476 = vpack.c.b16 %v4460, %v4460
  %v4477 = vpack.c.b16 %v4461, %v4461
  %v4478 = vpack.c.b16 %v4462, %v4462
  %v4479 = vpack.c.b16 %v4463, %v4463
  %v4480 = vpack.c.b16 %v4464, %v4464
  %v4481 = vpack.c.b16 %v4465, %v4465
  %v4482 = vpack.c.b16 %v4466, %v4466
  %v4483 = vpack.c.b16 %v4467, %v4467
  %4500 = vst [vmem:[%s3] sm:$0xf] %v4468
  %4501 = vst [vmem:[%s3 + $0x4] sm:$0xf] %v4469
  %4502 = vst [vmem:[%s3 + $0x8] sm:$0xf] %v4470
  %4503 = vst [vmem:[%s3 + $0xc] sm:$0xf] %v4471
  %4504 = vst [vmem:[%s3 + $0x10] sm:$0xf] %v4472
  %4505 = vst [vmem:[%s3 + $0x14] sm:$0xf] %v4473
  %4506 = vst [vmem:[%s3 + $0x18] sm:$0xf] %v4474
  %4507 = vst [vmem:[%s3 + $0x1c] sm:$0xf] %v4475
  %4508 = vst [vmem:[%s3 + $0x20] sm:$0xf] %v4476
  %4509 = vst [vmem:[%s3 + $0x24] sm:$0xf] %v4477
  %4510 = vst [vmem:[%s3 + $0x28] sm:$0xf] %v4478
  %4511 = vst [vmem:[%s3 + $0x2c] sm:$0xf] %v4479
  %4512 = vst [vmem:[%s3 + $0x30] sm:$0xf] %v4480
  %4513 = vst [vmem:[%s3 + $0x34] sm:$0xf] %v4481
  %4514 = vst [vmem:[%s3 + $0x38] sm:$0xf] %v4482
  %4515 = vst [vmem:[%s3 + $0x3c] sm:$0xf] %v4483
  // Predicated region
  $region14: #{sparse_autoencoder_forward.10} parent=0 // pred_check
    _
  $region15: #{sparse_autoencoder_forward.10} parent=0 // pred_check_branch
    %4517 = sbr.rel (0) target = $region17
  $region16: #{sparse_autoencoder_forward.10} parent=0 // pred_region
    _
  $region17: #{sparse_autoencoder_forward.10} parent=0 // pred_fallthru
    _
  // Predicated region
  $region18: #{sparse_autoencoder_forward.10} parent=0 // pred_check
    _
  $region19: #{sparse_autoencoder_forward.10} parent=0 // pred_check_branch
    %4519 = sbr.rel (0) target = $region21
  $region20: #{sparse_autoencoder_forward.10} parent=0 // pred_region
    _
  $region21: #{sparse_autoencoder_forward.10} parent=0 // pred_fallthru
    _

// kernel: sparse_autoencoder_forward.11
$region0: #{sparse_autoencoder_forward.11}
  #allocation0 [shape = 'u32[]', space=smem, size = 0x4, offset = 0x4, fixed_abs, tag = 'smem constant byte address 0x4 - core index']
  #allocation1 [shape = 'u32[144,128]{1,0:T(1,128)}', space=vmem, size = 0x12000, scoped, tag = 'internal scratch']
  %s0 = inlined_call_operand.vmem [shape: bf16[512,2048], index: 0, kind: input, shape index: {}]
  %s1 = inlined_call_operand.vmem [shape: bf16[2048,128], index: 1, kind: input, shape index: {}]
  %s2 = inlined_call_operand.vmem [shape: f32[1,128], index: 2, kind: input, shape index: {}]
  %s3 = inlined_call_operand.vmem [shape: f32[512,128], index: 3, kind: output, shape index: {}]
  %s4 = sld [smem:[#allocation0]]
  $region45: #{sparse_autoencoder_forward.11} parent=0
    _
  %s6 = ssub.s32 1, %s4
  %s7 = scalar_select 0, %s6, %s4
  loop: start=0, step=1, limit=4
  $region2: #{sparse_autoencoder_forward.11} parent=0 // loop_pre_header
    _
  $region3: #{sparse_autoencoder_forward.11} parent=0 // loop_header
    %s9 = sphi 0, %s13
    %p10 = scmp.ge.s32.totalorder %s9, 4
    %s19 = sphi 0, %s21
    %s22 = sphi 0, %s19
    %s23 = sphi 0, %s22
    %s39 = sphi 0, %s23
    %s43 = sphi 0, %s43
    %s45 = sphi 0, %s43
    %s46 = sphi 0, %s45
    %s60 = sphi 0, %s46
    %s64 = sphi 0, %s64
    %s66 = sphi 0, %s64
    %s67 = sphi 0, %s66
    %s81 = sphi 0, %s67
    %s87 = sphi 0, %s89
    %s90 = sphi 0, %s87
    %s91 = sphi 0, %s90
    %s107 = sphi 0, %s91
  $region4: #{sparse_autoencoder_forward.11} parent=0 // loop_header_branch
    %12 = sbr.rel (%p10) target = $region8
  $region5: #{sparse_autoencoder_forward.11} parent=0 // loop_body
    %s14 = ssub.s32 %s9, 1
    %s15 = ssub.s32 %s9, 2
    %s16 = sadd.s32 %s9, 1
    %s17 = ssub.s32 %s9, %s16
    %p18 = scmp.eq.s32.totalorder %s17, 0
    %s20 = sadd.s32 %s19, 1
    %s21 = scalar_select %p18, %s19, %s20
    %p24 = pneg %p18
    %p25 = scmp.eq.s32.totalorder %s9, 1
    %p26 = por %p24, %p25
    %p27 = scmp.ne.s32.totalorder %s19, %s22
    %p28 = scmp.eq.s32.totalorder %s9, 0
    %p29 = por %p27, %p28
    %p30 = scmp.ne.s32.totalorder %s19, %s22
    %p31 = scmp.eq.s32.totalorder %s14, 1
    %p32 = por %p30, %p31
    %p33 = scmp.ne.s32.totalorder %s22, %s23
    %p34 = scmp.eq.s32.totalorder %s14, 0
    %p35 = por %p33, %p34
    %p36 = scmp.ne.s32.totalorder %s22, %s23
    %p37 = scmp.eq.s32.totalorder %s15, 1
    %p38 = por %p36, %p37
    %p40 = scmp.ne.s32.totalorder %s23, %s39
    %p41 = scmp.eq.s32.totalorder %s15, 0
    %p42 = por %p40, %p41
    %s44 = sadd.s32 %s43, 1
    %p47 = scmp.eq.s32.totalorder %s9, 1
    %p48 = scmp.ne.s32.totalorder %s43, %s45
    %p49 = scmp.eq.s32.totalorder %s9, 0
    %p50 = por %p48, %p49
    %p51 = scmp.ne.s32.totalorder %s43, %s45
    %p52 = scmp.eq.s32.totalorder %s14, 1
    %p53 = por %p51, %p52
    %p54 = scmp.ne.s32.totalorder %s45, %s46
    %p55 = scmp.eq.s32.totalorder %s14, 0
    %p56 = por %p54, %p55
    %p57 = scmp.ne.s32.totalorder %s45, %s46
    %p58 = scmp.eq.s32.totalorder %s15, 1
    %p59 = por %p57, %p58
    %p61 = scmp.ne.s32.totalorder %s46, %s60
    %p62 = scmp.eq.s32.totalorder %s15, 0
    %p63 = por %p61, %p62
    %s65 = sadd.s32 %s64, 1
    %p68 = scmp.eq.s32.totalorder %s9, 1
    %p69 = scmp.ne.s32.totalorder %s64, %s66
    %p70 = scmp.eq.s32.totalorder %s9, 0
    %p71 = por %p69, %p70
    %p72 = scmp.ne.s32.totalorder %s64, %s66
    %p73 = scmp.eq.s32.totalorder %s14, 1
    %p74 = por %p72, %p73
    %p75 = scmp.ne.s32.totalorder %s66, %s67
    %p76 = scmp.eq.s32.totalorder %s14, 0
    %p77 = por %p75, %p76
    %p78 = scmp.ne.s32.totalorder %s66, %s67
    %p79 = scmp.eq.s32.totalorder %s15, 1
    %p80 = por %p78, %p79
    %p82 = scmp.ne.s32.totalorder %s67, %s81
    %p83 = scmp.eq.s32.totalorder %s15, 0
    %p84 = por %p82, %p83
    %s85 = ssub.s32 %s9, %s16
    %p86 = scmp.eq.s32.totalorder %s85, 0
    %s88 = sadd.s32 %s87, 1
    %s89 = scalar_select %p86, %s87, %s88
    %p92 = pneg %p86
    %p93 = scmp.eq.s32.totalorder %s9, 1
    %p94 = por %p92, %p93
    %p95 = scmp.ne.s32.totalorder %s87, %s90
    %p96 = scmp.eq.s32.totalorder %s9, 0
    %p97 = por %p95, %p96
    %p98 = scmp.ne.s32.totalorder %s87, %s90
    %p99 = scmp.eq.s32.totalorder %s14, 1
    %p100 = por %p98, %p99
    %p101 = scmp.ne.s32.totalorder %s90, %s91
    %p102 = scmp.eq.s32.totalorder %s14, 0
    %p103 = por %p101, %p102
    %p104 = scmp.ne.s32.totalorder %s90, %s91
    %p105 = scmp.eq.s32.totalorder %s15, 1
    %p106 = por %p104, %p105
    %p108 = scmp.ne.s32.totalorder %s91, %s107
    %p109 = scmp.eq.s32.totalorder %s15, 0
    %p110 = por %p108, %p109
    %p111 = scmp.le.s32.totalorder 1, %s9
    %p112 = scmp.lt.s32.totalorder %s9, 3
    %p113 = pnand %p111, %p112
    %p114 = pneg %p113
    // Predicated region
    $region9: #{sparse_autoencoder_forward.11} parent=5 // pred_check
      _
    $region10: #{sparse_autoencoder_forward.11} parent=5 // pred_check_branch
      %116 = sbr.rel (%p113) target = $region12
    $region11: #{sparse_autoencoder_forward.11} parent=5 // pred_region
      %s117 = ssub.s32 %s9, 1
      // Predicated region
      $region13: #{sparse_autoencoder_forward.11} parent=11 // pred_check
        %p118 = pneg %p56
      $region14: #{sparse_autoencoder_forward.11} parent=11 // pred_check_branch
        %120 = sbr.rel (%p118) target = $region16
      $region15: #{sparse_autoencoder_forward.11} parent=11 // pred_region
        _
      $region16: #{sparse_autoencoder_forward.11} parent=11 // pred_fallthru
        _
      // Predicated region
      $region17: #{sparse_autoencoder_forward.11} parent=11 // pred_check
        %p121 = pneg %p77
      $region18: #{sparse_autoencoder_forward.11} parent=11 // pred_check_branch
        %123 = sbr.rel (%p121) target = $region20
      $region19: #{sparse_autoencoder_forward.11} parent=11 // pred_region
        _
      $region20: #{sparse_autoencoder_forward.11} parent=11 // pred_fallthru
        _
    $region12: #{sparse_autoencoder_forward.11} parent=5 // pred_fallthru
      _
    %p124 = scmp.lt.s32.totalorder %s9, 2
    // Predicated region
    $region21: #{sparse_autoencoder_forward.11} parent=5 // pred_check
      %p125 = pneg %p124
    $region22: #{sparse_autoencoder_forward.11} parent=5 // pred_check_branch
      %127 = sbr.rel (%p125) target = $region24
    $region23: #{sparse_autoencoder_forward.11} parent=5 // pred_region
      // Predicated region
      $region25: #{sparse_autoencoder_forward.11} parent=23 // pred_check
        %p128 = pneg %p29
      $region26: #{sparse_autoencoder_forward.11} parent=23 // pred_check_branch
        %130 = sbr.rel (%p128) target = $region28
      $region27: #{sparse_autoencoder_forward.11} parent=23 // pred_region
        %s131 = smul.u32 32, %s9
        %p132 = scmp.lt.s32.totalorder %s131, 63
        %s133 = scalar_select %p132, %s131, 63
        %s134 = smul.addr %s133, 16
        %s135 = smul.addr %s134, 4
        %s136 = scalar_lea.vmem %s0, %s135
        %s137 = smul.u32 32, %s9
      $region28: #{sparse_autoencoder_forward.11} parent=23 // pred_fallthru
        _
    $region24: #{sparse_autoencoder_forward.11} parent=5 // pred_fallthru
      _
    %p138 = scmp.le.s32.totalorder 1, %s9
    %p139 = scmp.lt.s32.totalorder %s9, 3
    %p140 = pnand %p138, %p139
    %p141 = pneg %p140
    // Predicated region
    $region29: #{sparse_autoencoder_forward.11} parent=5 // pred_check
      _
    $region30: #{sparse_autoencoder_forward.11} parent=5 // pred_check_branch
      %143 = sbr.rel (%p140) target = $region32
    $region31: #{sparse_autoencoder_forward.11} parent=5 // pred_region
      %s144 = ssub.s32 %s9, 1
      %s145 = smul.u32 32, %s14
      %p146 = scmp.lt.s32.totalorder %s145, 63
      %s147 = scalar_select %p146, %s145, 63
      %s148 = smul.addr %s147, 16
      %s149 = smul.addr %s148, 4
      %s150 = scalar_lea.vmem %s0, %s149
      %p151 = pneg %p35
      %p152 = pneg %p32
      %p153 = pneg %p56
      %p154 = pneg %p53
      %p155 = pneg %p77
      %p156 = pneg %p74
      %p157 = pneg %p103
      %p158 = pneg %p100
      %s159 = smul.u32 32, %s14
      %p160 = scmp.lt.s32.totalorder %s159, 63
      %s161 = scalar_select %p160, %s159, 63
      %s162 = smul.addr %s161, 8
      %s163 = scalar_lea.vmem %s3, %s162
      %s164 = smul.u32 32, %s14
      %p165 = scmp.lt.s32.totalorder %s164, 63
      %s166 = scalar_select %p165, %s164, 63
      %s167 = smul.addr %s166, 16
      %s168 = smul.addr %s167, 4
      %s169 = scalar_lea.vmem %s0, %s168
      %s170 = smul.u32 32, %s14
      %s171 = smul.u32 32, %s14
      %p172 = scmp.lt.s32.totalorder %s171, 63
      %s173 = scalar_select %p172, %s171, 63
      %s174 = smul.addr %s173, 8
      %s175 = scalar_lea.vmem %s3, %s174
      %s176 = smul.u32 32, %s14
      %v178 = vld [vmem:[%s169] sm:$0xff]
      %v179 = vld [vmem:[%s169 + $0x8] sm:$0xff]
      %v180 = vld [vmem:[%s169 + $0x10] sm:$0xff]
      %v181 = vld [vmem:[%s169 + $0x18] sm:$0xff]
      %v182 = vld [vmem:[%s169 + $0x20] sm:$0xff]
      %v183 = vld [vmem:[%s169 + $0x28] sm:$0xff]
      %v184 = vld [vmem:[%s169 + $0x30] sm:$0xff]
      %v185 = vld [vmem:[%s169 + $0x38] sm:$0xff]
      %v186 = vld [vmem:[%s169 + $0x40] sm:$0xff]
      %v187 = vld [vmem:[%s169 + $0x48] sm:$0xff]
      %v188 = vld [vmem:[%s169 + $0x50] sm:$0xff]
      %v189 = vld [vmem:[%s169 + $0x58] sm:$0xff]
      %v190 = vld [vmem:[%s169 + $0x60] sm:$0xff]
      %v191 = vld [vmem:[%s169 + $0x68] sm:$0xff]
      %v192 = vld [vmem:[%s169 + $0x70] sm:$0xff]
      %v193 = vld [vmem:[%s169 + $0x78] sm:$0xff]
      %v194 = vld [vmem:[%s169 + $0x80] sm:$0xff]
      %v195 = vld [vmem:[%s169 + $0x88] sm:$0xff]
      %v196 = vld [vmem:[%s169 + $0x90] sm:$0xff]
      %v197 = vld [vmem:[%s169 + $0x98] sm:$0xff]
      %v198 = vld [vmem:[%s169 + $0xa0] sm:$0xff]
      %v199 = vld [vmem:[%s169 + $0xa8] sm:$0xff]
      %v200 = vld [vmem:[%s169 + $0xb0] sm:$0xff]
      %v201 = vld [vmem:[%s169 + $0xb8] sm:$0xff]
      %v202 = vld [vmem:[%s169 + $0xc0] sm:$0xff]
      %v203 = vld [vmem:[%s169 + $0xc8] sm:$0xff]
      %v204 = vld [vmem:[%s169 + $0xd0] sm:$0xff]
      %v205 = vld [vmem:[%s169 + $0xd8] sm:$0xff]
      %v206 = vld [vmem:[%s169 + $0xe0] sm:$0xff]
      %v207 = vld [vmem:[%s169 + $0xe8] sm:$0xff]
      %v208 = vld [vmem:[%s169 + $0xf0] sm:$0xff]
      %v209 = vld [vmem:[%s169 + $0xf8] sm:$0xff]
      %v210 = vld [vmem:[%s169 + $0x100] sm:$0xff]
      %v211 = vld [vmem:[%s169 + $0x108] sm:$0xff]
      %v212 = vld [vmem:[%s169 + $0x110] sm:$0xff]
      %v213 = vld [vmem:[%s169 + $0x118] sm:$0xff]
      %v214 = vld [vmem:[%s169 + $0x120] sm:$0xff]
      %v215 = vld [vmem:[%s169 + $0x128] sm:$0xff]
      %v216 = vld [vmem:[%s169 + $0x130] sm:$0xff]
      %v217 = vld [vmem:[%s169 + $0x138] sm:$0xff]
      %v218 = vld [vmem:[%s169 + $0x140] sm:$0xff]
      %v219 = vld [vmem:[%s169 + $0x148] sm:$0xff]
      %v220 = vld [vmem:[%s169 + $0x150] sm:$0xff]
      %v221 = vld [vmem:[%s169 + $0x158] sm:$0xff]
      %v222 = vld [vmem:[%s169 + $0x160] sm:$0xff]
      %v223 = vld [vmem:[%s169 + $0x168] sm:$0xff]
      %v224 = vld [vmem:[%s169 + $0x170] sm:$0xff]
      %v225 = vld [vmem:[%s169 + $0x178] sm:$0xff]
      %v226 = vld [vmem:[%s169 + $0x180] sm:$0xff]
      %v227 = vld [vmem:[%s169 + $0x188] sm:$0xff]
      %v228 = vld [vmem:[%s169 + $0x190] sm:$0xff]
      %v229 = vld [vmem:[%s169 + $0x198] sm:$0xff]
      %v230 = vld [vmem:[%s169 + $0x1a0] sm:$0xff]
      %v231 = vld [vmem:[%s169 + $0x1a8] sm:$0xff]
      %v232 = vld [vmem:[%s169 + $0x1b0] sm:$0xff]
      %v233 = vld [vmem:[%s169 + $0x1b8] sm:$0xff]
      %v234 = vld [vmem:[%s169 + $0x1c0] sm:$0xff]
      %v235 = vld [vmem:[%s169 + $0x1c8] sm:$0xff]
      %v236 = vld [vmem:[%s169 + $0x1d0] sm:$0xff]
      %v237 = vld [vmem:[%s169 + $0x1d8] sm:$0xff]
      %v238 = vld [vmem:[%s169 + $0x1e0] sm:$0xff]
      %v239 = vld [vmem:[%s169 + $0x1e8] sm:$0xff]
      %v240 = vld [vmem:[%s169 + $0x1f0] sm:$0xff]
      %v241 = vld [vmem:[%s169 + $0x1f8] sm:$0xff]
      %v242 = vld [vmem:[%s169 + $0x200] sm:$0xff]
      %v243 = vld [vmem:[%s169 + $0x208] sm:$0xff]
      %v244 = vld [vmem:[%s169 + $0x210] sm:$0xff]
      %v245 = vld [vmem:[%s169 + $0x218] sm:$0xff]
      %v246 = vld [vmem:[%s169 + $0x220] sm:$0xff]
      %v247 = vld [vmem:[%s169 + $0x228] sm:$0xff]
      %v248 = vld [vmem:[%s169 + $0x230] sm:$0xff]
      %v249 = vld [vmem:[%s169 + $0x238] sm:$0xff]
      %v250 = vld [vmem:[%s169 + $0x240] sm:$0xff]
      %v251 = vld [vmem:[%s169 + $0x248] sm:$0xff]
      %v252 = vld [vmem:[%s169 + $0x250] sm:$0xff]
      %v253 = vld [vmem:[%s169 + $0x258] sm:$0xff]
      %v254 = vld [vmem:[%s169 + $0x260] sm:$0xff]
      %v255 = vld [vmem:[%s169 + $0x268] sm:$0xff]
      %v256 = vld [vmem:[%s169 + $0x270] sm:$0xff]
      %v257 = vld [vmem:[%s169 + $0x278] sm:$0xff]
      %v258 = vld [vmem:[%s169 + $0x280] sm:$0xff]
      %v259 = vld [vmem:[%s169 + $0x288] sm:$0xff]
      %v260 = vld [vmem:[%s169 + $0x290] sm:$0xff]
      %v261 = vld [vmem:[%s169 + $0x298] sm:$0xff]
      %v262 = vld [vmem:[%s169 + $0x2a0] sm:$0xff]
      %v263 = vld [vmem:[%s169 + $0x2a8] sm:$0xff]
      %v264 = vld [vmem:[%s169 + $0x2b0] sm:$0xff]
      %v265 = vld [vmem:[%s169 + $0x2b8] sm:$0xff]
      %v266 = vld [vmem:[%s169 + $0x2c0] sm:$0xff]
      %v267 = vld [vmem:[%s169 + $0x2c8] sm:$0xff]
      %v268 = vld [vmem:[%s169 + $0x2d0] sm:$0xff]
      %v269 = vld [vmem:[%s169 + $0x2d8] sm:$0xff]
      %v270 = vld [vmem:[%s169 + $0x2e0] sm:$0xff]
      %v271 = vld [vmem:[%s169 + $0x2e8] sm:$0xff]
      %v272 = vld [vmem:[%s169 + $0x2f0] sm:$0xff]
      %v273 = vld [vmem:[%s169 + $0x2f8] sm:$0xff]
      %v274 = vld [vmem:[%s169 + $0x300] sm:$0xff]
      %v275 = vld [vmem:[%s169 + $0x308] sm:$0xff]
      %v276 = vld [vmem:[%s169 + $0x310] sm:$0xff]
      %v277 = vld [vmem:[%s169 + $0x318] sm:$0xff]
      %v278 = vld [vmem:[%s169 + $0x320] sm:$0xff]
      %v279 = vld [vmem:[%s169 + $0x328] sm:$0xff]
      %v280 = vld [vmem:[%s169 + $0x330] sm:$0xff]
      %v281 = vld [vmem:[%s169 + $0x338] sm:$0xff]
      %v282 = vld [vmem:[%s169 + $0x340] sm:$0xff]
      %v283 = vld [vmem:[%s169 + $0x348] sm:$0xff]
      %v284 = vld [vmem:[%s169 + $0x350] sm:$0xff]
      %v285 = vld [vmem:[%s169 + $0x358] sm:$0xff]
      %v286 = vld [vmem:[%s169 + $0x360] sm:$0xff]
      %v287 = vld [vmem:[%s169 + $0x368] sm:$0xff]
      %v288 = vld [vmem:[%s169 + $0x370] sm:$0xff]
      %v289 = vld [vmem:[%s169 + $0x378] sm:$0xff]
      %v290 = vld [vmem:[%s169 + $0x380] sm:$0xff]
      %v291 = vld [vmem:[%s169 + $0x388] sm:$0xff]
      %v292 = vld [vmem:[%s169 + $0x390] sm:$0xff]
      %v293 = vld [vmem:[%s169 + $0x398] sm:$0xff]
      %v294 = vld [vmem:[%s169 + $0x3a0] sm:$0xff]
      %v295 = vld [vmem:[%s169 + $0x3a8] sm:$0xff]
      %v296 = vld [vmem:[%s169 + $0x3b0] sm:$0xff]
      %v297 = vld [vmem:[%s169 + $0x3b8] sm:$0xff]
      %v298 = vld [vmem:[%s169 + $0x3c0] sm:$0xff]
      %v299 = vld [vmem:[%s169 + $0x3c8] sm:$0xff]
      %v300 = vld [vmem:[%s169 + $0x3d0] sm:$0xff]
      %v301 = vld [vmem:[%s169 + $0x3d8] sm:$0xff]
      %v302 = vld [vmem:[%s169 + $0x3e0] sm:$0xff]
      %v303 = vld [vmem:[%s169 + $0x3e8] sm:$0xff]
      %v304 = vld [vmem:[%s169 + $0x3f0] sm:$0xff]
      %v305 = vld [vmem:[%s169 + $0x3f8] sm:$0xff]
      %v306 = vld [vmem:[%s169 + $0x400] sm:$0xff]
      %v307 = vld [vmem:[%s169 + $0x408] sm:$0xff]
      %v308 = vld [vmem:[%s169 + $0x410] sm:$0xff]
      %v309 = vld [vmem:[%s169 + $0x418] sm:$0xff]
      %v310 = vld [vmem:[%s169 + $0x420] sm:$0xff]
      %v311 = vld [vmem:[%s169 + $0x428] sm:$0xff]
      %v312 = vld [vmem:[%s169 + $0x430] sm:$0xff]
      %v313 = vld [vmem:[%s169 + $0x438] sm:$0xff]
      %v314 = vld [vmem:[%s169 + $0x440] sm:$0xff]
      %v315 = vld [vmem:[%s169 + $0x448] sm:$0xff]
      %v316 = vld [vmem:[%s169 + $0x450] sm:$0xff]
      %v317 = vld [vmem:[%s169 + $0x458] sm:$0xff]
      %v318 = vld [vmem:[%s169 + $0x460] sm:$0xff]
      %v319 = vld [vmem:[%s169 + $0x468] sm:$0xff]
      %v320 = vld [vmem:[%s169 + $0x470] sm:$0xff]
      %v321 = vld [vmem:[%s169 + $0x478] sm:$0xff]
      %v322 = vld [vmem:[%s169 + $0x480] sm:$0xff]
      %v323 = vld [vmem:[%s169 + $0x488] sm:$0xff]
      %v324 = vld [vmem:[%s169 + $0x490] sm:$0xff]
      %v325 = vld [vmem:[%s169 + $0x498] sm:$0xff]
      %v326 = vld [vmem:[%s169 + $0x4a0] sm:$0xff]
      %v327 = vld [vmem:[%s169 + $0x4a8] sm:$0xff]
      %v328 = vld [vmem:[%s169 + $0x4b0] sm:$0xff]
      %v329 = vld [vmem:[%s169 + $0x4b8] sm:$0xff]
      %v330 = vld [vmem:[%s169 + $0x4c0] sm:$0xff]
      %v331 = vld [vmem:[%s169 + $0x4c8] sm:$0xff]
      %v332 = vld [vmem:[%s169 + $0x4d0] sm:$0xff]
      %v333 = vld [vmem:[%s169 + $0x4d8] sm:$0xff]
      %v334 = vld [vmem:[%s169 + $0x4e0] sm:$0xff]
      %v335 = vld [vmem:[%s169 + $0x4e8] sm:$0xff]
      %v336 = vld [vmem:[%s169 + $0x4f0] sm:$0xff]
      %v337 = vld [vmem:[%s169 + $0x4f8] sm:$0xff]
      %v338 = vld [vmem:[%s169 + $0x500] sm:$0xff]
      %v339 = vld [vmem:[%s169 + $0x508] sm:$0xff]
      %v340 = vld [vmem:[%s169 + $0x510] sm:$0xff]
      %v341 = vld [vmem:[%s169 + $0x518] sm:$0xff]
      %v342 = vld [vmem:[%s169 + $0x520] sm:$0xff]
      %v343 = vld [vmem:[%s169 + $0x528] sm:$0xff]
      %v344 = vld [vmem:[%s169 + $0x530] sm:$0xff]
      %v345 = vld [vmem:[%s169 + $0x538] sm:$0xff]
      %v346 = vld [vmem:[%s169 + $0x540] sm:$0xff]
      %v347 = vld [vmem:[%s169 + $0x548] sm:$0xff]
      %v348 = vld [vmem:[%s169 + $0x550] sm:$0xff]
      %v349 = vld [vmem:[%s169 + $0x558] sm:$0xff]
      %v350 = vld [vmem:[%s169 + $0x560] sm:$0xff]
      %v351 = vld [vmem:[%s169 + $0x568] sm:$0xff]
      %v352 = vld [vmem:[%s169 + $0x570] sm:$0xff]
      %v353 = vld [vmem:[%s169 + $0x578] sm:$0xff]
      %v354 = vld [vmem:[%s169 + $0x580] sm:$0xff]
      %v355 = vld [vmem:[%s169 + $0x588] sm:$0xff]
      %v356 = vld [vmem:[%s169 + $0x590] sm:$0xff]
      %v357 = vld [vmem:[%s169 + $0x598] sm:$0xff]
      %v358 = vld [vmem:[%s169 + $0x5a0] sm:$0xff]
      %v359 = vld [vmem:[%s169 + $0x5a8] sm:$0xff]
      %v360 = vld [vmem:[%s169 + $0x5b0] sm:$0xff]
      %v361 = vld [vmem:[%s169 + $0x5b8] sm:$0xff]
      %v362 = vld [vmem:[%s169 + $0x5c0] sm:$0xff]
      %v363 = vld [vmem:[%s169 + $0x5c8] sm:$0xff]
      %v364 = vld [vmem:[%s169 + $0x5d0] sm:$0xff]
      %v365 = vld [vmem:[%s169 + $0x5d8] sm:$0xff]
      %v366 = vld [vmem:[%s169 + $0x5e0] sm:$0xff]
      %v367 = vld [vmem:[%s169 + $0x5e8] sm:$0xff]
      %v368 = vld [vmem:[%s169 + $0x5f0] sm:$0xff]
      %v369 = vld [vmem:[%s169 + $0x5f8] sm:$0xff]
      %v370 = vld [vmem:[%s169 + $0x600] sm:$0xff]
      %v371 = vld [vmem:[%s169 + $0x608] sm:$0xff]
      %v372 = vld [vmem:[%s169 + $0x610] sm:$0xff]
      %v373 = vld [vmem:[%s169 + $0x618] sm:$0xff]
      %v374 = vld [vmem:[%s169 + $0x620] sm:$0xff]
      %v375 = vld [vmem:[%s169 + $0x628] sm:$0xff]
      %v376 = vld [vmem:[%s169 + $0x630] sm:$0xff]
      %v377 = vld [vmem:[%s169 + $0x638] sm:$0xff]
      %v378 = vld [vmem:[%s169 + $0x640] sm:$0xff]
      %v379 = vld [vmem:[%s169 + $0x648] sm:$0xff]
      %v380 = vld [vmem:[%s169 + $0x650] sm:$0xff]
      %v381 = vld [vmem:[%s169 + $0x658] sm:$0xff]
      %v382 = vld [vmem:[%s169 + $0x660] sm:$0xff]
      %v383 = vld [vmem:[%s169 + $0x668] sm:$0xff]
      %v384 = vld [vmem:[%s169 + $0x670] sm:$0xff]
      %v385 = vld [vmem:[%s169 + $0x678] sm:$0xff]
      %v386 = vld [vmem:[%s169 + $0x680] sm:$0xff]
      %v387 = vld [vmem:[%s169 + $0x688] sm:$0xff]
      %v388 = vld [vmem:[%s169 + $0x690] sm:$0xff]
      %v389 = vld [vmem:[%s169 + $0x698] sm:$0xff]
      %v390 = vld [vmem:[%s169 + $0x6a0] sm:$0xff]
      %v391 = vld [vmem:[%s169 + $0x6a8] sm:$0xff]
      %v392 = vld [vmem:[%s169 + $0x6b0] sm:$0xff]
      %v393 = vld [vmem:[%s169 + $0x6b8] sm:$0xff]
      %v394 = vld [vmem:[%s169 + $0x6c0] sm:$0xff]
      %v395 = vld [vmem:[%s169 + $0x6c8] sm:$0xff]
      %v396 = vld [vmem:[%s169 + $0x6d0] sm:$0xff]
      %v397 = vld [vmem:[%s169 + $0x6d8] sm:$0xff]
      %v398 = vld [vmem:[%s169 + $0x6e0] sm:$0xff]
      %v399 = vld [vmem:[%s169 + $0x6e8] sm:$0xff]
      %v400 = vld [vmem:[%s169 + $0x6f0] sm:$0xff]
      %v401 = vld [vmem:[%s169 + $0x6f8] sm:$0xff]
      %v402 = vld [vmem:[%s169 + $0x700] sm:$0xff]
      %v403 = vld [vmem:[%s169 + $0x708] sm:$0xff]
      %v404 = vld [vmem:[%s169 + $0x710] sm:$0xff]
      %v405 = vld [vmem:[%s169 + $0x718] sm:$0xff]
      %v406 = vld [vmem:[%s169 + $0x720] sm:$0xff]
      %v407 = vld [vmem:[%s169 + $0x728] sm:$0xff]
      %v408 = vld [vmem:[%s169 + $0x730] sm:$0xff]
      %v409 = vld [vmem:[%s169 + $0x738] sm:$0xff]
      %v410 = vld [vmem:[%s169 + $0x740] sm:$0xff]
      %v411 = vld [vmem:[%s169 + $0x748] sm:$0xff]
      %v412 = vld [vmem:[%s169 + $0x750] sm:$0xff]
      %v413 = vld [vmem:[%s169 + $0x758] sm:$0xff]
      %v414 = vld [vmem:[%s169 + $0x760] sm:$0xff]
      %v415 = vld [vmem:[%s169 + $0x768] sm:$0xff]
      %v416 = vld [vmem:[%s169 + $0x770] sm:$0xff]
      %v417 = vld [vmem:[%s169 + $0x778] sm:$0xff]
      %v418 = vld [vmem:[%s169 + $0x780] sm:$0xff]
      %v419 = vld [vmem:[%s169 + $0x788] sm:$0xff]
      %v420 = vld [vmem:[%s169 + $0x790] sm:$0xff]
      %v421 = vld [vmem:[%s169 + $0x798] sm:$0xff]
      %v422 = vld [vmem:[%s169 + $0x7a0] sm:$0xff]
      %v423 = vld [vmem:[%s169 + $0x7a8] sm:$0xff]
      %v424 = vld [vmem:[%s169 + $0x7b0] sm:$0xff]
      %v425 = vld [vmem:[%s169 + $0x7b8] sm:$0xff]
      %v426 = vld [vmem:[%s169 + $0x7c0] sm:$0xff]
      %v427 = vld [vmem:[%s169 + $0x7c8] sm:$0xff]
      %v428 = vld [vmem:[%s169 + $0x7d0] sm:$0xff]
      %v429 = vld [vmem:[%s169 + $0x7d8] sm:$0xff]
      %v430 = vld [vmem:[%s169 + $0x7e0] sm:$0xff]
      %v431 = vld [vmem:[%s169 + $0x7e8] sm:$0xff]
      %v432 = vld [vmem:[%s169 + $0x7f0] sm:$0xff]
      %v433 = vld [vmem:[%s169 + $0x7f8] sm:$0xff]
      %v434 = vld [vmem:[%s1] sm:$0xf]
      %v435 = vld [vmem:[%s1 + $0x4] sm:$0xf]
      %v436 = vld [vmem:[%s1 + $0x8] sm:$0xf]
      %v437 = vld [vmem:[%s1 + $0xc] sm:$0xf]
      %v438 = vld [vmem:[%s1 + $0x10] sm:$0xf]
      %v439 = vld [vmem:[%s1 + $0x14] sm:$0xf]
      %v440 = vld [vmem:[%s1 + $0x18] sm:$0xf]
      %v441 = vld [vmem:[%s1 + $0x1c] sm:$0xf]
      %v442 = vld [vmem:[%s1 + $0x20] sm:$0xf]
      %v443 = vld [vmem:[%s1 + $0x24] sm:$0xf]
      %v444 = vld [vmem:[%s1 + $0x28] sm:$0xf]
      %v445 = vld [vmem:[%s1 + $0x2c] sm:$0xf]
      %v446 = vld [vmem:[%s1 + $0x30] sm:$0xf]
      %v447 = vld [vmem:[%s1 + $0x34] sm:$0xf]
      %v448 = vld [vmem:[%s1 + $0x38] sm:$0xf]
      %v449 = vld [vmem:[%s1 + $0x3c] sm:$0xf]
      %v450 = vld [vmem:[%s1 + $0x40] sm:$0xf]
      %v451 = vld [vmem:[%s1 + $0x44] sm:$0xf]
      %v452 = vld [vmem:[%s1 + $0x48] sm:$0xf]
      %v453 = vld [vmem:[%s1 + $0x4c] sm:$0xf]
      %v454 = vld [vmem:[%s1 + $0x50] sm:$0xf]
      %v455 = vld [vmem:[%s1 + $0x54] sm:$0xf]
      %v456 = vld [vmem:[%s1 + $0x58] sm:$0xf]
      %v457 = vld [vmem:[%s1 + $0x5c] sm:$0xf]
      %v458 = vld [vmem:[%s1 + $0x60] sm:$0xf]
      %v459 = vld [vmem:[%s1 + $0x64] sm:$0xf]
      %v460 = vld [vmem:[%s1 + $0x68] sm:$0xf]
      %v461 = vld [vmem:[%s1 + $0x6c] sm:$0xf]
      %v462 = vld [vmem:[%s1 + $0x70] sm:$0xf]
      %v463 = vld [vmem:[%s1 + $0x74] sm:$0xf]
      %v464 = vld [vmem:[%s1 + $0x78] sm:$0xf]
      %v465 = vld [vmem:[%s1 + $0x7c] sm:$0xf]
      %v466 = vld [vmem:[%s1 + $0x80] sm:$0xf]
      %v467 = vld [vmem:[%s1 + $0x84] sm:$0xf]
      %v468 = vld [vmem:[%s1 + $0x88] sm:$0xf]
      %v469 = vld [vmem:[%s1 + $0x8c] sm:$0xf]
      %v470 = vld [vmem:[%s1 + $0x90] sm:$0xf]
      %v471 = vld [vmem:[%s1 + $0x94] sm:$0xf]
      %v472 = vld [vmem:[%s1 + $0x98] sm:$0xf]
      %v473 = vld [vmem:[%s1 + $0x9c] sm:$0xf]
      %v474 = vld [vmem:[%s1 + $0xa0] sm:$0xf]
      %v475 = vld [vmem:[%s1 + $0xa4] sm:$0xf]
      %v476 = vld [vmem:[%s1 + $0xa8] sm:$0xf]
      %v477 = vld [vmem:[%s1 + $0xac] sm:$0xf]
      %v478 = vld [vmem:[%s1 + $0xb0] sm:$0xf]
      %v479 = vld [vmem:[%s1 + $0xb4] sm:$0xf]
      %v480 = vld [vmem:[%s1 + $0xb8] sm:$0xf]
      %v481 = vld [vmem:[%s1 + $0xbc] sm:$0xf]
      %v482 = vld [vmem:[%s1 + $0xc0] sm:$0xf]
      %v483 = vld [vmem:[%s1 + $0xc4] sm:$0xf]
      %v484 = vld [vmem:[%s1 + $0xc8] sm:$0xf]
      %v485 = vld [vmem:[%s1 + $0xcc] sm:$0xf]
      %v486 = vld [vmem:[%s1 + $0xd0] sm:$0xf]
      %v487 = vld [vmem:[%s1 + $0xd4] sm:$0xf]
      %v488 = vld [vmem:[%s1 + $0xd8] sm:$0xf]
      %v489 = vld [vmem:[%s1 + $0xdc] sm:$0xf]
      %v490 = vld [vmem:[%s1 + $0xe0] sm:$0xf]
      %v491 = vld [vmem:[%s1 + $0xe4] sm:$0xf]
      %v492 = vld [vmem:[%s1 + $0xe8] sm:$0xf]
      %v493 = vld [vmem:[%s1 + $0xec] sm:$0xf]
      %v494 = vld [vmem:[%s1 + $0xf0] sm:$0xf]
      %v495 = vld [vmem:[%s1 + $0xf4] sm:$0xf]
      %v496 = vld [vmem:[%s1 + $0xf8] sm:$0xf]
      %v497 = vld [vmem:[%s1 + $0xfc] sm:$0xf]
      %v498 = vld [vmem:[%s1 + $0x100] sm:$0xf]
      %v499 = vld [vmem:[%s1 + $0x104] sm:$0xf]
      %v500 = vld [vmem:[%s1 + $0x108] sm:$0xf]
      %v501 = vld [vmem:[%s1 + $0x10c] sm:$0xf]
      %v502 = vld [vmem:[%s1 + $0x110] sm:$0xf]
      %v503 = vld [vmem:[%s1 + $0x114] sm:$0xf]
      %v504 = vld [vmem:[%s1 + $0x118] sm:$0xf]
      %v505 = vld [vmem:[%s1 + $0x11c] sm:$0xf]
      %v506 = vld [vmem:[%s1 + $0x120] sm:$0xf]
      %v507 = vld [vmem:[%s1 + $0x124] sm:$0xf]
      %v508 = vld [vmem:[%s1 + $0x128] sm:$0xf]
      %v509 = vld [vmem:[%s1 + $0x12c] sm:$0xf]
      %v510 = vld [vmem:[%s1 + $0x130] sm:$0xf]
      %v511 = vld [vmem:[%s1 + $0x134] sm:$0xf]
      %v512 = vld [vmem:[%s1 + $0x138] sm:$0xf]
      %v513 = vld [vmem:[%s1 + $0x13c] sm:$0xf]
      %v514 = vld [vmem:[%s1 + $0x140] sm:$0xf]
      %v515 = vld [vmem:[%s1 + $0x144] sm:$0xf]
      %v516 = vld [vmem:[%s1 + $0x148] sm:$0xf]
      %v517 = vld [vmem:[%s1 + $0x14c] sm:$0xf]
      %v518 = vld [vmem:[%s1 + $0x150] sm:$0xf]
      %v519 = vld [vmem:[%s1 + $0x154] sm:$0xf]
      %v520 = vld [vmem:[%s1 + $0x158] sm:$0xf]
      %v521 = vld [vmem:[%s1 + $0x15c] sm:$0xf]
      %v522 = vld [vmem:[%s1 + $0x160] sm:$0xf]
      %v523 = vld [vmem:[%s1 + $0x164] sm:$0xf]
      %v524 = vld [vmem:[%s1 + $0x168] sm:$0xf]
      %v525 = vld [vmem:[%s1 + $0x16c] sm:$0xf]
      %v526 = vld [vmem:[%s1 + $0x170] sm:$0xf]
      %v527 = vld [vmem:[%s1 + $0x174] sm:$0xf]
      %v528 = vld [vmem:[%s1 + $0x178] sm:$0xf]
      %v529 = vld [vmem:[%s1 + $0x17c] sm:$0xf]
      %v530 = vld [vmem:[%s1 + $0x180] sm:$0xf]
      %v531 = vld [vmem:[%s1 + $0x184] sm:$0xf]
      %v532 = vld [vmem:[%s1 + $0x188] sm:$0xf]
      %v533 = vld [vmem:[%s1 + $0x18c] sm:$0xf]
      %v534 = vld [vmem:[%s1 + $0x190] sm:$0xf]
      %v535 = vld [vmem:[%s1 + $0x194] sm:$0xf]
      %v536 = vld [vmem:[%s1 + $0x198] sm:$0xf]
      %v537 = vld [vmem:[%s1 + $0x19c] sm:$0xf]
      %v538 = vld [vmem:[%s1 + $0x1a0] sm:$0xf]
      %v539 = vld [vmem:[%s1 + $0x1a4] sm:$0xf]
      %v540 = vld [vmem:[%s1 + $0x1a8] sm:$0xf]
      %v541 = vld [vmem:[%s1 + $0x1ac] sm:$0xf]
      %v542 = vld [vmem:[%s1 + $0x1b0] sm:$0xf]
      %v543 = vld [vmem:[%s1 + $0x1b4] sm:$0xf]
      %v544 = vld [vmem:[%s1 + $0x1b8] sm:$0xf]
      %v545 = vld [vmem:[%s1 + $0x1bc] sm:$0xf]
      %v546 = vld [vmem:[%s1 + $0x1c0] sm:$0xf]
      %v547 = vld [vmem:[%s1 + $0x1c4] sm:$0xf]
      %v548 = vld [vmem:[%s1 + $0x1c8] sm:$0xf]
      %v549 = vld [vmem:[%s1 + $0x1cc] sm:$0xf]
      %v550 = vld [vmem:[%s1 + $0x1d0] sm:$0xf]
      %v551 = vld [vmem:[%s1 + $0x1d4] sm:$0xf]
      %v552 = vld [vmem:[%s1 + $0x1d8] sm:$0xf]
      %v553 = vld [vmem:[%s1 + $0x1dc] sm:$0xf]
      %v554 = vld [vmem:[%s1 + $0x1e0] sm:$0xf]
      %v555 = vld [vmem:[%s1 + $0x1e4] sm:$0xf]
      %v556 = vld [vmem:[%s1 + $0x1e8] sm:$0xf]
      %v557 = vld [vmem:[%s1 + $0x1ec] sm:$0xf]
      %v558 = vld [vmem:[%s1 + $0x1f0] sm:$0xf]
      %v559 = vld [vmem:[%s1 + $0x1f4] sm:$0xf]
      %v560 = vld [vmem:[%s1 + $0x1f8] sm:$0xf]
      %v561 = vld [vmem:[%s1 + $0x1fc] sm:$0xf]
      %v562 = vld [vmem:[%s1 + $0x200] sm:$0xf]
      %v563 = vld [vmem:[%s1 + $0x204] sm:$0xf]
      %v564 = vld [vmem:[%s1 + $0x208] sm:$0xf]
      %v565 = vld [vmem:[%s1 + $0x20c] sm:$0xf]
      %v566 = vld [vmem:[%s1 + $0x210] sm:$0xf]
      %v567 = vld [vmem:[%s1 + $0x214] sm:$0xf]
      %v568 = vld [vmem:[%s1 + $0x218] sm:$0xf]
      %v569 = vld [vmem:[%s1 + $0x21c] sm:$0xf]
      %v570 = vld [vmem:[%s1 + $0x220] sm:$0xf]
      %v571 = vld [vmem:[%s1 + $0x224] sm:$0xf]
      %v572 = vld [vmem:[%s1 + $0x228] sm:$0xf]
      %v573 = vld [vmem:[%s1 + $0x22c] sm:$0xf]
      %v574 = vld [vmem:[%s1 + $0x230] sm:$0xf]
      %v575 = vld [vmem:[%s1 + $0x234] sm:$0xf]
      %v576 = vld [vmem:[%s1 + $0x238] sm:$0xf]
      %v577 = vld [vmem:[%s1 + $0x23c] sm:$0xf]
      %v578 = vld [vmem:[%s1 + $0x240] sm:$0xf]
      %v579 = vld [vmem:[%s1 + $0x244] sm:$0xf]
      %v580 = vld [vmem:[%s1 + $0x248] sm:$0xf]
      %v581 = vld [vmem:[%s1 + $0x24c] sm:$0xf]
      %v582 = vld [vmem:[%s1 + $0x250] sm:$0xf]
      %v583 = vld [vmem:[%s1 + $0x254] sm:$0xf]
      %v584 = vld [vmem:[%s1 + $0x258] sm:$0xf]
      %v585 = vld [vmem:[%s1 + $0x25c] sm:$0xf]
      %v586 = vld [vmem:[%s1 + $0x260] sm:$0xf]
      %v587 = vld [vmem:[%s1 + $0x264] sm:$0xf]
      %v588 = vld [vmem:[%s1 + $0x268] sm:$0xf]
      %v589 = vld [vmem:[%s1 + $0x26c] sm:$0xf]
      %v590 = vld [vmem:[%s1 + $0x270] sm:$0xf]
      %v591 = vld [vmem:[%s1 + $0x274] sm:$0xf]
      %v592 = vld [vmem:[%s1 + $0x278] sm:$0xf]
      %v593 = vld [vmem:[%s1 + $0x27c] sm:$0xf]
      %v594 = vld [vmem:[%s1 + $0x280] sm:$0xf]
      %v595 = vld [vmem:[%s1 + $0x284] sm:$0xf]
      %v596 = vld [vmem:[%s1 + $0x288] sm:$0xf]
      %v597 = vld [vmem:[%s1 + $0x28c] sm:$0xf]
      %v598 = vld [vmem:[%s1 + $0x290] sm:$0xf]
      %v599 = vld [vmem:[%s1 + $0x294] sm:$0xf]
      %v600 = vld [vmem:[%s1 + $0x298] sm:$0xf]
      %v601 = vld [vmem:[%s1 + $0x29c] sm:$0xf]
      %v602 = vld [vmem:[%s1 + $0x2a0] sm:$0xf]
      %v603 = vld [vmem:[%s1 + $0x2a4] sm:$0xf]
      %v604 = vld [vmem:[%s1 + $0x2a8] sm:$0xf]
      %v605 = vld [vmem:[%s1 + $0x2ac] sm:$0xf]
      %v606 = vld [vmem:[%s1 + $0x2b0] sm:$0xf]
      %v607 = vld [vmem:[%s1 + $0x2b4] sm:$0xf]
      %v608 = vld [vmem:[%s1 + $0x2b8] sm:$0xf]
      %v609 = vld [vmem:[%s1 + $0x2bc] sm:$0xf]
      %v610 = vld [vmem:[%s1 + $0x2c0] sm:$0xf]
      %v611 = vld [vmem:[%s1 + $0x2c4] sm:$0xf]
      %v612 = vld [vmem:[%s1 + $0x2c8] sm:$0xf]
      %v613 = vld [vmem:[%s1 + $0x2cc] sm:$0xf]
      %v614 = vld [vmem:[%s1 + $0x2d0] sm:$0xf]
      %v615 = vld [vmem:[%s1 + $0x2d4] sm:$0xf]
      %v616 = vld [vmem:[%s1 + $0x2d8] sm:$0xf]
      %v617 = vld [vmem:[%s1 + $0x2dc] sm:$0xf]
      %v618 = vld [vmem:[%s1 + $0x2e0] sm:$0xf]
      %v619 = vld [vmem:[%s1 + $0x2e4] sm:$0xf]
      %v620 = vld [vmem:[%s1 + $0x2e8] sm:$0xf]
      %v621 = vld [vmem:[%s1 + $0x2ec] sm:$0xf]
      %v622 = vld [vmem:[%s1 + $0x2f0] sm:$0xf]
      %v623 = vld [vmem:[%s1 + $0x2f4] sm:$0xf]
      %v624 = vld [vmem:[%s1 + $0x2f8] sm:$0xf]
      %v625 = vld [vmem:[%s1 + $0x2fc] sm:$0xf]
      %v626 = vld [vmem:[%s1 + $0x300] sm:$0xf]
      %v627 = vld [vmem:[%s1 + $0x304] sm:$0xf]
      %v628 = vld [vmem:[%s1 + $0x308] sm:$0xf]
      %v629 = vld [vmem:[%s1 + $0x30c] sm:$0xf]
      %v630 = vld [vmem:[%s1 + $0x310] sm:$0xf]
      %v631 = vld [vmem:[%s1 + $0x314] sm:$0xf]
      %v632 = vld [vmem:[%s1 + $0x318] sm:$0xf]
      %v633 = vld [vmem:[%s1 + $0x31c] sm:$0xf]
      %v634 = vld [vmem:[%s1 + $0x320] sm:$0xf]
      %v635 = vld [vmem:[%s1 + $0x324] sm:$0xf]
      %v636 = vld [vmem:[%s1 + $0x328] sm:$0xf]
      %v637 = vld [vmem:[%s1 + $0x32c] sm:$0xf]
      %v638 = vld [vmem:[%s1 + $0x330] sm:$0xf]
      %v639 = vld [vmem:[%s1 + $0x334] sm:$0xf]
      %v640 = vld [vmem:[%s1 + $0x338] sm:$0xf]
      %v641 = vld [vmem:[%s1 + $0x33c] sm:$0xf]
      %v642 = vld [vmem:[%s1 + $0x340] sm:$0xf]
      %v643 = vld [vmem:[%s1 + $0x344] sm:$0xf]
      %v644 = vld [vmem:[%s1 + $0x348] sm:$0xf]
      %v645 = vld [vmem:[%s1 + $0x34c] sm:$0xf]
      %v646 = vld [vmem:[%s1 + $0x350] sm:$0xf]
      %v647 = vld [vmem:[%s1 + $0x354] sm:$0xf]
      %v648 = vld [vmem:[%s1 + $0x358] sm:$0xf]
      %v649 = vld [vmem:[%s1 + $0x35c] sm:$0xf]
      %v650 = vld [vmem:[%s1 + $0x360] sm:$0xf]
      %v651 = vld [vmem:[%s1 + $0x364] sm:$0xf]
      %v652 = vld [vmem:[%s1 + $0x368] sm:$0xf]
      %v653 = vld [vmem:[%s1 + $0x36c] sm:$0xf]
      %v654 = vld [vmem:[%s1 + $0x370] sm:$0xf]
      %v655 = vld [vmem:[%s1 + $0x374] sm:$0xf]
      %v656 = vld [vmem:[%s1 + $0x378] sm:$0xf]
      %v657 = vld [vmem:[%s1 + $0x37c] sm:$0xf]
      %v658 = vld [vmem:[%s1 + $0x380] sm:$0xf]
      %v659 = vld [vmem:[%s1 + $0x384] sm:$0xf]
      %v660 = vld [vmem:[%s1 + $0x388] sm:$0xf]
      %v661 = vld [vmem:[%s1 + $0x38c] sm:$0xf]
      %v662 = vld [vmem:[%s1 + $0x390] sm:$0xf]
      %v663 = vld [vmem:[%s1 + $0x394] sm:$0xf]
      %v664 = vld [vmem:[%s1 + $0x398] sm:$0xf]
      %v665 = vld [vmem:[%s1 + $0x39c] sm:$0xf]
      %v666 = vld [vmem:[%s1 + $0x3a0] sm:$0xf]
      %v667 = vld [vmem:[%s1 + $0x3a4] sm:$0xf]
      %v668 = vld [vmem:[%s1 + $0x3a8] sm:$0xf]
      %v669 = vld [vmem:[%s1 + $0x3ac] sm:$0xf]
      %v670 = vld [vmem:[%s1 + $0x3b0] sm:$0xf]
      %v671 = vld [vmem:[%s1 + $0x3b4] sm:$0xf]
      %v672 = vld [vmem:[%s1 + $0x3b8] sm:$0xf]
      %v673 = vld [vmem:[%s1 + $0x3bc] sm:$0xf]
      %v674 = vld [vmem:[%s1 + $0x3c0] sm:$0xf]
      %v675 = vld [vmem:[%s1 + $0x3c4] sm:$0xf]
      %v676 = vld [vmem:[%s1 + $0x3c8] sm:$0xf]
      %v677 = vld [vmem:[%s1 + $0x3cc] sm:$0xf]
      %v678 = vld [vmem:[%s1 + $0x3d0] sm:$0xf]
      %v679 = vld [vmem:[%s1 + $0x3d4] sm:$0xf]
      %v680 = vld [vmem:[%s1 + $0x3d8] sm:$0xf]
      %v681 = vld [vmem:[%s1 + $0x3dc] sm:$0xf]
      %v682 = vld [vmem:[%s1 + $0x3e0] sm:$0xf]
      %v683 = vld [vmem:[%s1 + $0x3e4] sm:$0xf]
      %v684 = vld [vmem:[%s1 + $0x3e8] sm:$0xf]
      %v685 = vld [vmem:[%s1 + $0x3ec] sm:$0xf]
      %v686 = vld [vmem:[%s1 + $0x3f0] sm:$0xf]
      %v687 = vld [vmem:[%s1 + $0x3f4] sm:$0xf]
      %v688 = vld [vmem:[%s1 + $0x3f8] sm:$0xf]
      %v689 = vld [vmem:[%s1 + $0x3fc] sm:$0xf]
      %v690 = vld [vmem:[%s2] sm:$0x1]
      %v692 = vlaneseq
      %v693 = vshrl.u32 %v692, 7
      %v694 = vsub.s32 0, %v693
      %v695 = vrot.slane %v690, %v694
      %v953 = vunpack.c.l.b16 %v178
      %v954 = vunpack.c.h.b16 %v178
      %v955 = vunpack.c.l.b16 %v179
      %v956 = vunpack.c.h.b16 %v179
      %v957 = vunpack.c.l.b16 %v180
      %v958 = vunpack.c.h.b16 %v180
      %v959 = vunpack.c.l.b16 %v181
      %v960 = vunpack.c.h.b16 %v181
      %v961 = vunpack.c.l.b16 %v182
      %v962 = vunpack.c.h.b16 %v182
      %v963 = vunpack.c.l.b16 %v183
      %v964 = vunpack.c.h.b16 %v183
      %v965 = vunpack.c.l.b16 %v184
      %v966 = vunpack.c.h.b16 %v184
      %v967 = vunpack.c.l.b16 %v185
      %v968 = vunpack.c.h.b16 %v185
      %v969 = vunpack.c.l.b16 %v186
      %v970 = vunpack.c.h.b16 %v186
      %v971 = vunpack.c.l.b16 %v187
      %v972 = vunpack.c.h.b16 %v187
      %v973 = vunpack.c.l.b16 %v188
      %v974 = vunpack.c.h.b16 %v188
      %v975 = vunpack.c.l.b16 %v189
      %v976 = vunpack.c.h.b16 %v189
      %v977 = vunpack.c.l.b16 %v190
      %v978 = vunpack.c.h.b16 %v190
      %v979 = vunpack.c.l.b16 %v191
      %v980 = vunpack.c.h.b16 %v191
      %v981 = vunpack.c.l.b16 %v192
      %v982 = vunpack.c.h.b16 %v192
      %v983 = vunpack.c.l.b16 %v193
      %v984 = vunpack.c.h.b16 %v193
      %v985 = vunpack.c.l.b16 %v194
      %v986 = vunpack.c.h.b16 %v194
      %v987 = vunpack.c.l.b16 %v195
      %v988 = vunpack.c.h.b16 %v195
      %v989 = vunpack.c.l.b16 %v196
      %v990 = vunpack.c.h.b16 %v196
      %v991 = vunpack.c.l.b16 %v197
      %v992 = vunpack.c.h.b16 %v197
      %v993 = vunpack.c.l.b16 %v198
      %v994 = vunpack.c.h.b16 %v198
      %v995 = vunpack.c.l.b16 %v199
      %v996 = vunpack.c.h.b16 %v199
      %v997 = vunpack.c.l.b16 %v200
      %v998 = vunpack.c.h.b16 %v200
      %v999 = vunpack.c.l.b16 %v201
      %v1000 = vunpack.c.h.b16 %v201
      %v1001 = vunpack.c.l.b16 %v202
      %v1002 = vunpack.c.h.b16 %v202
      %v1003 = vunpack.c.l.b16 %v203
      %v1004 = vunpack.c.h.b16 %v203
      %v1005 = vunpack.c.l.b16 %v204
      %v1006 = vunpack.c.h.b16 %v204
      %v1007 = vunpack.c.l.b16 %v205
      %v1008 = vunpack.c.h.b16 %v205
      %v1009 = vunpack.c.l.b16 %v206
      %v1010 = vunpack.c.h.b16 %v206
      %v1011 = vunpack.c.l.b16 %v207
      %v1012 = vunpack.c.h.b16 %v207
      %v1013 = vunpack.c.l.b16 %v208
      %v1014 = vunpack.c.h.b16 %v208
      %v1015 = vunpack.c.l.b16 %v209
      %v1016 = vunpack.c.h.b16 %v209
      %v1017 = vunpack.c.l.b16 %v210
      %v1018 = vunpack.c.h.b16 %v210
      %v1019 = vunpack.c.l.b16 %v211
      %v1020 = vunpack.c.h.b16 %v211
      %v1021 = vunpack.c.l.b16 %v212
      %v1022 = vunpack.c.h.b16 %v212
      %v1023 = vunpack.c.l.b16 %v213
      %v1024 = vunpack.c.h.b16 %v213
      %v1025 = vunpack.c.l.b16 %v214
      %v1026 = vunpack.c.h.b16 %v214
      %v1027 = vunpack.c.l.b16 %v215
      %v1028 = vunpack.c.h.b16 %v215
      %v1029 = vunpack.c.l.b16 %v216
      %v1030 = vunpack.c.h.b16 %v216
      %v1031 = vunpack.c.l.b16 %v217
      %v1032 = vunpack.c.h.b16 %v217
      %v1033 = vunpack.c.l.b16 %v218
      %v1034 = vunpack.c.h.b16 %v218
      %v1035 = vunpack.c.l.b16 %v219
      %v1036 = vunpack.c.h.b16 %v219
      %v1037 = vunpack.c.l.b16 %v220
      %v1038 = vunpack.c.h.b16 %v220
      %v1039 = vunpack.c.l.b16 %v221
      %v1040 = vunpack.c.h.b16 %v221
      %v1041 = vunpack.c.l.b16 %v222
      %v1042 = vunpack.c.h.b16 %v222
      %v1043 = vunpack.c.l.b16 %v223
      %v1044 = vunpack.c.h.b16 %v223
      %v1045 = vunpack.c.l.b16 %v224
      %v1046 = vunpack.c.h.b16 %v224
      %v1047 = vunpack.c.l.b16 %v225
      %v1048 = vunpack.c.h.b16 %v225
      %v1049 = vunpack.c.l.b16 %v226
      %v1050 = vunpack.c.h.b16 %v226
      %v1051 = vunpack.c.l.b16 %v227
      %v1052 = vunpack.c.h.b16 %v227
      %v1053 = vunpack.c.l.b16 %v228
      %v1054 = vunpack.c.h.b16 %v228
      %v1055 = vunpack.c.l.b16 %v229
      %v1056 = vunpack.c.h.b16 %v229
      %v1057 = vunpack.c.l.b16 %v230
      %v1058 = vunpack.c.h.b16 %v230
      %v1059 = vunpack.c.l.b16 %v231
      %v1060 = vunpack.c.h.b16 %v231
      %v1061 = vunpack.c.l.b16 %v232
      %v1062 = vunpack.c.h.b16 %v232
      %v1063 = vunpack.c.l.b16 %v233
      %v1064 = vunpack.c.h.b16 %v233
      %v1065 = vunpack.c.l.b16 %v234
      %v1066 = vunpack.c.h.b16 %v234
      %v1067 = vunpack.c.l.b16 %v235
      %v1068 = vunpack.c.h.b16 %v235
      %v1069 = vunpack.c.l.b16 %v236
      %v1070 = vunpack.c.h.b16 %v236
      %v1071 = vunpack.c.l.b16 %v237
      %v1072 = vunpack.c.h.b16 %v237
      %v1073 = vunpack.c.l.b16 %v238
      %v1074 = vunpack.c.h.b16 %v238
      %v1075 = vunpack.c.l.b16 %v239
      %v1076 = vunpack.c.h.b16 %v239
      %v1077 = vunpack.c.l.b16 %v240
      %v1078 = vunpack.c.h.b16 %v240
      %v1079 = vunpack.c.l.b16 %v241
      %v1080 = vunpack.c.h.b16 %v241
      %v1081 = vunpack.c.l.b16 %v242
      %v1082 = vunpack.c.h.b16 %v242
      %v1083 = vunpack.c.l.b16 %v243
      %v1084 = vunpack.c.h.b16 %v243
      %v1085 = vunpack.c.l.b16 %v244
      %v1086 = vunpack.c.h.b16 %v244
      %v1087 = vunpack.c.l.b16 %v245
      %v1088 = vunpack.c.h.b16 %v245
      %v1089 = vunpack.c.l.b16 %v246
      %v1090 = vunpack.c.h.b16 %v246
      %v1091 = vunpack.c.l.b16 %v247
      %v1092 = vunpack.c.h.b16 %v247
      %v1093 = vunpack.c.l.b16 %v248
      %v1094 = vunpack.c.h.b16 %v248
      %v1095 = vunpack.c.l.b16 %v249
      %v1096 = vunpack.c.h.b16 %v249
      %v1097 = vunpack.c.l.b16 %v250
      %v1098 = vunpack.c.h.b16 %v250
      %v1099 = vunpack.c.l.b16 %v251
      %v1100 = vunpack.c.h.b16 %v251
      %v1101 = vunpack.c.l.b16 %v252
      %v1102 = vunpack.c.h.b16 %v252
      %v1103 = vunpack.c.l.b16 %v253
      %v1104 = vunpack.c.h.b16 %v253
      %v1105 = vunpack.c.l.b16 %v254
      %v1106 = vunpack.c.h.b16 %v254
      %v1107 = vunpack.c.l.b16 %v255
      %v1108 = vunpack.c.h.b16 %v255
      %v1109 = vunpack.c.l.b16 %v256
      %v1110 = vunpack.c.h.b16 %v256
      %v1111 = vunpack.c.l.b16 %v257
      %v1112 = vunpack.c.h.b16 %v257
      %v1113 = vunpack.c.l.b16 %v258
      %v1114 = vunpack.c.h.b16 %v258
      %v1115 = vunpack.c.l.b16 %v259
      %v1116 = vunpack.c.h.b16 %v259
      %v1117 = vunpack.c.l.b16 %v260
      %v1118 = vunpack.c.h.b16 %v260
      %v1119 = vunpack.c.l.b16 %v261
      %v1120 = vunpack.c.h.b16 %v261
      %v1121 = vunpack.c.l.b16 %v262
      %v1122 = vunpack.c.h.b16 %v262
      %v1123 = vunpack.c.l.b16 %v263
      %v1124 = vunpack.c.h.b16 %v263
      %v1125 = vunpack.c.l.b16 %v264
      %v1126 = vunpack.c.h.b16 %v264
      %v1127 = vunpack.c.l.b16 %v265
      %v1128 = vunpack.c.h.b16 %v265
      %v1129 = vunpack.c.l.b16 %v266
      %v1130 = vunpack.c.h.b16 %v266
      %v1131 = vunpack.c.l.b16 %v267
      %v1132 = vunpack.c.h.b16 %v267
      %v1133 = vunpack.c.l.b16 %v268
      %v1134 = vunpack.c.h.b16 %v268
      %v1135 = vunpack.c.l.b16 %v269
      %v1136 = vunpack.c.h.b16 %v269
      %v1137 = vunpack.c.l.b16 %v270
      %v1138 = vunpack.c.h.b16 %v270
      %v1139 = vunpack.c.l.b16 %v271
      %v1140 = vunpack.c.h.b16 %v271
      %v1141 = vunpack.c.l.b16 %v272
      %v1142 = vunpack.c.h.b16 %v272
      %v1143 = vunpack.c.l.b16 %v273
      %v1144 = vunpack.c.h.b16 %v273
      %v1145 = vunpack.c.l.b16 %v274
      %v1146 = vunpack.c.h.b16 %v274
      %v1147 = vunpack.c.l.b16 %v275
      %v1148 = vunpack.c.h.b16 %v275
      %v1149 = vunpack.c.l.b16 %v276
      %v1150 = vunpack.c.h.b16 %v276
      %v1151 = vunpack.c.l.b16 %v277
      %v1152 = vunpack.c.h.b16 %v277
      %v1153 = vunpack.c.l.b16 %v278
      %v1154 = vunpack.c.h.b16 %v278
      %v1155 = vunpack.c.l.b16 %v279
      %v1156 = vunpack.c.h.b16 %v279
      %v1157 = vunpack.c.l.b16 %v280
      %v1158 = vunpack.c.h.b16 %v280
      %v1159 = vunpack.c.l.b16 %v281
      %v1160 = vunpack.c.h.b16 %v281
      %v1161 = vunpack.c.l.b16 %v282
      %v1162 = vunpack.c.h.b16 %v282
      %v1163 = vunpack.c.l.b16 %v283
      %v1164 = vunpack.c.h.b16 %v283
      %v1165 = vunpack.c.l.b16 %v284
      %v1166 = vunpack.c.h.b16 %v284
      %v1167 = vunpack.c.l.b16 %v285
      %v1168 = vunpack.c.h.b16 %v285
      %v1169 = vunpack.c.l.b16 %v286
      %v1170 = vunpack.c.h.b16 %v286
      %v1171 = vunpack.c.l.b16 %v287
      %v1172 = vunpack.c.h.b16 %v287
      %v1173 = vunpack.c.l.b16 %v288
      %v1174 = vunpack.c.h.b16 %v288
      %v1175 = vunpack.c.l.b16 %v289
      %v1176 = vunpack.c.h.b16 %v289
      %v1177 = vunpack.c.l.b16 %v290
      %v1178 = vunpack.c.h.b16 %v290
      %v1179 = vunpack.c.l.b16 %v291
      %v1180 = vunpack.c.h.b16 %v291
      %v1181 = vunpack.c.l.b16 %v292
      %v1182 = vunpack.c.h.b16 %v292
      %v1183 = vunpack.c.l.b16 %v293
      %v1184 = vunpack.c.h.b16 %v293
      %v1185 = vunpack.c.l.b16 %v294
      %v1186 = vunpack.c.h.b16 %v294
      %v1187 = vunpack.c.l.b16 %v295
      %v1188 = vunpack.c.h.b16 %v295
      %v1189 = vunpack.c.l.b16 %v296
      %v1190 = vunpack.c.h.b16 %v296
      %v1191 = vunpack.c.l.b16 %v297
      %v1192 = vunpack.c.h.b16 %v297
      %v1193 = vunpack.c.l.b16 %v298
      %v1194 = vunpack.c.h.b16 %v298
      %v1195 = vunpack.c.l.b16 %v299
      %v1196 = vunpack.c.h.b16 %v299
      %v1197 = vunpack.c.l.b16 %v300
      %v1198 = vunpack.c.h.b16 %v300
      %v1199 = vunpack.c.l.b16 %v301
      %v1200 = vunpack.c.h.b16 %v301
      %v1201 = vunpack.c.l.b16 %v302
      %v1202 = vunpack.c.h.b16 %v302
      %v1203 = vunpack.c.l.b16 %v303
      %v1204 = vunpack.c.h.b16 %v303
      %v1205 = vunpack.c.l.b16 %v304
      %v1206 = vunpack.c.h.b16 %v304
      %v1207 = vunpack.c.l.b16 %v305
      %v1208 = vunpack.c.h.b16 %v305
      %v1209 = vunpack.c.l.b16 %v306
      %v1210 = vunpack.c.h.b16 %v306
      %v1211 = vunpack.c.l.b16 %v307
      %v1212 = vunpack.c.h.b16 %v307
      %v1213 = vunpack.c.l.b16 %v308
      %v1214 = vunpack.c.h.b16 %v308
      %v1215 = vunpack.c.l.b16 %v309
      %v1216 = vunpack.c.h.b16 %v309
      %v1217 = vunpack.c.l.b16 %v310
      %v1218 = vunpack.c.h.b16 %v310
      %v1219 = vunpack.c.l.b16 %v311
      %v1220 = vunpack.c.h.b16 %v311
      %v1221 = vunpack.c.l.b16 %v312
      %v1222 = vunpack.c.h.b16 %v312
      %v1223 = vunpack.c.l.b16 %v313
      %v1224 = vunpack.c.h.b16 %v313
      %v1225 = vunpack.c.l.b16 %v314
      %v1226 = vunpack.c.h.b16 %v314
      %v1227 = vunpack.c.l.b16 %v315
      %v1228 = vunpack.c.h.b16 %v315
      %v1229 = vunpack.c.l.b16 %v316
      %v1230 = vunpack.c.h.b16 %v316
      %v1231 = vunpack.c.l.b16 %v317
      %v1232 = vunpack.c.h.b16 %v317
      %v1233 = vunpack.c.l.b16 %v318
      %v1234 = vunpack.c.h.b16 %v318
      %v1235 = vunpack.c.l.b16 %v319
      %v1236 = vunpack.c.h.b16 %v319
      %v1237 = vunpack.c.l.b16 %v320
      %v1238 = vunpack.c.h.b16 %v320
      %v1239 = vunpack.c.l.b16 %v321
      %v1240 = vunpack.c.h.b16 %v321
      %v1241 = vunpack.c.l.b16 %v322
      %v1242 = vunpack.c.h.b16 %v322
      %v1243 = vunpack.c.l.b16 %v323
      %v1244 = vunpack.c.h.b16 %v323
      %v1245 = vunpack.c.l.b16 %v324
      %v1246 = vunpack.c.h.b16 %v324
      %v1247 = vunpack.c.l.b16 %v325
      %v1248 = vunpack.c.h.b16 %v325
      %v1249 = vunpack.c.l.b16 %v326
      %v1250 = vunpack.c.h.b16 %v326
      %v1251 = vunpack.c.l.b16 %v327
      %v1252 = vunpack.c.h.b16 %v327
      %v1253 = vunpack.c.l.b16 %v328
      %v1254 = vunpack.c.h.b16 %v328
      %v1255 = vunpack.c.l.b16 %v329
      %v1256 = vunpack.c.h.b16 %v329
      %v1257 = vunpack.c.l.b16 %v330
      %v1258 = vunpack.c.h.b16 %v330
      %v1259 = vunpack.c.l.b16 %v331
      %v1260 = vunpack.c.h.b16 %v331
      %v1261 = vunpack.c.l.b16 %v332
      %v1262 = vunpack.c.h.b16 %v332
      %v1263 = vunpack.c.l.b16 %v333
      %v1264 = vunpack.c.h.b16 %v333
      %v1265 = vunpack.c.l.b16 %v334
      %v1266 = vunpack.c.h.b16 %v334
      %v1267 = vunpack.c.l.b16 %v335
      %v1268 = vunpack.c.h.b16 %v335
      %v1269 = vunpack.c.l.b16 %v336
      %v1270 = vunpack.c.h.b16 %v336
      %v1271 = vunpack.c.l.b16 %v337
      %v1272 = vunpack.c.h.b16 %v337
      %v1273 = vunpack.c.l.b16 %v338
      %v1274 = vunpack.c.h.b16 %v338
      %v1275 = vunpack.c.l.b16 %v339
      %v1276 = vunpack.c.h.b16 %v339
      %v1277 = vunpack.c.l.b16 %v340
      %v1278 = vunpack.c.h.b16 %v340
      %v1279 = vunpack.c.l.b16 %v341
      %v1280 = vunpack.c.h.b16 %v341
      %v1281 = vunpack.c.l.b16 %v342
      %v1282 = vunpack.c.h.b16 %v342
      %v1283 = vunpack.c.l.b16 %v343
      %v1284 = vunpack.c.h.b16 %v343
      %v1285 = vunpack.c.l.b16 %v344
      %v1286 = vunpack.c.h.b16 %v344
      %v1287 = vunpack.c.l.b16 %v345
      %v1288 = vunpack.c.h.b16 %v345
      %v1289 = vunpack.c.l.b16 %v346
      %v1290 = vunpack.c.h.b16 %v346
      %v1291 = vunpack.c.l.b16 %v347
      %v1292 = vunpack.c.h.b16 %v347
      %v1293 = vunpack.c.l.b16 %v348
      %v1294 = vunpack.c.h.b16 %v348
      %v1295 = vunpack.c.l.b16 %v349
      %v1296 = vunpack.c.h.b16 %v349
      %v1297 = vunpack.c.l.b16 %v350
      %v1298 = vunpack.c.h.b16 %v350
      %v1299 = vunpack.c.l.b16 %v351
      %v1300 = vunpack.c.h.b16 %v351
      %v1301 = vunpack.c.l.b16 %v352
      %v1302 = vunpack.c.h.b16 %v352
      %v1303 = vunpack.c.l.b16 %v353
      %v1304 = vunpack.c.h.b16 %v353
      %v1305 = vunpack.c.l.b16 %v354
      %v1306 = vunpack.c.h.b16 %v354
      %v1307 = vunpack.c.l.b16 %v355
      %v1308 = vunpack.c.h.b16 %v355
      %v1309 = vunpack.c.l.b16 %v356
      %v1310 = vunpack.c.h.b16 %v356
      %v1311 = vunpack.c.l.b16 %v357
      %v1312 = vunpack.c.h.b16 %v357
      %v1313 = vunpack.c.l.b16 %v358
      %v1314 = vunpack.c.h.b16 %v358
      %v1315 = vunpack.c.l.b16 %v359
      %v1316 = vunpack.c.h.b16 %v359
      %v1317 = vunpack.c.l.b16 %v360
      %v1318 = vunpack.c.h.b16 %v360
      %v1319 = vunpack.c.l.b16 %v361
      %v1320 = vunpack.c.h.b16 %v361
      %v1321 = vunpack.c.l.b16 %v362
      %v1322 = vunpack.c.h.b16 %v362
      %v1323 = vunpack.c.l.b16 %v363
      %v1324 = vunpack.c.h.b16 %v363
      %v1325 = vunpack.c.l.b16 %v364
      %v1326 = vunpack.c.h.b16 %v364
      %v1327 = vunpack.c.l.b16 %v365
      %v1328 = vunpack.c.h.b16 %v365
      %v1329 = vunpack.c.l.b16 %v366
      %v1330 = vunpack.c.h.b16 %v366
      %v1331 = vunpack.c.l.b16 %v367
      %v1332 = vunpack.c.h.b16 %v367
      %v1333 = vunpack.c.l.b16 %v368
      %v1334 = vunpack.c.h.b16 %v368
      %v1335 = vunpack.c.l.b16 %v369
      %v1336 = vunpack.c.h.b16 %v369
      %v1337 = vunpack.c.l.b16 %v370
      %v1338 = vunpack.c.h.b16 %v370
      %v1339 = vunpack.c.l.b16 %v371
      %v1340 = vunpack.c.h.b16 %v371
      %v1341 = vunpack.c.l.b16 %v372
      %v1342 = vunpack.c.h.b16 %v372
      %v1343 = vunpack.c.l.b16 %v373
      %v1344 = vunpack.c.h.b16 %v373
      %v1345 = vunpack.c.l.b16 %v374
      %v1346 = vunpack.c.h.b16 %v374
      %v1347 = vunpack.c.l.b16 %v375
      %v1348 = vunpack.c.h.b16 %v375
      %v1349 = vunpack.c.l.b16 %v376
      %v1350 = vunpack.c.h.b16 %v376
      %v1351 = vunpack.c.l.b16 %v377
      %v1352 = vunpack.c.h.b16 %v377
      %v1353 = vunpack.c.l.b16 %v378
      %v1354 = vunpack.c.h.b16 %v378
      %v1355 = vunpack.c.l.b16 %v379
      %v1356 = vunpack.c.h.b16 %v379
      %v1357 = vunpack.c.l.b16 %v380
      %v1358 = vunpack.c.h.b16 %v380
      %v1359 = vunpack.c.l.b16 %v381
      %v1360 = vunpack.c.h.b16 %v381
      %v1361 = vunpack.c.l.b16 %v382
      %v1362 = vunpack.c.h.b16 %v382
      %v1363 = vunpack.c.l.b16 %v383
      %v1364 = vunpack.c.h.b16 %v383
      %v1365 = vunpack.c.l.b16 %v384
      %v1366 = vunpack.c.h.b16 %v384
      %v1367 = vunpack.c.l.b16 %v385
      %v1368 = vunpack.c.h.b16 %v385
      %v1369 = vunpack.c.l.b16 %v386
      %v1370 = vunpack.c.h.b16 %v386
      %v1371 = vunpack.c.l.b16 %v387
      %v1372 = vunpack.c.h.b16 %v387
      %v1373 = vunpack.c.l.b16 %v388
      %v1374 = vunpack.c.h.b16 %v388
      %v1375 = vunpack.c.l.b16 %v389
      %v1376 = vunpack.c.h.b16 %v389
      %v1377 = vunpack.c.l.b16 %v390
      %v1378 = vunpack.c.h.b16 %v390
      %v1379 = vunpack.c.l.b16 %v391
      %v1380 = vunpack.c.h.b16 %v391
      %v1381 = vunpack.c.l.b16 %v392
      %v1382 = vunpack.c.h.b16 %v392
      %v1383 = vunpack.c.l.b16 %v393
      %v1384 = vunpack.c.h.b16 %v393
      %v1385 = vunpack.c.l.b16 %v394
      %v1386 = vunpack.c.h.b16 %v394
      %v1387 = vunpack.c.l.b16 %v395
      %v1388 = vunpack.c.h.b16 %v395
      %v1389 = vunpack.c.l.b16 %v396
      %v1390 = vunpack.c.h.b16 %v396
      %v1391 = vunpack.c.l.b16 %v397
      %v1392 = vunpack.c.h.b16 %v397
      %v1393 = vunpack.c.l.b16 %v398
      %v1394 = vunpack.c.h.b16 %v398
      %v1395 = vunpack.c.l.b16 %v399
      %v1396 = vunpack.c.h.b16 %v399
      %v1397 = vunpack.c.l.b16 %v400
      %v1398 = vunpack.c.h.b16 %v400
      %v1399 = vunpack.c.l.b16 %v401
      %v1400 = vunpack.c.h.b16 %v401
      %v1401 = vunpack.c.l.b16 %v402
      %v1402 = vunpack.c.h.b16 %v402
      %v1403 = vunpack.c.l.b16 %v403
      %v1404 = vunpack.c.h.b16 %v403
      %v1405 = vunpack.c.l.b16 %v404
      %v1406 = vunpack.c.h.b16 %v404
      %v1407 = vunpack.c.l.b16 %v405
      %v1408 = vunpack.c.h.b16 %v405
      %v1409 = vunpack.c.l.b16 %v406
      %v1410 = vunpack.c.h.b16 %v406
      %v1411 = vunpack.c.l.b16 %v407
      %v1412 = vunpack.c.h.b16 %v407
      %v1413 = vunpack.c.l.b16 %v408
      %v1414 = vunpack.c.h.b16 %v408
      %v1415 = vunpack.c.l.b16 %v409
      %v1416 = vunpack.c.h.b16 %v409
      %v1417 = vunpack.c.l.b16 %v410
      %v1418 = vunpack.c.h.b16 %v410
      %v1419 = vunpack.c.l.b16 %v411
      %v1420 = vunpack.c.h.b16 %v411
      %v1421 = vunpack.c.l.b16 %v412
      %v1422 = vunpack.c.h.b16 %v412
      %v1423 = vunpack.c.l.b16 %v413
      %v1424 = vunpack.c.h.b16 %v413
      %v1425 = vunpack.c.l.b16 %v414
      %v1426 = vunpack.c.h.b16 %v414
      %v1427 = vunpack.c.l.b16 %v415
      %v1428 = vunpack.c.h.b16 %v415
      %v1429 = vunpack.c.l.b16 %v416
      %v1430 = vunpack.c.h.b16 %v416
      %v1431 = vunpack.c.l.b16 %v417
      %v1432 = vunpack.c.h.b16 %v417
      %v1433 = vunpack.c.l.b16 %v418
      %v1434 = vunpack.c.h.b16 %v418
      %v1435 = vunpack.c.l.b16 %v419
      %v1436 = vunpack.c.h.b16 %v419
      %v1437 = vunpack.c.l.b16 %v420
      %v1438 = vunpack.c.h.b16 %v420
      %v1439 = vunpack.c.l.b16 %v421
      %v1440 = vunpack.c.h.b16 %v421
      %v1441 = vunpack.c.l.b16 %v422
      %v1442 = vunpack.c.h.b16 %v422
      %v1443 = vunpack.c.l.b16 %v423
      %v1444 = vunpack.c.h.b16 %v423
      %v1445 = vunpack.c.l.b16 %v424
      %v1446 = vunpack.c.h.b16 %v424
      %v1447 = vunpack.c.l.b16 %v425
      %v1448 = vunpack.c.h.b16 %v425
      %v1449 = vunpack.c.l.b16 %v426
      %v1450 = vunpack.c.h.b16 %v426
      %v1451 = vunpack.c.l.b16 %v427
      %v1452 = vunpack.c.h.b16 %v427
      %v1453 = vunpack.c.l.b16 %v428
      %v1454 = vunpack.c.h.b16 %v428
      %v1455 = vunpack.c.l.b16 %v429
      %v1456 = vunpack.c.h.b16 %v429
      %v1457 = vunpack.c.l.b16 %v430
      %v1458 = vunpack.c.h.b16 %v430
      %v1459 = vunpack.c.l.b16 %v431
      %v1460 = vunpack.c.h.b16 %v431
      %v1461 = vunpack.c.l.b16 %v432
      %v1462 = vunpack.c.h.b16 %v432
      %v1463 = vunpack.c.l.b16 %v433
      %v1464 = vunpack.c.h.b16 %v433
      %v1465 = vpack.c.b16 %v969, %v953
      %v1466 = vpack.c.b16 %v970, %v954
      %v1467 = vpack.c.b16 %v971, %v955
      %v1468 = vpack.c.b16 %v972, %v956
      %v1469 = vpack.c.b16 %v973, %v957
      %v1470 = vpack.c.b16 %v974, %v958
      %v1471 = vpack.c.b16 %v975, %v959
      %v1472 = vpack.c.b16 %v976, %v960
      %v1473 = vpack.c.b16 %v977, %v961
      %v1474 = vpack.c.b16 %v978, %v962
      %v1475 = vpack.c.b16 %v979, %v963
      %v1476 = vpack.c.b16 %v980, %v964
      %v1477 = vpack.c.b16 %v981, %v965
      %v1478 = vpack.c.b16 %v982, %v966
      %v1479 = vpack.c.b16 %v983, %v967
      %v1480 = vpack.c.b16 %v984, %v968
      %v1481 = vpack.c.b16 %v1001, %v985
      %v1482 = vpack.c.b16 %v1002, %v986
      %v1483 = vpack.c.b16 %v1003, %v987
      %v1484 = vpack.c.b16 %v1004, %v988
      %v1485 = vpack.c.b16 %v1005, %v989
      %v1486 = vpack.c.b16 %v1006, %v990
      %v1487 = vpack.c.b16 %v1007, %v991
      %v1488 = vpack.c.b16 %v1008, %v992
      %v1489 = vpack.c.b16 %v1009, %v993
      %v1490 = vpack.c.b16 %v1010, %v994
      %v1491 = vpack.c.b16 %v1011, %v995
      %v1492 = vpack.c.b16 %v1012, %v996
      %v1493 = vpack.c.b16 %v1013, %v997
      %v1494 = vpack.c.b16 %v1014, %v998
      %v1495 = vpack.c.b16 %v1015, %v999
      %v1496 = vpack.c.b16 %v1016, %v1000
      %v1497 = vpack.c.b16 %v1033, %v1017
      %v1498 = vpack.c.b16 %v1034, %v1018
      %v1499 = vpack.c.b16 %v1035, %v1019
      %v1500 = vpack.c.b16 %v1036, %v1020
      %v1501 = vpack.c.b16 %v1037, %v1021
      %v1502 = vpack.c.b16 %v1038, %v1022
      %v1503 = vpack.c.b16 %v1039, %v1023
      %v1504 = vpack.c.b16 %v1040, %v1024
      %v1505 = vpack.c.b16 %v1041, %v1025
      %v1506 = vpack.c.b16 %v1042, %v1026
      %v1507 = vpack.c.b16 %v1043, %v1027
      %v1508 = vpack.c.b16 %v1044, %v1028
      %v1509 = vpack.c.b16 %v1045, %v1029
      %v1510 = vpack.c.b16 %v1046, %v1030
      %v1511 = vpack.c.b16 %v1047, %v1031
      %v1512 = vpack.c.b16 %v1048, %v1032
      %v1513 = vpack.c.b16 %v1065, %v1049
      %v1514 = vpack.c.b16 %v1066, %v1050
      %v1515 = vpack.c.b16 %v1067, %v1051
      %v1516 = vpack.c.b16 %v1068, %v1052
      %v1517 = vpack.c.b16 %v1069, %v1053
      %v1518 = vpack.c.b16 %v1070, %v1054
      %v1519 = vpack.c.b16 %v1071, %v1055
      %v1520 = vpack.c.b16 %v1072, %v1056
      %v1521 = vpack.c.b16 %v1073, %v1057
      %v1522 = vpack.c.b16 %v1074, %v1058
      %v1523 = vpack.c.b16 %v1075, %v1059
      %v1524 = vpack.c.b16 %v1076, %v1060
      %v1525 = vpack.c.b16 %v1077, %v1061
      %v1526 = vpack.c.b16 %v1078, %v1062
      %v1527 = vpack.c.b16 %v1079, %v1063
      %v1528 = vpack.c.b16 %v1080, %v1064
      %v1529 = vpack.c.b16 %v1097, %v1081
      %v1530 = vpack.c.b16 %v1098, %v1082
      %v1531 = vpack.c.b16 %v1099, %v1083
      %v1532 = vpack.c.b16 %v1100, %v1084
      %v1533 = vpack.c.b16 %v1101, %v1085
      %v1534 = vpack.c.b16 %v1102, %v1086
      %v1535 = vpack.c.b16 %v1103, %v1087
      %v1536 = vpack.c.b16 %v1104, %v1088
      %v1537 = vpack.c.b16 %v1105, %v1089
      %v1538 = vpack.c.b16 %v1106, %v1090
      %v1539 = vpack.c.b16 %v1107, %v1091
      %v1540 = vpack.c.b16 %v1108, %v1092
      %v1541 = vpack.c.b16 %v1109, %v1093
      %v1542 = vpack.c.b16 %v1110, %v1094
      %v1543 = vpack.c.b16 %v1111, %v1095
      %v1544 = vpack.c.b16 %v1112, %v1096
      %v1545 = vpack.c.b16 %v1129, %v1113
      %v1546 = vpack.c.b16 %v1130, %v1114
      %v1547 = vpack.c.b16 %v1131, %v1115
      %v1548 = vpack.c.b16 %v1132, %v1116
      %v1549 = vpack.c.b16 %v1133, %v1117
      %v1550 = vpack.c.b16 %v1134, %v1118
      %v1551 = vpack.c.b16 %v1135, %v1119
      %v1552 = vpack.c.b16 %v1136, %v1120
      %v1553 = vpack.c.b16 %v1137, %v1121
      %v1554 = vpack.c.b16 %v1138, %v1122
      %v1555 = vpack.c.b16 %v1139, %v1123
      %v1556 = vpack.c.b16 %v1140, %v1124
      %v1557 = vpack.c.b16 %v1141, %v1125
      %v1558 = vpack.c.b16 %v1142, %v1126
      %v1559 = vpack.c.b16 %v1143, %v1127
      %v1560 = vpack.c.b16 %v1144, %v1128
      %v1561 = vpack.c.b16 %v1161, %v1145
      %v1562 = vpack.c.b16 %v1162, %v1146
      %v1563 = vpack.c.b16 %v1163, %v1147
      %v1564 = vpack.c.b16 %v1164, %v1148
      %v1565 = vpack.c.b16 %v1165, %v1149
      %v1566 = vpack.c.b16 %v1166, %v1150
      %v1567 = vpack.c.b16 %v1167, %v1151
      %v1568 = vpack.c.b16 %v1168, %v1152
      %v1569 = vpack.c.b16 %v1169, %v1153
      %v1570 = vpack.c.b16 %v1170, %v1154
      %v1571 = vpack.c.b16 %v1171, %v1155
      %v1572 = vpack.c.b16 %v1172, %v1156
      %v1573 = vpack.c.b16 %v1173, %v1157
      %v1574 = vpack.c.b16 %v1174, %v1158
      %v1575 = vpack.c.b16 %v1175, %v1159
      %v1576 = vpack.c.b16 %v1176, %v1160
      %v1577 = vpack.c.b16 %v1193, %v1177
      %v1578 = vpack.c.b16 %v1194, %v1178
      %v1579 = vpack.c.b16 %v1195, %v1179
      %v1580 = vpack.c.b16 %v1196, %v1180
      %v1581 = vpack.c.b16 %v1197, %v1181
      %v1582 = vpack.c.b16 %v1198, %v1182
      %v1583 = vpack.c.b16 %v1199, %v1183
      %v1584 = vpack.c.b16 %v1200, %v1184
      %v1585 = vpack.c.b16 %v1201, %v1185
      %v1586 = vpack.c.b16 %v1202, %v1186
      %v1587 = vpack.c.b16 %v1203, %v1187
      %v1588 = vpack.c.b16 %v1204, %v1188
      %v1589 = vpack.c.b16 %v1205, %v1189
      %v1590 = vpack.c.b16 %v1206, %v1190
      %v1591 = vpack.c.b16 %v1207, %v1191
      %v1592 = vpack.c.b16 %v1208, %v1192
      %v1593 = vpack.c.b16 %v1225, %v1209
      %v1594 = vpack.c.b16 %v1226, %v1210
      %v1595 = vpack.c.b16 %v1227, %v1211
      %v1596 = vpack.c.b16 %v1228, %v1212
      %v1597 = vpack.c.b16 %v1229, %v1213
      %v1598 = vpack.c.b16 %v1230, %v1214
      %v1599 = vpack.c.b16 %v1231, %v1215
      %v1600 = vpack.c.b16 %v1232, %v1216
      %v1601 = vpack.c.b16 %v1233, %v1217
      %v1602 = vpack.c.b16 %v1234, %v1218
      %v1603 = vpack.c.b16 %v1235, %v1219
      %v1604 = vpack.c.b16 %v1236, %v1220
      %v1605 = vpack.c.b16 %v1237, %v1221
      %v1606 = vpack.c.b16 %v1238, %v1222
      %v1607 = vpack.c.b16 %v1239, %v1223
      %v1608 = vpack.c.b16 %v1240, %v1224
      %v1609 = vpack.c.b16 %v1257, %v1241
      %v1610 = vpack.c.b16 %v1258, %v1242
      %v1611 = vpack.c.b16 %v1259, %v1243
      %v1612 = vpack.c.b16 %v1260, %v1244
      %v1613 = vpack.c.b16 %v1261, %v1245
      %v1614 = vpack.c.b16 %v1262, %v1246
      %v1615 = vpack.c.b16 %v1263, %v1247
      %v1616 = vpack.c.b16 %v1264, %v1248
      %v1617 = vpack.c.b16 %v1265, %v1249
      %v1618 = vpack.c.b16 %v1266, %v1250
      %v1619 = vpack.c.b16 %v1267, %v1251
      %v1620 = vpack.c.b16 %v1268, %v1252
      %v1621 = vpack.c.b16 %v1269, %v1253
      %v1622 = vpack.c.b16 %v1270, %v1254
      %v1623 = vpack.c.b16 %v1271, %v1255
      %v1624 = vpack.c.b16 %v1272, %v1256
      %v1625 = vpack.c.b16 %v1289, %v1273
      %v1626 = vpack.c.b16 %v1290, %v1274
      %v1627 = vpack.c.b16 %v1291, %v1275
      %v1628 = vpack.c.b16 %v1292, %v1276
      %v1629 = vpack.c.b16 %v1293, %v1277
      %v1630 = vpack.c.b16 %v1294, %v1278
      %v1631 = vpack.c.b16 %v1295, %v1279
      %v1632 = vpack.c.b16 %v1296, %v1280
      %v1633 = vpack.c.b16 %v1297, %v1281
      %v1634 = vpack.c.b16 %v1298, %v1282
      %v1635 = vpack.c.b16 %v1299, %v1283
      %v1636 = vpack.c.b16 %v1300, %v1284
      %v1637 = vpack.c.b16 %v1301, %v1285
      %v1638 = vpack.c.b16 %v1302, %v1286
      %v1639 = vpack.c.b16 %v1303, %v1287
      %v1640 = vpack.c.b16 %v1304, %v1288
      %v1641 = vpack.c.b16 %v1321, %v1305
      %v1642 = vpack.c.b16 %v1322, %v1306
      %v1643 = vpack.c.b16 %v1323, %v1307
      %v1644 = vpack.c.b16 %v1324, %v1308
      %v1645 = vpack.c.b16 %v1325, %v1309
      %v1646 = vpack.c.b16 %v1326, %v1310
      %v1647 = vpack.c.b16 %v1327, %v1311
      %v1648 = vpack.c.b16 %v1328, %v1312
      %v1649 = vpack.c.b16 %v1329, %v1313
      %v1650 = vpack.c.b16 %v1330, %v1314
      %v1651 = vpack.c.b16 %v1331, %v1315
      %v1652 = vpack.c.b16 %v1332, %v1316
      %v1653 = vpack.c.b16 %v1333, %v1317
      %v1654 = vpack.c.b16 %v1334, %v1318
      %v1655 = vpack.c.b16 %v1335, %v1319
      %v1656 = vpack.c.b16 %v1336, %v1320
      %v1657 = vpack.c.b16 %v1353, %v1337
      %v1658 = vpack.c.b16 %v1354, %v1338
      %v1659 = vpack.c.b16 %v1355, %v1339
      %v1660 = vpack.c.b16 %v1356, %v1340
      %v1661 = vpack.c.b16 %v1357, %v1341
      %v1662 = vpack.c.b16 %v1358, %v1342
      %v1663 = vpack.c.b16 %v1359, %v1343
      %v1664 = vpack.c.b16 %v1360, %v1344
      %v1665 = vpack.c.b16 %v1361, %v1345
      %v1666 = vpack.c.b16 %v1362, %v1346
      %v1667 = vpack.c.b16 %v1363, %v1347
      %v1668 = vpack.c.b16 %v1364, %v1348
      %v1669 = vpack.c.b16 %v1365, %v1349
      %v1670 = vpack.c.b16 %v1366, %v1350
      %v1671 = vpack.c.b16 %v1367, %v1351
      %v1672 = vpack.c.b16 %v1368, %v1352
      %v1673 = vpack.c.b16 %v1385, %v1369
      %v1674 = vpack.c.b16 %v1386, %v1370
      %v1675 = vpack.c.b16 %v1387, %v1371
      %v1676 = vpack.c.b16 %v1388, %v1372
      %v1677 = vpack.c.b16 %v1389, %v1373
      %v1678 = vpack.c.b16 %v1390, %v1374
      %v1679 = vpack.c.b16 %v1391, %v1375
      %v1680 = vpack.c.b16 %v1392, %v1376
      %v1681 = vpack.c.b16 %v1393, %v1377
      %v1682 = vpack.c.b16 %v1394, %v1378
      %v1683 = vpack.c.b16 %v1395, %v1379
      %v1684 = vpack.c.b16 %v1396, %v1380
      %v1685 = vpack.c.b16 %v1397, %v1381
      %v1686 = vpack.c.b16 %v1398, %v1382
      %v1687 = vpack.c.b16 %v1399, %v1383
      %v1688 = vpack.c.b16 %v1400, %v1384
      %v1689 = vpack.c.b16 %v1417, %v1401
      %v1690 = vpack.c.b16 %v1418, %v1402
      %v1691 = vpack.c.b16 %v1419, %v1403
      %v1692 = vpack.c.b16 %v1420, %v1404
      %v1693 = vpack.c.b16 %v1421, %v1405
      %v1694 = vpack.c.b16 %v1422, %v1406
      %v1695 = vpack.c.b16 %v1423, %v1407
      %v1696 = vpack.c.b16 %v1424, %v1408
      %v1697 = vpack.c.b16 %v1425, %v1409
      %v1698 = vpack.c.b16 %v1426, %v1410
      %v1699 = vpack.c.b16 %v1427, %v1411
      %v1700 = vpack.c.b16 %v1428, %v1412
      %v1701 = vpack.c.b16 %v1429, %v1413
      %v1702 = vpack.c.b16 %v1430, %v1414
      %v1703 = vpack.c.b16 %v1431, %v1415
      %v1704 = vpack.c.b16 %v1432, %v1416
      %v1705 = vpack.c.b16 %v1449, %v1433
      %v1706 = vpack.c.b16 %v1450, %v1434
      %v1707 = vpack.c.b16 %v1451, %v1435
      %v1708 = vpack.c.b16 %v1452, %v1436
      %v1709 = vpack.c.b16 %v1453, %v1437
      %v1710 = vpack.c.b16 %v1454, %v1438
      %v1711 = vpack.c.b16 %v1455, %v1439
      %v1712 = vpack.c.b16 %v1456, %v1440
      %v1713 = vpack.c.b16 %v1457, %v1441
      %v1714 = vpack.c.b16 %v1458, %v1442
      %v1715 = vpack.c.b16 %v1459, %v1443
      %v1716 = vpack.c.b16 %v1460, %v1444
      %v1717 = vpack.c.b16 %v1461, %v1445
      %v1718 = vpack.c.b16 %v1462, %v1446
      %v1719 = vpack.c.b16 %v1463, %v1447
      %v1720 = vpack.c.b16 %v1464, %v1448
      %v2233 = vunpack.c.l.b16 %v434
      %v2234 = vunpack.c.l.b16 %v435
      %v2235 = vunpack.c.l.b16 %v436
      %v2236 = vunpack.c.l.b16 %v437
      %v2237 = vunpack.c.l.b16 %v438
      %v2238 = vunpack.c.l.b16 %v439
      %v2239 = vunpack.c.l.b16 %v440
      %v2240 = vunpack.c.l.b16 %v441
      %v2241 = vunpack.c.l.b16 %v442
      %v2242 = vunpack.c.l.b16 %v443
      %v2243 = vunpack.c.l.b16 %v444
      %v2244 = vunpack.c.l.b16 %v445
      %v2245 = vunpack.c.l.b16 %v446
      %v2246 = vunpack.c.l.b16 %v447
      %v2247 = vunpack.c.l.b16 %v448
      %v2248 = vunpack.c.l.b16 %v449
      %v2249 = vunpack.c.l.b16 %v450
      %v2250 = vunpack.c.l.b16 %v451
      %v2251 = vunpack.c.l.b16 %v452
      %v2252 = vunpack.c.l.b16 %v453
      %v2253 = vunpack.c.l.b16 %v454
      %v2254 = vunpack.c.l.b16 %v455
      %v2255 = vunpack.c.l.b16 %v456
      %v2256 = vunpack.c.l.b16 %v457
      %v2257 = vunpack.c.l.b16 %v458
      %v2258 = vunpack.c.l.b16 %v459
      %v2259 = vunpack.c.l.b16 %v460
      %v2260 = vunpack.c.l.b16 %v461
      %v2261 = vunpack.c.l.b16 %v462
      %v2262 = vunpack.c.l.b16 %v463
      %v2263 = vunpack.c.l.b16 %v464
      %v2264 = vunpack.c.l.b16 %v465
      %v2265 = vunpack.c.l.b16 %v466
      %v2266 = vunpack.c.l.b16 %v467
      %v2267 = vunpack.c.l.b16 %v468
      %v2268 = vunpack.c.l.b16 %v469
      %v2269 = vunpack.c.l.b16 %v470
      %v2270 = vunpack.c.l.b16 %v471
      %v2271 = vunpack.c.l.b16 %v472
      %v2272 = vunpack.c.l.b16 %v473
      %v2273 = vunpack.c.l.b16 %v474
      %v2274 = vunpack.c.l.b16 %v475
      %v2275 = vunpack.c.l.b16 %v476
      %v2276 = vunpack.c.l.b16 %v477
      %v2277 = vunpack.c.l.b16 %v478
      %v2278 = vunpack.c.l.b16 %v479
      %v2279 = vunpack.c.l.b16 %v480
      %v2280 = vunpack.c.l.b16 %v481
      %v2281 = vunpack.c.l.b16 %v482
      %v2282 = vunpack.c.l.b16 %v483
      %v2283 = vunpack.c.l.b16 %v484
      %v2284 = vunpack.c.l.b16 %v485
      %v2285 = vunpack.c.l.b16 %v486
      %v2286 = vunpack.c.l.b16 %v487
      %v2287 = vunpack.c.l.b16 %v488
      %v2288 = vunpack.c.l.b16 %v489
      %v2289 = vunpack.c.l.b16 %v490
      %v2290 = vunpack.c.l.b16 %v491
      %v2291 = vunpack.c.l.b16 %v492
      %v2292 = vunpack.c.l.b16 %v493
      %v2293 = vunpack.c.l.b16 %v494
      %v2294 = vunpack.c.l.b16 %v495
      %v2295 = vunpack.c.l.b16 %v496
      %v2296 = vunpack.c.l.b16 %v497
      %v2297 = vunpack.c.l.b16 %v498
      %v2298 = vunpack.c.l.b16 %v499
      %v2299 = vunpack.c.l.b16 %v500
      %v2300 = vunpack.c.l.b16 %v501
      %v2301 = vunpack.c.l.b16 %v502
      %v2302 = vunpack.c.l.b16 %v503
      %v2303 = vunpack.c.l.b16 %v504
      %v2304 = vunpack.c.l.b16 %v505
      %v2305 = vunpack.c.l.b16 %v506
      %v2306 = vunpack.c.l.b16 %v507
      %v2307 = vunpack.c.l.b16 %v508
      %v2308 = vunpack.c.l.b16 %v509
      %v2309 = vunpack.c.l.b16 %v510
      %v2310 = vunpack.c.l.b16 %v511
      %v2311 = vunpack.c.l.b16 %v512
      %v2312 = vunpack.c.l.b16 %v513
      %v2313 = vunpack.c.l.b16 %v514
      %v2314 = vunpack.c.l.b16 %v515
      %v2315 = vunpack.c.l.b16 %v516
      %v2316 = vunpack.c.l.b16 %v517
      %v2317 = vunpack.c.l.b16 %v518
      %v2318 = vunpack.c.l.b16 %v519
      %v2319 = vunpack.c.l.b16 %v520
      %v2320 = vunpack.c.l.b16 %v521
      %v2321 = vunpack.c.l.b16 %v522
      %v2322 = vunpack.c.l.b16 %v523
      %v2323 = vunpack.c.l.b16 %v524
      %v2324 = vunpack.c.l.b16 %v525
      %v2325 = vunpack.c.l.b16 %v526
      %v2326 = vunpack.c.l.b16 %v527
      %v2327 = vunpack.c.l.b16 %v528
      %v2328 = vunpack.c.l.b16 %v529
      %v2329 = vunpack.c.l.b16 %v530
      %v2330 = vunpack.c.l.b16 %v531
      %v2331 = vunpack.c.l.b16 %v532
      %v2332 = vunpack.c.l.b16 %v533
      %v2333 = vunpack.c.l.b16 %v534
      %v2334 = vunpack.c.l.b16 %v535
      %v2335 = vunpack.c.l.b16 %v536
      %v2336 = vunpack.c.l.b16 %v537
      %v2337 = vunpack.c.l.b16 %v538
      %v2338 = vunpack.c.l.b16 %v539
      %v2339 = vunpack.c.l.b16 %v540
      %v2340 = vunpack.c.l.b16 %v541
      %v2341 = vunpack.c.l.b16 %v542
      %v2342 = vunpack.c.l.b16 %v543
      %v2343 = vunpack.c.l.b16 %v544
      %v2344 = vunpack.c.l.b16 %v545
      %v2345 = vunpack.c.l.b16 %v546
      %v2346 = vunpack.c.l.b16 %v547
      %v2347 = vunpack.c.l.b16 %v548
      %v2348 = vunpack.c.l.b16 %v549
      %v2349 = vunpack.c.l.b16 %v550
      %v2350 = vunpack.c.l.b16 %v551
      %v2351 = vunpack.c.l.b16 %v552
      %v2352 = vunpack.c.l.b16 %v553
      %v2353 = vunpack.c.l.b16 %v554
      %v2354 = vunpack.c.l.b16 %v555
      %v2355 = vunpack.c.l.b16 %v556
      %v2356 = vunpack.c.l.b16 %v557
      %v2357 = vunpack.c.l.b16 %v558
      %v2358 = vunpack.c.l.b16 %v559
      %v2359 = vunpack.c.l.b16 %v560
      %v2360 = vunpack.c.l.b16 %v561
      %v2361 = vunpack.c.l.b16 %v562
      %v2362 = vunpack.c.l.b16 %v563
      %v2363 = vunpack.c.l.b16 %v564
      %v2364 = vunpack.c.l.b16 %v565
      %v2365 = vunpack.c.l.b16 %v566
      %v2366 = vunpack.c.l.b16 %v567
      %v2367 = vunpack.c.l.b16 %v568
      %v2368 = vunpack.c.l.b16 %v569
      %v2369 = vunpack.c.l.b16 %v570
      %v2370 = vunpack.c.l.b16 %v571
      %v2371 = vunpack.c.l.b16 %v572
      %v2372 = vunpack.c.l.b16 %v573
      %v2373 = vunpack.c.l.b16 %v574
      %v2374 = vunpack.c.l.b16 %v575
      %v2375 = vunpack.c.l.b16 %v576
      %v2376 = vunpack.c.l.b16 %v577
      %v2377 = vunpack.c.l.b16 %v578
      %v2378 = vunpack.c.l.b16 %v579
      %v2379 = vunpack.c.l.b16 %v580
      %v2380 = vunpack.c.l.b16 %v581
      %v2381 = vunpack.c.l.b16 %v582
      %v2382 = vunpack.c.l.b16 %v583
      %v2383 = vunpack.c.l.b16 %v584
      %v2384 = vunpack.c.l.b16 %v585
      %v2385 = vunpack.c.l.b16 %v586
      %v2386 = vunpack.c.l.b16 %v587
      %v2387 = vunpack.c.l.b16 %v588
      %v2388 = vunpack.c.l.b16 %v589
      %v2389 = vunpack.c.l.b16 %v590
      %v2390 = vunpack.c.l.b16 %v591
      %v2391 = vunpack.c.l.b16 %v592
      %v2392 = vunpack.c.l.b16 %v593
      %v2393 = vunpack.c.l.b16 %v594
      %v2394 = vunpack.c.l.b16 %v595
      %v2395 = vunpack.c.l.b16 %v596
      %v2396 = vunpack.c.l.b16 %v597
      %v2397 = vunpack.c.l.b16 %v598
      %v2398 = vunpack.c.l.b16 %v599
      %v2399 = vunpack.c.l.b16 %v600
      %v2400 = vunpack.c.l.b16 %v601
      %v2401 = vunpack.c.l.b16 %v602
      %v2402 = vunpack.c.l.b16 %v603
      %v2403 = vunpack.c.l.b16 %v604
      %v2404 = vunpack.c.l.b16 %v605
      %v2405 = vunpack.c.l.b16 %v606
      %v2406 = vunpack.c.l.b16 %v607
      %v2407 = vunpack.c.l.b16 %v608
      %v2408 = vunpack.c.l.b16 %v609
      %v2409 = vunpack.c.l.b16 %v610
      %v2410 = vunpack.c.l.b16 %v611
      %v2411 = vunpack.c.l.b16 %v612
      %v2412 = vunpack.c.l.b16 %v613
      %v2413 = vunpack.c.l.b16 %v614
      %v2414 = vunpack.c.l.b16 %v615
      %v2415 = vunpack.c.l.b16 %v616
      %v2416 = vunpack.c.l.b16 %v617
      %v2417 = vunpack.c.l.b16 %v618
      %v2418 = vunpack.c.l.b16 %v619
      %v2419 = vunpack.c.l.b16 %v620
      %v2420 = vunpack.c.l.b16 %v621
      %v2421 = vunpack.c.l.b16 %v622
      %v2422 = vunpack.c.l.b16 %v623
      %v2423 = vunpack.c.l.b16 %v624
      %v2424 = vunpack.c.l.b16 %v625
      %v2425 = vunpack.c.l.b16 %v626
      %v2426 = vunpack.c.l.b16 %v627
      %v2427 = vunpack.c.l.b16 %v628
      %v2428 = vunpack.c.l.b16 %v629
      %v2429 = vunpack.c.l.b16 %v630
      %v2430 = vunpack.c.l.b16 %v631
      %v2431 = vunpack.c.l.b16 %v632
      %v2432 = vunpack.c.l.b16 %v633
      %v2433 = vunpack.c.l.b16 %v634
      %v2434 = vunpack.c.l.b16 %v635
      %v2435 = vunpack.c.l.b16 %v636
      %v2436 = vunpack.c.l.b16 %v637
      %v2437 = vunpack.c.l.b16 %v638
      %v2438 = vunpack.c.l.b16 %v639
      %v2439 = vunpack.c.l.b16 %v640
      %v2440 = vunpack.c.l.b16 %v641
      %v2441 = vunpack.c.l.b16 %v642
      %v2442 = vunpack.c.l.b16 %v643
      %v2443 = vunpack.c.l.b16 %v644
      %v2444 = vunpack.c.l.b16 %v645
      %v2445 = vunpack.c.l.b16 %v646
      %v2446 = vunpack.c.l.b16 %v647
      %v2447 = vunpack.c.l.b16 %v648
      %v2448 = vunpack.c.l.b16 %v649
      %v2449 = vunpack.c.l.b16 %v650
      %v2450 = vunpack.c.l.b16 %v651
      %v2451 = vunpack.c.l.b16 %v652
      %v2452 = vunpack.c.l.b16 %v653
      %v2453 = vunpack.c.l.b16 %v654
      %v2454 = vunpack.c.l.b16 %v655
      %v2455 = vunpack.c.l.b16 %v656
      %v2456 = vunpack.c.l.b16 %v657
      %v2457 = vunpack.c.l.b16 %v658
      %v2458 = vunpack.c.l.b16 %v659
      %v2459 = vunpack.c.l.b16 %v660
      %v2460 = vunpack.c.l.b16 %v661
      %v2461 = vunpack.c.l.b16 %v662
      %v2462 = vunpack.c.l.b16 %v663
      %v2463 = vunpack.c.l.b16 %v664
      %v2464 = vunpack.c.l.b16 %v665
      %v2465 = vunpack.c.l.b16 %v666
      %v2466 = vunpack.c.l.b16 %v667
      %v2467 = vunpack.c.l.b16 %v668
      %v2468 = vunpack.c.l.b16 %v669
      %v2469 = vunpack.c.l.b16 %v670
      %v2470 = vunpack.c.l.b16 %v671
      %v2471 = vunpack.c.l.b16 %v672
      %v2472 = vunpack.c.l.b16 %v673
      %v2473 = vunpack.c.l.b16 %v674
      %v2474 = vunpack.c.l.b16 %v675
      %v2475 = vunpack.c.l.b16 %v676
      %v2476 = vunpack.c.l.b16 %v677
      %v2477 = vunpack.c.l.b16 %v678
      %v2478 = vunpack.c.l.b16 %v679
      %v2479 = vunpack.c.l.b16 %v680
      %v2480 = vunpack.c.l.b16 %v681
      %v2481 = vunpack.c.l.b16 %v682
      %v2482 = vunpack.c.l.b16 %v683
      %v2483 = vunpack.c.l.b16 %v684
      %v2484 = vunpack.c.l.b16 %v685
      %v2485 = vunpack.c.l.b16 %v686
      %v2486 = vunpack.c.l.b16 %v687
      %v2487 = vunpack.c.l.b16 %v688
      %v2488 = vunpack.c.l.b16 %v689
      %v2489 = vpack.c.b16 %v2234, %v2233
      %v2490 = vpack.c.b16 %v2236, %v2235
      %v2491 = vpack.c.b16 %v2238, %v2237
      %v2492 = vpack.c.b16 %v2240, %v2239
      %v2493 = vpack.c.b16 %v2242, %v2241
      %v2494 = vpack.c.b16 %v2244, %v2243
      %v2495 = vpack.c.b16 %v2246, %v2245
      %v2496 = vpack.c.b16 %v2248, %v2247
      %v2497 = vpack.c.b16 %v2250, %v2249
      %v2498 = vpack.c.b16 %v2252, %v2251
      %v2499 = vpack.c.b16 %v2254, %v2253
      %v2500 = vpack.c.b16 %v2256, %v2255
      %v2501 = vpack.c.b16 %v2258, %v2257
      %v2502 = vpack.c.b16 %v2260, %v2259
      %v2503 = vpack.c.b16 %v2262, %v2261
      %v2504 = vpack.c.b16 %v2264, %v2263
      %v2505 = vpack.c.b16 %v2266, %v2265
      %v2506 = vpack.c.b16 %v2268, %v2267
      %v2507 = vpack.c.b16 %v2270, %v2269
      %v2508 = vpack.c.b16 %v2272, %v2271
      %v2509 = vpack.c.b16 %v2274, %v2273
      %v2510 = vpack.c.b16 %v2276, %v2275
      %v2511 = vpack.c.b16 %v2278, %v2277
      %v2512 = vpack.c.b16 %v2280, %v2279
      %v2513 = vpack.c.b16 %v2282, %v2281
      %v2514 = vpack.c.b16 %v2284, %v2283
      %v2515 = vpack.c.b16 %v2286, %v2285
      %v2516 = vpack.c.b16 %v2288, %v2287
      %v2517 = vpack.c.b16 %v2290, %v2289
      %v2518 = vpack.c.b16 %v2292, %v2291
      %v2519 = vpack.c.b16 %v2294, %v2293
      %v2520 = vpack.c.b16 %v2296, %v2295
      %v2521 = vpack.c.b16 %v2298, %v2297
      %v2522 = vpack.c.b16 %v2300, %v2299
      %v2523 = vpack.c.b16 %v2302, %v2301
      %v2524 = vpack.c.b16 %v2304, %v2303
      %v2525 = vpack.c.b16 %v2306, %v2305
      %v2526 = vpack.c.b16 %v2308, %v2307
      %v2527 = vpack.c.b16 %v2310, %v2309
      %v2528 = vpack.c.b16 %v2312, %v2311
      %v2529 = vpack.c.b16 %v2314, %v2313
      %v2530 = vpack.c.b16 %v2316, %v2315
      %v2531 = vpack.c.b16 %v2318, %v2317
      %v2532 = vpack.c.b16 %v2320, %v2319
      %v2533 = vpack.c.b16 %v2322, %v2321
      %v2534 = vpack.c.b16 %v2324, %v2323
      %v2535 = vpack.c.b16 %v2326, %v2325
      %v2536 = vpack.c.b16 %v2328, %v2327
      %v2537 = vpack.c.b16 %v2330, %v2329
      %v2538 = vpack.c.b16 %v2332, %v2331
      %v2539 = vpack.c.b16 %v2334, %v2333
      %v2540 = vpack.c.b16 %v2336, %v2335
      %v2541 = vpack.c.b16 %v2338, %v2337
      %v2542 = vpack.c.b16 %v2340, %v2339
      %v2543 = vpack.c.b16 %v2342, %v2341
      %v2544 = vpack.c.b16 %v2344, %v2343
      %v2545 = vpack.c.b16 %v2346, %v2345
      %v2546 = vpack.c.b16 %v2348, %v2347
      %v2547 = vpack.c.b16 %v2350, %v2349
      %v2548 = vpack.c.b16 %v2352, %v2351
      %v2549 = vpack.c.b16 %v2354, %v2353
      %v2550 = vpack.c.b16 %v2356, %v2355
      %v2551 = vpack.c.b16 %v2358, %v2357
      %v2552 = vpack.c.b16 %v2360, %v2359
      %v2553 = vpack.c.b16 %v2362, %v2361
      %v2554 = vpack.c.b16 %v2364, %v2363
      %v2555 = vpack.c.b16 %v2366, %v2365
      %v2556 = vpack.c.b16 %v2368, %v2367
      %v2557 = vpack.c.b16 %v2370, %v2369
      %v2558 = vpack.c.b16 %v2372, %v2371
      %v2559 = vpack.c.b16 %v2374, %v2373
      %v2560 = vpack.c.b16 %v2376, %v2375
      %v2561 = vpack.c.b16 %v2378, %v2377
      %v2562 = vpack.c.b16 %v2380, %v2379
      %v2563 = vpack.c.b16 %v2382, %v2381
      %v2564 = vpack.c.b16 %v2384, %v2383
      %v2565 = vpack.c.b16 %v2386, %v2385
      %v2566 = vpack.c.b16 %v2388, %v2387
      %v2567 = vpack.c.b16 %v2390, %v2389
      %v2568 = vpack.c.b16 %v2392, %v2391
      %v2569 = vpack.c.b16 %v2394, %v2393
      %v2570 = vpack.c.b16 %v2396, %v2395
      %v2571 = vpack.c.b16 %v2398, %v2397
      %v2572 = vpack.c.b16 %v2400, %v2399
      %v2573 = vpack.c.b16 %v2402, %v2401
      %v2574 = vpack.c.b16 %v2404, %v2403
      %v2575 = vpack.c.b16 %v2406, %v2405
      %v2576 = vpack.c.b16 %v2408, %v2407
      %v2577 = vpack.c.b16 %v2410, %v2409
      %v2578 = vpack.c.b16 %v2412, %v2411
      %v2579 = vpack.c.b16 %v2414, %v2413
      %v2580 = vpack.c.b16 %v2416, %v2415
      %v2581 = vpack.c.b16 %v2418, %v2417
      %v2582 = vpack.c.b16 %v2420, %v2419
      %v2583 = vpack.c.b16 %v2422, %v2421
      %v2584 = vpack.c.b16 %v2424, %v2423
      %v2585 = vpack.c.b16 %v2426, %v2425
      %v2586 = vpack.c.b16 %v2428, %v2427
      %v2587 = vpack.c.b16 %v2430, %v2429
      %v2588 = vpack.c.b16 %v2432, %v2431
      %v2589 = vpack.c.b16 %v2434, %v2433
      %v2590 = vpack.c.b16 %v2436, %v2435
      %v2591 = vpack.c.b16 %v2438, %v2437
      %v2592 = vpack.c.b16 %v2440, %v2439
      %v2593 = vpack.c.b16 %v2442, %v2441
      %v2594 = vpack.c.b16 %v2444, %v2443
      %v2595 = vpack.c.b16 %v2446, %v2445
      %v2596 = vpack.c.b16 %v2448, %v2447
      %v2597 = vpack.c.b16 %v2450, %v2449
      %v2598 = vpack.c.b16 %v2452, %v2451
      %v2599 = vpack.c.b16 %v2454, %v2453
      %v2600 = vpack.c.b16 %v2456, %v2455
      %v2601 = vpack.c.b16 %v2458, %v2457
      %v2602 = vpack.c.b16 %v2460, %v2459
      %v2603 = vpack.c.b16 %v2462, %v2461
      %v2604 = vpack.c.b16 %v2464, %v2463
      %v2605 = vpack.c.b16 %v2466, %v2465
      %v2606 = vpack.c.b16 %v2468, %v2467
      %v2607 = vpack.c.b16 %v2470, %v2469
      %v2608 = vpack.c.b16 %v2472, %v2471
      %v2609 = vpack.c.b16 %v2474, %v2473
      %v2610 = vpack.c.b16 %v2476, %v2475
      %v2611 = vpack.c.b16 %v2478, %v2477
      %v2612 = vpack.c.b16 %v2480, %v2479
      %v2613 = vpack.c.b16 %v2482, %v2481
      %v2614 = vpack.c.b16 %v2484, %v2483
      %v2615 = vpack.c.b16 %v2486, %v2485
      %v2616 = vpack.c.b16 %v2488, %v2487
      %2745 = vmatprep.subr.bf16.mxu0 0
      %2746 = vmatpush1.bf16.msra.mxu0 %v2489
      %2747 = vmatprep.subr.bf16.mxu0 0
      %2748 = vmatpush1.bf16.msra.mxu0 %v2490
      %2749 = vmatprep.subr.bf16.mxu0 0
      %2750 = vmatpush1.bf16.msra.mxu0 %v2491
      %2751 = vmatprep.subr.bf16.mxu0 0
      %2752 = vmatpush1.bf16.msra.mxu0 %v2492
      %2753 = vmatprep.subr.bf16.mxu0 0
      %2754 = vmatpush1.bf16.msra.mxu0 %v2493
      %2755 = vmatprep.subr.bf16.mxu0 0
      %2756 = vmatpush1.bf16.msra.mxu0 %v2494
      %2757 = vmatprep.subr.bf16.mxu0 0
      %2758 = vmatpush1.bf16.msra.mxu0 %v2495
      %2759 = vmatprep.subr.bf16.mxu0 0
      %2760 = vmatpush1.bf16.msra.mxu0 %v2496
      %2761 = vmatprep.subr.bf16.mxu0 0
      %2762 = vmatpush1.bf16.msra.mxu0 %v2497
      %2763 = vmatprep.subr.bf16.mxu0 0
      %2764 = vmatpush1.bf16.msra.mxu0 %v2498
      %2765 = vmatprep.subr.bf16.mxu0 0
      %2766 = vmatpush1.bf16.msra.mxu0 %v2499
      %2767 = vmatprep.subr.bf16.mxu0 0
      %2768 = vmatpush1.bf16.msra.mxu0 %v2500
      %2769 = vmatprep.subr.bf16.mxu0 0
      %2770 = vmatpush1.bf16.msra.mxu0 %v2501
      %2771 = vmatprep.subr.bf16.mxu0 0
      %2772 = vmatpush1.bf16.msra.mxu0 %v2502
      %2773 = vmatprep.subr.bf16.mxu0 0
      %2774 = vmatpush1.bf16.msra.mxu0 %v2503
      %2775 = vmatprep.subr.bf16.mxu0 0
      %2776 = vmatpush1.bf16.msra.mxu0 %v2504
      %2777 = vmatprep.mubr.bf16.mxu0 %v1466
      %2778 = vmatmul.mubr.bf16.gmra.mrb[0].mxu0 %v1465
      %v2779 = vpop.f32.mrb[0].mxu0
      %v2780 = vadd.f32 %v695, %v2779
      %v2781 = vpop.f32.mrb[0].mxu0
      %v2782 = vpop.f32.mrb[0].mxu0
      %v2783 = vadd.f32 %v695, %v2782
      %v2784 = vpop.f32.mrb[0].mxu0
      %2785 = vmatprep.mubr.bf16.mxu0 %v1482
      %2786 = vmatmul.mubr.bf16.gmra.mrb[0].mxu0 %v1481
      %v2787 = vpop.f32.mrb[0].mxu0
      %v2788 = vadd.f32 %v695, %v2787
      %v2789 = vpop.f32.mrb[0].mxu0
      %v2790 = vpop.f32.mrb[0].mxu0
      %v2791 = vadd.f32 %v695, %v2790
      %v2792 = vpop.f32.mrb[0].mxu0
      %2793 = vmatprep.mubr.bf16.mxu0 %v1498
      %2794 = vmatmul.mubr.bf16.gmra.mrb[0].mxu0 %v1497
      %v2795 = vpop.f32.mrb[0].mxu0
      %v2796 = vadd.f32 %v695, %v2795
      %v2797 = vpop.f32.mrb[0].mxu0
      %v2798 = vpop.f32.mrb[0].mxu0
      %v2799 = vadd.f32 %v695, %v2798
      %v2800 = vpop.f32.mrb[0].mxu0
      %2801 = vmatprep.mubr.bf16.mxu0 %v1514
      %2802 = vmatmul.mubr.bf16.gmra.mrb[0].mxu0 %v1513
      %v2803 = vpop.f32.mrb[0].mxu0
      %v2804 = vadd.f32 %v695, %v2803
      %v2805 = vpop.f32.mrb[0].mxu0
      %v2806 = vpop.f32.mrb[0].mxu0
      %v2807 = vadd.f32 %v695, %v2806
      %v2808 = vpop.f32.mrb[0].mxu0
      %2809 = vmatprep.mubr.bf16.mxu0 %v1530
      %2810 = vmatmul.mubr.bf16.gmra.mrb[0].mxu0 %v1529
      %v2811 = vpop.f32.mrb[0].mxu0
      %v2812 = vadd.f32 %v695, %v2811
      %v2813 = vpop.f32.mrb[0].mxu0
      %v2814 = vpop.f32.mrb[0].mxu0
      %v2815 = vadd.f32 %v695, %v2814
      %v2816 = vpop.f32.mrb[0].mxu0
      %2817 = vmatprep.mubr.bf16.mxu0 %v1546
      %2818 = vmatmul.mubr.bf16.gmra.mrb[0].mxu0 %v1545
      %v2819 = vpop.f32.mrb[0].mxu0
      %v2820 = vadd.f32 %v695, %v2819
      %v2821 = vpop.f32.mrb[0].mxu0
      %v2822 = vpop.f32.mrb[0].mxu0
      %v2823 = vadd.f32 %v695, %v2822
      %v2824 = vpop.f32.mrb[0].mxu0
      %2825 = vmatprep.mubr.bf16.mxu0 %v1562
      %2826 = vmatmul.mubr.bf16.gmra.mrb[0].mxu0 %v1561
      %v2827 = vpop.f32.mrb[0].mxu0
      %v2828 = vadd.f32 %v695, %v2827
      %v2829 = vpop.f32.mrb[0].mxu0
      %v2830 = vpop.f32.mrb[0].mxu0
      %v2831 = vadd.f32 %v695, %v2830
      %v2832 = vpop.f32.mrb[0].mxu0
      %2833 = vmatprep.mubr.bf16.mxu0 %v1578
      %2834 = vmatmul.mubr.bf16.gmra.mrb[0].mxu0 %v1577
      %v2835 = vpop.f32.mrb[0].mxu0
      %v2836 = vadd.f32 %v695, %v2835
      %v2837 = vpop.f32.mrb[0].mxu0
      %v2838 = vpop.f32.mrb[0].mxu0
      %v2839 = vadd.f32 %v695, %v2838
      %v2840 = vpop.f32.mrb[0].mxu0
      %2841 = vmatprep.mubr.bf16.mxu0 %v1594
      %2842 = vmatmul.mubr.bf16.gmra.mrb[0].mxu0 %v1593
      %v2843 = vpop.f32.mrb[0].mxu0
      %v2844 = vadd.f32 %v695, %v2843
      %v2845 = vpop.f32.mrb[0].mxu0
      %v2846 = vpop.f32.mrb[0].mxu0
      %v2847 = vadd.f32 %v695, %v2846
      %v2848 = vpop.f32.mrb[0].mxu0
      %2849 = vmatprep.mubr.bf16.mxu0 %v1610
      %2850 = vmatmul.mubr.bf16.gmra.mrb[0].mxu0 %v1609
      %v2851 = vpop.f32.mrb[0].mxu0
      %v2852 = vadd.f32 %v695, %v2851
      %v2853 = vpop.f32.mrb[0].mxu0
      %v2854 = vpop.f32.mrb[0].mxu0
      %v2855 = vadd.f32 %v695, %v2854
      %v2856 = vpop.f32.mrb[0].mxu0
      %2857 = vmatprep.mubr.bf16.mxu0 %v1626
      %2858 = vmatmul.mubr.bf16.gmra.mrb[0].mxu0 %v1625
      %v2859 = vpop.f32.mrb[0].mxu0
      %v2860 = vadd.f32 %v695, %v2859
      %v2861 = vpop.f32.mrb[0].mxu0
      %v2862 = vpop.f32.mrb[0].mxu0
      %v2863 = vadd.f32 %v695, %v2862
      %v2864 = vpop.f32.mrb[0].mxu0
      %2865 = vmatprep.mubr.bf16.mxu0 %v1642
      %2866 = vmatmul.mubr.bf16.gmra.mrb[0].mxu0 %v1641
      %v2867 = vpop.f32.mrb[0].mxu0
      %v2868 = vadd.f32 %v695, %v2867
      %v2869 = vpop.f32.mrb[0].mxu0
      %v2870 = vpop.f32.mrb[0].mxu0
      %v2871 = vadd.f32 %v695, %v2870
      %v2872 = vpop.f32.mrb[0].mxu0
      %2873 = vmatprep.mubr.bf16.mxu0 %v1658
      %2874 = vmatmul.mubr.bf16.gmra.mrb[0].mxu0 %v1657
      %v2875 = vpop.f32.mrb[0].mxu0
      %v2876 = vadd.f32 %v695, %v2875
      %v2877 = vpop.f32.mrb[0].mxu0
      %v2878 = vpop.f32.mrb[0].mxu0
      %v2879 = vadd.f32 %v695, %v2878
      %v2880 = vpop.f32.mrb[0].mxu0
      %2881 = vmatprep.mubr.bf16.mxu0 %v1674
      %2882 = vmatmul.mubr.bf16.gmra.mrb[0].mxu0 %v1673
      %v2883 = vpop.f32.mrb[0].mxu0
      %v2884 = vadd.f32 %v695, %v2883
      %v2885 = vpop.f32.mrb[0].mxu0
      %v2886 = vpop.f32.mrb[0].mxu0
      %v2887 = vadd.f32 %v695, %v2886
      %v2888 = vpop.f32.mrb[0].mxu0
      %2889 = vmatprep.mubr.bf16.mxu0 %v1690
      %2890 = vmatmul.mubr.bf16.gmra.mrb[0].mxu0 %v1689
      %v2891 = vpop.f32.mrb[0].mxu0
      %v2892 = vadd.f32 %v695, %v2891
      %v2893 = vpop.f32.mrb[0].mxu0
      %v2894 = vpop.f32.mrb[0].mxu0
      %v2895 = vadd.f32 %v695, %v2894
      %v2896 = vpop.f32.mrb[0].mxu0
      %2897 = vmatprep.mubr.bf16.mxu0 %v1706
      %2898 = vmatmul.mubr.bf16.gmra.mrb[0].mxu0 %v1705
      %v2899 = vpop.f32.mrb[0].mxu0
      %v2900 = vadd.f32 %v695, %v2899
      %v2901 = vpop.f32.mrb[0].mxu0
      %v2902 = vpop.f32.mrb[0].mxu0
      %v2903 = vadd.f32 %v695, %v2902
      %v2904 = vpop.f32.mrb[0].mxu0
      %2905 = vdwg.mxu0
      %2906 = vmatprep.subr.bf16.mxu0 0
      %2907 = vmatpush1.bf16.msra.mxu0 %v2505
      %2908 = vmatprep.subr.bf16.mxu0 0
      %2909 = vmatpush1.bf16.msra.mxu0 %v2506
      %2910 = vmatprep.subr.bf16.mxu0 0
      %2911 = vmatpush1.bf16.msra.mxu0 %v2507
      %2912 = vmatprep.subr.bf16.mxu0 0
      %2913 = vmatpush1.bf16.msra.mxu0 %v2508
      %2914 = vmatprep.subr.bf16.mxu0 0
      %2915 = vmatpush1.bf16.msra.mxu0 %v2509
      %2916 = vmatprep.subr.bf16.mxu0 0
      %2917 = vmatpush1.bf16.msra.mxu0 %v2510
      %2918 = vmatprep.subr.bf16.mxu0 0
      %2919 = vmatpush1.bf16.msra.mxu0 %v2511
      %2920 = vmatprep.subr.bf16.mxu0 0
      %2921 = vmatpush1.bf16.msra.mxu0 %v2512
      %2922 = vmatprep.subr.bf16.mxu0 0
      %2923 = vmatpush1.bf16.msra.mxu0 %v2513
      %2924 = vmatprep.subr.bf16.mxu0 0
      %2925 = vmatpush1.bf16.msra.mxu0 %v2514
      %2926 = vmatprep.subr.bf16.mxu0 0
      %2927 = vmatpush1.bf16.msra.mxu0 %v2515
      %2928 = vmatprep.subr.bf16.mxu0 0
      %2929 = vmatpush1.bf16.msra.mxu0 %v2516
      %2930 = vmatprep.subr.bf16.mxu0 0
      %2931 = vmatpush1.bf16.msra.mxu0 %v2517
      %2932 = vmatprep.subr.bf16.mxu0 0
      %2933 = vmatpush1.bf16.msra.mxu0 %v2518
      %2934 = vmatprep.subr.bf16.mxu0 0
      %2935 = vmatpush1.bf16.msra.mxu0 %v2519
      %2936 = vmatprep.subr.bf16.mxu0 0
      %2937 = vmatpush1.bf16.msra.mxu0 %v2520
      %2938 = vmatprep.mubr.bf16.mxu0 %v1468
      %2939 = vmatmul.mubr.bf16.gmra.mrb[0].mxu0 %v1467
      %v2940 = vpop.f32.mrb[0].mxu0
      %v2941 = vadd.f32 %v2780, %v2940
      %v2942 = vpop.f32.mrb[0].mxu0
      %v2943 = vpop.f32.mrb[0].mxu0
      %v2944 = vadd.f32 %v2783, %v2943
      %v2945 = vpop.f32.mrb[0].mxu0
      %2946 = vmatprep.mubr.bf16.mxu0 %v1484
      %2947 = vmatmul.mubr.bf16.gmra.mrb[0].mxu0 %v1483
      %v2948 = vpop.f32.mrb[0].mxu0
      %v2949 = vadd.f32 %v2788, %v2948
      %v2950 = vpop.f32.mrb[0].mxu0
      %v2951 = vpop.f32.mrb[0].mxu0
      %v2952 = vadd.f32 %v2791, %v2951
      %v2953 = vpop.f32.mrb[0].mxu0
      %2954 = vmatprep.mubr.bf16.mxu0 %v1500
      %2955 = vmatmul.mubr.bf16.gmra.mrb[0].mxu0 %v1499
      %v2956 = vpop.f32.mrb[0].mxu0
      %v2957 = vadd.f32 %v2796, %v2956
      %v2958 = vpop.f32.mrb[0].mxu0
      %v2959 = vpop.f32.mrb[0].mxu0
      %v2960 = vadd.f32 %v2799, %v2959
      %v2961 = vpop.f32.mrb[0].mxu0
      %2962 = vmatprep.mubr.bf16.mxu0 %v1516
      %2963 = vmatmul.mubr.bf16.gmra.mrb[0].mxu0 %v1515
      %v2964 = vpop.f32.mrb[0].mxu0
      %v2965 = vadd.f32 %v2804, %v2964
      %v2966 = vpop.f32.mrb[0].mxu0
      %v2967 = vpop.f32.mrb[0].mxu0
      %v2968 = vadd.f32 %v2807, %v2967
      %v2969 = vpop.f32.mrb[0].mxu0
      %2970 = vmatprep.mubr.bf16.mxu0 %v1532
      %2971 = vmatmul.mubr.bf16.gmra.mrb[0].mxu0 %v1531
      %v2972 = vpop.f32.mrb[0].mxu0
      %v2973 = vadd.f32 %v2812, %v2972
      %v2974 = vpop.f32.mrb[0].mxu0
      %v2975 = vpop.f32.mrb[0].mxu0
      %v2976 = vadd.f32 %v2815, %v2975
      %v2977 = vpop.f32.mrb[0].mxu0
      %2978 = vmatprep.mubr.bf16.mxu0 %v1548
      %2979 = vmatmul.mubr.bf16.gmra.mrb[0].mxu0 %v1547
      %v2980 = vpop.f32.mrb[0].mxu0
      %v2981 = vadd.f32 %v2820, %v2980
      %v2982 = vpop.f32.mrb[0].mxu0
      %v2983 = vpop.f32.mrb[0].mxu0
      %v2984 = vadd.f32 %v2823, %v2983
      %v2985 = vpop.f32.mrb[0].mxu0
      %2986 = vmatprep.mubr.bf16.mxu0 %v1564
      %2987 = vmatmul.mubr.bf16.gmra.mrb[0].mxu0 %v1563
      %v2988 = vpop.f32.mrb[0].mxu0
      %v2989 = vadd.f32 %v2828, %v2988
      %v2990 = vpop.f32.mrb[0].mxu0
      %v2991 = vpop.f32.mrb[0].mxu0
      %v2992 = vadd.f32 %v2831, %v2991
      %v2993 = vpop.f32.mrb[0].mxu0
      %2994 = vmatprep.mubr.bf16.mxu0 %v1580
      %2995 = vmatmul.mubr.bf16.gmra.mrb[0].mxu0 %v1579
      %v2996 = vpop.f32.mrb[0].mxu0
      %v2997 = vadd.f32 %v2836, %v2996
      %v2998 = vpop.f32.mrb[0].mxu0
      %v2999 = vpop.f32.mrb[0].mxu0
      %v3000 = vadd.f32 %v2839, %v2999
      %v3001 = vpop.f32.mrb[0].mxu0
      %3002 = vmatprep.mubr.bf16.mxu0 %v1596
      %3003 = vmatmul.mubr.bf16.gmra.mrb[0].mxu0 %v1595
      %v3004 = vpop.f32.mrb[0].mxu0
      %v3005 = vadd.f32 %v2844, %v3004
      %v3006 = vpop.f32.mrb[0].mxu0
      %v3007 = vpop.f32.mrb[0].mxu0
      %v3008 = vadd.f32 %v2847, %v3007
      %v3009 = vpop.f32.mrb[0].mxu0
      %3010 = vmatprep.mubr.bf16.mxu0 %v1612
      %3011 = vmatmul.mubr.bf16.gmra.mrb[0].mxu0 %v1611
      %v3012 = vpop.f32.mrb[0].mxu0
      %v3013 = vadd.f32 %v2852, %v3012
      %v3014 = vpop.f32.mrb[0].mxu0
      %v3015 = vpop.f32.mrb[0].mxu0
      %v3016 = vadd.f32 %v2855, %v3015
      %v3017 = vpop.f32.mrb[0].mxu0
      %3018 = vmatprep.mubr.bf16.mxu0 %v1628
      %3019 = vmatmul.mubr.bf16.gmra.mrb[0].mxu0 %v1627
      %v3020 = vpop.f32.mrb[0].mxu0
      %v3021 = vadd.f32 %v2860, %v3020
      %v3022 = vpop.f32.mrb[0].mxu0
      %v3023 = vpop.f32.mrb[0].mxu0
      %v3024 = vadd.f32 %v2863, %v3023
      %v3025 = vpop.f32.mrb[0].mxu0
      %3026 = vmatprep.mubr.bf16.mxu0 %v1644
      %3027 = vmatmul.mubr.bf16.gmra.mrb[0].mxu0 %v1643
      %v3028 = vpop.f32.mrb[0].mxu0
      %v3029 = vadd.f32 %v2868, %v3028
      %v3030 = vpop.f32.mrb[0].mxu0
      %v3031 = vpop.f32.mrb[0].mxu0
      %v3032 = vadd.f32 %v2871, %v3031
      %v3033 = vpop.f32.mrb[0].mxu0
      %3034 = vmatprep.mubr.bf16.mxu0 %v1660
      %3035 = vmatmul.mubr.bf16.gmra.mrb[0].mxu0 %v1659
      %v3036 = vpop.f32.mrb[0].mxu0
      %v3037 = vadd.f32 %v2876, %v3036
      %v3038 = vpop.f32.mrb[0].mxu0
      %v3039 = vpop.f32.mrb[0].mxu0
      %v3040 = vadd.f32 %v2879, %v3039
      %v3041 = vpop.f32.mrb[0].mxu0
      %3042 = vmatprep.mubr.bf16.mxu0 %v1676
      %3043 = vmatmul.mubr.bf16.gmra.mrb[0].mxu0 %v1675
      %v3044 = vpop.f32.mrb[0].mxu0
      %v3045 = vadd.f32 %v2884, %v3044
      %v3046 = vpop.f32.mrb[0].mxu0
      %v3047 = vpop.f32.mrb[0].mxu0
      %v3048 = vadd.f32 %v2887, %v3047
      %v3049 = vpop.f32.mrb[0].mxu0
      %3050 = vmatprep.mubr.bf16.mxu0 %v1692
      %3051 = vmatmul.mubr.bf16.gmra.mrb[0].mxu0 %v1691
      %v3052 = vpop.f32.mrb[0].mxu0
      %v3053 = vadd.f32 %v2892, %v3052
      %v3054 = vpop.f32.mrb[0].mxu0
      %v3055 = vpop.f32.mrb[0].mxu0
      %v3056 = vadd.f32 %v2895, %v3055
      %v3057 = vpop.f32.mrb[0].mxu0
      %3058 = vmatprep.mubr.bf16.mxu0 %v1708
      %3059 = vmatmul.mubr.bf16.gmra.mrb[0].mxu0 %v1707
      %v3060 = vpop.f32.mrb[0].mxu0
      %v3061 = vadd.f32 %v2900, %v3060
      %v3062 = vpop.f32.mrb[0].mxu0
      %v3063 = vpop.f32.mrb[0].mxu0
      %v3064 = vadd.f32 %v2903, %v3063
      %v3065 = vpop.f32.mrb[0].mxu0
      %3066 = vdwg.mxu0
      %3067 = vmatprep.subr.bf16.mxu0 0
      %3068 = vmatpush1.bf16.msra.mxu0 %v2521
      %3069 = vmatprep.subr.bf16.mxu0 0
      %3070 = vmatpush1.bf16.msra.mxu0 %v2522
      %3071 = vmatprep.subr.bf16.mxu0 0
      %3072 = vmatpush1.bf16.msra.mxu0 %v2523
      %3073 = vmatprep.subr.bf16.mxu0 0
      %3074 = vmatpush1.bf16.msra.mxu0 %v2524
      %3075 = vmatprep.subr.bf16.mxu0 0
      %3076 = vmatpush1.bf16.msra.mxu0 %v2525
      %3077 = vmatprep.subr.bf16.mxu0 0
      %3078 = vmatpush1.bf16.msra.mxu0 %v2526
      %3079 = vmatprep.subr.bf16.mxu0 0
      %3080 = vmatpush1.bf16.msra.mxu0 %v2527
      %3081 = vmatprep.subr.bf16.mxu0 0
      %3082 = vmatpush1.bf16.msra.mxu0 %v2528
      %3083 = vmatprep.subr.bf16.mxu0 0
      %3084 = vmatpush1.bf16.msra.mxu0 %v2529
      %3085 = vmatprep.subr.bf16.mxu0 0
      %3086 = vmatpush1.bf16.msra.mxu0 %v2530
      %3087 = vmatprep.subr.bf16.mxu0 0
      %3088 = vmatpush1.bf16.msra.mxu0 %v2531
      %3089 = vmatprep.subr.bf16.mxu0 0
      %3090 = vmatpush1.bf16.msra.mxu0 %v2532
      %3091 = vmatprep.subr.bf16.mxu0 0
      %3092 = vmatpush1.bf16.msra.mxu0 %v2533
      %3093 = vmatprep.subr.bf16.mxu0 0
      %3094 = vmatpush1.bf16.msra.mxu0 %v2534
      %3095 = vmatprep.subr.bf16.mxu0 0
      %3096 = vmatpush1.bf16.msra.mxu0 %v2535
      %3097 = vmatprep.subr.bf16.mxu0 0
      %3098 = vmatpush1.bf16.msra.mxu0 %v2536
      %3099 = vmatprep.mubr.bf16.mxu0 %v1470
      %3100 = vmatmul.mubr.bf16.gmra.mrb[0].mxu0 %v1469
      %v3101 = vpop.f32.mrb[0].mxu0
      %v3102 = vadd.f32 %v2941, %v3101
      %v3103 = vpop.f32.mrb[0].mxu0
      %v3104 = vpop.f32.mrb[0].mxu0
      %v3105 = vadd.f32 %v2944, %v3104
      %v3106 = vpop.f32.mrb[0].mxu0
      %3107 = vmatprep.mubr.bf16.mxu0 %v1486
      %3108 = vmatmul.mubr.bf16.gmra.mrb[0].mxu0 %v1485
      %v3109 = vpop.f32.mrb[0].mxu0
      %v3110 = vadd.f32 %v2949, %v3109
      %v3111 = vpop.f32.mrb[0].mxu0
      %v3112 = vpop.f32.mrb[0].mxu0
      %v3113 = vadd.f32 %v2952, %v3112
      %v3114 = vpop.f32.mrb[0].mxu0
      %3115 = vmatprep.mubr.bf16.mxu0 %v1502
      %3116 = vmatmul.mubr.bf16.gmra.mrb[0].mxu0 %v1501
      %v3117 = vpop.f32.mrb[0].mxu0
      %v3118 = vadd.f32 %v2957, %v3117
      %v3119 = vpop.f32.mrb[0].mxu0
      %v3120 = vpop.f32.mrb[0].mxu0
      %v3121 = vadd.f32 %v2960, %v3120
      %v3122 = vpop.f32.mrb[0].mxu0
      %3123 = vmatprep.mubr.bf16.mxu0 %v1518
      %3124 = vmatmul.mubr.bf16.gmra.mrb[0].mxu0 %v1517
      %v3125 = vpop.f32.mrb[0].mxu0
      %v3126 = vadd.f32 %v2965, %v3125
      %v3127 = vpop.f32.mrb[0].mxu0
      %v3128 = vpop.f32.mrb[0].mxu0
      %v3129 = vadd.f32 %v2968, %v3128
      %v3130 = vpop.f32.mrb[0].mxu0
      %3131 = vmatprep.mubr.bf16.mxu0 %v1534
      %3132 = vmatmul.mubr.bf16.gmra.mrb[0].mxu0 %v1533
      %v3133 = vpop.f32.mrb[0].mxu0
      %v3134 = vadd.f32 %v2973, %v3133
      %v3135 = vpop.f32.mrb[0].mxu0
      %v3136 = vpop.f32.mrb[0].mxu0
      %v3137 = vadd.f32 %v2976, %v3136
      %v3138 = vpop.f32.mrb[0].mxu0
      %3139 = vmatprep.mubr.bf16.mxu0 %v1550
      %3140 = vmatmul.mubr.bf16.gmra.mrb[0].mxu0 %v1549
      %v3141 = vpop.f32.mrb[0].mxu0
      %v3142 = vadd.f32 %v2981, %v3141
      %v3143 = vpop.f32.mrb[0].mxu0
      %v3144 = vpop.f32.mrb[0].mxu0
      %v3145 = vadd.f32 %v2984, %v3144
      %v3146 = vpop.f32.mrb[0].mxu0
      %3147 = vmatprep.mubr.bf16.mxu0 %v1566
      %3148 = vmatmul.mubr.bf16.gmra.mrb[0].mxu0 %v1565
      %v3149 = vpop.f32.mrb[0].mxu0
      %v3150 = vadd.f32 %v2989, %v3149
      %v3151 = vpop.f32.mrb[0].mxu0
      %v3152 = vpop.f32.mrb[0].mxu0
      %v3153 = vadd.f32 %v2992, %v3152
      %v3154 = vpop.f32.mrb[0].mxu0
      %3155 = vmatprep.mubr.bf16.mxu0 %v1582
      %3156 = vmatmul.mubr.bf16.gmra.mrb[0].mxu0 %v1581
      %v3157 = vpop.f32.mrb[0].mxu0
      %v3158 = vadd.f32 %v2997, %v3157
      %v3159 = vpop.f32.mrb[0].mxu0
      %v3160 = vpop.f32.mrb[0].mxu0
      %v3161 = vadd.f32 %v3000, %v3160
      %v3162 = vpop.f32.mrb[0].mxu0
      %3163 = vmatprep.mubr.bf16.mxu0 %v1598
      %3164 = vmatmul.mubr.bf16.gmra.mrb[0].mxu0 %v1597
      %v3165 = vpop.f32.mrb[0].mxu0
      %v3166 = vadd.f32 %v3005, %v3165
      %v3167 = vpop.f32.mrb[0].mxu0
      %v3168 = vpop.f32.mrb[0].mxu0
      %v3169 = vadd.f32 %v3008, %v3168
      %v3170 = vpop.f32.mrb[0].mxu0
      %3171 = vmatprep.mubr.bf16.mxu0 %v1614
      %3172 = vmatmul.mubr.bf16.gmra.mrb[0].mxu0 %v1613
      %v3173 = vpop.f32.mrb[0].mxu0
      %v3174 = vadd.f32 %v3013, %v3173
      %v3175 = vpop.f32.mrb[0].mxu0
      %v3176 = vpop.f32.mrb[0].mxu0
      %v3177 = vadd.f32 %v3016, %v3176
      %v3178 = vpop.f32.mrb[0].mxu0
      %3179 = vmatprep.mubr.bf16.mxu0 %v1630
      %3180 = vmatmul.mubr.bf16.gmra.mrb[0].mxu0 %v1629
      %v3181 = vpop.f32.mrb[0].mxu0
      %v3182 = vadd.f32 %v3021, %v3181
      %v3183 = vpop.f32.mrb[0].mxu0
      %v3184 = vpop.f32.mrb[0].mxu0
      %v3185 = vadd.f32 %v3024, %v3184
      %v3186 = vpop.f32.mrb[0].mxu0
      %3187 = vmatprep.mubr.bf16.mxu0 %v1646
      %3188 = vmatmul.mubr.bf16.gmra.mrb[0].mxu0 %v1645
      %v3189 = vpop.f32.mrb[0].mxu0
      %v3190 = vadd.f32 %v3029, %v3189
      %v3191 = vpop.f32.mrb[0].mxu0
      %v3192 = vpop.f32.mrb[0].mxu0
      %v3193 = vadd.f32 %v3032, %v3192
      %v3194 = vpop.f32.mrb[0].mxu0
      %3195 = vmatprep.mubr.bf16.mxu0 %v1662
      %3196 = vmatmul.mubr.bf16.gmra.mrb[0].mxu0 %v1661
      %v3197 = vpop.f32.mrb[0].mxu0
      %v3198 = vadd.f32 %v3037, %v3197
      %v3199 = vpop.f32.mrb[0].mxu0
      %v3200 = vpop.f32.mrb[0].mxu0
      %v3201 = vadd.f32 %v3040, %v3200
      %v3202 = vpop.f32.mrb[0].mxu0
      %3203 = vmatprep.mubr.bf16.mxu0 %v1678
      %3204 = vmatmul.mubr.bf16.gmra.mrb[0].mxu0 %v1677
      %v3205 = vpop.f32.mrb[0].mxu0
      %v3206 = vadd.f32 %v3045, %v3205
      %v3207 = vpop.f32.mrb[0].mxu0
      %v3208 = vpop.f32.mrb[0].mxu0
      %v3209 = vadd.f32 %v3048, %v3208
      %v3210 = vpop.f32.mrb[0].mxu0
      %3211 = vmatprep.mubr.bf16.mxu0 %v1694
      %3212 = vmatmul.mubr.bf16.gmra.mrb[0].mxu0 %v1693
      %v3213 = vpop.f32.mrb[0].mxu0
      %v3214 = vadd.f32 %v3053, %v3213
      %v3215 = vpop.f32.mrb[0].mxu0
      %v3216 = vpop.f32.mrb[0].mxu0
      %v3217 = vadd.f32 %v3056, %v3216
      %v3218 = vpop.f32.mrb[0].mxu0
      %3219 = vmatprep.mubr.bf16.mxu0 %v1710
      %3220 = vmatmul.mubr.bf16.gmra.mrb[0].mxu0 %v1709
      %v3221 = vpop.f32.mrb[0].mxu0
      %v3222 = vadd.f32 %v3061, %v3221
      %v3223 = vpop.f32.mrb[0].mxu0
      %v3224 = vpop.f32.mrb[0].mxu0
      %v3225 = vadd.f32 %v3064, %v3224
      %v3226 = vpop.f32.mrb[0].mxu0
      %3227 = vdwg.mxu0
      %3228 = vmatprep.subr.bf16.mxu0 0
      %3229 = vmatpush1.bf16.msra.mxu0 %v2537
      %3230 = vmatprep.subr.bf16.mxu0 0
      %3231 = vmatpush1.bf16.msra.mxu0 %v2538
      %3232 = vmatprep.subr.bf16.mxu0 0
      %3233 = vmatpush1.bf16.msra.mxu0 %v2539
      %3234 = vmatprep.subr.bf16.mxu0 0
      %3235 = vmatpush1.bf16.msra.mxu0 %v2540
      %3236 = vmatprep.subr.bf16.mxu0 0
      %3237 = vmatpush1.bf16.msra.mxu0 %v2541
      %3238 = vmatprep.subr.bf16.mxu0 0
      %3239 = vmatpush1.bf16.msra.mxu0 %v2542
      %3240 = vmatprep.subr.bf16.mxu0 0
      %3241 = vmatpush1.bf16.msra.mxu0 %v2543
      %3242 = vmatprep.subr.bf16.mxu0 0
      %3243 = vmatpush1.bf16.msra.mxu0 %v2544
      %3244 = vmatprep.subr.bf16.mxu0 0
      %3245 = vmatpush1.bf16.msra.mxu0 %v2545
      %3246 = vmatprep.subr.bf16.mxu0 0
      %3247 = vmatpush1.bf16.msra.mxu0 %v2546
      %3248 = vmatprep.subr.bf16.mxu0 0
      %3249 = vmatpush1.bf16.msra.mxu0 %v2547
      %3250 = vmatprep.subr.bf16.mxu0 0
      %3251 = vmatpush1.bf16.msra.mxu0 %v2548
      %3252 = vmatprep.subr.bf16.mxu0 0
      %3253 = vmatpush1.bf16.msra.mxu0 %v2549
      %3254 = vmatprep.subr.bf16.mxu0 0
      %3255 = vmatpush1.bf16.msra.mxu0 %v2550
      %3256 = vmatprep.subr.bf16.mxu0 0
      %3257 = vmatpush1.bf16.msra.mxu0 %v2551
      %3258 = vmatprep.subr.bf16.mxu0 0
      %3259 = vmatpush1.bf16.msra.mxu0 %v2552
      %3260 = vmatprep.mubr.bf16.mxu0 %v1472
      %3261 = vmatmul.mubr.bf16.gmra.mrb[0].mxu0 %v1471
      %v3262 = vpop.f32.mrb[0].mxu0
      %v3263 = vadd.f32 %v3102, %v3262
      %v3264 = vpop.f32.mrb[0].mxu0
      %v3265 = vpop.f32.mrb[0].mxu0
      %v3266 = vadd.f32 %v3105, %v3265
      %v3267 = vpop.f32.mrb[0].mxu0
      %3268 = vmatprep.mubr.bf16.mxu0 %v1488
      %3269 = vmatmul.mubr.bf16.gmra.mrb[0].mxu0 %v1487
      %v3270 = vpop.f32.mrb[0].mxu0
      %v3271 = vadd.f32 %v3110, %v3270
      %v3272 = vpop.f32.mrb[0].mxu0
      %v3273 = vpop.f32.mrb[0].mxu0
      %v3274 = vadd.f32 %v3113, %v3273
      %v3275 = vpop.f32.mrb[0].mxu0
      %3276 = vmatprep.mubr.bf16.mxu0 %v1504
      %3277 = vmatmul.mubr.bf16.gmra.mrb[0].mxu0 %v1503
      %v3278 = vpop.f32.mrb[0].mxu0
      %v3279 = vadd.f32 %v3118, %v3278
      %v3280 = vpop.f32.mrb[0].mxu0
      %v3281 = vpop.f32.mrb[0].mxu0
      %v3282 = vadd.f32 %v3121, %v3281
      %v3283 = vpop.f32.mrb[0].mxu0
      %3284 = vmatprep.mubr.bf16.mxu0 %v1520
      %3285 = vmatmul.mubr.bf16.gmra.mrb[0].mxu0 %v1519
      %v3286 = vpop.f32.mrb[0].mxu0
      %v3287 = vadd.f32 %v3126, %v3286
      %v3288 = vpop.f32.mrb[0].mxu0
      %v3289 = vpop.f32.mrb[0].mxu0
      %v3290 = vadd.f32 %v3129, %v3289
      %v3291 = vpop.f32.mrb[0].mxu0
      %3292 = vmatprep.mubr.bf16.mxu0 %v1536
      %3293 = vmatmul.mubr.bf16.gmra.mrb[0].mxu0 %v1535
      %v3294 = vpop.f32.mrb[0].mxu0
      %v3295 = vadd.f32 %v3134, %v3294
      %v3296 = vpop.f32.mrb[0].mxu0
      %v3297 = vpop.f32.mrb[0].mxu0
      %v3298 = vadd.f32 %v3137, %v3297
      %v3299 = vpop.f32.mrb[0].mxu0
      %3300 = vmatprep.mubr.bf16.mxu0 %v1552
      %3301 = vmatmul.mubr.bf16.gmra.mrb[0].mxu0 %v1551
      %v3302 = vpop.f32.mrb[0].mxu0
      %v3303 = vadd.f32 %v3142, %v3302
      %v3304 = vpop.f32.mrb[0].mxu0
      %v3305 = vpop.f32.mrb[0].mxu0
      %v3306 = vadd.f32 %v3145, %v3305
      %v3307 = vpop.f32.mrb[0].mxu0
      %3308 = vmatprep.mubr.bf16.mxu0 %v1568
      %3309 = vmatmul.mubr.bf16.gmra.mrb[0].mxu0 %v1567
      %v3310 = vpop.f32.mrb[0].mxu0
      %v3311 = vadd.f32 %v3150, %v3310
      %v3312 = vpop.f32.mrb[0].mxu0
      %v3313 = vpop.f32.mrb[0].mxu0
      %v3314 = vadd.f32 %v3153, %v3313
      %v3315 = vpop.f32.mrb[0].mxu0
      %3316 = vmatprep.mubr.bf16.mxu0 %v1584
      %3317 = vmatmul.mubr.bf16.gmra.mrb[0].mxu0 %v1583
      %v3318 = vpop.f32.mrb[0].mxu0
      %v3319 = vadd.f32 %v3158, %v3318
      %v3320 = vpop.f32.mrb[0].mxu0
      %v3321 = vpop.f32.mrb[0].mxu0
      %v3322 = vadd.f32 %v3161, %v3321
      %v3323 = vpop.f32.mrb[0].mxu0
      %3324 = vmatprep.mubr.bf16.mxu0 %v1600
      %3325 = vmatmul.mubr.bf16.gmra.mrb[0].mxu0 %v1599
      %v3326 = vpop.f32.mrb[0].mxu0
      %v3327 = vadd.f32 %v3166, %v3326
      %v3328 = vpop.f32.mrb[0].mxu0
      %v3329 = vpop.f32.mrb[0].mxu0
      %v3330 = vadd.f32 %v3169, %v3329
      %v3331 = vpop.f32.mrb[0].mxu0
      %3332 = vmatprep.mubr.bf16.mxu0 %v1616
      %3333 = vmatmul.mubr.bf16.gmra.mrb[0].mxu0 %v1615
      %v3334 = vpop.f32.mrb[0].mxu0
      %v3335 = vadd.f32 %v3174, %v3334
      %v3336 = vpop.f32.mrb[0].mxu0
      %v3337 = vpop.f32.mrb[0].mxu0
      %v3338 = vadd.f32 %v3177, %v3337
      %v3339 = vpop.f32.mrb[0].mxu0
      %3340 = vmatprep.mubr.bf16.mxu0 %v1632
      %3341 = vmatmul.mubr.bf16.gmra.mrb[0].mxu0 %v1631
      %v3342 = vpop.f32.mrb[0].mxu0
      %v3343 = vadd.f32 %v3182, %v3342
      %v3344 = vpop.f32.mrb[0].mxu0
      %v3345 = vpop.f32.mrb[0].mxu0
      %v3346 = vadd.f32 %v3185, %v3345
      %v3347 = vpop.f32.mrb[0].mxu0
      %3348 = vmatprep.mubr.bf16.mxu0 %v1648
      %3349 = vmatmul.mubr.bf16.gmra.mrb[0].mxu0 %v1647
      %v3350 = vpop.f32.mrb[0].mxu0
      %v3351 = vadd.f32 %v3190, %v3350
      %v3352 = vpop.f32.mrb[0].mxu0
      %v3353 = vpop.f32.mrb[0].mxu0
      %v3354 = vadd.f32 %v3193, %v3353
      %v3355 = vpop.f32.mrb[0].mxu0
      %3356 = vmatprep.mubr.bf16.mxu0 %v1664
      %3357 = vmatmul.mubr.bf16.gmra.mrb[0].mxu0 %v1663
      %v3358 = vpop.f32.mrb[0].mxu0
      %v3359 = vadd.f32 %v3198, %v3358
      %v3360 = vpop.f32.mrb[0].mxu0
      %v3361 = vpop.f32.mrb[0].mxu0
      %v3362 = vadd.f32 %v3201, %v3361
      %v3363 = vpop.f32.mrb[0].mxu0
      %3364 = vmatprep.mubr.bf16.mxu0 %v1680
      %3365 = vmatmul.mubr.bf16.gmra.mrb[0].mxu0 %v1679
      %v3366 = vpop.f32.mrb[0].mxu0
      %v3367 = vadd.f32 %v3206, %v3366
      %v3368 = vpop.f32.mrb[0].mxu0
      %v3369 = vpop.f32.mrb[0].mxu0
      %v3370 = vadd.f32 %v3209, %v3369
      %v3371 = vpop.f32.mrb[0].mxu0
      %3372 = vmatprep.mubr.bf16.mxu0 %v1696
      %3373 = vmatmul.mubr.bf16.gmra.mrb[0].mxu0 %v1695
      %v3374 = vpop.f32.mrb[0].mxu0
      %v3375 = vadd.f32 %v3214, %v3374
      %v3376 = vpop.f32.mrb[0].mxu0
      %v3377 = vpop.f32.mrb[0].mxu0
      %v3378 = vadd.f32 %v3217, %v3377
      %v3379 = vpop.f32.mrb[0].mxu0
      %3380 = vmatprep.mubr.bf16.mxu0 %v1712
      %3381 = vmatmul.mubr.bf16.gmra.mrb[0].mxu0 %v1711
      %v3382 = vpop.f32.mrb[0].mxu0
      %v3383 = vadd.f32 %v3222, %v3382
      %v3384 = vpop.f32.mrb[0].mxu0
      %v3385 = vpop.f32.mrb[0].mxu0
      %v3386 = vadd.f32 %v3225, %v3385
      %v3387 = vpop.f32.mrb[0].mxu0
      %3388 = vdwg.mxu0
      %3389 = vmatprep.subr.bf16.mxu0 0
      %3390 = vmatpush1.bf16.msra.mxu0 %v2553
      %3391 = vmatprep.subr.bf16.mxu0 0
      %3392 = vmatpush1.bf16.msra.mxu0 %v2554
      %3393 = vmatprep.subr.bf16.mxu0 0
      %3394 = vmatpush1.bf16.msra.mxu0 %v2555
      %3395 = vmatprep.subr.bf16.mxu0 0
      %3396 = vmatpush1.bf16.msra.mxu0 %v2556
      %3397 = vmatprep.subr.bf16.mxu0 0
      %3398 = vmatpush1.bf16.msra.mxu0 %v2557
      %3399 = vmatprep.subr.bf16.mxu0 0
      %3400 = vmatpush1.bf16.msra.mxu0 %v2558
      %3401 = vmatprep.subr.bf16.mxu0 0
      %3402 = vmatpush1.bf16.msra.mxu0 %v2559
      %3403 = vmatprep.subr.bf16.mxu0 0
      %3404 = vmatpush1.bf16.msra.mxu0 %v2560
      %3405 = vmatprep.subr.bf16.mxu0 0
      %3406 = vmatpush1.bf16.msra.mxu0 %v2561
      %3407 = vmatprep.subr.bf16.mxu0 0
      %3408 = vmatpush1.bf16.msra.mxu0 %v2562
      %3409 = vmatprep.subr.bf16.mxu0 0
      %3410 = vmatpush1.bf16.msra.mxu0 %v2563
      %3411 = vmatprep.subr.bf16.mxu0 0
      %3412 = vmatpush1.bf16.msra.mxu0 %v2564
      %3413 = vmatprep.subr.bf16.mxu0 0
      %3414 = vmatpush1.bf16.msra.mxu0 %v2565
      %3415 = vmatprep.subr.bf16.mxu0 0
      %3416 = vmatpush1.bf16.msra.mxu0 %v2566
      %3417 = vmatprep.subr.bf16.mxu0 0
      %3418 = vmatpush1.bf16.msra.mxu0 %v2567
      %3419 = vmatprep.subr.bf16.mxu0 0
      %3420 = vmatpush1.bf16.msra.mxu0 %v2568
      %3421 = vmatprep.mubr.bf16.mxu0 %v1474
      %3422 = vmatmul.mubr.bf16.gmra.mrb[0].mxu0 %v1473
      %v3423 = vpop.f32.mrb[0].mxu0
      %v3424 = vadd.f32 %v3263, %v3423
      %v3425 = vpop.f32.mrb[0].mxu0
      %v3426 = vpop.f32.mrb[0].mxu0
      %v3427 = vadd.f32 %v3266, %v3426
      %v3428 = vpop.f32.mrb[0].mxu0
      %3429 = vmatprep.mubr.bf16.mxu0 %v1490
      %3430 = vmatmul.mubr.bf16.gmra.mrb[0].mxu0 %v1489
      %v3431 = vpop.f32.mrb[0].mxu0
      %v3432 = vadd.f32 %v3271, %v3431
      %v3433 = vpop.f32.mrb[0].mxu0
      %v3434 = vpop.f32.mrb[0].mxu0
      %v3435 = vadd.f32 %v3274, %v3434
      %v3436 = vpop.f32.mrb[0].mxu0
      %3437 = vmatprep.mubr.bf16.mxu0 %v1506
      %3438 = vmatmul.mubr.bf16.gmra.mrb[0].mxu0 %v1505
      %v3439 = vpop.f32.mrb[0].mxu0
      %v3440 = vadd.f32 %v3279, %v3439
      %v3441 = vpop.f32.mrb[0].mxu0
      %v3442 = vpop.f32.mrb[0].mxu0
      %v3443 = vadd.f32 %v3282, %v3442
      %v3444 = vpop.f32.mrb[0].mxu0
      %3445 = vmatprep.mubr.bf16.mxu0 %v1522
      %3446 = vmatmul.mubr.bf16.gmra.mrb[0].mxu0 %v1521
      %v3447 = vpop.f32.mrb[0].mxu0
      %v3448 = vadd.f32 %v3287, %v3447
      %v3449 = vpop.f32.mrb[0].mxu0
      %v3450 = vpop.f32.mrb[0].mxu0
      %v3451 = vadd.f32 %v3290, %v3450
      %v3452 = vpop.f32.mrb[0].mxu0
      %3453 = vmatprep.mubr.bf16.mxu0 %v1538
      %3454 = vmatmul.mubr.bf16.gmra.mrb[0].mxu0 %v1537
      %v3455 = vpop.f32.mrb[0].mxu0
      %v3456 = vadd.f32 %v3295, %v3455
      %v3457 = vpop.f32.mrb[0].mxu0
      %v3458 = vpop.f32.mrb[0].mxu0
      %v3459 = vadd.f32 %v3298, %v3458
      %v3460 = vpop.f32.mrb[0].mxu0
      %3461 = vmatprep.mubr.bf16.mxu0 %v1554
      %3462 = vmatmul.mubr.bf16.gmra.mrb[0].mxu0 %v1553
      %v3463 = vpop.f32.mrb[0].mxu0
      %v3464 = vadd.f32 %v3303, %v3463
      %v3465 = vpop.f32.mrb[0].mxu0
      %v3466 = vpop.f32.mrb[0].mxu0
      %v3467 = vadd.f32 %v3306, %v3466
      %v3468 = vpop.f32.mrb[0].mxu0
      %3469 = vmatprep.mubr.bf16.mxu0 %v1570
      %3470 = vmatmul.mubr.bf16.gmra.mrb[0].mxu0 %v1569
      %v3471 = vpop.f32.mrb[0].mxu0
      %v3472 = vadd.f32 %v3311, %v3471
      %v3473 = vpop.f32.mrb[0].mxu0
      %v3474 = vpop.f32.mrb[0].mxu0
      %v3475 = vadd.f32 %v3314, %v3474
      %v3476 = vpop.f32.mrb[0].mxu0
      %3477 = vmatprep.mubr.bf16.mxu0 %v1586
      %3478 = vmatmul.mubr.bf16.gmra.mrb[0].mxu0 %v1585
      %v3479 = vpop.f32.mrb[0].mxu0
      %v3480 = vadd.f32 %v3319, %v3479
      %v3481 = vpop.f32.mrb[0].mxu0
      %v3482 = vpop.f32.mrb[0].mxu0
      %v3483 = vadd.f32 %v3322, %v3482
      %v3484 = vpop.f32.mrb[0].mxu0
      %3485 = vmatprep.mubr.bf16.mxu0 %v1602
      %3486 = vmatmul.mubr.bf16.gmra.mrb[0].mxu0 %v1601
      %v3487 = vpop.f32.mrb[0].mxu0
      %v3488 = vadd.f32 %v3327, %v3487
      %v3489 = vpop.f32.mrb[0].mxu0
      %v3490 = vpop.f32.mrb[0].mxu0
      %v3491 = vadd.f32 %v3330, %v3490
      %v3492 = vpop.f32.mrb[0].mxu0
      %3493 = vmatprep.mubr.bf16.mxu0 %v1618
      %3494 = vmatmul.mubr.bf16.gmra.mrb[0].mxu0 %v1617
      %v3495 = vpop.f32.mrb[0].mxu0
      %v3496 = vadd.f32 %v3335, %v3495
      %v3497 = vpop.f32.mrb[0].mxu0
      %v3498 = vpop.f32.mrb[0].mxu0
      %v3499 = vadd.f32 %v3338, %v3498
      %v3500 = vpop.f32.mrb[0].mxu0
      %3501 = vmatprep.mubr.bf16.mxu0 %v1634
      %3502 = vmatmul.mubr.bf16.gmra.mrb[0].mxu0 %v1633
      %v3503 = vpop.f32.mrb[0].mxu0
      %v3504 = vadd.f32 %v3343, %v3503
      %v3505 = vpop.f32.mrb[0].mxu0
      %v3506 = vpop.f32.mrb[0].mxu0
      %v3507 = vadd.f32 %v3346, %v3506
      %v3508 = vpop.f32.mrb[0].mxu0
      %3509 = vmatprep.mubr.bf16.mxu0 %v1650
      %3510 = vmatmul.mubr.bf16.gmra.mrb[0].mxu0 %v1649
      %v3511 = vpop.f32.mrb[0].mxu0
      %v3512 = vadd.f32 %v3351, %v3511
      %v3513 = vpop.f32.mrb[0].mxu0
      %v3514 = vpop.f32.mrb[0].mxu0
      %v3515 = vadd.f32 %v3354, %v3514
      %v3516 = vpop.f32.mrb[0].mxu0
      %3517 = vmatprep.mubr.bf16.mxu0 %v1666
      %3518 = vmatmul.mubr.bf16.gmra.mrb[0].mxu0 %v1665
      %v3519 = vpop.f32.mrb[0].mxu0
      %v3520 = vadd.f32 %v3359, %v3519
      %v3521 = vpop.f32.mrb[0].mxu0
      %v3522 = vpop.f32.mrb[0].mxu0
      %v3523 = vadd.f32 %v3362, %v3522
      %v3524 = vpop.f32.mrb[0].mxu0
      %3525 = vmatprep.mubr.bf16.mxu0 %v1682
      %3526 = vmatmul.mubr.bf16.gmra.mrb[0].mxu0 %v1681
      %v3527 = vpop.f32.mrb[0].mxu0
      %v3528 = vadd.f32 %v3367, %v3527
      %v3529 = vpop.f32.mrb[0].mxu0
      %v3530 = vpop.f32.mrb[0].mxu0
      %v3531 = vadd.f32 %v3370, %v3530
      %v3532 = vpop.f32.mrb[0].mxu0
      %3533 = vmatprep.mubr.bf16.mxu0 %v1698
      %3534 = vmatmul.mubr.bf16.gmra.mrb[0].mxu0 %v1697
      %v3535 = vpop.f32.mrb[0].mxu0
      %v3536 = vadd.f32 %v3375, %v3535
      %v3537 = vpop.f32.mrb[0].mxu0
      %v3538 = vpop.f32.mrb[0].mxu0
      %v3539 = vadd.f32 %v3378, %v3538
      %v3540 = vpop.f32.mrb[0].mxu0
      %3541 = vmatprep.mubr.bf16.mxu0 %v1714
      %3542 = vmatmul.mubr.bf16.gmra.mrb[0].mxu0 %v1713
      %v3543 = vpop.f32.mrb[0].mxu0
      %v3544 = vadd.f32 %v3383, %v3543
      %v3545 = vpop.f32.mrb[0].mxu0
      %v3546 = vpop.f32.mrb[0].mxu0
      %v3547 = vadd.f32 %v3386, %v3546
      %v3548 = vpop.f32.mrb[0].mxu0
      %3549 = vdwg.mxu0
      %3550 = vmatprep.subr.bf16.mxu0 0
      %3551 = vmatpush1.bf16.msra.mxu0 %v2569
      %3552 = vmatprep.subr.bf16.mxu0 0
      %3553 = vmatpush1.bf16.msra.mxu0 %v2570
      %3554 = vmatprep.subr.bf16.mxu0 0
      %3555 = vmatpush1.bf16.msra.mxu0 %v2571
      %3556 = vmatprep.subr.bf16.mxu0 0
      %3557 = vmatpush1.bf16.msra.mxu0 %v2572
      %3558 = vmatprep.subr.bf16.mxu0 0
      %3559 = vmatpush1.bf16.msra.mxu0 %v2573
      %3560 = vmatprep.subr.bf16.mxu0 0
      %3561 = vmatpush1.bf16.msra.mxu0 %v2574
      %3562 = vmatprep.subr.bf16.mxu0 0
      %3563 = vmatpush1.bf16.msra.mxu0 %v2575
      %3564 = vmatprep.subr.bf16.mxu0 0
      %3565 = vmatpush1.bf16.msra.mxu0 %v2576
      %3566 = vmatprep.subr.bf16.mxu0 0
      %3567 = vmatpush1.bf16.msra.mxu0 %v2577
      %3568 = vmatprep.subr.bf16.mxu0 0
      %3569 = vmatpush1.bf16.msra.mxu0 %v2578
      %3570 = vmatprep.subr.bf16.mxu0 0
      %3571 = vmatpush1.bf16.msra.mxu0 %v2579
      %3572 = vmatprep.subr.bf16.mxu0 0
      %3573 = vmatpush1.bf16.msra.mxu0 %v2580
      %3574 = vmatprep.subr.bf16.mxu0 0
      %3575 = vmatpush1.bf16.msra.mxu0 %v2581
      %3576 = vmatprep.subr.bf16.mxu0 0
      %3577 = vmatpush1.bf16.msra.mxu0 %v2582
      %3578 = vmatprep.subr.bf16.mxu0 0
      %3579 = vmatpush1.bf16.msra.mxu0 %v2583
      %3580 = vmatprep.subr.bf16.mxu0 0
      %3581 = vmatpush1.bf16.msra.mxu0 %v2584
      %3582 = vmatprep.mubr.bf16.mxu0 %v1476
      %3583 = vmatmul.mubr.bf16.gmra.mrb[0].mxu0 %v1475
      %v3584 = vpop.f32.mrb[0].mxu0
      %v3585 = vadd.f32 %v3424, %v3584
      %v3586 = vpop.f32.mrb[0].mxu0
      %v3587 = vpop.f32.mrb[0].mxu0
      %v3588 = vadd.f32 %v3427, %v3587
      %v3589 = vpop.f32.mrb[0].mxu0
      %3590 = vmatprep.mubr.bf16.mxu0 %v1492
      %3591 = vmatmul.mubr.bf16.gmra.mrb[0].mxu0 %v1491
      %v3592 = vpop.f32.mrb[0].mxu0
      %v3593 = vadd.f32 %v3432, %v3592
      %v3594 = vpop.f32.mrb[0].mxu0
      %v3595 = vpop.f32.mrb[0].mxu0
      %v3596 = vadd.f32 %v3435, %v3595
      %v3597 = vpop.f32.mrb[0].mxu0
      %3598 = vmatprep.mubr.bf16.mxu0 %v1508
      %3599 = vmatmul.mubr.bf16.gmra.mrb[0].mxu0 %v1507
      %v3600 = vpop.f32.mrb[0].mxu0
      %v3601 = vadd.f32 %v3440, %v3600
      %v3602 = vpop.f32.mrb[0].mxu0
      %v3603 = vpop.f32.mrb[0].mxu0
      %v3604 = vadd.f32 %v3443, %v3603
      %v3605 = vpop.f32.mrb[0].mxu0
      %3606 = vmatprep.mubr.bf16.mxu0 %v1524
      %3607 = vmatmul.mubr.bf16.gmra.mrb[0].mxu0 %v1523
      %v3608 = vpop.f32.mrb[0].mxu0
      %v3609 = vadd.f32 %v3448, %v3608
      %v3610 = vpop.f32.mrb[0].mxu0
      %v3611 = vpop.f32.mrb[0].mxu0
      %v3612 = vadd.f32 %v3451, %v3611
      %v3613 = vpop.f32.mrb[0].mxu0
      %3614 = vmatprep.mubr.bf16.mxu0 %v1540
      %3615 = vmatmul.mubr.bf16.gmra.mrb[0].mxu0 %v1539
      %v3616 = vpop.f32.mrb[0].mxu0
      %v3617 = vadd.f32 %v3456, %v3616
      %v3618 = vpop.f32.mrb[0].mxu0
      %v3619 = vpop.f32.mrb[0].mxu0
      %v3620 = vadd.f32 %v3459, %v3619
      %v3621 = vpop.f32.mrb[0].mxu0
      %3622 = vmatprep.mubr.bf16.mxu0 %v1556
      %3623 = vmatmul.mubr.bf16.gmra.mrb[0].mxu0 %v1555
      %v3624 = vpop.f32.mrb[0].mxu0
      %v3625 = vadd.f32 %v3464, %v3624
      %v3626 = vpop.f32.mrb[0].mxu0
      %v3627 = vpop.f32.mrb[0].mxu0
      %v3628 = vadd.f32 %v3467, %v3627
      %v3629 = vpop.f32.mrb[0].mxu0
      %3630 = vmatprep.mubr.bf16.mxu0 %v1572
      %3631 = vmatmul.mubr.bf16.gmra.mrb[0].mxu0 %v1571
      %v3632 = vpop.f32.mrb[0].mxu0
      %v3633 = vadd.f32 %v3472, %v3632
      %v3634 = vpop.f32.mrb[0].mxu0
      %v3635 = vpop.f32.mrb[0].mxu0
      %v3636 = vadd.f32 %v3475, %v3635
      %v3637 = vpop.f32.mrb[0].mxu0
      %3638 = vmatprep.mubr.bf16.mxu0 %v1588
      %3639 = vmatmul.mubr.bf16.gmra.mrb[0].mxu0 %v1587
      %v3640 = vpop.f32.mrb[0].mxu0
      %v3641 = vadd.f32 %v3480, %v3640
      %v3642 = vpop.f32.mrb[0].mxu0
      %v3643 = vpop.f32.mrb[0].mxu0
      %v3644 = vadd.f32 %v3483, %v3643
      %v3645 = vpop.f32.mrb[0].mxu0
      %3646 = vmatprep.mubr.bf16.mxu0 %v1604
      %3647 = vmatmul.mubr.bf16.gmra.mrb[0].mxu0 %v1603
      %v3648 = vpop.f32.mrb[0].mxu0
      %v3649 = vadd.f32 %v3488, %v3648
      %v3650 = vpop.f32.mrb[0].mxu0
      %v3651 = vpop.f32.mrb[0].mxu0
      %v3652 = vadd.f32 %v3491, %v3651
      %v3653 = vpop.f32.mrb[0].mxu0
      %3654 = vmatprep.mubr.bf16.mxu0 %v1620
      %3655 = vmatmul.mubr.bf16.gmra.mrb[0].mxu0 %v1619
      %v3656 = vpop.f32.mrb[0].mxu0
      %v3657 = vadd.f32 %v3496, %v3656
      %v3658 = vpop.f32.mrb[0].mxu0
      %v3659 = vpop.f32.mrb[0].mxu0
      %v3660 = vadd.f32 %v3499, %v3659
      %v3661 = vpop.f32.mrb[0].mxu0
      %3662 = vmatprep.mubr.bf16.mxu0 %v1636
      %3663 = vmatmul.mubr.bf16.gmra.mrb[0].mxu0 %v1635
      %v3664 = vpop.f32.mrb[0].mxu0
      %v3665 = vadd.f32 %v3504, %v3664
      %v3666 = vpop.f32.mrb[0].mxu0
      %v3667 = vpop.f32.mrb[0].mxu0
      %v3668 = vadd.f32 %v3507, %v3667
      %v3669 = vpop.f32.mrb[0].mxu0
      %3670 = vmatprep.mubr.bf16.mxu0 %v1652
      %3671 = vmatmul.mubr.bf16.gmra.mrb[0].mxu0 %v1651
      %v3672 = vpop.f32.mrb[0].mxu0
      %v3673 = vadd.f32 %v3512, %v3672
      %v3674 = vpop.f32.mrb[0].mxu0
      %v3675 = vpop.f32.mrb[0].mxu0
      %v3676 = vadd.f32 %v3515, %v3675
      %v3677 = vpop.f32.mrb[0].mxu0
      %3678 = vmatprep.mubr.bf16.mxu0 %v1668
      %3679 = vmatmul.mubr.bf16.gmra.mrb[0].mxu0 %v1667
      %v3680 = vpop.f32.mrb[0].mxu0
      %v3681 = vadd.f32 %v3520, %v3680
      %v3682 = vpop.f32.mrb[0].mxu0
      %v3683 = vpop.f32.mrb[0].mxu0
      %v3684 = vadd.f32 %v3523, %v3683
      %v3685 = vpop.f32.mrb[0].mxu0
      %3686 = vmatprep.mubr.bf16.mxu0 %v1684
      %3687 = vmatmul.mubr.bf16.gmra.mrb[0].mxu0 %v1683
      %v3688 = vpop.f32.mrb[0].mxu0
      %v3689 = vadd.f32 %v3528, %v3688
      %v3690 = vpop.f32.mrb[0].mxu0
      %v3691 = vpop.f32.mrb[0].mxu0
      %v3692 = vadd.f32 %v3531, %v3691
      %v3693 = vpop.f32.mrb[0].mxu0
      %3694 = vmatprep.mubr.bf16.mxu0 %v1700
      %3695 = vmatmul.mubr.bf16.gmra.mrb[0].mxu0 %v1699
      %v3696 = vpop.f32.mrb[0].mxu0
      %v3697 = vadd.f32 %v3536, %v3696
      %v3698 = vpop.f32.mrb[0].mxu0
      %v3699 = vpop.f32.mrb[0].mxu0
      %v3700 = vadd.f32 %v3539, %v3699
      %v3701 = vpop.f32.mrb[0].mxu0
      %3702 = vmatprep.mubr.bf16.mxu0 %v1716
      %3703 = vmatmul.mubr.bf16.gmra.mrb[0].mxu0 %v1715
      %v3704 = vpop.f32.mrb[0].mxu0
      %v3705 = vadd.f32 %v3544, %v3704
      %v3706 = vpop.f32.mrb[0].mxu0
      %v3707 = vpop.f32.mrb[0].mxu0
      %v3708 = vadd.f32 %v3547, %v3707
      %v3709 = vpop.f32.mrb[0].mxu0
      %3710 = vdwg.mxu0
      %3711 = vmatprep.subr.bf16.mxu0 0
      %3712 = vmatpush1.bf16.msra.mxu0 %v2585
      %3713 = vmatprep.subr.bf16.mxu0 0
      %3714 = vmatpush1.bf16.msra.mxu0 %v2586
      %3715 = vmatprep.subr.bf16.mxu0 0
      %3716 = vmatpush1.bf16.msra.mxu0 %v2587
      %3717 = vmatprep.subr.bf16.mxu0 0
      %3718 = vmatpush1.bf16.msra.mxu0 %v2588
      %3719 = vmatprep.subr.bf16.mxu0 0
      %3720 = vmatpush1.bf16.msra.mxu0 %v2589
      %3721 = vmatprep.subr.bf16.mxu0 0
      %3722 = vmatpush1.bf16.msra.mxu0 %v2590
      %3723 = vmatprep.subr.bf16.mxu0 0
      %3724 = vmatpush1.bf16.msra.mxu0 %v2591
      %3725 = vmatprep.subr.bf16.mxu0 0
      %3726 = vmatpush1.bf16.msra.mxu0 %v2592
      %3727 = vmatprep.subr.bf16.mxu0 0
      %3728 = vmatpush1.bf16.msra.mxu0 %v2593
      %3729 = vmatprep.subr.bf16.mxu0 0
      %3730 = vmatpush1.bf16.msra.mxu0 %v2594
      %3731 = vmatprep.subr.bf16.mxu0 0
      %3732 = vmatpush1.bf16.msra.mxu0 %v2595
      %3733 = vmatprep.subr.bf16.mxu0 0
      %3734 = vmatpush1.bf16.msra.mxu0 %v2596
      %3735 = vmatprep.subr.bf16.mxu0 0
      %3736 = vmatpush1.bf16.msra.mxu0 %v2597
      %3737 = vmatprep.subr.bf16.mxu0 0
      %3738 = vmatpush1.bf16.msra.mxu0 %v2598
      %3739 = vmatprep.subr.bf16.mxu0 0
      %3740 = vmatpush1.bf16.msra.mxu0 %v2599
      %3741 = vmatprep.subr.bf16.mxu0 0
      %3742 = vmatpush1.bf16.msra.mxu0 %v2600
      %3743 = vmatprep.mubr.bf16.mxu0 %v1478
      %3744 = vmatmul.mubr.bf16.gmra.mrb[0].mxu0 %v1477
      %v3745 = vpop.f32.mrb[0].mxu0
      %v3746 = vadd.f32 %v3585, %v3745
      %v3747 = vpop.f32.mrb[0].mxu0
      %v3748 = vpop.f32.mrb[0].mxu0
      %v3749 = vadd.f32 %v3588, %v3748
      %v3750 = vpop.f32.mrb[0].mxu0
      %3751 = vmatprep.mubr.bf16.mxu0 %v1494
      %3752 = vmatmul.mubr.bf16.gmra.mrb[0].mxu0 %v1493
      %v3753 = vpop.f32.mrb[0].mxu0
      %v3754 = vadd.f32 %v3593, %v3753
      %v3755 = vpop.f32.mrb[0].mxu0
      %v3756 = vpop.f32.mrb[0].mxu0
      %v3757 = vadd.f32 %v3596, %v3756
      %v3758 = vpop.f32.mrb[0].mxu0
      %3759 = vmatprep.mubr.bf16.mxu0 %v1510
      %3760 = vmatmul.mubr.bf16.gmra.mrb[0].mxu0 %v1509
      %v3761 = vpop.f32.mrb[0].mxu0
      %v3762 = vadd.f32 %v3601, %v3761
      %v3763 = vpop.f32.mrb[0].mxu0
      %v3764 = vpop.f32.mrb[0].mxu0
      %v3765 = vadd.f32 %v3604, %v3764
      %v3766 = vpop.f32.mrb[0].mxu0
      %3767 = vmatprep.mubr.bf16.mxu0 %v1526
      %3768 = vmatmul.mubr.bf16.gmra.mrb[0].mxu0 %v1525
      %v3769 = vpop.f32.mrb[0].mxu0
      %v3770 = vadd.f32 %v3609, %v3769
      %v3771 = vpop.f32.mrb[0].mxu0
      %v3772 = vpop.f32.mrb[0].mxu0
      %v3773 = vadd.f32 %v3612, %v3772
      %v3774 = vpop.f32.mrb[0].mxu0
      %3775 = vmatprep.mubr.bf16.mxu0 %v1542
      %3776 = vmatmul.mubr.bf16.gmra.mrb[0].mxu0 %v1541
      %v3777 = vpop.f32.mrb[0].mxu0
      %v3778 = vadd.f32 %v3617, %v3777
      %v3779 = vpop.f32.mrb[0].mxu0
      %v3780 = vpop.f32.mrb[0].mxu0
      %v3781 = vadd.f32 %v3620, %v3780
      %v3782 = vpop.f32.mrb[0].mxu0
      %3783 = vmatprep.mubr.bf16.mxu0 %v1558
      %3784 = vmatmul.mubr.bf16.gmra.mrb[0].mxu0 %v1557
      %v3785 = vpop.f32.mrb[0].mxu0
      %v3786 = vadd.f32 %v3625, %v3785
      %v3787 = vpop.f32.mrb[0].mxu0
      %v3788 = vpop.f32.mrb[0].mxu0
      %v3789 = vadd.f32 %v3628, %v3788
      %v3790 = vpop.f32.mrb[0].mxu0
      %3791 = vmatprep.mubr.bf16.mxu0 %v1574
      %3792 = vmatmul.mubr.bf16.gmra.mrb[0].mxu0 %v1573
      %v3793 = vpop.f32.mrb[0].mxu0
      %v3794 = vadd.f32 %v3633, %v3793
      %v3795 = vpop.f32.mrb[0].mxu0
      %v3796 = vpop.f32.mrb[0].mxu0
      %v3797 = vadd.f32 %v3636, %v3796
      %v3798 = vpop.f32.mrb[0].mxu0
      %3799 = vmatprep.mubr.bf16.mxu0 %v1590
      %3800 = vmatmul.mubr.bf16.gmra.mrb[0].mxu0 %v1589
      %v3801 = vpop.f32.mrb[0].mxu0
      %v3802 = vadd.f32 %v3641, %v3801
      %v3803 = vpop.f32.mrb[0].mxu0
      %v3804 = vpop.f32.mrb[0].mxu0
      %v3805 = vadd.f32 %v3644, %v3804
      %v3806 = vpop.f32.mrb[0].mxu0
      %3807 = vmatprep.mubr.bf16.mxu0 %v1606
      %3808 = vmatmul.mubr.bf16.gmra.mrb[0].mxu0 %v1605
      %v3809 = vpop.f32.mrb[0].mxu0
      %v3810 = vadd.f32 %v3649, %v3809
      %v3811 = vpop.f32.mrb[0].mxu0
      %v3812 = vpop.f32.mrb[0].mxu0
      %v3813 = vadd.f32 %v3652, %v3812
      %v3814 = vpop.f32.mrb[0].mxu0
      %3815 = vmatprep.mubr.bf16.mxu0 %v1622
      %3816 = vmatmul.mubr.bf16.gmra.mrb[0].mxu0 %v1621
      %v3817 = vpop.f32.mrb[0].mxu0
      %v3818 = vadd.f32 %v3657, %v3817
      %v3819 = vpop.f32.mrb[0].mxu0
      %v3820 = vpop.f32.mrb[0].mxu0
      %v3821 = vadd.f32 %v3660, %v3820
      %v3822 = vpop.f32.mrb[0].mxu0
      %3823 = vmatprep.mubr.bf16.mxu0 %v1638
      %3824 = vmatmul.mubr.bf16.gmra.mrb[0].mxu0 %v1637
      %v3825 = vpop.f32.mrb[0].mxu0
      %v3826 = vadd.f32 %v3665, %v3825
      %v3827 = vpop.f32.mrb[0].mxu0
      %v3828 = vpop.f32.mrb[0].mxu0
      %v3829 = vadd.f32 %v3668, %v3828
      %v3830 = vpop.f32.mrb[0].mxu0
      %3831 = vmatprep.mubr.bf16.mxu0 %v1654
      %3832 = vmatmul.mubr.bf16.gmra.mrb[0].mxu0 %v1653
      %v3833 = vpop.f32.mrb[0].mxu0
      %v3834 = vadd.f32 %v3673, %v3833
      %v3835 = vpop.f32.mrb[0].mxu0
      %v3836 = vpop.f32.mrb[0].mxu0
      %v3837 = vadd.f32 %v3676, %v3836
      %v3838 = vpop.f32.mrb[0].mxu0
      %3839 = vmatprep.mubr.bf16.mxu0 %v1670
      %3840 = vmatmul.mubr.bf16.gmra.mrb[0].mxu0 %v1669
      %v3841 = vpop.f32.mrb[0].mxu0
      %v3842 = vadd.f32 %v3681, %v3841
      %v3843 = vpop.f32.mrb[0].mxu0
      %v3844 = vpop.f32.mrb[0].mxu0
      %v3845 = vadd.f32 %v3684, %v3844
      %v3846 = vpop.f32.mrb[0].mxu0
      %3847 = vmatprep.mubr.bf16.mxu0 %v1686
      %3848 = vmatmul.mubr.bf16.gmra.mrb[0].mxu0 %v1685
      %v3849 = vpop.f32.mrb[0].mxu0
      %v3850 = vadd.f32 %v3689, %v3849
      %v3851 = vpop.f32.mrb[0].mxu0
      %v3852 = vpop.f32.mrb[0].mxu0
      %v3853 = vadd.f32 %v3692, %v3852
      %v3854 = vpop.f32.mrb[0].mxu0
      %3855 = vmatprep.mubr.bf16.mxu0 %v1702
      %3856 = vmatmul.mubr.bf16.gmra.mrb[0].mxu0 %v1701
      %v3857 = vpop.f32.mrb[0].mxu0
      %v3858 = vadd.f32 %v3697, %v3857
      %v3859 = vpop.f32.mrb[0].mxu0
      %v3860 = vpop.f32.mrb[0].mxu0
      %v3861 = vadd.f32 %v3700, %v3860
      %v3862 = vpop.f32.mrb[0].mxu0
      %3863 = vmatprep.mubr.bf16.mxu0 %v1718
      %3864 = vmatmul.mubr.bf16.gmra.mrb[0].mxu0 %v1717
      %v3865 = vpop.f32.mrb[0].mxu0
      %v3866 = vadd.f32 %v3705, %v3865
      %v3867 = vpop.f32.mrb[0].mxu0
      %v3868 = vpop.f32.mrb[0].mxu0
      %v3869 = vadd.f32 %v3708, %v3868
      %v3870 = vpop.f32.mrb[0].mxu0
      %3871 = vdwg.mxu0
      %3872 = vmatprep.subr.bf16.mxu0 0
      %3873 = vmatpush1.bf16.msra.mxu0 %v2601
      %3874 = vmatprep.subr.bf16.mxu0 0
      %3875 = vmatpush1.bf16.msra.mxu0 %v2602
      %3876 = vmatprep.subr.bf16.mxu0 0
      %3877 = vmatpush1.bf16.msra.mxu0 %v2603
      %3878 = vmatprep.subr.bf16.mxu0 0
      %3879 = vmatpush1.bf16.msra.mxu0 %v2604
      %3880 = vmatprep.subr.bf16.mxu0 0
      %3881 = vmatpush1.bf16.msra.mxu0 %v2605
      %3882 = vmatprep.subr.bf16.mxu0 0
      %3883 = vmatpush1.bf16.msra.mxu0 %v2606
      %3884 = vmatprep.subr.bf16.mxu0 0
      %3885 = vmatpush1.bf16.msra.mxu0 %v2607
      %3886 = vmatprep.subr.bf16.mxu0 0
      %3887 = vmatpush1.bf16.msra.mxu0 %v2608
      %3888 = vmatprep.subr.bf16.mxu0 0
      %3889 = vmatpush1.bf16.msra.mxu0 %v2609
      %3890 = vmatprep.subr.bf16.mxu0 0
      %3891 = vmatpush1.bf16.msra.mxu0 %v2610
      %3892 = vmatprep.subr.bf16.mxu0 0
      %3893 = vmatpush1.bf16.msra.mxu0 %v2611
      %3894 = vmatprep.subr.bf16.mxu0 0
      %3895 = vmatpush1.bf16.msra.mxu0 %v2612
      %3896 = vmatprep.subr.bf16.mxu0 0
      %3897 = vmatpush1.bf16.msra.mxu0 %v2613
      %3898 = vmatprep.subr.bf16.mxu0 0
      %3899 = vmatpush1.bf16.msra.mxu0 %v2614
      %3900 = vmatprep.subr.bf16.mxu0 0
      %3901 = vmatpush1.bf16.msra.mxu0 %v2615
      %3902 = vmatprep.subr.bf16.mxu0 0
      %3903 = vmatpush1.bf16.msra.mxu0 %v2616
      %3904 = vmatprep.mubr.bf16.mxu0 %v1480
      %3905 = vmatmul.mubr.bf16.gmra.mrb[0].mxu0 %v1479
      %v3906 = vpop.f32.mrb[0].mxu0
      %v3907 = vadd.f32 %v3746, %v3906
      %v3908 = vpop.f32.mrb[0].mxu0
      %v3909 = vpop.f32.mrb[0].mxu0
      %v3910 = vadd.f32 %v3749, %v3909
      %v3911 = vpop.f32.mrb[0].mxu0
      %3912 = vmatprep.mubr.bf16.mxu0 %v1496
      %3913 = vmatmul.mubr.bf16.gmra.mrb[0].mxu0 %v1495
      %v3914 = vpop.f32.mrb[0].mxu0
      %v3915 = vadd.f32 %v3754, %v3914
      %v3916 = vpop.f32.mrb[0].mxu0
      %v3917 = vpop.f32.mrb[0].mxu0
      %v3918 = vadd.f32 %v3757, %v3917
      %v3919 = vpop.f32.mrb[0].mxu0
      %3920 = vmatprep.mubr.bf16.mxu0 %v1512
      %3921 = vmatmul.mubr.bf16.gmra.mrb[0].mxu0 %v1511
      %v3922 = vpop.f32.mrb[0].mxu0
      %v3923 = vadd.f32 %v3762, %v3922
      %v3924 = vpop.f32.mrb[0].mxu0
      %v3925 = vpop.f32.mrb[0].mxu0
      %v3926 = vadd.f32 %v3765, %v3925
      %v3927 = vpop.f32.mrb[0].mxu0
      %3928 = vmatprep.mubr.bf16.mxu0 %v1528
      %3929 = vmatmul.mubr.bf16.gmra.mrb[0].mxu0 %v1527
      %v3930 = vpop.f32.mrb[0].mxu0
      %v3931 = vadd.f32 %v3770, %v3930
      %v3932 = vpop.f32.mrb[0].mxu0
      %v3933 = vpop.f32.mrb[0].mxu0
      %v3934 = vadd.f32 %v3773, %v3933
      %v3935 = vpop.f32.mrb[0].mxu0
      %3936 = vmatprep.mubr.bf16.mxu0 %v1544
      %3937 = vmatmul.mubr.bf16.gmra.mrb[0].mxu0 %v1543
      %v3938 = vpop.f32.mrb[0].mxu0
      %v3939 = vadd.f32 %v3778, %v3938
      %v3940 = vpop.f32.mrb[0].mxu0
      %v3941 = vpop.f32.mrb[0].mxu0
      %v3942 = vadd.f32 %v3781, %v3941
      %v3943 = vpop.f32.mrb[0].mxu0
      %3944 = vmatprep.mubr.bf16.mxu0 %v1560
      %3945 = vmatmul.mubr.bf16.gmra.mrb[0].mxu0 %v1559
      %v3946 = vpop.f32.mrb[0].mxu0
      %v3947 = vadd.f32 %v3786, %v3946
      %v3948 = vpop.f32.mrb[0].mxu0
      %v3949 = vpop.f32.mrb[0].mxu0
      %v3950 = vadd.f32 %v3789, %v3949
      %v3951 = vpop.f32.mrb[0].mxu0
      %3952 = vmatprep.mubr.bf16.mxu0 %v1576
      %3953 = vmatmul.mubr.bf16.gmra.mrb[0].mxu0 %v1575
      %v3954 = vpop.f32.mrb[0].mxu0
      %v3955 = vadd.f32 %v3794, %v3954
      %v3956 = vpop.f32.mrb[0].mxu0
      %v3957 = vpop.f32.mrb[0].mxu0
      %v3958 = vadd.f32 %v3797, %v3957
      %v3959 = vpop.f32.mrb[0].mxu0
      %3960 = vmatprep.mubr.bf16.mxu0 %v1592
      %3961 = vmatmul.mubr.bf16.gmra.mrb[0].mxu0 %v1591
      %v3962 = vpop.f32.mrb[0].mxu0
      %v3963 = vadd.f32 %v3802, %v3962
      %v3964 = vpop.f32.mrb[0].mxu0
      %v3965 = vpop.f32.mrb[0].mxu0
      %v3966 = vadd.f32 %v3805, %v3965
      %v3967 = vpop.f32.mrb[0].mxu0
      %3968 = vmatprep.mubr.bf16.mxu0 %v1608
      %3969 = vmatmul.mubr.bf16.gmra.mrb[0].mxu0 %v1607
      %v3970 = vpop.f32.mrb[0].mxu0
      %v3971 = vadd.f32 %v3810, %v3970
      %v3972 = vpop.f32.mrb[0].mxu0
      %v3973 = vpop.f32.mrb[0].mxu0
      %v3974 = vadd.f32 %v3813, %v3973
      %v3975 = vpop.f32.mrb[0].mxu0
      %3976 = vmatprep.mubr.bf16.mxu0 %v1624
      %3977 = vmatmul.mubr.bf16.gmra.mrb[0].mxu0 %v1623
      %v3978 = vpop.f32.mrb[0].mxu0
      %v3979 = vadd.f32 %v3818, %v3978
      %v3980 = vpop.f32.mrb[0].mxu0
      %v3981 = vpop.f32.mrb[0].mxu0
      %v3982 = vadd.f32 %v3821, %v3981
      %v3983 = vpop.f32.mrb[0].mxu0
      %3984 = vmatprep.mubr.bf16.mxu0 %v1640
      %3985 = vmatmul.mubr.bf16.gmra.mrb[0].mxu0 %v1639
      %v3986 = vpop.f32.mrb[0].mxu0
      %v3987 = vadd.f32 %v3826, %v3986
      %v3988 = vpop.f32.mrb[0].mxu0
      %v3989 = vpop.f32.mrb[0].mxu0
      %v3990 = vadd.f32 %v3829, %v3989
      %v3991 = vpop.f32.mrb[0].mxu0
      %3992 = vmatprep.mubr.bf16.mxu0 %v1656
      %3993 = vmatmul.mubr.bf16.gmra.mrb[0].mxu0 %v1655
      %v3994 = vpop.f32.mrb[0].mxu0
      %v3995 = vadd.f32 %v3834, %v3994
      %v3996 = vpop.f32.mrb[0].mxu0
      %v3997 = vpop.f32.mrb[0].mxu0
      %v3998 = vadd.f32 %v3837, %v3997
      %v3999 = vpop.f32.mrb[0].mxu0
      %4000 = vmatprep.mubr.bf16.mxu0 %v1672
      %4001 = vmatmul.mubr.bf16.gmra.mrb[0].mxu0 %v1671
      %v4002 = vpop.f32.mrb[0].mxu0
      %v4003 = vadd.f32 %v3842, %v4002
      %v4004 = vpop.f32.mrb[0].mxu0
      %v4005 = vpop.f32.mrb[0].mxu0
      %v4006 = vadd.f32 %v3845, %v4005
      %v4007 = vpop.f32.mrb[0].mxu0
      %4008 = vmatprep.mubr.bf16.mxu0 %v1688
      %4009 = vmatmul.mubr.bf16.gmra.mrb[0].mxu0 %v1687
      %v4010 = vpop.f32.mrb[0].mxu0
      %v4011 = vadd.f32 %v3850, %v4010
      %v4012 = vpop.f32.mrb[0].mxu0
      %v4013 = vpop.f32.mrb[0].mxu0
      %v4014 = vadd.f32 %v3853, %v4013
      %v4015 = vpop.f32.mrb[0].mxu0
      %4016 = vmatprep.mubr.bf16.mxu0 %v1704
      %4017 = vmatmul.mubr.bf16.gmra.mrb[0].mxu0 %v1703
      %v4018 = vpop.f32.mrb[0].mxu0
      %v4019 = vadd.f32 %v3858, %v4018
      %v4020 = vpop.f32.mrb[0].mxu0
      %v4021 = vpop.f32.mrb[0].mxu0
      %v4022 = vadd.f32 %v3861, %v4021
      %v4023 = vpop.f32.mrb[0].mxu0
      %4024 = vmatprep.mubr.bf16.mxu0 %v1720
      %4025 = vmatmul.mubr.bf16.gmra.mrb[0].mxu0 %v1719
      %v4026 = vpop.f32.mrb[0].mxu0
      %v4027 = vadd.f32 %v3866, %v4026
      %v4028 = vpop.f32.mrb[0].mxu0
      %v4029 = vpop.f32.mrb[0].mxu0
      %v4030 = vadd.f32 %v3869, %v4029
      %v4031 = vpop.f32.mrb[0].mxu0
      %4032 = vdwg.mxu0
      %v4033 = vmax.f32 %v3907, 0.0
      %v4034 = vmax.f32 %v3910, 0.0
      %v4035 = vmax.f32 %v3915, 0.0
      %v4036 = vmax.f32 %v3918, 0.0
      %v4037 = vmax.f32 %v3923, 0.0
      %v4038 = vmax.f32 %v3926, 0.0
      %v4039 = vmax.f32 %v3931, 0.0
      %v4040 = vmax.f32 %v3934, 0.0
      %v4041 = vmax.f32 %v3939, 0.0
      %v4042 = vmax.f32 %v3942, 0.0
      %v4043 = vmax.f32 %v3947, 0.0
      %v4044 = vmax.f32 %v3950, 0.0
      %v4045 = vmax.f32 %v3955, 0.0
      %v4046 = vmax.f32 %v3958, 0.0
      %v4047 = vmax.f32 %v3963, 0.0
      %v4048 = vmax.f32 %v3966, 0.0
      %v4049 = vmax.f32 %v3971, 0.0
      %v4050 = vmax.f32 %v3974, 0.0
      %v4051 = vmax.f32 %v3979, 0.0
      %v4052 = vmax.f32 %v3982, 0.0
      %v4053 = vmax.f32 %v3987, 0.0
      %v4054 = vmax.f32 %v3990, 0.0
      %v4055 = vmax.f32 %v3995, 0.0
      %v4056 = vmax.f32 %v3998, 0.0
      %v4057 = vmax.f32 %v4003, 0.0
      %v4058 = vmax.f32 %v4006, 0.0
      %v4059 = vmax.f32 %v4011, 0.0
      %v4060 = vmax.f32 %v4014, 0.0
      %v4061 = vmax.f32 %v4019, 0.0
      %v4062 = vmax.f32 %v4022, 0.0
      %v4063 = vmax.f32 %v4027, 0.0
      %v4064 = vmax.f32 %v4030, 0.0
      %v4065 = vmin.f32 %v4033, 1.0
      %v4066 = vmin.f32 %v4034, 1.0
      %v4067 = vmin.f32 %v4035, 1.0
      %v4068 = vmin.f32 %v4036, 1.0
      %v4069 = vmin.f32 %v4037, 1.0
      %v4070 = vmin.f32 %v4038, 1.0
      %v4071 = vmin.f32 %v4039, 1.0
      %v4072 = vmin.f32 %v4040, 1.0
      %v4073 = vmin.f32 %v4041, 1.0
      %v4074 = vmin.f32 %v4042, 1.0
      %v4075 = vmin.f32 %v4043, 1.0
      %v4076 = vmin.f32 %v4044, 1.0
      %v4077 = vmin.f32 %v4045, 1.0
      %v4078 = vmin.f32 %v4046, 1.0
      %v4079 = vmin.f32 %v4047, 1.0
      %v4080 = vmin.f32 %v4048, 1.0
      %v4081 = vmin.f32 %v4049, 1.0
      %v4082 = vmin.f32 %v4050, 1.0
      %v4083 = vmin.f32 %v4051, 1.0
      %v4084 = vmin.f32 %v4052, 1.0
      %v4085 = vmin.f32 %v4053, 1.0
      %v4086 = vmin.f32 %v4054, 1.0
      %v4087 = vmin.f32 %v4055, 1.0
      %v4088 = vmin.f32 %v4056, 1.0
      %v4089 = vmin.f32 %v4057, 1.0
      %v4090 = vmin.f32 %v4058, 1.0
      %v4091 = vmin.f32 %v4059, 1.0
      %v4092 = vmin.f32 %v4060, 1.0
      %v4093 = vmin.f32 %v4061, 1.0
      %v4094 = vmin.f32 %v4062, 1.0
      %v4095 = vmin.f32 %v4063, 1.0
      %v4096 = vmin.f32 %v4064, 1.0
      %4097 = vst [vmem:[%s175] sm:$0xff] %v4065
      %4098 = vst [vmem:[%s175 + $0x8] sm:$0xff] %v4066
      %4099 = vst [vmem:[%s175 + $0x10] sm:$0xff] %v4067
      %4100 = vst [vmem:[%s175 + $0x18] sm:$0xff] %v4068
      %4101 = vst [vmem:[%s175 + $0x20] sm:$0xff] %v4069
      %4102 = vst [vmem:[%s175 + $0x28] sm:$0xff] %v4070
      %4103 = vst [vmem:[%s175 + $0x30] sm:$0xff] %v4071
      %4104 = vst [vmem:[%s175 + $0x38] sm:$0xff] %v4072
      %4105 = vst [vmem:[%s175 + $0x40] sm:$0xff] %v4073
      %4106 = vst [vmem:[%s175 + $0x48] sm:$0xff] %v4074
      %4107 = vst [vmem:[%s175 + $0x50] sm:$0xff] %v4075
      %4108 = vst [vmem:[%s175 + $0x58] sm:$0xff] %v4076
      %4109 = vst [vmem:[%s175 + $0x60] sm:$0xff] %v4077
      %4110 = vst [vmem:[%s175 + $0x68] sm:$0xff] %v4078
      %4111 = vst [vmem:[%s175 + $0x70] sm:$0xff] %v4079
      %4112 = vst [vmem:[%s175 + $0x78] sm:$0xff] %v4080
      %4113 = vst [vmem:[%s175 + $0x80] sm:$0xff] %v4081
      %4114 = vst [vmem:[%s175 + $0x88] sm:$0xff] %v4082
      %4115 = vst [vmem:[%s175 + $0x90] sm:$0xff] %v4083
      %4116 = vst [vmem:[%s175 + $0x98] sm:$0xff] %v4084
      %4117 = vst [vmem:[%s175 + $0xa0] sm:$0xff] %v4085
      %4118 = vst [vmem:[%s175 + $0xa8] sm:$0xff] %v4086
      %4119 = vst [vmem:[%s175 + $0xb0] sm:$0xff] %v4087
      %4120 = vst [vmem:[%s175 + $0xb8] sm:$0xff] %v4088
      %4121 = vst [vmem:[%s175 + $0xc0] sm:$0xff] %v4089
      %4122 = vst [vmem:[%s175 + $0xc8] sm:$0xff] %v4090
      %4123 = vst [vmem:[%s175 + $0xd0] sm:$0xff] %v4091
      %4124 = vst [vmem:[%s175 + $0xd8] sm:$0xff] %v4092
      %4125 = vst [vmem:[%s175 + $0xe0] sm:$0xff] %v4093
      %4126 = vst [vmem:[%s175 + $0xe8] sm:$0xff] %v4094
      %4127 = vst [vmem:[%s175 + $0xf0] sm:$0xff] %v4095
      %4128 = vst [vmem:[%s175 + $0xf8] sm:$0xff] %v4096
      %s4129 = smul.u32 32, %s14
      %p4130 = scmp.lt.s32.totalorder %s4129, 63
      %s4131 = scalar_select %p4130, %s4129, 63
      %s4132 = smul.addr %s4131, 8
      %s4133 = scalar_lea.vmem %s3, %s4132
      // Predicated region
      $region33: #{sparse_autoencoder_forward.11} parent=31 // pred_check
        %p4134 = pneg %p100
      $region34: #{sparse_autoencoder_forward.11} parent=31 // pred_check_branch
        %4136 = sbr.rel (%p4134) target = $region36
      $region35: #{sparse_autoencoder_forward.11} parent=31 // pred_region
        %s4137 = smul.u32 32, %s14
      $region36: #{sparse_autoencoder_forward.11} parent=31 // pred_fallthru
        _
    $region32: #{sparse_autoencoder_forward.11} parent=5 // pred_fallthru
      _
    %p4138 = scmp.le.s32.totalorder 2, %s9
    // Predicated region
    $region37: #{sparse_autoencoder_forward.11} parent=5 // pred_check
      %p4139 = pneg %p4138
    $region38: #{sparse_autoencoder_forward.11} parent=5 // pred_check_branch
      %4141 = sbr.rel (%p4139) target = $region40
    $region39: #{sparse_autoencoder_forward.11} parent=5 // pred_region
      %s4142 = ssub.s32 %s9, 2
      // Predicated region
      $region41: #{sparse_autoencoder_forward.11} parent=39 // pred_check
        %p4143 = pneg %p106
      $region42: #{sparse_autoencoder_forward.11} parent=39 // pred_check_branch
        %4145 = sbr.rel (%p4143) target = $region44
      $region43: #{sparse_autoencoder_forward.11} parent=39 // pred_region
        %s4146 = smul.u32 32, %s15
        %p4147 = scmp.lt.s32.totalorder %s4146, 63
        %s4148 = scalar_select %p4147, %s4146, 63
        %s4149 = smul.addr %s4148, 8
        %s4150 = scalar_lea.vmem %s3, %s4149
      $region44: #{sparse_autoencoder_forward.11} parent=39 // pred_fallthru
        _
    $region40: #{sparse_autoencoder_forward.11} parent=5 // pred_fallthru
      _
  $region6: #{sparse_autoencoder_forward.11} parent=0 // loop_footer
    %s13 = sadd.s32 1, %s9
  $region7: #{sparse_autoencoder_forward.11} parent=0 // loop_footer_branch
    %8 = sbr.rel target = $region3
  $region8: #{sparse_autoencoder_forward.11} parent=0 // loop_exit
    _

</llo_original>
